<compile_context>
chip_gen: v7x
topology: tpu7x:2x2x1
jax: 0.10.0
libtpu: 0.0.40
codegen_flags: <defaults>
</compile_context>

<pallas_src>
import jax
import jax.numpy as jnp
from jax.experimental import pallas as pl
from jax.experimental.pallas import tpu as pltpu

LANE = 128
_BN_EPS = 1e-5


# ------------------------------------------------------------------ Pallas kernels

def _phase_matmul_bn_relu_kernel(a_ref, w_ref, bias_ref, g_ref, b_ref, o_ref, acc_ref):
    """Grid axis 0 = sub-pixel phase.

    Per phase: (Mp, K) @ (K, N) on the MXU (bf16 in, f32 acc) + bias, staged into
    acc_ref.  On the last phase: BatchNorm statistics over every output pixel of
    every phase, then gamma/beta + ReLU, one lane-dense store of the whole output.
    """
    p = pl.program_id(0)

    z = jnp.dot(a_ref[0], w_ref[0], preferred_element_type=jnp.float32)
    acc_ref[p] = z + bias_ref[...]

    @pl.when(p == pl.num_programs(0) - 1)
    def _():
        zall = acc_ref[...]                                   # (P, Mp, N) f32
        cnt = zall.shape[0] * zall.shape[1]                   # = B * H_out * W_out
        s1 = jnp.sum(jnp.sum(zall, axis=0), axis=0, keepdims=True)          # (1, N)
        s2 = jnp.sum(jnp.sum(zall * zall, axis=0), axis=0, keepdims=True)   # (1, N)
        mean = s1 / cnt
        var = s2 / cnt - mean * mean                          # biased batch variance
        scale = jax.lax.rsqrt(var + _BN_EPS) * g_ref[...]
        y = (zall - mean) * scale + b_ref[...]
        o_ref[...] = jnp.maximum(y, 0.0).astype(o_ref.dtype)


def _phase_matmul_bias_kernel(a_ref, w_ref, bias_ref, o_ref):
    """No-BN variant (final layer).  Phases are independent -> 'parallel' grid axis,
    no accumulator scratch, direct store."""
    o_ref[0] = (jnp.dot(a_ref[0], w_ref[0], preferred_element_type=jnp.float32)
                + bias_ref[...]).astype(o_ref.dtype)


def fused_deconv_bn_relu(a_phases, w_phases, bias, gamma, beta,
                         out_dtype=jnp.bfloat16):
    """a_phases: (P, Mp, K) bf16, w_phases: (P, K, N) bf16 -> (P, Mp, N) out_dtype."""
    P, Mp, K = a_phases.shape
    N = w_phases.shape[-1]
    return pl.pallas_call(
        _phase_matmul_bn_relu_kernel,
        out_shape=jax.ShapeDtypeStruct((P, Mp, N), out_dtype),
        grid_spec=pltpu.PrefetchScalarGridSpec(
            num_scalar_prefetch=0,
            grid=(P,),
            in_specs=[
                pl.BlockSpec((1, Mp, K), lambda p: (p, 0, 0)),
                pl.BlockSpec((1, K, N), lambda p: (p, 0, 0)),
                pl.BlockSpec((1, N), lambda p: (0, 0)),
                pl.BlockSpec((1, N), lambda p: (0, 0)),
                pl.BlockSpec((1, N), lambda p: (0, 0)),
            ],
            out_specs=pl.BlockSpec((P, Mp, N), lambda p: (0, 0, 0)),
            scratch_shapes=[pltpu.VMEM((P, Mp, N), jnp.float32)],
        ),
        compiler_params=pltpu.CompilerParams(
            dimension_semantics=("arbitrary",)),
    )(a_phases.astype(jnp.bfloat16), w_phases,
      bias.reshape(1, N).astype(jnp.float32),
      gamma.reshape(1, N).astype(jnp.float32),
      beta.reshape(1, N).astype(jnp.float32))


def fused_deconv_bias(a_phases, w_phases, bias, out_dtype=jnp.float32):
    P, Mp, K = a_phases.shape
    N = w_phases.shape[-1]
    return pl.pallas_call(
        _phase_matmul_bias_kernel,
        out_shape=jax.ShapeDtypeStruct((P, Mp, N), out_dtype),
        grid_spec=pltpu.PrefetchScalarGridSpec(
            num_scalar_prefetch=0,
            grid=(P,),
            in_specs=[
                pl.BlockSpec((1, Mp, K), lambda p: (p, 0, 0)),
                pl.BlockSpec((1, K, N), lambda p: (p, 0, 0)),
                pl.BlockSpec((1, N), lambda p: (0, 0)),
            ],
            out_specs=pl.BlockSpec((1, Mp, N), lambda p: (p, 0, 0)),
        ),
        compiler_params=pltpu.CompilerParams(
            dimension_semantics=("parallel",)),
    )(a_phases.astype(jnp.bfloat16), w_phases,
      bias.reshape(1, N).astype(jnp.float32))


# ------------------------------------------------------------------ layout glue (JAX)

def _pad_last(a, to):
    pad = to - a.shape[-1]
    if pad <= 0:
        return a
    return jnp.pad(a, [(0, 0)] * (a.ndim - 1) + [(0, pad)])


def _im2col_phases(h_nhwc):
    """4 sub-pixel-phase im2col matrices for a k=4, s=2, p=1 ConvTranspose2d.
    h_nhwc: (B, H, W, C) -> (4, B*H*W, 4*C); column order per phase = (dy, dx, c)."""
    B, H, W, C = h_nhwc.shape
    hp = jnp.pad(h_nhwc, ((0, 0), (1, 1), (1, 1), (0, 0)))
    phases = []
    for py in range(2):
        for px in range(2):
            slabs = [hp[:, py + dy:py + dy + H, px + dx:px + dx + W, :]
                     for dy in range(2) for dx in range(2)]
            phases.append(jnp.concatenate(slabs, axis=-1).reshape(B * H * W, 4 * C))
    return jnp.stack(phases, axis=0)


def _interleave_phases(y_phases, B, H, W, C):
    """(4, B*H*W, C) phase outputs -> (B, 2H, 2W, C) NHWC;  out[b,2y+py,2x+px] = phase[py*2+px]."""
    y = y_phases.reshape(2, 2, B, H, W, C)                 # (py, px, b, y, x, c)
    return y.transpose(2, 3, 0, 4, 1, 5).reshape(B, 2 * H, 2 * W, C)


# ------------------------------------------------------------------ one-time weight prep

def _pack_phase_weights(w, cin_pad, cout_pad):
    """PyTorch ConvTranspose2d weight (Cin, Cout, 4, 4), stride 2, padding 1
    -> (4 phases, 4*cin_pad, cout_pad) bf16, row order per phase = (dy, dx, cin).
    Phase (py, px), tap (dy, dx) uses w[..., 3 - py - 2*dy, 3 - px - 2*dx]."""
    cin, cout = w.shape[0], w.shape[1]
    w = jnp.pad(w, ((0, cin_pad - cin), (0, cout_pad - cout), (0, 0), (0, 0)))
    phases = []
    for py in range(2):
        for px in range(2):
            taps = [w[:, :, 3 - py - 2 * dy, 3 - px - 2 * dx]       # (cin_pad, cout_pad)
                    for dy in range(2) for dx in range(2)]
            phases.append(jnp.stack(taps, axis=0).reshape(4 * cin_pad, cout_pad))
    return jnp.stack(phases, axis=0).astype(jnp.bfloat16)


def prepare_generator_params(p):
    """One-time repack of PyTorch-layout params into lane-dense bf16 matmul operands."""
    latent = p["w1"].shape[0]
    c1, c2, c3 = 64 * 8, 32 * 4, 16 * 2                      # 512, 128, 32
    c3p = ((c3 + LANE - 1) // LANE) * LANE                   # 128 (lane padding)
    c4p = LANE                                               # 128 (Cout=1 padded)

    # layer 1 (1x1 input, p=0): every output position (oy, ox) is its own "phase".
    w1p = p["w1"].transpose(2, 3, 0, 1).reshape(16, latent, c1).astype(jnp.bfloat16)

    return {
        "w1": w1p,
        "b1": jnp.zeros((c1,), jnp.float32),
        "g1": p["g1"].astype(jnp.float32), "be1": p["be1"].astype(jnp.float32),
        "w2": _pack_phase_weights(p["w2"], c1, c2),
        "b2": jnp.zeros((c2,), jnp.float32),
        "g2": p["g2"].astype(jnp.float32), "be2": p["be2"].astype(jnp.float32),
        "w3": _pack_phase_weights(p["w3"], c2, c3p),
        "b3": _pad_last(p["b3"].astype(jnp.float32), c3p),
        "g3": _pad_last(p["g3"].astype(jnp.float32), c3p),
        "be3": _pad_last(p["be3"].astype(jnp.float32), c3p),
        "w4": _pack_phase_weights(p["w4"], c3p, c4p),
        "b4": _pad_last(p["b4"].astype(jnp.float32), c4p),
    }


# ------------------------------------------------------------------ Generator forward

def generator_forward(x_nchw, q):
    """x_nchw: (B, latent, 1, 1) -> (B, 1, 32, 32), matching the PyTorch Generator."""
    B = x_nchw.shape[0]
    latent = x_nchw.shape[1]
    c1 = q["w1"].shape[-1]                                   # 512
    c2 = q["w2"].shape[-1]                                   # 128
    c3p = q["w3"].shape[-1]                                  # 128 (32 real + pad)

    # --- deconv1 (k=4, s=2, p=0): 1x1 -> 4x4, fused bias + BN + ReLU --------------
    x_flat = x_nchw.reshape(B, latent).astype(jnp.bfloat16)
    a1 = jnp.broadcast_to(x_flat[None], (16, B, latent))
    y1 = fused_deconv_bn_relu(a1, q["w1"], q["b1"], q["g1"], q["be1"])  # (16, B, 512)
    h = y1.reshape(4, 4, B, c1).transpose(2, 0, 1, 3)                   # (B, 4, 4, 512)

    # --- deconv2: 4x4 -> 8x8 ------------------------------------------------------
    y2 = fused_deconv_bn_relu(_im2col_phases(h), q["w2"], q["b2"], q["g2"], q["be2"])
    h = _interleave_phases(y2, B, 4, 4, c2)                             # (B, 8, 8, 128)

    # --- deconv3: 8x8 -> 16x16 (Cout=32 zero-padded to 128 lanes) -----------------
    y3 = fused_deconv_bn_relu(_im2col_phases(h), q["w3"], q["b3"], q["g3"], q["be3"])
    h = _interleave_phases(y3, B, 8, 8, c3p)                            # (B, 16, 16, 128)

    # --- deconv4: 16x16 -> 32x32, bias only (no BN / activation) ------------------
    y4 = fused_deconv_bias(_im2col_phases(h), q["w4"], q["b4"])         # (4, B*256, 128)

    y = y4[:, :, 0].reshape(2, 2, B, 16, 16)                            # (py, px, b, y, x)
    y = y.transpose(2, 3, 0, 4, 1).reshape(B, 32, 32)
    return y[:, None, :, :]                                             # NCHW (B, 1, 32, 32)


# ------------------------------------------------------------------ params + reference

def init_generator_params(key, latent_dim):
    ks = jax.random.split(key, 9)
    std = 0.02

    def nrm(k, shape):
        return std * jax.random.normal(k, shape, jnp.float32)

    return {
        # ConvTranspose2d weights: (Cin, Cout, kH, kW); spec: conv W ~ N(0, .02),
        # BN gamma ~ N(0, .02), BN beta = 0; deconv1/2 have no bias.
        "w1": nrm(ks[0], (latent_dim, 64 * 8, 4, 4)), "b1": jnp.zeros((64 * 8,)),
        "g1": nrm(ks[1], (64 * 8,)), "be1": jnp.zeros((64 * 8,), jnp.float32),
        "w2": nrm(ks[2], (64 * 8, 32 * 4, 4, 4)), "b2": jnp.zeros((32 * 4,)),
        "g2": nrm(ks[3], (32 * 4,)), "be2": jnp.zeros((32 * 4,), jnp.float32),
        "w3": nrm(ks[4], (32 * 4, 16 * 2, 4, 4)), "b3": nrm(ks[5], (16 * 2,)),
        "g3": nrm(ks[6], (16 * 2,)), "be3": jnp.zeros((16 * 2,), jnp.float32),
        "w4": nrm(ks[7], (16 * 2, 1, 4, 4)), "b4": nrm(ks[8], (1,)),
    }


def _conv_transpose_ref(x, w, b, stride, padding):
    k = w.shape[2]
    rhs = jnp.flip(w, (2, 3)).transpose(1, 0, 2, 3)           # (Cout, Cin, k, k)
    y = jax.lax.conv_general_dilated(
        x, rhs, window_strides=(1, 1),
        padding=[(k - 1 - padding, k - 1 - padding)] * 2,
        lhs_dilation=(stride, stride),
        dimension_numbers=("NCHW", "OIHW", "NCHW"),
        precision=jax.lax.Precision.HIGHEST)
    return y + b.reshape(1, -1, 1, 1)


def _bn_relu_ref(x, g, b):
    m = jnp.mean(x, axis=(0, 2, 3), keepdims=True)
    v = jnp.mean((x - m) ** 2, axis=(0, 2, 3), keepdims=True)
    y = (x - m) * jax.lax.rsqrt(v + _BN_EPS) * g.reshape(1, -1, 1, 1) + b.reshape(1, -1, 1, 1)
    return jnp.maximum(y, 0.0)


def reference_forward(x, p):
    h = _bn_relu_ref(_conv_transpose_ref(x, p["w1"], p["b1"], 2, 0), p["g1"], p["be1"])
    h = _bn_relu_ref(_conv_transpose_ref(h, p["w2"], p["b2"], 2, 1), p["g2"], p["be2"])
    h = _bn_relu_ref(_conv_transpose_ref(h, p["w3"], p["b3"], 2, 1), p["g3"], p["be3"])
    return _conv_transpose_ref(h, p["w4"], p["b4"], 2, 1)


if __name__ == "__main__":
    latent_dim = 64
    batch = 2

    key = jax.random.PRNGKey(0)
    k_x, k_p = jax.random.split(key)
    x = jax.random.normal(k_x, (batch, latent_dim, 1, 1), jnp.float32)  # NCHW latent
    params = init_generator_params(k_p, latent_dim)

    packed = prepare_generator_params(params)      # one-time weight repack (hoisted)
    fwd = jax.jit(generator_forward)
    y = fwd(x, packed)
    jax.block_until_ready(y)

    assert y.shape == (batch, 1, 32, 32), y.shape
    assert y.dtype == jnp.float32
    assert bool(jnp.all(jnp.isfinite(y)))

    # Cross-check against a plain-JAX f32 reference of the same PyTorch forward
    # (tolerance sized for bf16 MXU operands through 3 BN layers).
    y_ref = reference_forward(x, params)
    err = float(jnp.max(jnp.abs(y - y_ref)))
    scale = float(jnp.max(jnp.abs(y_ref)))
    assert err <= 7.5e-2 * scale + 1e-3, ("mismatch vs reference", err, scale)

    print("KERNEL_OK")
</pallas_src>

<mosaic_0001>
module attributes {stable_mosaic.version = 11 : i64} {
  func.func @_phase_matmul_bn_relu_kernel(%arg0: i32, %arg1: memref<1x2x64xbf16, #tpu.memory_space<vmem>>, %arg2: memref<1x64x512xbf16, #tpu.memory_space<vmem>>, %arg3: memref<1x512xf32, #tpu.memory_space<vmem>>, %arg4: memref<1x512xf32, #tpu.memory_space<vmem>>, %arg5: memref<1x512xf32, #tpu.memory_space<vmem>>, %arg6: memref<16x2x512xbf16, #tpu.memory_space<vmem>>, %arg7: memref<16x2x512xf32, #tpu.memory_space<vmem>>) attributes {dimension_semantics = [#tpu.dimension_semantics<arbitrary>], iteration_bounds = array<i64: 16>, scalar_prefetch = 0 : i64, scratch_operands = 1 : i64, tpu.core_type = #tpu.core_type<tc>, window_params = [{transform_indices = @transform_0, window_bounds = array<i64: 1, 2, 64>}, {transform_indices = @transform_1, window_bounds = array<i64: 1, 64, 512>}, {pipeline_mode = #tpu.pipeline_mode<synchronous>, transform_indices = @transform_2, window_bounds = array<i64: 1, 512>}, {pipeline_mode = #tpu.pipeline_mode<synchronous>, transform_indices = @transform_3, window_bounds = array<i64: 1, 512>}, {pipeline_mode = #tpu.pipeline_mode<synchronous>, transform_indices = @transform_4, window_bounds = array<i64: 1, 512>}, {pipeline_mode = #tpu.pipeline_mode<synchronous>, transform_indices = @transform_5, window_bounds = array<i64: 16, 2, 512>}]} {
    %c0 = arith.constant 0 : index
    %c0_0 = arith.constant 0 : index
    %c0_1 = arith.constant 0 : index
    %0 = vector.load %arg1[%c0, %c0_0, %c0_1] : memref<1x2x64xbf16, #tpu.memory_space<vmem>>, vector<1x2x64xbf16>
    %1 = vector.shape_cast %0 : vector<1x2x64xbf16> to vector<2x64xbf16>
    %c0_2 = arith.constant 0 : index
    %c0_3 = arith.constant 0 : index
    %c0_4 = arith.constant 0 : index
    %2 = vector.load %arg2[%c0_2, %c0_3, %c0_4] : memref<1x64x512xbf16, #tpu.memory_space<vmem>>, vector<1x64x512xbf16>
    %3 = vector.shape_cast %2 : vector<1x64x512xbf16> to vector<64x512xbf16>
    %cst = arith.constant dense<0.000000e+00> : vector<2x512xf32>
    %4 = tpu.matmul %1, %3, %cst {dimension_numbers = #tpu.dot_dimension_numbers<[1], [0], [0], [1], [0, 0, 1, 1], [], []>} : vector<2x64xbf16>, vector<64x512xbf16>, vector<2x512xf32> -> vector<2x512xf32>
    %c0_5 = arith.constant 0 : index
    %c0_6 = arith.constant 0 : index
    %5 = vector.load %arg3[%c0_5, %c0_6] : memref<1x512xf32, #tpu.memory_space<vmem>>, vector<1x512xf32>
    %6 = vector.broadcast %5 : vector<1x512xf32> to vector<2x512xf32>
    %7 = arith.addf %4, %6 : vector<2x512xf32>
    %8 = arith.index_cast %arg0 : i32 to index
    %c0_7 = arith.constant 0 : index
    %c0_8 = arith.constant 0 : index
    %9 = vector.load %arg7[%8, %c0_7, %c0_8] : memref<16x2x512xf32, #tpu.memory_space<vmem>>, vector<1x2x512xf32>
    %10 = vector.shape_cast %9 : vector<1x2x512xf32> to vector<2x512xf32>
    %11 = vector.shape_cast %7 : vector<2x512xf32> to vector<1x2x512xf32>
    tpu.vector_store %arg7[%8, %c0_7, %c0_8], %11 {strides = array<i32>} : memref<16x2x512xf32, #tpu.memory_space<vmem>>, vector<1x2x512xf32>,
    %c15_i32 = arith.constant 15 : i32
    %12 = arith.cmpi eq, %arg0, %c15_i32 : i32
    %13 = arith.extui %12 : i1 to i32
    %c0_i32 = arith.constant 0 : i32
    %14 = arith.cmpi ne, %13, %c0_i32 : i32
    scf.if %14 {
      %c0_9 = arith.constant 0 : index
      %c0_10 = arith.constant 0 : index
      %c0_11 = arith.constant 0 : index
      %15 = vector.load %arg7[%c0_9, %c0_10, %c0_11] : memref<16x2x512xf32, #tpu.memory_space<vmem>>, vector<16x2x512xf32>
      %cst_12 = arith.constant dense<0.000000e+00> : vector<2x512xf32>
      %16 = vector.multi_reduction <add>, %15, %cst_12 [0] : vector<16x2x512xf32> to vector<2x512xf32>
      %cst_13 = arith.constant dense<0.000000e+00> : vector<512xf32>
      %17 = vector.multi_reduction <add>, %16, %cst_13 [0] : vector<2x512xf32> to vector<512xf32>
      %18 = vector.shape_cast %17 : vector<512xf32> to vector<1x512xf32>
      %19 = arith.mulf %15, %15 : vector<16x2x512xf32>
      %cst_14 = arith.constant dense<0.000000e+00> : vector<2x512xf32>
      %20 = vector.multi_reduction <add>, %19, %cst_14 [0] : vector<16x2x512xf32> to vector<2x512xf32>
      %cst_15 = arith.constant dense<0.000000e+00> : vector<512xf32>
      %21 = vector.multi_reduction <add>, %20, %cst_15 [0] : vector<2x512xf32> to vector<512xf32>
      %22 = vector.shape_cast %21 : vector<512xf32> to vector<1x512xf32>
      %cst_16 = arith.constant 3.200000e+01 : f32
      %23 = vector.broadcast %cst_16 : f32 to vector<1x512xf32>
      %24 = arith.divf %18, %23 : vector<1x512xf32>
      %cst_17 = arith.constant 3.200000e+01 : f32
      %25 = vector.broadcast %cst_17 : f32 to vector<1x512xf32>
      %26 = arith.divf %22, %25 : vector<1x512xf32>
      %27 = arith.mulf %24, %24 : vector<1x512xf32>
      %28 = arith.subf %26, %27 : vector<1x512xf32>
      %cst_18 = arith.constant 9.99999974E-6 : f32
      %29 = vector.broadcast %cst_18 : f32 to vector<1x512xf32>
      %30 = arith.addf %28, %29 : vector<1x512xf32>
      %31 = math.rsqrt %30 : vector<1x512xf32>
      %c0_19 = arith.constant 0 : index
      %c0_20 = arith.constant 0 : index
      %32 = vector.load %arg4[%c0_19, %c0_20] : memref<1x512xf32, #tpu.memory_space<vmem>>, vector<1x512xf32>
      %33 = arith.mulf %31, %32 : vector<1x512xf32>
      %34 = vector.shape_cast %24 : vector<1x512xf32> to vector<1x1x512xf32>
      %35 = vector.broadcast %34 : vector<1x1x512xf32> to vector<16x2x512xf32>
      %36 = arith.subf %15, %35 : vector<16x2x512xf32>
      %37 = vector.shape_cast %33 : vector<1x512xf32> to vector<1x1x512xf32>
      %38 = vector.broadcast %37 : vector<1x1x512xf32> to vector<16x2x512xf32>
      %39 = arith.mulf %36, %38 : vector<16x2x512xf32>
      %c0_21 = arith.constant 0 : index
      %c0_22 = arith.constant 0 : index
      %40 = vector.load %arg5[%c0_21, %c0_22] : memref<1x512xf32, #tpu.memory_space<vmem>>, vector<1x512xf32>
      %41 = vector.shape_cast %40 : vector<1x512xf32> to vector<1x1x512xf32>
      %42 = vector.broadcast %41 : vector<1x1x512xf32> to vector<16x2x512xf32>
      %43 = arith.addf %39, %42 : vector<16x2x512xf32>
      %cst_23 = arith.constant 0.000000e+00 : f32
      %44 = vector.broadcast %cst_23 : f32 to vector<16x2x512xf32>
      %45 = arith.maximumf %43, %44 : vector<16x2x512xf32>
      %46 = arith.truncf %45 : vector<16x2x512xf32> to vector<16x2x512xbf16>
      %c0_24 = arith.constant 0 : index
      %c0_25 = arith.constant 0 : index
      %c0_26 = arith.constant 0 : index
      %47 = vector.load %arg6[%c0_24, %c0_25, %c0_26] : memref<16x2x512xbf16, #tpu.memory_space<vmem>>, vector<16x2x512xbf16>
      tpu.vector_store %arg6[%c0_24, %c0_25, %c0_26], %46 {strides = array<i32>} : memref<16x2x512xbf16, #tpu.memory_space<vmem>>, vector<16x2x512xbf16>,
    } else {
    }
    return
  }
  func.func @transform_0(%arg0: i32) -> (i32, i32, i32) {
    %c0_i32 = arith.constant 0 : i32
    %c0_i32_0 = arith.constant 0 : i32
    %c0_i32_1 = arith.constant 0 : i32
    return %arg0, %c0_i32, %c0_i32_0 : i32, i32, i32
  }
  func.func @transform_1(%arg0: i32) -> (i32, i32, i32) {
    %c0_i32 = arith.constant 0 : i32
    %c0_i32_0 = arith.constant 0 : i32
    %c0_i32_1 = arith.constant 0 : i32
    return %arg0, %c0_i32, %c0_i32_0 : i32, i32, i32
  }
  func.func @transform_2(%arg0: i32) -> (i32, i32) {
    %c0_i32 = arith.constant 0 : i32
    %c0_i32_0 = arith.constant 0 : i32
    %c0_i32_1 = arith.constant 0 : i32
    return %c0_i32, %c0_i32_0 : i32, i32
  }
  func.func @transform_3(%arg0: i32) -> (i32, i32) {
    %c0_i32 = arith.constant 0 : i32
    %c0_i32_0 = arith.constant 0 : i32
    %c0_i32_1 = arith.constant 0 : i32
    return %c0_i32, %c0_i32_0 : i32, i32
  }
  func.func @transform_4(%arg0: i32) -> (i32, i32) {
    %c0_i32 = arith.constant 0 : i32
    %c0_i32_0 = arith.constant 0 : i32
    %c0_i32_1 = arith.constant 0 : i32
    return %c0_i32, %c0_i32_0 : i32, i32
  }
  func.func @transform_5(%arg0: i32) -> (i32, i32, i32) {
    %c0_i32 = arith.constant 0 : i32
    %c0_i32_0 = arith.constant 0 : i32
    %c0_i32_1 = arith.constant 0 : i32
    %c0_i32_2 = arith.constant 0 : i32
    return %c0_i32, %c0_i32_0, %c0_i32_1 : i32, i32, i32
  }
}

module attributes {stable_mosaic.version = 11 : i64} {
  func.func @_phase_matmul_bn_relu_kernel(%arg0: i32, %arg1: memref<1x32x2048xbf16, #tpu.memory_space<vmem>>, %arg2: memref<1x2048x128xbf16, #tpu.memory_space<vmem>>, %arg3: memref<1x128xf32, #tpu.memory_space<vmem>>, %arg4: memref<1x128xf32, #tpu.memory_space<vmem>>, %arg5: memref<1x128xf32, #tpu.memory_space<vmem>>, %arg6: memref<4x32x128xbf16, #tpu.memory_space<vmem>>, %arg7: memref<4x32x128xf32, #tpu.memory_space<vmem>>) attributes {dimension_semantics = [#tpu.dimension_semantics<arbitrary>], iteration_bounds = array<i64: 4>, scalar_prefetch = 0 : i64, scratch_operands = 1 : i64, tpu.core_type = #tpu.core_type<tc>, window_params = [{transform_indices = @transform_0, window_bounds = array<i64: 1, 32, 2048>}, {transform_indices = @transform_1, window_bounds = array<i64: 1, 2048, 128>}, {pipeline_mode = #tpu.pipeline_mode<synchronous>, transform_indices = @transform_2, window_bounds = array<i64: 1, 128>}, {pipeline_mode = #tpu.pipeline_mode<synchronous>, transform_indices = @transform_3, window_bounds = array<i64: 1, 128>}, {pipeline_mode = #tpu.pipeline_mode<synchronous>, transform_indices = @transform_4, window_bounds = array<i64: 1, 128>}, {pipeline_mode = #tpu.pipeline_mode<synchronous>, transform_indices = @transform_5, window_bounds = array<i64: 4, 32, 128>}]} {
    %c0 = arith.constant 0 : index
    %c0_0 = arith.constant 0 : index
    %c0_1 = arith.constant 0 : index
    %0 = vector.load %arg1[%c0, %c0_0, %c0_1] : memref<1x32x2048xbf16, #tpu.memory_space<vmem>>, vector<1x32x2048xbf16>
    %1 = vector.shape_cast %0 : vector<1x32x2048xbf16> to vector<32x2048xbf16>
    %c0_2 = arith.constant 0 : index
    %c0_3 = arith.constant 0 : index
    %c0_4 = arith.constant 0 : index
    %2 = vector.load %arg2[%c0_2, %c0_3, %c0_4] : memref<1x2048x128xbf16, #tpu.memory_space<vmem>>, vector<1x2048x128xbf16>
    %3 = vector.shape_cast %2 : vector<1x2048x128xbf16> to vector<2048x128xbf16>
    %cst = arith.constant dense<0.000000e+00> : vector<32x128xf32>
    %4 = tpu.matmul %1, %3, %cst {dimension_numbers = #tpu.dot_dimension_numbers<[1], [0], [0], [1], [0, 0, 1, 1], [], []>} : vector<32x2048xbf16>, vector<2048x128xbf16>, vector<32x128xf32> -> vector<32x128xf32>
    %c0_5 = arith.constant 0 : index
    %c0_6 = arith.constant 0 : index
    %5 = vector.load %arg3[%c0_5, %c0_6] : memref<1x128xf32, #tpu.memory_space<vmem>>, vector<1x128xf32>
    %6 = vector.broadcast %5 : vector<1x128xf32> to vector<32x128xf32>
    %7 = arith.addf %4, %6 : vector<32x128xf32>
    %8 = arith.index_cast %arg0 : i32 to index
    %c0_7 = arith.constant 0 : index
    %c0_8 = arith.constant 0 : index
    %9 = vector.load %arg7[%8, %c0_7, %c0_8] : memref<4x32x128xf32, #tpu.memory_space<vmem>>, vector<1x32x128xf32>
    %10 = vector.shape_cast %9 : vector<1x32x128xf32> to vector<32x128xf32>
    %11 = vector.shape_cast %7 : vector<32x128xf32> to vector<1x32x128xf32>
    tpu.vector_store %arg7[%8, %c0_7, %c0_8], %11 {strides = array<i32>} : memref<4x32x128xf32, #tpu.memory_space<vmem>>, vector<1x32x128xf32>,
    %c3_i32 = arith.constant 3 : i32
    %12 = arith.cmpi eq, %arg0, %c3_i32 : i32
    %13 = arith.extui %12 : i1 to i32
    %c0_i32 = arith.constant 0 : i32
    %14 = arith.cmpi ne, %13, %c0_i32 : i32
    scf.if %14 {
      %c0_9 = arith.constant 0 : index
      %c0_10 = arith.constant 0 : index
      %c0_11 = arith.constant 0 : index
      %15 = vector.load %arg7[%c0_9, %c0_10, %c0_11] : memref<4x32x128xf32, #tpu.memory_space<vmem>>, vector<4x32x128xf32>
      %cst_12 = arith.constant dense<0.000000e+00> : vector<32x128xf32>
      %16 = vector.multi_reduction <add>, %15, %cst_12 [0] : vector<4x32x128xf32> to vector<32x128xf32>
      %cst_13 = arith.constant dense<0.000000e+00> : vector<128xf32>
      %17 = vector.multi_reduction <add>, %16, %cst_13 [0] : vector<32x128xf32> to vector<128xf32>
      %18 = vector.shape_cast %17 : vector<128xf32> to vector<1x128xf32>
      %19 = arith.mulf %15, %15 : vector<4x32x128xf32>
      %cst_14 = arith.constant dense<0.000000e+00> : vector<32x128xf32>
      %20 = vector.multi_reduction <add>, %19, %cst_14 [0] : vector<4x32x128xf32> to vector<32x128xf32>
      %cst_15 = arith.constant dense<0.000000e+00> : vector<128xf32>
      %21 = vector.multi_reduction <add>, %20, %cst_15 [0] : vector<32x128xf32> to vector<128xf32>
      %22 = vector.shape_cast %21 : vector<128xf32> to vector<1x128xf32>
      %cst_16 = arith.constant 1.280000e+02 : f32
      %23 = vector.broadcast %cst_16 : f32 to vector<1x128xf32>
      %24 = arith.divf %18, %23 : vector<1x128xf32>
      %cst_17 = arith.constant 1.280000e+02 : f32
      %25 = vector.broadcast %cst_17 : f32 to vector<1x128xf32>
      %26 = arith.divf %22, %25 : vector<1x128xf32>
      %27 = arith.mulf %24, %24 : vector<1x128xf32>
      %28 = arith.subf %26, %27 : vector<1x128xf32>
      %cst_18 = arith.constant 9.99999974E-6 : f32
      %29 = vector.broadcast %cst_18 : f32 to vector<1x128xf32>
      %30 = arith.addf %28, %29 : vector<1x128xf32>
      %31 = math.rsqrt %30 : vector<1x128xf32>
      %c0_19 = arith.constant 0 : index
      %c0_20 = arith.constant 0 : index
      %32 = vector.load %arg4[%c0_19, %c0_20] : memref<1x128xf32, #tpu.memory_space<vmem>>, vector<1x128xf32>
      %33 = arith.mulf %31, %32 : vector<1x128xf32>
      %34 = vector.shape_cast %24 : vector<1x128xf32> to vector<1x1x128xf32>
      %35 = vector.broadcast %34 : vector<1x1x128xf32> to vector<4x32x128xf32>
      %36 = arith.subf %15, %35 : vector<4x32x128xf32>
      %37 = vector.shape_cast %33 : vector<1x128xf32> to vector<1x1x128xf32>
      %38 = vector.broadcast %37 : vector<1x1x128xf32> to vector<4x32x128xf32>
      %39 = arith.mulf %36, %38 : vector<4x32x128xf32>
      %c0_21 = arith.constant 0 : index
      %c0_22 = arith.constant 0 : index
      %40 = vector.load %arg5[%c0_21, %c0_22] : memref<1x128xf32, #tpu.memory_space<vmem>>, vector<1x128xf32>
      %41 = vector.shape_cast %40 : vector<1x128xf32> to vector<1x1x128xf32>
      %42 = vector.broadcast %41 : vector<1x1x128xf32> to vector<4x32x128xf32>
      %43 = arith.addf %39, %42 : vector<4x32x128xf32>
      %cst_23 = arith.constant 0.000000e+00 : f32
      %44 = vector.broadcast %cst_23 : f32 to vector<4x32x128xf32>
      %45 = arith.maximumf %43, %44 : vector<4x32x128xf32>
      %46 = arith.truncf %45 : vector<4x32x128xf32> to vector<4x32x128xbf16>
      %c0_24 = arith.constant 0 : index
      %c0_25 = arith.constant 0 : index
      %c0_26 = arith.constant 0 : index
      %47 = vector.load %arg6[%c0_24, %c0_25, %c0_26] : memref<4x32x128xbf16, #tpu.memory_space<vmem>>, vector<4x32x128xbf16>
      tpu.vector_store %arg6[%c0_24, %c0_25, %c0_26], %46 {strides = array<i32>} : memref<4x32x128xbf16, #tpu.memory_space<vmem>>, vector<4x32x128xbf16>,
    } else {
    }
    return
  }
  func.func @transform_0(%arg0: i32) -> (i32, i32, i32) {
    %c0_i32 = arith.constant 0 : i32
    %c0_i32_0 = arith.constant 0 : i32
    %c0_i32_1 = arith.constant 0 : i32
    return %arg0, %c0_i32, %c0_i32_0 : i32, i32, i32
  }
  func.func @transform_1(%arg0: i32) -> (i32, i32, i32) {
    %c0_i32 = arith.constant 0 : i32
    %c0_i32_0 = arith.constant 0 : i32
    %c0_i32_1 = arith.constant 0 : i32
    return %arg0, %c0_i32, %c0_i32_0 : i32, i32, i32
  }
  func.func @transform_2(%arg0: i32) -> (i32, i32) {
    %c0_i32 = arith.constant 0 : i32
    %c0_i32_0 = arith.constant 0 : i32
    %c0_i32_1 = arith.constant 0 : i32
    return %c0_i32, %c0_i32_0 : i32, i32
  }
  func.func @transform_3(%arg0: i32) -> (i32, i32) {
    %c0_i32 = arith.constant 0 : i32
    %c0_i32_0 = arith.constant 0 : i32
    %c0_i32_1 = arith.constant 0 : i32
    return %c0_i32, %c0_i32_0 : i32, i32
  }
  func.func @transform_4(%arg0: i32) -> (i32, i32) {
    %c0_i32 = arith.constant 0 : i32
    %c0_i32_0 = arith.constant 0 : i32
    %c0_i32_1 = arith.constant 0 : i32
    return %c0_i32, %c0_i32_0 : i32, i32
  }
  func.func @transform_5(%arg0: i32) -> (i32, i32, i32) {
    %c0_i32 = arith.constant 0 : i32
    %c0_i32_0 = arith.constant 0 : i32
    %c0_i32_1 = arith.constant 0 : i32
    %c0_i32_2 = arith.constant 0 : i32
    return %c0_i32, %c0_i32_0, %c0_i32_1 : i32, i32, i32
  }
}

module attributes {stable_mosaic.version = 11 : i64} {
  func.func @_phase_matmul_bn_relu_kernel(%arg0: i32, %arg1: memref<1x128x512xbf16, #tpu.memory_space<vmem>>, %arg2: memref<1x512x128xbf16, #tpu.memory_space<vmem>>, %arg3: memref<1x128xf32, #tpu.memory_space<vmem>>, %arg4: memref<1x128xf32, #tpu.memory_space<vmem>>, %arg5: memref<1x128xf32, #tpu.memory_space<vmem>>, %arg6: memref<4x128x128xbf16, #tpu.memory_space<vmem>>, %arg7: memref<4x128x128xf32, #tpu.memory_space<vmem>>) attributes {dimension_semantics = [#tpu.dimension_semantics<arbitrary>], iteration_bounds = array<i64: 4>, scalar_prefetch = 0 : i64, scratch_operands = 1 : i64, tpu.core_type = #tpu.core_type<tc>, window_params = [{transform_indices = @transform_0, window_bounds = array<i64: 1, 128, 512>}, {transform_indices = @transform_1, window_bounds = array<i64: 1, 512, 128>}, {pipeline_mode = #tpu.pipeline_mode<synchronous>, transform_indices = @transform_2, window_bounds = array<i64: 1, 128>}, {pipeline_mode = #tpu.pipeline_mode<synchronous>, transform_indices = @transform_3, window_bounds = array<i64: 1, 128>}, {pipeline_mode = #tpu.pipeline_mode<synchronous>, transform_indices = @transform_4, window_bounds = array<i64: 1, 128>}, {pipeline_mode = #tpu.pipeline_mode<synchronous>, transform_indices = @transform_5, window_bounds = array<i64: 4, 128, 128>}]} {
    %c0 = arith.constant 0 : index
    %c0_0 = arith.constant 0 : index
    %c0_1 = arith.constant 0 : index
    %0 = vector.load %arg1[%c0, %c0_0, %c0_1] : memref<1x128x512xbf16, #tpu.memory_space<vmem>>, vector<1x128x512xbf16>
    %1 = vector.shape_cast %0 : vector<1x128x512xbf16> to vector<128x512xbf16>
    %c0_2 = arith.constant 0 : index
    %c0_3 = arith.constant 0 : index
    %c0_4 = arith.constant 0 : index
    %2 = vector.load %arg2[%c0_2, %c0_3, %c0_4] : memref<1x512x128xbf16, #tpu.memory_space<vmem>>, vector<1x512x128xbf16>
    %3 = vector.shape_cast %2 : vector<1x512x128xbf16> to vector<512x128xbf16>
    %cst = arith.constant dense<0.000000e+00> : vector<128x128xf32>
    %4 = tpu.matmul %1, %3, %cst {dimension_numbers = #tpu.dot_dimension_numbers<[1], [0], [0], [1], [0, 0, 1, 1], [], []>} : vector<128x512xbf16>, vector<512x128xbf16>, vector<128x128xf32> -> vector<128x128xf32>
    %c0_5 = arith.constant 0 : index
    %c0_6 = arith.constant 0 : index
    %5 = vector.load %arg3[%c0_5, %c0_6] : memref<1x128xf32, #tpu.memory_space<vmem>>, vector<1x128xf32>
    %6 = vector.broadcast %5 : vector<1x128xf32> to vector<128x128xf32>
    %7 = arith.addf %4, %6 : vector<128x128xf32>
    %8 = arith.index_cast %arg0 : i32 to index
    %c0_7 = arith.constant 0 : index
    %c0_8 = arith.constant 0 : index
    %9 = vector.load %arg7[%8, %c0_7, %c0_8] : memref<4x128x128xf32, #tpu.memory_space<vmem>>, vector<1x128x128xf32>
    %10 = vector.shape_cast %9 : vector<1x128x128xf32> to vector<128x128xf32>
    %11 = vector.shape_cast %7 : vector<128x128xf32> to vector<1x128x128xf32>
    tpu.vector_store %arg7[%8, %c0_7, %c0_8], %11 {strides = array<i32>} : memref<4x128x128xf32, #tpu.memory_space<vmem>>, vector<1x128x128xf32>,
    %c3_i32 = arith.constant 3 : i32
    %12 = arith.cmpi eq, %arg0, %c3_i32 : i32
    %13 = arith.extui %12 : i1 to i32
    %c0_i32 = arith.constant 0 : i32
    %14 = arith.cmpi ne, %13, %c0_i32 : i32
    scf.if %14 {
      %c0_9 = arith.constant 0 : index
      %c0_10 = arith.constant 0 : index
      %c0_11 = arith.constant 0 : index
      %15 = vector.load %arg7[%c0_9, %c0_10, %c0_11] : memref<4x128x128xf32, #tpu.memory_space<vmem>>, vector<4x128x128xf32>
      %cst_12 = arith.constant dense<0.000000e+00> : vector<128x128xf32>
      %16 = vector.multi_reduction <add>, %15, %cst_12 [0] : vector<4x128x128xf32> to vector<128x128xf32>
      %cst_13 = arith.constant dense<0.000000e+00> : vector<128xf32>
      %17 = vector.multi_reduction <add>, %16, %cst_13 [0] : vector<128x128xf32> to vector<128xf32>
      %18 = vector.shape_cast %17 : vector<128xf32> to vector<1x128xf32>
      %19 = arith.mulf %15, %15 : vector<4x128x128xf32>
      %cst_14 = arith.constant dense<0.000000e+00> : vector<128x128xf32>
      %20 = vector.multi_reduction <add>, %19, %cst_14 [0] : vector<4x128x128xf32> to vector<128x128xf32>
      %cst_15 = arith.constant dense<0.000000e+00> : vector<128xf32>
      %21 = vector.multi_reduction <add>, %20, %cst_15 [0] : vector<128x128xf32> to vector<128xf32>
      %22 = vector.shape_cast %21 : vector<128xf32> to vector<1x128xf32>
      %cst_16 = arith.constant 5.120000e+02 : f32
      %23 = vector.broadcast %cst_16 : f32 to vector<1x128xf32>
      %24 = arith.divf %18, %23 : vector<1x128xf32>
      %cst_17 = arith.constant 5.120000e+02 : f32
      %25 = vector.broadcast %cst_17 : f32 to vector<1x128xf32>
      %26 = arith.divf %22, %25 : vector<1x128xf32>
      %27 = arith.mulf %24, %24 : vector<1x128xf32>
      %28 = arith.subf %26, %27 : vector<1x128xf32>
      %cst_18 = arith.constant 9.99999974E-6 : f32
      %29 = vector.broadcast %cst_18 : f32 to vector<1x128xf32>
      %30 = arith.addf %28, %29 : vector<1x128xf32>
      %31 = math.rsqrt %30 : vector<1x128xf32>
      %c0_19 = arith.constant 0 : index
      %c0_20 = arith.constant 0 : index
      %32 = vector.load %arg4[%c0_19, %c0_20] : memref<1x128xf32, #tpu.memory_space<vmem>>, vector<1x128xf32>
      %33 = arith.mulf %31, %32 : vector<1x128xf32>
      %34 = vector.shape_cast %24 : vector<1x128xf32> to vector<1x1x128xf32>
      %35 = vector.broadcast %34 : vector<1x1x128xf32> to vector<4x128x128xf32>
      %36 = arith.subf %15, %35 : vector<4x128x128xf32>
      %37 = vector.shape_cast %33 : vector<1x128xf32> to vector<1x1x128xf32>
      %38 = vector.broadcast %37 : vector<1x1x128xf32> to vector<4x128x128xf32>
      %39 = arith.mulf %36, %38 : vector<4x128x128xf32>
      %c0_21 = arith.constant 0 : index
      %c0_22 = arith.constant 0 : index
      %40 = vector.load %arg5[%c0_21, %c0_22] : memref<1x128xf32, #tpu.memory_space<vmem>>, vector<1x128xf32>
      %41 = vector.shape_cast %40 : vector<1x128xf32> to vector<1x1x128xf32>
      %42 = vector.broadcast %41 : vector<1x1x128xf32> to vector<4x128x128xf32>
      %43 = arith.addf %39, %42 : vector<4x128x128xf32>
      %cst_23 = arith.constant 0.000000e+00 : f32
      %44 = vector.broadcast %cst_23 : f32 to vector<4x128x128xf32>
      %45 = arith.maximumf %43, %44 : vector<4x128x128xf32>
      %46 = arith.truncf %45 : vector<4x128x128xf32> to vector<4x128x128xbf16>
      %c0_24 = arith.constant 0 : index
      %c0_25 = arith.constant 0 : index
      %c0_26 = arith.constant 0 : index
      %47 = vector.load %arg6[%c0_24, %c0_25, %c0_26] : memref<4x128x128xbf16, #tpu.memory_space<vmem>>, vector<4x128x128xbf16>
      tpu.vector_store %arg6[%c0_24, %c0_25, %c0_26], %46 {strides = array<i32>} : memref<4x128x128xbf16, #tpu.memory_space<vmem>>, vector<4x128x128xbf16>,
    } else {
    }
    return
  }
  func.func @transform_0(%arg0: i32) -> (i32, i32, i32) {
    %c0_i32 = arith.constant 0 : i32
    %c0_i32_0 = arith.constant 0 : i32
    %c0_i32_1 = arith.constant 0 : i32
    return %arg0, %c0_i32, %c0_i32_0 : i32, i32, i32
  }
  func.func @transform_1(%arg0: i32) -> (i32, i32, i32) {
    %c0_i32 = arith.constant 0 : i32
    %c0_i32_0 = arith.constant 0 : i32
    %c0_i32_1 = arith.constant 0 : i32
    return %arg0, %c0_i32, %c0_i32_0 : i32, i32, i32
  }
  func.func @transform_2(%arg0: i32) -> (i32, i32) {
    %c0_i32 = arith.constant 0 : i32
    %c0_i32_0 = arith.constant 0 : i32
    %c0_i32_1 = arith.constant 0 : i32
    return %c0_i32, %c0_i32_0 : i32, i32
  }
  func.func @transform_3(%arg0: i32) -> (i32, i32) {
    %c0_i32 = arith.constant 0 : i32
    %c0_i32_0 = arith.constant 0 : i32
    %c0_i32_1 = arith.constant 0 : i32
    return %c0_i32, %c0_i32_0 : i32, i32
  }
  func.func @transform_4(%arg0: i32) -> (i32, i32) {
    %c0_i32 = arith.constant 0 : i32
    %c0_i32_0 = arith.constant 0 : i32
    %c0_i32_1 = arith.constant 0 : i32
    return %c0_i32, %c0_i32_0 : i32, i32
  }
  func.func @transform_5(%arg0: i32) -> (i32, i32, i32) {
    %c0_i32 = arith.constant 0 : i32
    %c0_i32_0 = arith.constant 0 : i32
    %c0_i32_1 = arith.constant 0 : i32
    %c0_i32_2 = arith.constant 0 : i32
    return %c0_i32, %c0_i32_0, %c0_i32_1 : i32, i32, i32
  }
}

module attributes {stable_mosaic.version = 11 : i64} {
  func.func @_phase_matmul_bias_kernel(%arg0: i32, %arg1: memref<1x512x512xbf16, #tpu.memory_space<vmem>>, %arg2: memref<1x512x128xbf16, #tpu.memory_space<vmem>>, %arg3: memref<1x128xf32, #tpu.memory_space<vmem>>, %arg4: memref<1x512x128xf32, #tpu.memory_space<vmem>>) attributes {dimension_semantics = [#tpu.dimension_semantics<parallel>], iteration_bounds = array<i64: 4>, scalar_prefetch = 0 : i64, scratch_operands = 0 : i64, tpu.core_type = #tpu.core_type<tc>, window_params = [{transform_indices = @transform_0, window_bounds = array<i64: 1, 512, 512>}, {transform_indices = @transform_1, window_bounds = array<i64: 1, 512, 128>}, {pipeline_mode = #tpu.pipeline_mode<synchronous>, transform_indices = @transform_2, window_bounds = array<i64: 1, 128>}, {transform_indices = @transform_3, window_bounds = array<i64: 1, 512, 128>}]} {
    %c0 = arith.constant 0 : index
    %c0_0 = arith.constant 0 : index
    %c0_1 = arith.constant 0 : index
    %0 = vector.load %arg1[%c0, %c0_0, %c0_1] : memref<1x512x512xbf16, #tpu.memory_space<vmem>>, vector<1x512x512xbf16>
    %1 = vector.shape_cast %0 : vector<1x512x512xbf16> to vector<512x512xbf16>
    %c0_2 = arith.constant 0 : index
    %c0_3 = arith.constant 0 : index
    %c0_4 = arith.constant 0 : index
    %2 = vector.load %arg2[%c0_2, %c0_3, %c0_4] : memref<1x512x128xbf16, #tpu.memory_space<vmem>>, vector<1x512x128xbf16>
    %3 = vector.shape_cast %2 : vector<1x512x128xbf16> to vector<512x128xbf16>
    %cst = arith.constant dense<0.000000e+00> : vector<512x128xf32>
    %4 = tpu.matmul %1, %3, %cst {dimension_numbers = #tpu.dot_dimension_numbers<[1], [0], [0], [1], [0, 0, 1, 1], [], []>} : vector<512x512xbf16>, vector<512x128xbf16>, vector<512x128xf32> -> vector<512x128xf32>
    %c0_5 = arith.constant 0 : index
    %c0_6 = arith.constant 0 : index
    %5 = vector.load %arg3[%c0_5, %c0_6] : memref<1x128xf32, #tpu.memory_space<vmem>>, vector<1x128xf32>
    %6 = vector.broadcast %5 : vector<1x128xf32> to vector<512x128xf32>
    %7 = arith.addf %4, %6 : vector<512x128xf32>
    %c0_7 = arith.constant 0 : index
    %c0_8 = arith.constant 0 : index
    %c0_9 = arith.constant 0 : index
    %8 = vector.load %arg4[%c0_7, %c0_8, %c0_9] : memref<1x512x128xf32, #tpu.memory_space<vmem>>, vector<1x512x128xf32>
    %9 = vector.shape_cast %8 : vector<1x512x128xf32> to vector<512x128xf32>
    %10 = vector.shape_cast %7 : vector<512x128xf32> to vector<1x512x128xf32>
    tpu.vector_store %arg4[%c0_7, %c0_8, %c0_9], %10 {strides = array<i32>} : memref<1x512x128xf32, #tpu.memory_space<vmem>>, vector<1x512x128xf32>,
    return
  }
  func.func @transform_0(%arg0: i32) -> (i32, i32, i32) {
    %c0_i32 = arith.constant 0 : i32
    %c0_i32_0 = arith.constant 0 : i32
    %c0_i32_1 = arith.constant 0 : i32
    return %arg0, %c0_i32, %c0_i32_0 : i32, i32, i32
  }
  func.func @transform_1(%arg0: i32) -> (i32, i32, i32) {
    %c0_i32 = arith.constant 0 : i32
    %c0_i32_0 = arith.constant 0 : i32
    %c0_i32_1 = arith.constant 0 : i32
    return %arg0, %c0_i32, %c0_i32_0 : i32, i32, i32
  }
  func.func @transform_2(%arg0: i32) -> (i32, i32) {
    %c0_i32 = arith.constant 0 : i32
    %c0_i32_0 = arith.constant 0 : i32
    %c0_i32_1 = arith.constant 0 : i32
    return %c0_i32, %c0_i32_0 : i32, i32
  }
  func.func @transform_3(%arg0: i32) -> (i32, i32, i32) {
    %c0_i32 = arith.constant 0 : i32
    %c0_i32_0 = arith.constant 0 : i32
    %c0_i32_1 = arith.constant 0 : i32
    return %arg0, %c0_i32, %c0_i32_0 : i32, i32, i32
  }
}

</mosaic_0001>

<llo_original>
// kernel: generator_forward.4
$region0: #{generator_forward.4}
  #allocation0 [shape = 'u32[]', space=smem, size = 0x4, offset = 0x4, fixed_abs, tag = 'smem constant byte address 0x4 - core index']
  #allocation1 [shape = 'u32[144,128]{1,0:T(1,128)}', space=vmem, size = 0x12000, scoped, tag = 'internal scratch']
  #allocation2 [shape = 'f32[16,2,512]{2,1,0:T(2,128)}', space=vmem, size = 0x10000, scoped, tag = 'scratch operand']
  %s0 = inlined_call_operand.vmem [shape: bf16[16,2,64], index: 0, kind: input, shape index: {}]
  %s1 = inlined_call_operand.hbm [shape: bf16[16,64,512], index: 1, kind: input, shape index: {}]
  %s2 = inlined_call_operand.hbm [shape: f32[1,512], index: 2, kind: input, shape index: {}]
  %s3 = inlined_call_operand.hbm [shape: f32[1,512], index: 3, kind: input, shape index: {}]
  %s4 = inlined_call_operand.hbm [shape: f32[1,512], index: 4, kind: input, shape index: {}]
  %s5 = inlined_call_operand.vmem [shape: bf16[16,2,512], index: 5, kind: output, shape index: {}]
  %s6 = sld [smem:[#allocation0]]
  $region73: #{generator_forward.4} parent=0
    _
  %s8 = ssub.s32 1, %s6
  %s9 = scalar_select 0, %s8, %s6
  $region1: #{generator_forward.4} parent=0
    #allocation3 [shape = 'u8[131072]{0}', space=vmem, size = 0x20000, scoped, tag = 'input window, operand 1']
    #allocation4 [shape = 's32[2]{0}', space=sflag, size = 0x8, scoped, tag = 'scoped memory for generator_forward.4']
    #allocation5 [shape = 'u8[2048]{0}', space=vmem, size = 0x800, scoped, tag = 'input window, operand 2, single buffered']
    #allocation6 [shape = 's32[1]{0}', space=sflag, size = 0x4, scoped, tag = 'scoped memory for generator_forward.4']
    #allocation7 [shape = 'u8[2048]{0}', space=vmem, size = 0x800, scoped, tag = 'input window, operand 3, single buffered']
    #allocation8 [shape = 'u8[2048]{0}', space=vmem, size = 0x800, scoped, tag = 'input window, operand 4, single buffered']
    #allocation9 [shape = 's32[1]{0}', space=sflag, size = 0x4, scoped, tag = 'scoped memory for generator_forward.4']
    %10 = vsyncpa [#allocation4], 0
    %s11 = scalar_lea.sflag [#allocation4], 1
    %12 = vsyncpa %s11, 0
    %13 = vsyncpa [#allocation6], 0
    %14 = vsyncpa [#allocation9], 0
    loop: start=0, step=1, limit=18
    $region2: #{generator_forward.4} parent=1 // loop_pre_header
      _
    $region3: #{generator_forward.4} parent=1 // loop_header
      %s16 = sphi 0, %s20
      %p17 = scmp.ge.s32.totalorder %s16, 18
      %s26 = sphi 0, %s28
      %s29 = sphi 0, %s26
      %s30 = sphi 0, %s29
      %s46 = sphi 0, %s30
      %s52 = sphi 0, %s54
      %s55 = sphi 0, %s52
      %s56 = sphi 0, %s55
      %s72 = sphi 0, %s56
      %s76 = sphi 0, %s76
      %s78 = sphi 0, %s76
      %s79 = sphi 0, %s78
      %s93 = sphi 0, %s79
      %s97 = sphi 0, %s97
      %s99 = sphi 0, %s97
      %s100 = sphi 0, %s99
      %s114 = sphi 0, %s100
      %s118 = sphi 0, %s118
      %s120 = sphi 0, %s118
      %s121 = sphi 0, %s120
      %s135 = sphi 0, %s121
      %s139 = sphi 0, %s139
      %s141 = sphi 0, %s139
      %s142 = sphi 0, %s141
      %s156 = sphi 0, %s142
    $region4: #{generator_forward.4} parent=1 // loop_header_branch
      %19 = sbr.rel (%p17) target = $region8
    $region5: #{generator_forward.4} parent=1 // loop_body
      %s21 = ssub.s32 %s16, 1
      %s22 = ssub.s32 %s16, 2
      %s23 = sadd.s32 %s16, 1
      %s24 = ssub.s32 %s16, %s23
      %p25 = scmp.eq.s32.totalorder %s24, 0
      %s27 = sadd.s32 %s26, 1
      %s28 = scalar_select %p25, %s26, %s27
      %p31 = pneg %p25
      %p32 = scmp.eq.s32.totalorder %s16, 15
      %p33 = por %p31, %p32
      %p34 = scmp.ne.s32.totalorder %s26, %s29
      %p35 = scmp.eq.s32.totalorder %s16, 0
      %p36 = por %p34, %p35
      %p37 = scmp.ne.s32.totalorder %s26, %s29
      %p38 = scmp.eq.s32.totalorder %s21, 15
      %p39 = por %p37, %p38
      %p40 = scmp.ne.s32.totalorder %s29, %s30
      %p41 = scmp.eq.s32.totalorder %s21, 0
      %p42 = por %p40, %p41
      %p43 = scmp.ne.s32.totalorder %s29, %s30
      %p44 = scmp.eq.s32.totalorder %s22, 15
      %p45 = por %p43, %p44
      %p47 = scmp.ne.s32.totalorder %s30, %s46
      %p48 = scmp.eq.s32.totalorder %s22, 0
      %p49 = por %p47, %p48
      %s50 = ssub.s32 %s16, %s23
      %p51 = scmp.eq.s32.totalorder %s50, 0
      %s53 = sadd.s32 %s52, 1
      %s54 = scalar_select %p51, %s52, %s53
      %p57 = pneg %p51
      %p58 = scmp.eq.s32.totalorder %s16, 15
      %p59 = por %p57, %p58
      %p60 = scmp.ne.s32.totalorder %s52, %s55
      %p61 = scmp.eq.s32.totalorder %s16, 0
      %p62 = por %p60, %p61
      %p63 = scmp.ne.s32.totalorder %s52, %s55
      %p64 = scmp.eq.s32.totalorder %s21, 15
      %p65 = por %p63, %p64
      %p66 = scmp.ne.s32.totalorder %s55, %s56
      %p67 = scmp.eq.s32.totalorder %s21, 0
      %p68 = por %p66, %p67
      %p69 = scmp.ne.s32.totalorder %s55, %s56
      %p70 = scmp.eq.s32.totalorder %s22, 15
      %p71 = por %p69, %p70
      %p73 = scmp.ne.s32.totalorder %s56, %s72
      %p74 = scmp.eq.s32.totalorder %s22, 0
      %p75 = por %p73, %p74
      %s77 = sadd.s32 %s76, 1
      %p80 = scmp.eq.s32.totalorder %s16, 15
      %p81 = scmp.ne.s32.totalorder %s76, %s78
      %p82 = scmp.eq.s32.totalorder %s16, 0
      %p83 = por %p81, %p82
      %p84 = scmp.ne.s32.totalorder %s76, %s78
      %p85 = scmp.eq.s32.totalorder %s21, 15
      %p86 = por %p84, %p85
      %p87 = scmp.ne.s32.totalorder %s78, %s79
      %p88 = scmp.eq.s32.totalorder %s21, 0
      %p89 = por %p87, %p88
      %p90 = scmp.ne.s32.totalorder %s78, %s79
      %p91 = scmp.eq.s32.totalorder %s22, 15
      %p92 = por %p90, %p91
      %p94 = scmp.ne.s32.totalorder %s79, %s93
      %p95 = scmp.eq.s32.totalorder %s22, 0
      %p96 = por %p94, %p95
      %s98 = sadd.s32 %s97, 1
      %p101 = scmp.eq.s32.totalorder %s16, 15
      %p102 = scmp.ne.s32.totalorder %s97, %s99
      %p103 = scmp.eq.s32.totalorder %s16, 0
      %p104 = por %p102, %p103
      %p105 = scmp.ne.s32.totalorder %s97, %s99
      %p106 = scmp.eq.s32.totalorder %s21, 15
      %p107 = por %p105, %p106
      %p108 = scmp.ne.s32.totalorder %s99, %s100
      %p109 = scmp.eq.s32.totalorder %s21, 0
      %p110 = por %p108, %p109
      %p111 = scmp.ne.s32.totalorder %s99, %s100
      %p112 = scmp.eq.s32.totalorder %s22, 15
      %p113 = por %p111, %p112
      %p115 = scmp.ne.s32.totalorder %s100, %s114
      %p116 = scmp.eq.s32.totalorder %s22, 0
      %p117 = por %p115, %p116
      %s119 = sadd.s32 %s118, 1
      %p122 = scmp.eq.s32.totalorder %s16, 15
      %p123 = scmp.ne.s32.totalorder %s118, %s120
      %p124 = scmp.eq.s32.totalorder %s16, 0
      %p125 = por %p123, %p124
      %p126 = scmp.ne.s32.totalorder %s118, %s120
      %p127 = scmp.eq.s32.totalorder %s21, 15
      %p128 = por %p126, %p127
      %p129 = scmp.ne.s32.totalorder %s120, %s121
      %p130 = scmp.eq.s32.totalorder %s21, 0
      %p131 = por %p129, %p130
      %p132 = scmp.ne.s32.totalorder %s120, %s121
      %p133 = scmp.eq.s32.totalorder %s22, 15
      %p134 = por %p132, %p133
      %p136 = scmp.ne.s32.totalorder %s121, %s135
      %p137 = scmp.eq.s32.totalorder %s22, 0
      %p138 = por %p136, %p137
      %s140 = sadd.s32 %s139, 1
      %p143 = scmp.eq.s32.totalorder %s16, 15
      %p144 = scmp.ne.s32.totalorder %s139, %s141
      %p145 = scmp.eq.s32.totalorder %s16, 0
      %p146 = por %p144, %p145
      %p147 = scmp.ne.s32.totalorder %s139, %s141
      %p148 = scmp.eq.s32.totalorder %s21, 15
      %p149 = por %p147, %p148
      %p150 = scmp.ne.s32.totalorder %s141, %s142
      %p151 = scmp.eq.s32.totalorder %s21, 0
      %p152 = por %p150, %p151
      %p153 = scmp.ne.s32.totalorder %s141, %s142
      %p154 = scmp.eq.s32.totalorder %s22, 15
      %p155 = por %p153, %p154
      %p157 = scmp.ne.s32.totalorder %s142, %s156
      %p158 = scmp.eq.s32.totalorder %s22, 0
      %p159 = por %p157, %p158
      %p160 = scmp.le.s32.totalorder 1, %s16
      %p161 = scmp.lt.s32.totalorder %s16, 17
      %p162 = pnand %p160, %p161
      %p163 = pneg %p162
      // Predicated region
      $region9: #{generator_forward.4} parent=5 // pred_check
        _
      $region10: #{generator_forward.4} parent=5 // pred_check_branch
        %165 = sbr.rel (%p162) target = $region12
      $region11: #{generator_forward.4} parent=5 // pred_region
        %s166 = ssub.s32 %s16, 1
        // Predicated region
        $region13: #{generator_forward.4} parent=11 // pred_check
          %p167 = pneg %p89
        $region14: #{generator_forward.4} parent=11 // pred_check_branch
          %169 = sbr.rel (%p167) target = $region16
        $region15: #{generator_forward.4} parent=11 // pred_region
          %s171 = ssub.s32 64, 64
          %172 = vsyncadd [#allocation6], %s171
          %s174 = sshll.u32 [#allocation5], 4
          %s175 = int_to_ptr.vmem [resolvable:$true] %s174
          %177 = dma.hbm_to_vmem [thread:$0]  %s2, 64, %s175, [#allocation6]
        $region16: #{generator_forward.4} parent=11 // pred_fallthru
          _
        // Predicated region
        $region17: #{generator_forward.4} parent=11 // pred_check
          %p178 = pneg %p110
        $region18: #{generator_forward.4} parent=11 // pred_check_branch
          %180 = sbr.rel (%p178) target = $region20
        $region19: #{generator_forward.4} parent=11 // pred_region
          %s182 = ssub.s32 64, 64
          %183 = vsyncadd [#allocation6], %s182
          %s185 = sshll.u32 [#allocation7], 4
          %s186 = int_to_ptr.vmem [resolvable:$true] %s185
          %188 = dma.hbm_to_vmem [thread:$0]  %s3, 64, %s186, [#allocation6]
        $region20: #{generator_forward.4} parent=11 // pred_fallthru
          _
        // Predicated region
        $region21: #{generator_forward.4} parent=11 // pred_check
          %p189 = pneg %p131
        $region22: #{generator_forward.4} parent=11 // pred_check_branch
          %191 = sbr.rel (%p189) target = $region24
        $region23: #{generator_forward.4} parent=11 // pred_region
          %s193 = ssub.s32 64, 64
          %194 = vsyncadd [#allocation9], %s193
          %s196 = sshll.u32 [#allocation8], 4
          %s197 = int_to_ptr.vmem [resolvable:$true] %s196
          %199 = dma.hbm_to_vmem [thread:$0]  %s4, 64, %s197, [#allocation9]
        $region24: #{generator_forward.4} parent=11 // pred_fallthru
          _
      $region12: #{generator_forward.4} parent=5 // pred_fallthru
        _
      %p200 = scmp.lt.s32.totalorder %s16, 16
      // Predicated region
      $region25: #{generator_forward.4} parent=5 // pred_check
        %p201 = pneg %p200
      $region26: #{generator_forward.4} parent=5 // pred_check_branch
        %203 = sbr.rel (%p201) target = $region28
      $region27: #{generator_forward.4} parent=5 // pred_region
        // Predicated region
        $region29: #{generator_forward.4} parent=27 // pred_check
          %p204 = pneg %p36
        $region30: #{generator_forward.4} parent=27 // pred_check_branch
          %206 = sbr.rel (%p204) target = $region32
        $region31: #{generator_forward.4} parent=27 // pred_region
          %p207 = scmp.lt.s32.totalorder %s16, 15
          %s208 = scalar_select %p207, %s16, 15
          %s209 = scalar_lea.vmem %s0, %s208
        $region32: #{generator_forward.4} parent=27 // pred_fallthru
          _
        // Predicated region
        $region33: #{generator_forward.4} parent=27 // pred_check
          %p210 = pneg %p62
        $region34: #{generator_forward.4} parent=27 // pred_check_branch
          %212 = sbr.rel (%p210) target = $region36
        $region35: #{generator_forward.4} parent=27 // pred_region
          %s213 = sand.u32 %s52, 1
          %s214 = scalar_lea.sflag [#allocation4], %s213
          %s215 = sand.u32 %s52, 1
          %s216 = smul.addr %s215, 128
          %s217 = scalar_lea.vmem [#allocation3], %s216
          %s219 = ssub.s32 2048, 2048
          %220 = vsyncadd %s214, %s219
          %s221 = smul.addr %s16, 32
          %s222 = smul.addr %s221, 64
          %s223 = scalar_lea.hbm %s1, %s222
          %s224 = sshll.u32 %s217, 4
          %s225 = int_to_ptr.vmem [resolvable:$true] %s224
          %230 = dma.hbm_to_vmem [thread:$0]  %s223, 2048, %s225, %s214, 256, 256, 16
        $region36: #{generator_forward.4} parent=27 // pred_fallthru
          _
      $region28: #{generator_forward.4} parent=5 // pred_fallthru
        _
      %p231 = scmp.le.s32.totalorder 1, %s16
      %p232 = scmp.lt.s32.totalorder %s16, 17
      %p233 = pnand %p231, %p232
      %p234 = pneg %p233
      // Predicated region
      $region37: #{generator_forward.4} parent=5 // pred_check
        _
      $region38: #{generator_forward.4} parent=5 // pred_check_branch
        %236 = sbr.rel (%p233) target = $region40
      $region39: #{generator_forward.4} parent=5 // pred_region
        %s237 = ssub.s32 %s16, 1
        %s238 = sand.u32 %s55, 1
        %s239 = scalar_lea.sflag [#allocation4], %s238
        %s240 = sand.u32 %s55, 1
        %s241 = smul.addr %s240, 128
        %s242 = scalar_lea.vmem [#allocation3], %s241
        // Predicated region
        $region41: #{generator_forward.4} parent=39 // pred_check
          %p243 = pneg %p68
        $region42: #{generator_forward.4} parent=39 // pred_check_branch
          %245 = sbr.rel (%p243) target = $region44
        $region43: #{generator_forward.4} parent=39 // pred_region
          %246 = dma.done %s239, 2048
        $region44: #{generator_forward.4} parent=39 // pred_fallthru
          _
        // Predicated region
        $region45: #{generator_forward.4} parent=39 // pred_check
          %p247 = pneg %p89
        $region46: #{generator_forward.4} parent=39 // pred_check_branch
          %249 = sbr.rel (%p247) target = $region48
        $region47: #{generator_forward.4} parent=39 // pred_region
          %250 = dma.done [#allocation6], 64
        $region48: #{generator_forward.4} parent=39 // pred_fallthru
          _
        // Predicated region
        $region49: #{generator_forward.4} parent=39 // pred_check
          %p251 = pneg %p110
        $region50: #{generator_forward.4} parent=39 // pred_check_branch
          %253 = sbr.rel (%p251) target = $region52
        $region51: #{generator_forward.4} parent=39 // pred_region
          %254 = dma.done [#allocation6], 64
        $region52: #{generator_forward.4} parent=39 // pred_fallthru
          _
        // Predicated region
        $region53: #{generator_forward.4} parent=39 // pred_check
          %p255 = pneg %p131
        $region54: #{generator_forward.4} parent=39 // pred_check_branch
          %257 = sbr.rel (%p255) target = $region56
        $region55: #{generator_forward.4} parent=39 // pred_region
          %258 = dma.done [#allocation9], 64
        $region56: #{generator_forward.4} parent=39 // pred_fallthru
          _
        %p259 = scmp.lt.s32.totalorder %s21, 15
        %s260 = scalar_select %p259, %s21, 15
        %s261 = scalar_lea.vmem %s0, %s260
        %p262 = pneg %p42
        %p263 = pneg %p39
        %s264 = sand.u32 %s55, 1
        %s265 = scalar_lea.sflag [#allocation4], %s264
        %s266 = sand.u32 %s55, 1
        %s267 = smul.addr %s266, 128
        %s268 = scalar_lea.vmem [#allocation3], %s267
        %p269 = pneg %p68
        %p270 = pneg %p65
        %p271 = pneg %p89
        %p272 = pneg %p86
        %p273 = pneg %p110
        %p274 = pneg %p107
        %p275 = pneg %p131
        %p276 = pneg %p128
        %p277 = pneg %p152
        %p278 = pneg %p149
        %p279 = scmp.lt.s32.totalorder %s21, 15
        %s280 = scalar_select %p279, %s21, 15
        %s281 = scalar_lea.vmem %s0, %s280
        %v283 = vld [vmem:[%s281] sm:$0x1]
        %v284 = vld [vmem:[%s242] sm:$0xff]
        %v285 = vld [vmem:[%s242 + $0x8] sm:$0xff]
        %v286 = vld [vmem:[%s242 + $0x10] sm:$0xff]
        %v287 = vld [vmem:[%s242 + $0x18] sm:$0xff]
        %v288 = vld [vmem:[%s242 + $0x20] sm:$0xff]
        %v289 = vld [vmem:[%s242 + $0x28] sm:$0xff]
        %v290 = vld [vmem:[%s242 + $0x30] sm:$0xff]
        %v291 = vld [vmem:[%s242 + $0x38] sm:$0xff]
        %v292 = vld [vmem:[%s242 + $0x40] sm:$0xff]
        %v293 = vld [vmem:[%s242 + $0x48] sm:$0xff]
        %v294 = vld [vmem:[%s242 + $0x50] sm:$0xff]
        %v295 = vld [vmem:[%s242 + $0x58] sm:$0xff]
        %v296 = vld [vmem:[%s242 + $0x60] sm:$0xff]
        %v297 = vld [vmem:[%s242 + $0x68] sm:$0xff]
        %v298 = vld [vmem:[%s242 + $0x70] sm:$0xff]
        %v299 = vld [vmem:[%s242 + $0x78] sm:$0xff]
        %v300 = vld [vmem:[#allocation5] sm:$0xf]
        %v302 = vlaneseq
        %v303 = vshrl.u32 %v302, 7
        %v304 = vsub.s32 0, %v303
        %v305 = vrot.slane %v300, %v304
        %v306 = vlaneseq
        %v307 = vshrl.u32 %v306, 7
        %v308 = vsub.s32 1, %v307
        %v309 = vrot.slane %v300, %v308
        %v310 = vlaneseq
        %v311 = vshrl.u32 %v310, 7
        %v312 = vsub.s32 2, %v311
        %v313 = vrot.slane %v300, %v312
        %v314 = vlaneseq
        %v315 = vshrl.u32 %v314, 7
        %v316 = vsub.s32 3, %v315
        %v317 = vrot.slane %v300, %v316
        %v338 = vunpack.c.l.b16 %v284
        %v339 = vunpack.c.h.b16 %v284
        %v340 = vunpack.c.l.b16 %v285
        %v341 = vunpack.c.h.b16 %v285
        %v342 = vunpack.c.l.b16 %v286
        %v343 = vunpack.c.h.b16 %v286
        %v344 = vunpack.c.l.b16 %v287
        %v345 = vunpack.c.h.b16 %v287
        %v346 = vunpack.c.l.b16 %v288
        %v347 = vunpack.c.h.b16 %v288
        %v348 = vunpack.c.l.b16 %v289
        %v349 = vunpack.c.h.b16 %v289
        %v350 = vunpack.c.l.b16 %v290
        %v351 = vunpack.c.h.b16 %v290
        %v352 = vunpack.c.l.b16 %v291
        %v353 = vunpack.c.h.b16 %v291
        %v354 = vunpack.c.l.b16 %v292
        %v355 = vunpack.c.h.b16 %v292
        %v356 = vunpack.c.l.b16 %v293
        %v357 = vunpack.c.h.b16 %v293
        %v358 = vunpack.c.l.b16 %v294
        %v359 = vunpack.c.h.b16 %v294
        %v360 = vunpack.c.l.b16 %v295
        %v361 = vunpack.c.h.b16 %v295
        %v362 = vunpack.c.l.b16 %v296
        %v363 = vunpack.c.h.b16 %v296
        %v364 = vunpack.c.l.b16 %v297
        %v365 = vunpack.c.h.b16 %v297
        %v366 = vunpack.c.l.b16 %v298
        %v367 = vunpack.c.h.b16 %v298
        %v368 = vunpack.c.l.b16 %v299
        %v369 = vunpack.c.h.b16 %v299
        %v370 = vpack.c.b16 %v342, %v338
        %v371 = vpack.c.b16 %v343, %v339
        %v372 = vpack.c.b16 %v344, %v340
        %v373 = vpack.c.b16 %v345, %v341
        %v374 = vpack.c.b16 %v350, %v346
        %v375 = vpack.c.b16 %v351, %v347
        %v376 = vpack.c.b16 %v352, %v348
        %v377 = vpack.c.b16 %v353, %v349
        %v378 = vpack.c.b16 %v358, %v354
        %v379 = vpack.c.b16 %v359, %v355
        %v380 = vpack.c.b16 %v360, %v356
        %v381 = vpack.c.b16 %v361, %v357
        %v382 = vpack.c.b16 %v366, %v362
        %v383 = vpack.c.b16 %v367, %v363
        %v384 = vpack.c.b16 %v368, %v364
        %v385 = vpack.c.b16 %v369, %v365
        %vm402 = vcmask 523264
        %v404 = vsel %vm402, %v283, 0
        %406 = vmatprep.subr.bf16.mxu0 %v371
        %407 = vmatpush1.bf16.msra.mxu0 %v370
        %408 = vmatprep.subr.bf16.mxu0 %v375
        %409 = vmatpush1.bf16.msra.mxu0 %v374
        %410 = vmatprep.subr.bf16.mxu0 %v379
        %411 = vmatpush1.bf16.msra.mxu0 %v378
        %412 = vmatprep.subr.bf16.mxu0 %v383
        %413 = vmatpush1.bf16.msra.mxu0 %v382
        %414 = vmatprep.subr.bf16.mxu0 0
        %415 = vmatpush1.bf16.msra.mxu0 0
        %416 = vmatprep.subr.bf16.mxu0 0
        %417 = vmatpush1.bf16.msra.mxu0 0
        %418 = vmatprep.subr.bf16.mxu0 0
        %419 = vmatpush1.bf16.msra.mxu0 0
        %420 = vmatprep.subr.bf16.mxu0 0
        %421 = vmatpush1.bf16.msra.mxu0 0
        %422 = vmatprep.subr.bf16.mxu0 0
        %423 = vmatpush1.bf16.msra.mxu0 0
        %424 = vmatprep.subr.bf16.mxu0 0
        %425 = vmatpush1.bf16.msra.mxu0 0
        %426 = vmatprep.subr.bf16.mxu0 0
        %427 = vmatpush1.bf16.msra.mxu0 0
        %428 = vmatprep.subr.bf16.mxu0 0
        %429 = vmatpush1.bf16.msra.mxu0 0
        %430 = vmatprep.subr.bf16.mxu0 0
        %431 = vmatpush1.bf16.msra.mxu0 0
        %432 = vmatprep.subr.bf16.mxu0 0
        %433 = vmatpush1.bf16.msra.mxu0 0
        %434 = vmatprep.subr.bf16.mxu0 0
        %435 = vmatpush1.bf16.msra.mxu0 0
        %436 = vmatprep.subr.bf16.mxu0 0
        %437 = vmatpush1.bf16.msra.mxu0 0
        %438 = vmatprep.mubr.bf16.mxu0 0
        %439 = vmatmul.mubr.bf16.gmra.mrb[0].mxu0 %v404
        %v440 = vpop.f32.mrb[0].mxu0
        %v441 = vadd.f32 %v305, %v440
        %v442 = vpop.f32.mrb[0].mxu0
        %v443 = vadd.f32 %v309, %v442
        %v444 = vpop.f32.mrb[0].mxu0
        %v445 = vpop.f32.mrb[0].mxu0
        %446 = vdwg.mxu0
        %447 = vmatprep.subr.bf16.mxu0 %v373
        %448 = vmatpush1.bf16.msra.mxu0 %v372
        %449 = vmatprep.subr.bf16.mxu0 %v377
        %450 = vmatpush1.bf16.msra.mxu0 %v376
        %451 = vmatprep.subr.bf16.mxu0 %v381
        %452 = vmatpush1.bf16.msra.mxu0 %v380
        %453 = vmatprep.subr.bf16.mxu0 %v385
        %454 = vmatpush1.bf16.msra.mxu0 %v384
        %455 = vmatprep.subr.bf16.mxu0 0
        %456 = vmatpush1.bf16.msra.mxu0 0
        %457 = vmatprep.subr.bf16.mxu0 0
        %458 = vmatpush1.bf16.msra.mxu0 0
        %459 = vmatprep.subr.bf16.mxu0 0
        %460 = vmatpush1.bf16.msra.mxu0 0
        %461 = vmatprep.subr.bf16.mxu0 0
        %462 = vmatpush1.bf16.msra.mxu0 0
        %463 = vmatprep.subr.bf16.mxu0 0
        %464 = vmatpush1.bf16.msra.mxu0 0
        %465 = vmatprep.subr.bf16.mxu0 0
        %466 = vmatpush1.bf16.msra.mxu0 0
        %467 = vmatprep.subr.bf16.mxu0 0
        %468 = vmatpush1.bf16.msra.mxu0 0
        %469 = vmatprep.subr.bf16.mxu0 0
        %470 = vmatpush1.bf16.msra.mxu0 0
        %471 = vmatprep.subr.bf16.mxu0 0
        %472 = vmatpush1.bf16.msra.mxu0 0
        %473 = vmatprep.subr.bf16.mxu0 0
        %474 = vmatpush1.bf16.msra.mxu0 0
        %475 = vmatprep.subr.bf16.mxu0 0
        %476 = vmatpush1.bf16.msra.mxu0 0
        %477 = vmatprep.subr.bf16.mxu0 0
        %478 = vmatpush1.bf16.msra.mxu0 0
        %479 = vmatprep.mubr.bf16.mxu0 0
        %480 = vmatmul.mubr.bf16.gmra.mrb[0].mxu0 %v404
        %v481 = vpop.f32.mrb[0].mxu0
        %v482 = vadd.f32 %v313, %v481
        %v483 = vpop.f32.mrb[0].mxu0
        %v484 = vadd.f32 %v317, %v483
        %v485 = vpop.f32.mrb[0].mxu0
        %v486 = vpop.f32.mrb[0].mxu0
        %487 = vdwg.mxu0
        %v492 = vcombine.low %v441, %v443
        %v493 = vcombine.low %v482, %v484
        %v495 = vunpack.c.l.s4 1983009808
        %v496 = vunpack.c.0.s8 %v495
        %v497 = vlaneseq
        %v498 = vshrl.u32 %v497, 7
        %v499 = vsub.s32 %v496, %v498
        %v500 = vrot.slane %v492, %v499
        %v502 = vunpack.c.l.s4 1983009808
        %v503 = vunpack.c.0.s8 %v502
        %v504 = vlaneseq
        %v505 = vshrl.u32 %v504, 7
        %v506 = vsub.s32 %v503, %v505
        %v507 = vrot.slane %v493, %v506
        %v508 = vcombine.low %v500, %v507
        %s510 = smul.u32 %s21, 4
        %s511 = smul.addr %s510, 2
        %s512 = scalar_lea.vmem [#allocation2], %s511
        %513 = vst [vmem:[%s512] sm:$0xff] %v508
        %p514 = scmp.eq.s32.totalorder %s21, 15
        // Predicated region
        $region57: #{generator_forward.4} parent=39 // pred_check
          %p515 = pneg %p514
        $region58: #{generator_forward.4} parent=39 // pred_check_branch
          %517 = sbr.rel (%p515) target = $region60
        $region59: #{generator_forward.4} parent=39 // pred_region
          %v518 = vld [vmem:[#allocation2] sm:$0xff]
          %v519 = vld [vmem:[#allocation2 + $0x8] sm:$0xff]
          %v520 = vld [vmem:[#allocation2 + $0x10] sm:$0xff]
          %v521 = vld [vmem:[#allocation2 + $0x18] sm:$0xff]
          %v522 = vld [vmem:[#allocation2 + $0x20] sm:$0xff]
          %v523 = vld [vmem:[#allocation2 + $0x28] sm:$0xff]
          %v524 = vld [vmem:[#allocation2 + $0x30] sm:$0xff]
          %v525 = vld [vmem:[#allocation2 + $0x38] sm:$0xff]
          %v526 = vld [vmem:[#allocation2 + $0x40] sm:$0xff]
          %v527 = vld [vmem:[#allocation2 + $0x48] sm:$0xff]
          %v528 = vld [vmem:[#allocation2 + $0x50] sm:$0xff]
          %v529 = vld [vmem:[#allocation2 + $0x58] sm:$0xff]
          %v530 = vld [vmem:[#allocation2 + $0x60] sm:$0xff]
          %v531 = vld [vmem:[#allocation2 + $0x68] sm:$0xff]
          %v532 = vld [vmem:[#allocation2 + $0x70] sm:$0xff]
          %v533 = vld [vmem:[#allocation2 + $0x78] sm:$0xff]
          %v550 = vcombine.high %v518, %v518
          %v552 = vunpack.c.l.s4 1983009808
          %v553 = vunpack.c.0.s8 %v552
          %v554 = vlaneseq
          %v555 = vshrl.u32 %v554, 7
          %v556 = vsub.s32 %v553, %v555
          %v557 = vrot.slane %v518, %v556
          %v559 = vunpack.c.l.s4 1983009808
          %v560 = vunpack.c.0.s8 %v559
          %v561 = vlaneseq
          %v562 = vshrl.u32 %v561, 7
          %v563 = vsub.s32 %v560, %v562
          %v564 = vrot.slane %v550, %v563
          %v565 = vcombine.high %v557, %v557
          %v566 = vcombine.high %v564, %v564
          %v567 = vcombine.high %v519, %v519
          %v569 = vunpack.c.l.s4 1983009808
          %v570 = vunpack.c.0.s8 %v569
          %v571 = vlaneseq
          %v572 = vshrl.u32 %v571, 7
          %v573 = vsub.s32 %v570, %v572
          %v574 = vrot.slane %v519, %v573
          %v576 = vunpack.c.l.s4 1983009808
          %v577 = vunpack.c.0.s8 %v576
          %v578 = vlaneseq
          %v579 = vshrl.u32 %v578, 7
          %v580 = vsub.s32 %v577, %v579
          %v581 = vrot.slane %v567, %v580
          %v582 = vcombine.high %v574, %v574
          %v583 = vcombine.high %v581, %v581
          %v584 = vcombine.high %v520, %v520
          %v586 = vunpack.c.l.s4 1983009808
          %v587 = vunpack.c.0.s8 %v586
          %v588 = vlaneseq
          %v589 = vshrl.u32 %v588, 7
          %v590 = vsub.s32 %v587, %v589
          %v591 = vrot.slane %v520, %v590
          %v593 = vunpack.c.l.s4 1983009808
          %v594 = vunpack.c.0.s8 %v593
          %v595 = vlaneseq
          %v596 = vshrl.u32 %v595, 7
          %v597 = vsub.s32 %v594, %v596
          %v598 = vrot.slane %v584, %v597
          %v599 = vcombine.high %v591, %v591
          %v600 = vcombine.high %v598, %v598
          %v601 = vcombine.high %v521, %v521
          %v603 = vunpack.c.l.s4 1983009808
          %v604 = vunpack.c.0.s8 %v603
          %v605 = vlaneseq
          %v606 = vshrl.u32 %v605, 7
          %v607 = vsub.s32 %v604, %v606
          %v608 = vrot.slane %v521, %v607
          %v610 = vunpack.c.l.s4 1983009808
          %v611 = vunpack.c.0.s8 %v610
          %v612 = vlaneseq
          %v613 = vshrl.u32 %v612, 7
          %v614 = vsub.s32 %v611, %v613
          %v615 = vrot.slane %v601, %v614
          %v616 = vcombine.high %v608, %v608
          %v617 = vcombine.high %v615, %v615
          %v618 = vcombine.high %v522, %v522
          %v620 = vunpack.c.l.s4 1983009808
          %v621 = vunpack.c.0.s8 %v620
          %v622 = vlaneseq
          %v623 = vshrl.u32 %v622, 7
          %v624 = vsub.s32 %v621, %v623
          %v625 = vrot.slane %v522, %v624
          %v627 = vunpack.c.l.s4 1983009808
          %v628 = vunpack.c.0.s8 %v627
          %v629 = vlaneseq
          %v630 = vshrl.u32 %v629, 7
          %v631 = vsub.s32 %v628, %v630
          %v632 = vrot.slane %v618, %v631
          %v633 = vcombine.high %v625, %v625
          %v634 = vcombine.high %v632, %v632
          %v635 = vcombine.high %v523, %v523
          %v637 = vunpack.c.l.s4 1983009808
          %v638 = vunpack.c.0.s8 %v637
          %v639 = vlaneseq
          %v640 = vshrl.u32 %v639, 7
          %v641 = vsub.s32 %v638, %v640
          %v642 = vrot.slane %v523, %v641
          %v644 = vunpack.c.l.s4 1983009808
          %v645 = vunpack.c.0.s8 %v644
          %v646 = vlaneseq
          %v647 = vshrl.u32 %v646, 7
          %v648 = vsub.s32 %v645, %v647
          %v649 = vrot.slane %v635, %v648
          %v650 = vcombine.high %v642, %v642
          %v651 = vcombine.high %v649, %v649
          %v652 = vcombine.high %v524, %v524
          %v654 = vunpack.c.l.s4 1983009808
          %v655 = vunpack.c.0.s8 %v654
          %v656 = vlaneseq
          %v657 = vshrl.u32 %v656, 7
          %v658 = vsub.s32 %v655, %v657
          %v659 = vrot.slane %v524, %v658
          %v661 = vunpack.c.l.s4 1983009808
          %v662 = vunpack.c.0.s8 %v661
          %v663 = vlaneseq
          %v664 = vshrl.u32 %v663, 7
          %v665 = vsub.s32 %v662, %v664
          %v666 = vrot.slane %v652, %v665
          %v667 = vcombine.high %v659, %v659
          %v668 = vcombine.high %v666, %v666
          %v669 = vcombine.high %v525, %v525
          %v671 = vunpack.c.l.s4 1983009808
          %v672 = vunpack.c.0.s8 %v671
          %v673 = vlaneseq
          %v674 = vshrl.u32 %v673, 7
          %v675 = vsub.s32 %v672, %v674
          %v676 = vrot.slane %v525, %v675
          %v678 = vunpack.c.l.s4 1983009808
          %v679 = vunpack.c.0.s8 %v678
          %v680 = vlaneseq
          %v681 = vshrl.u32 %v680, 7
          %v682 = vsub.s32 %v679, %v681
          %v683 = vrot.slane %v669, %v682
          %v684 = vcombine.high %v676, %v676
          %v685 = vcombine.high %v683, %v683
          %v686 = vcombine.high %v526, %v526
          %v688 = vunpack.c.l.s4 1983009808
          %v689 = vunpack.c.0.s8 %v688
          %v690 = vlaneseq
          %v691 = vshrl.u32 %v690, 7
          %v692 = vsub.s32 %v689, %v691
          %v693 = vrot.slane %v526, %v692
          %v695 = vunpack.c.l.s4 1983009808
          %v696 = vunpack.c.0.s8 %v695
          %v697 = vlaneseq
          %v698 = vshrl.u32 %v697, 7
          %v699 = vsub.s32 %v696, %v698
          %v700 = vrot.slane %v686, %v699
          %v701 = vcombine.high %v693, %v693
          %v702 = vcombine.high %v700, %v700
          %v703 = vcombine.high %v527, %v527
          %v705 = vunpack.c.l.s4 1983009808
          %v706 = vunpack.c.0.s8 %v705
          %v707 = vlaneseq
          %v708 = vshrl.u32 %v707, 7
          %v709 = vsub.s32 %v706, %v708
          %v710 = vrot.slane %v527, %v709
          %v712 = vunpack.c.l.s4 1983009808
          %v713 = vunpack.c.0.s8 %v712
          %v714 = vlaneseq
          %v715 = vshrl.u32 %v714, 7
          %v716 = vsub.s32 %v713, %v715
          %v717 = vrot.slane %v703, %v716
          %v718 = vcombine.high %v710, %v710
          %v719 = vcombine.high %v717, %v717
          %v720 = vcombine.high %v528, %v528
          %v722 = vunpack.c.l.s4 1983009808
          %v723 = vunpack.c.0.s8 %v722
          %v724 = vlaneseq
          %v725 = vshrl.u32 %v724, 7
          %v726 = vsub.s32 %v723, %v725
          %v727 = vrot.slane %v528, %v726
          %v729 = vunpack.c.l.s4 1983009808
          %v730 = vunpack.c.0.s8 %v729
          %v731 = vlaneseq
          %v732 = vshrl.u32 %v731, 7
          %v733 = vsub.s32 %v730, %v732
          %v734 = vrot.slane %v720, %v733
          %v735 = vcombine.high %v727, %v727
          %v736 = vcombine.high %v734, %v734
          %v737 = vcombine.high %v529, %v529
          %v739 = vunpack.c.l.s4 1983009808
          %v740 = vunpack.c.0.s8 %v739
          %v741 = vlaneseq
          %v742 = vshrl.u32 %v741, 7
          %v743 = vsub.s32 %v740, %v742
          %v744 = vrot.slane %v529, %v743
          %v746 = vunpack.c.l.s4 1983009808
          %v747 = vunpack.c.0.s8 %v746
          %v748 = vlaneseq
          %v749 = vshrl.u32 %v748, 7
          %v750 = vsub.s32 %v747, %v749
          %v751 = vrot.slane %v737, %v750
          %v752 = vcombine.high %v744, %v744
          %v753 = vcombine.high %v751, %v751
          %v754 = vcombine.high %v530, %v530
          %v756 = vunpack.c.l.s4 1983009808
          %v757 = vunpack.c.0.s8 %v756
          %v758 = vlaneseq
          %v759 = vshrl.u32 %v758, 7
          %v760 = vsub.s32 %v757, %v759
          %v761 = vrot.slane %v530, %v760
          %v763 = vunpack.c.l.s4 1983009808
          %v764 = vunpack.c.0.s8 %v763
          %v765 = vlaneseq
          %v766 = vshrl.u32 %v765, 7
          %v767 = vsub.s32 %v764, %v766
          %v768 = vrot.slane %v754, %v767
          %v769 = vcombine.high %v761, %v761
          %v770 = vcombine.high %v768, %v768
          %v771 = vcombine.high %v531, %v531
          %v773 = vunpack.c.l.s4 1983009808
          %v774 = vunpack.c.0.s8 %v773
          %v775 = vlaneseq
          %v776 = vshrl.u32 %v775, 7
          %v777 = vsub.s32 %v774, %v776
          %v778 = vrot.slane %v531, %v777
          %v780 = vunpack.c.l.s4 1983009808
          %v781 = vunpack.c.0.s8 %v780
          %v782 = vlaneseq
          %v783 = vshrl.u32 %v782, 7
          %v784 = vsub.s32 %v781, %v783
          %v785 = vrot.slane %v771, %v784
          %v786 = vcombine.high %v778, %v778
          %v787 = vcombine.high %v785, %v785
          %v788 = vcombine.high %v532, %v532
          %v790 = vunpack.c.l.s4 1983009808
          %v791 = vunpack.c.0.s8 %v790
          %v792 = vlaneseq
          %v793 = vshrl.u32 %v792, 7
          %v794 = vsub.s32 %v791, %v793
          %v795 = vrot.slane %v532, %v794
          %v797 = vunpack.c.l.s4 1983009808
          %v798 = vunpack.c.0.s8 %v797
          %v799 = vlaneseq
          %v800 = vshrl.u32 %v799, 7
          %v801 = vsub.s32 %v798, %v800
          %v802 = vrot.slane %v788, %v801
          %v803 = vcombine.high %v795, %v795
          %v804 = vcombine.high %v802, %v802
          %v805 = vcombine.high %v533, %v533
          %v807 = vunpack.c.l.s4 1983009808
          %v808 = vunpack.c.0.s8 %v807
          %v809 = vlaneseq
          %v810 = vshrl.u32 %v809, 7
          %v811 = vsub.s32 %v808, %v810
          %v812 = vrot.slane %v533, %v811
          %v814 = vunpack.c.l.s4 1983009808
          %v815 = vunpack.c.0.s8 %v814
          %v816 = vlaneseq
          %v817 = vshrl.u32 %v816, 7
          %v818 = vsub.s32 %v815, %v817
          %v819 = vrot.slane %v805, %v818
          %v820 = vcombine.high %v812, %v812
          %v821 = vcombine.high %v819, %v819
          %vm886 = vcmask 1041408
          %v887 = vsel %vm886, %v557, 0.0
          %v888 = vsel %vm886, %v574, 0.0
          %v889 = vadd.f32 %v887, %v888
          %v890 = vsel %vm886, %v591, 0.0
          %v891 = vadd.f32 %v889, %v890
          %v892 = vsel %vm886, %v608, 0.0
          %v893 = vadd.f32 %v891, %v892
          %v894 = vsel %vm886, %v625, 0.0
          %v895 = vadd.f32 %v893, %v894
          %v896 = vsel %vm886, %v642, 0.0
          %v897 = vadd.f32 %v895, %v896
          %v898 = vsel %vm886, %v659, 0.0
          %v899 = vadd.f32 %v897, %v898
          %v900 = vsel %vm886, %v676, 0.0
          %v901 = vadd.f32 %v899, %v900
          %v902 = vsel %vm886, %v693, 0.0
          %v903 = vadd.f32 %v901, %v902
          %v904 = vsel %vm886, %v710, 0.0
          %v905 = vadd.f32 %v903, %v904
          %v906 = vsel %vm886, %v727, 0.0
          %v907 = vadd.f32 %v905, %v906
          %v908 = vsel %vm886, %v744, 0.0
          %v909 = vadd.f32 %v907, %v908
          %v910 = vsel %vm886, %v761, 0.0
          %v911 = vadd.f32 %v909, %v910
          %v912 = vsel %vm886, %v778, 0.0
          %v913 = vadd.f32 %v911, %v912
          %v914 = vsel %vm886, %v795, 0.0
          %v915 = vadd.f32 %v913, %v914
          %v916 = vsel %vm886, %v812, 0.0
          %v917 = vadd.f32 %v915, %v916
          %v918 = vsel %vm886, %v565, 0.0
          %v919 = vsel %vm886, %v582, 0.0
          %v920 = vadd.f32 %v918, %v919
          %v921 = vsel %vm886, %v599, 0.0
          %v922 = vadd.f32 %v920, %v921
          %v923 = vsel %vm886, %v616, 0.0
          %v924 = vadd.f32 %v922, %v923
          %v925 = vsel %vm886, %v633, 0.0
          %v926 = vadd.f32 %v924, %v925
          %v927 = vsel %vm886, %v650, 0.0
          %v928 = vadd.f32 %v926, %v927
          %v929 = vsel %vm886, %v667, 0.0
          %v930 = vadd.f32 %v928, %v929
          %v931 = vsel %vm886, %v684, 0.0
          %v932 = vadd.f32 %v930, %v931
          %v933 = vsel %vm886, %v701, 0.0
          %v934 = vadd.f32 %v932, %v933
          %v935 = vsel %vm886, %v718, 0.0
          %v936 = vadd.f32 %v934, %v935
          %v937 = vsel %vm886, %v735, 0.0
          %v938 = vadd.f32 %v936, %v937
          %v939 = vsel %vm886, %v752, 0.0
          %v940 = vadd.f32 %v938, %v939
          %v941 = vsel %vm886, %v769, 0.0
          %v942 = vadd.f32 %v940, %v941
          %v943 = vsel %vm886, %v786, 0.0
          %v944 = vadd.f32 %v942, %v943
          %v945 = vsel %vm886, %v803, 0.0
          %v946 = vadd.f32 %v944, %v945
          %v947 = vsel %vm886, %v820, 0.0
          %v948 = vadd.f32 %v946, %v947
          %v949 = vsel %vm886, %v564, 0.0
          %v950 = vsel %vm886, %v581, 0.0
          %v951 = vadd.f32 %v949, %v950
          %v952 = vsel %vm886, %v598, 0.0
          %v953 = vadd.f32 %v951, %v952
          %v954 = vsel %vm886, %v615, 0.0
          %v955 = vadd.f32 %v953, %v954
          %v956 = vsel %vm886, %v632, 0.0
          %v957 = vadd.f32 %v955, %v956
          %v958 = vsel %vm886, %v649, 0.0
          %v959 = vadd.f32 %v957, %v958
          %v960 = vsel %vm886, %v666, 0.0
          %v961 = vadd.f32 %v959, %v960
          %v962 = vsel %vm886, %v683, 0.0
          %v963 = vadd.f32 %v961, %v962
          %v964 = vsel %vm886, %v700, 0.0
          %v965 = vadd.f32 %v963, %v964
          %v966 = vsel %vm886, %v717, 0.0
          %v967 = vadd.f32 %v965, %v966
          %v968 = vsel %vm886, %v734, 0.0
          %v969 = vadd.f32 %v967, %v968
          %v970 = vsel %vm886, %v751, 0.0
          %v971 = vadd.f32 %v969, %v970
          %v972 = vsel %vm886, %v768, 0.0
          %v973 = vadd.f32 %v971, %v972
          %v974 = vsel %vm886, %v785, 0.0
          %v975 = vadd.f32 %v973, %v974
          %v976 = vsel %vm886, %v802, 0.0
          %v977 = vadd.f32 %v975, %v976
          %v978 = vsel %vm886, %v819, 0.0
          %v979 = vadd.f32 %v977, %v978
          %v980 = vsel %vm886, %v566, 0.0
          %v981 = vsel %vm886, %v583, 0.0
          %v982 = vadd.f32 %v980, %v981
          %v983 = vsel %vm886, %v600, 0.0
          %v984 = vadd.f32 %v982, %v983
          %v985 = vsel %vm886, %v617, 0.0
          %v986 = vadd.f32 %v984, %v985
          %v987 = vsel %vm886, %v634, 0.0
          %v988 = vadd.f32 %v986, %v987
          %v989 = vsel %vm886, %v651, 0.0
          %v990 = vadd.f32 %v988, %v989
          %v991 = vsel %vm886, %v668, 0.0
          %v992 = vadd.f32 %v990, %v991
          %v993 = vsel %vm886, %v685, 0.0
          %v994 = vadd.f32 %v992, %v993
          %v995 = vsel %vm886, %v702, 0.0
          %v996 = vadd.f32 %v994, %v995
          %v997 = vsel %vm886, %v719, 0.0
          %v998 = vadd.f32 %v996, %v997
          %v999 = vsel %vm886, %v736, 0.0
          %v1000 = vadd.f32 %v998, %v999
          %v1001 = vsel %vm886, %v753, 0.0
          %v1002 = vadd.f32 %v1000, %v1001
          %v1003 = vsel %vm886, %v770, 0.0
          %v1004 = vadd.f32 %v1002, %v1003
          %v1005 = vsel %vm886, %v787, 0.0
          %v1006 = vadd.f32 %v1004, %v1005
          %v1007 = vsel %vm886, %v804, 0.0
          %v1008 = vadd.f32 %v1006, %v1007
          %v1009 = vsel %vm886, %v821, 0.0
          %v1010 = vadd.f32 %v1008, %v1009
          %v1011 = vsel %vm886, %v917, 0.0
          %v1012 = vrot.slane %v1011, 4
          %v1013 = vadd.f32 %v1011, %v1012
          %v1014 = vrot.slane %v1013, 2
          %v1015 = vadd.f32 %v1013, %v1014
          %v1016 = vrot.slane %v1015, 1
          %v1017 = vadd.f32 %v1015, %v1016
          %v1018 = vsel %vm886, %v948, 0.0
          %v1019 = vrot.slane %v1018, 4
          %v1020 = vadd.f32 %v1018, %v1019
          %v1021 = vrot.slane %v1020, 2
          %v1022 = vadd.f32 %v1020, %v1021
          %v1023 = vrot.slane %v1022, 1
          %v1024 = vadd.f32 %v1022, %v1023
          %v1025 = vsel %vm886, %v979, 0.0
          %v1026 = vrot.slane %v1025, 4
          %v1027 = vadd.f32 %v1025, %v1026
          %v1028 = vrot.slane %v1027, 2
          %v1029 = vadd.f32 %v1027, %v1028
          %v1030 = vrot.slane %v1029, 1
          %v1031 = vadd.f32 %v1029, %v1030
          %v1032 = vsel %vm886, %v1010, 0.0
          %v1033 = vrot.slane %v1032, 4
          %v1034 = vadd.f32 %v1032, %v1033
          %v1035 = vrot.slane %v1034, 2
          %v1036 = vadd.f32 %v1034, %v1035
          %v1037 = vrot.slane %v1036, 1
          %v1038 = vadd.f32 %v1036, %v1037
          %v1039 = vmul.f32 %v518, %v518
          %v1040 = vmul.f32 %v519, %v519
          %v1041 = vmul.f32 %v520, %v520
          %v1042 = vmul.f32 %v521, %v521
          %v1043 = vmul.f32 %v522, %v522
          %v1044 = vmul.f32 %v523, %v523
          %v1045 = vmul.f32 %v524, %v524
          %v1046 = vmul.f32 %v525, %v525
          %v1047 = vmul.f32 %v526, %v526
          %v1048 = vmul.f32 %v527, %v527
          %v1049 = vmul.f32 %v528, %v528
          %v1050 = vmul.f32 %v529, %v529
          %v1051 = vmul.f32 %v530, %v530
          %v1052 = vmul.f32 %v531, %v531
          %v1053 = vmul.f32 %v532, %v532
          %v1054 = vmul.f32 %v533, %v533
          %v1071 = vcombine.high %v1039, %v1039
          %v1073 = vunpack.c.l.s4 1983009808
          %v1074 = vunpack.c.0.s8 %v1073
          %v1075 = vlaneseq
          %v1076 = vshrl.u32 %v1075, 7
          %v1077 = vsub.s32 %v1074, %v1076
          %v1078 = vrot.slane %v1039, %v1077
          %v1080 = vunpack.c.l.s4 1983009808
          %v1081 = vunpack.c.0.s8 %v1080
          %v1082 = vlaneseq
          %v1083 = vshrl.u32 %v1082, 7
          %v1084 = vsub.s32 %v1081, %v1083
          %v1085 = vrot.slane %v1071, %v1084
          %v1086 = vcombine.high %v1078, %v1078
          %v1087 = vcombine.high %v1085, %v1085
          %v1088 = vcombine.high %v1040, %v1040
          %v1090 = vunpack.c.l.s4 1983009808
          %v1091 = vunpack.c.0.s8 %v1090
          %v1092 = vlaneseq
          %v1093 = vshrl.u32 %v1092, 7
          %v1094 = vsub.s32 %v1091, %v1093
          %v1095 = vrot.slane %v1040, %v1094
          %v1097 = vunpack.c.l.s4 1983009808
          %v1098 = vunpack.c.0.s8 %v1097
          %v1099 = vlaneseq
          %v1100 = vshrl.u32 %v1099, 7
          %v1101 = vsub.s32 %v1098, %v1100
          %v1102 = vrot.slane %v1088, %v1101
          %v1103 = vcombine.high %v1095, %v1095
          %v1104 = vcombine.high %v1102, %v1102
          %v1105 = vcombine.high %v1041, %v1041
          %v1107 = vunpack.c.l.s4 1983009808
          %v1108 = vunpack.c.0.s8 %v1107
          %v1109 = vlaneseq
          %v1110 = vshrl.u32 %v1109, 7
          %v1111 = vsub.s32 %v1108, %v1110
          %v1112 = vrot.slane %v1041, %v1111
          %v1114 = vunpack.c.l.s4 1983009808
          %v1115 = vunpack.c.0.s8 %v1114
          %v1116 = vlaneseq
          %v1117 = vshrl.u32 %v1116, 7
          %v1118 = vsub.s32 %v1115, %v1117
          %v1119 = vrot.slane %v1105, %v1118
          %v1120 = vcombine.high %v1112, %v1112
          %v1121 = vcombine.high %v1119, %v1119
          %v1122 = vcombine.high %v1042, %v1042
          %v1124 = vunpack.c.l.s4 1983009808
          %v1125 = vunpack.c.0.s8 %v1124
          %v1126 = vlaneseq
          %v1127 = vshrl.u32 %v1126, 7
          %v1128 = vsub.s32 %v1125, %v1127
          %v1129 = vrot.slane %v1042, %v1128
          %v1131 = vunpack.c.l.s4 1983009808
          %v1132 = vunpack.c.0.s8 %v1131
          %v1133 = vlaneseq
          %v1134 = vshrl.u32 %v1133, 7
          %v1135 = vsub.s32 %v1132, %v1134
          %v1136 = vrot.slane %v1122, %v1135
          %v1137 = vcombine.high %v1129, %v1129
          %v1138 = vcombine.high %v1136, %v1136
          %v1139 = vcombine.high %v1043, %v1043
          %v1141 = vunpack.c.l.s4 1983009808
          %v1142 = vunpack.c.0.s8 %v1141
          %v1143 = vlaneseq
          %v1144 = vshrl.u32 %v1143, 7
          %v1145 = vsub.s32 %v1142, %v1144
          %v1146 = vrot.slane %v1043, %v1145
          %v1148 = vunpack.c.l.s4 1983009808
          %v1149 = vunpack.c.0.s8 %v1148
          %v1150 = vlaneseq
          %v1151 = vshrl.u32 %v1150, 7
          %v1152 = vsub.s32 %v1149, %v1151
          %v1153 = vrot.slane %v1139, %v1152
          %v1154 = vcombine.high %v1146, %v1146
          %v1155 = vcombine.high %v1153, %v1153
          %v1156 = vcombine.high %v1044, %v1044
          %v1158 = vunpack.c.l.s4 1983009808
          %v1159 = vunpack.c.0.s8 %v1158
          %v1160 = vlaneseq
          %v1161 = vshrl.u32 %v1160, 7
          %v1162 = vsub.s32 %v1159, %v1161
          %v1163 = vrot.slane %v1044, %v1162
          %v1165 = vunpack.c.l.s4 1983009808
          %v1166 = vunpack.c.0.s8 %v1165
          %v1167 = vlaneseq
          %v1168 = vshrl.u32 %v1167, 7
          %v1169 = vsub.s32 %v1166, %v1168
          %v1170 = vrot.slane %v1156, %v1169
          %v1171 = vcombine.high %v1163, %v1163
          %v1172 = vcombine.high %v1170, %v1170
          %v1173 = vcombine.high %v1045, %v1045
          %v1175 = vunpack.c.l.s4 1983009808
          %v1176 = vunpack.c.0.s8 %v1175
          %v1177 = vlaneseq
          %v1178 = vshrl.u32 %v1177, 7
          %v1179 = vsub.s32 %v1176, %v1178
          %v1180 = vrot.slane %v1045, %v1179
          %v1182 = vunpack.c.l.s4 1983009808
          %v1183 = vunpack.c.0.s8 %v1182
          %v1184 = vlaneseq
          %v1185 = vshrl.u32 %v1184, 7
          %v1186 = vsub.s32 %v1183, %v1185
          %v1187 = vrot.slane %v1173, %v1186
          %v1188 = vcombine.high %v1180, %v1180
          %v1189 = vcombine.high %v1187, %v1187
          %v1190 = vcombine.high %v1046, %v1046
          %v1192 = vunpack.c.l.s4 1983009808
          %v1193 = vunpack.c.0.s8 %v1192
          %v1194 = vlaneseq
          %v1195 = vshrl.u32 %v1194, 7
          %v1196 = vsub.s32 %v1193, %v1195
          %v1197 = vrot.slane %v1046, %v1196
          %v1199 = vunpack.c.l.s4 1983009808
          %v1200 = vunpack.c.0.s8 %v1199
          %v1201 = vlaneseq
          %v1202 = vshrl.u32 %v1201, 7
          %v1203 = vsub.s32 %v1200, %v1202
          %v1204 = vrot.slane %v1190, %v1203
          %v1205 = vcombine.high %v1197, %v1197
          %v1206 = vcombine.high %v1204, %v1204
          %v1207 = vcombine.high %v1047, %v1047
          %v1209 = vunpack.c.l.s4 1983009808
          %v1210 = vunpack.c.0.s8 %v1209
          %v1211 = vlaneseq
          %v1212 = vshrl.u32 %v1211, 7
          %v1213 = vsub.s32 %v1210, %v1212
          %v1214 = vrot.slane %v1047, %v1213
          %v1216 = vunpack.c.l.s4 1983009808
          %v1217 = vunpack.c.0.s8 %v1216
          %v1218 = vlaneseq
          %v1219 = vshrl.u32 %v1218, 7
          %v1220 = vsub.s32 %v1217, %v1219
          %v1221 = vrot.slane %v1207, %v1220
          %v1222 = vcombine.high %v1214, %v1214
          %v1223 = vcombine.high %v1221, %v1221
          %v1224 = vcombine.high %v1048, %v1048
          %v1226 = vunpack.c.l.s4 1983009808
          %v1227 = vunpack.c.0.s8 %v1226
          %v1228 = vlaneseq
          %v1229 = vshrl.u32 %v1228, 7
          %v1230 = vsub.s32 %v1227, %v1229
          %v1231 = vrot.slane %v1048, %v1230
          %v1233 = vunpack.c.l.s4 1983009808
          %v1234 = vunpack.c.0.s8 %v1233
          %v1235 = vlaneseq
          %v1236 = vshrl.u32 %v1235, 7
          %v1237 = vsub.s32 %v1234, %v1236
          %v1238 = vrot.slane %v1224, %v1237
          %v1239 = vcombine.high %v1231, %v1231
          %v1240 = vcombine.high %v1238, %v1238
          %v1241 = vcombine.high %v1049, %v1049
          %v1243 = vunpack.c.l.s4 1983009808
          %v1244 = vunpack.c.0.s8 %v1243
          %v1245 = vlaneseq
          %v1246 = vshrl.u32 %v1245, 7
          %v1247 = vsub.s32 %v1244, %v1246
          %v1248 = vrot.slane %v1049, %v1247
          %v1250 = vunpack.c.l.s4 1983009808
          %v1251 = vunpack.c.0.s8 %v1250
          %v1252 = vlaneseq
          %v1253 = vshrl.u32 %v1252, 7
          %v1254 = vsub.s32 %v1251, %v1253
          %v1255 = vrot.slane %v1241, %v1254
          %v1256 = vcombine.high %v1248, %v1248
          %v1257 = vcombine.high %v1255, %v1255
          %v1258 = vcombine.high %v1050, %v1050
          %v1260 = vunpack.c.l.s4 1983009808
          %v1261 = vunpack.c.0.s8 %v1260
          %v1262 = vlaneseq
          %v1263 = vshrl.u32 %v1262, 7
          %v1264 = vsub.s32 %v1261, %v1263
          %v1265 = vrot.slane %v1050, %v1264
          %v1267 = vunpack.c.l.s4 1983009808
          %v1268 = vunpack.c.0.s8 %v1267
          %v1269 = vlaneseq
          %v1270 = vshrl.u32 %v1269, 7
          %v1271 = vsub.s32 %v1268, %v1270
          %v1272 = vrot.slane %v1258, %v1271
          %v1273 = vcombine.high %v1265, %v1265
          %v1274 = vcombine.high %v1272, %v1272
          %v1275 = vcombine.high %v1051, %v1051
          %v1277 = vunpack.c.l.s4 1983009808
          %v1278 = vunpack.c.0.s8 %v1277
          %v1279 = vlaneseq
          %v1280 = vshrl.u32 %v1279, 7
          %v1281 = vsub.s32 %v1278, %v1280
          %v1282 = vrot.slane %v1051, %v1281
          %v1284 = vunpack.c.l.s4 1983009808
          %v1285 = vunpack.c.0.s8 %v1284
          %v1286 = vlaneseq
          %v1287 = vshrl.u32 %v1286, 7
          %v1288 = vsub.s32 %v1285, %v1287
          %v1289 = vrot.slane %v1275, %v1288
          %v1290 = vcombine.high %v1282, %v1282
          %v1291 = vcombine.high %v1289, %v1289
          %v1292 = vcombine.high %v1052, %v1052
          %v1294 = vunpack.c.l.s4 1983009808
          %v1295 = vunpack.c.0.s8 %v1294
          %v1296 = vlaneseq
          %v1297 = vshrl.u32 %v1296, 7
          %v1298 = vsub.s32 %v1295, %v1297
          %v1299 = vrot.slane %v1052, %v1298
          %v1301 = vunpack.c.l.s4 1983009808
          %v1302 = vunpack.c.0.s8 %v1301
          %v1303 = vlaneseq
          %v1304 = vshrl.u32 %v1303, 7
          %v1305 = vsub.s32 %v1302, %v1304
          %v1306 = vrot.slane %v1292, %v1305
          %v1307 = vcombine.high %v1299, %v1299
          %v1308 = vcombine.high %v1306, %v1306
          %v1309 = vcombine.high %v1053, %v1053
          %v1311 = vunpack.c.l.s4 1983009808
          %v1312 = vunpack.c.0.s8 %v1311
          %v1313 = vlaneseq
          %v1314 = vshrl.u32 %v1313, 7
          %v1315 = vsub.s32 %v1312, %v1314
          %v1316 = vrot.slane %v1053, %v1315
          %v1318 = vunpack.c.l.s4 1983009808
          %v1319 = vunpack.c.0.s8 %v1318
          %v1320 = vlaneseq
          %v1321 = vshrl.u32 %v1320, 7
          %v1322 = vsub.s32 %v1319, %v1321
          %v1323 = vrot.slane %v1309, %v1322
          %v1324 = vcombine.high %v1316, %v1316
          %v1325 = vcombine.high %v1323, %v1323
          %v1326 = vcombine.high %v1054, %v1054
          %v1328 = vunpack.c.l.s4 1983009808
          %v1329 = vunpack.c.0.s8 %v1328
          %v1330 = vlaneseq
          %v1331 = vshrl.u32 %v1330, 7
          %v1332 = vsub.s32 %v1329, %v1331
          %v1333 = vrot.slane %v1054, %v1332
          %v1335 = vunpack.c.l.s4 1983009808
          %v1336 = vunpack.c.0.s8 %v1335
          %v1337 = vlaneseq
          %v1338 = vshrl.u32 %v1337, 7
          %v1339 = vsub.s32 %v1336, %v1338
          %v1340 = vrot.slane %v1326, %v1339
          %v1341 = vcombine.high %v1333, %v1333
          %v1342 = vcombine.high %v1340, %v1340
          %v1407 = vsel %vm886, %v1078, 0.0
          %v1408 = vsel %vm886, %v1095, 0.0
          %v1409 = vadd.f32 %v1407, %v1408
          %v1410 = vsel %vm886, %v1112, 0.0
          %v1411 = vadd.f32 %v1409, %v1410
          %v1412 = vsel %vm886, %v1129, 0.0
          %v1413 = vadd.f32 %v1411, %v1412
          %v1414 = vsel %vm886, %v1146, 0.0
          %v1415 = vadd.f32 %v1413, %v1414
          %v1416 = vsel %vm886, %v1163, 0.0
          %v1417 = vadd.f32 %v1415, %v1416
          %v1418 = vsel %vm886, %v1180, 0.0
          %v1419 = vadd.f32 %v1417, %v1418
          %v1420 = vsel %vm886, %v1197, 0.0
          %v1421 = vadd.f32 %v1419, %v1420
          %v1422 = vsel %vm886, %v1214, 0.0
          %v1423 = vadd.f32 %v1421, %v1422
          %v1424 = vsel %vm886, %v1231, 0.0
          %v1425 = vadd.f32 %v1423, %v1424
          %v1426 = vsel %vm886, %v1248, 0.0
          %v1427 = vadd.f32 %v1425, %v1426
          %v1428 = vsel %vm886, %v1265, 0.0
          %v1429 = vadd.f32 %v1427, %v1428
          %v1430 = vsel %vm886, %v1282, 0.0
          %v1431 = vadd.f32 %v1429, %v1430
          %v1432 = vsel %vm886, %v1299, 0.0
          %v1433 = vadd.f32 %v1431, %v1432
          %v1434 = vsel %vm886, %v1316, 0.0
          %v1435 = vadd.f32 %v1433, %v1434
          %v1436 = vsel %vm886, %v1333, 0.0
          %v1437 = vadd.f32 %v1435, %v1436
          %v1438 = vsel %vm886, %v1086, 0.0
          %v1439 = vsel %vm886, %v1103, 0.0
          %v1440 = vadd.f32 %v1438, %v1439
          %v1441 = vsel %vm886, %v1120, 0.0
          %v1442 = vadd.f32 %v1440, %v1441
          %v1443 = vsel %vm886, %v1137, 0.0
          %v1444 = vadd.f32 %v1442, %v1443
          %v1445 = vsel %vm886, %v1154, 0.0
          %v1446 = vadd.f32 %v1444, %v1445
          %v1447 = vsel %vm886, %v1171, 0.0
          %v1448 = vadd.f32 %v1446, %v1447
          %v1449 = vsel %vm886, %v1188, 0.0
          %v1450 = vadd.f32 %v1448, %v1449
          %v1451 = vsel %vm886, %v1205, 0.0
          %v1452 = vadd.f32 %v1450, %v1451
          %v1453 = vsel %vm886, %v1222, 0.0
          %v1454 = vadd.f32 %v1452, %v1453
          %v1455 = vsel %vm886, %v1239, 0.0
          %v1456 = vadd.f32 %v1454, %v1455
          %v1457 = vsel %vm886, %v1256, 0.0
          %v1458 = vadd.f32 %v1456, %v1457
          %v1459 = vsel %vm886, %v1273, 0.0
          %v1460 = vadd.f32 %v1458, %v1459
          %v1461 = vsel %vm886, %v1290, 0.0
          %v1462 = vadd.f32 %v1460, %v1461
          %v1463 = vsel %vm886, %v1307, 0.0
          %v1464 = vadd.f32 %v1462, %v1463
          %v1465 = vsel %vm886, %v1324, 0.0
          %v1466 = vadd.f32 %v1464, %v1465
          %v1467 = vsel %vm886, %v1341, 0.0
          %v1468 = vadd.f32 %v1466, %v1467
          %v1469 = vsel %vm886, %v1085, 0.0
          %v1470 = vsel %vm886, %v1102, 0.0
          %v1471 = vadd.f32 %v1469, %v1470
          %v1472 = vsel %vm886, %v1119, 0.0
          %v1473 = vadd.f32 %v1471, %v1472
          %v1474 = vsel %vm886, %v1136, 0.0
          %v1475 = vadd.f32 %v1473, %v1474
          %v1476 = vsel %vm886, %v1153, 0.0
          %v1477 = vadd.f32 %v1475, %v1476
          %v1478 = vsel %vm886, %v1170, 0.0
          %v1479 = vadd.f32 %v1477, %v1478
          %v1480 = vsel %vm886, %v1187, 0.0
          %v1481 = vadd.f32 %v1479, %v1480
          %v1482 = vsel %vm886, %v1204, 0.0
          %v1483 = vadd.f32 %v1481, %v1482
          %v1484 = vsel %vm886, %v1221, 0.0
          %v1485 = vadd.f32 %v1483, %v1484
          %v1486 = vsel %vm886, %v1238, 0.0
          %v1487 = vadd.f32 %v1485, %v1486
          %v1488 = vsel %vm886, %v1255, 0.0
          %v1489 = vadd.f32 %v1487, %v1488
          %v1490 = vsel %vm886, %v1272, 0.0
          %v1491 = vadd.f32 %v1489, %v1490
          %v1492 = vsel %vm886, %v1289, 0.0
          %v1493 = vadd.f32 %v1491, %v1492
          %v1494 = vsel %vm886, %v1306, 0.0
          %v1495 = vadd.f32 %v1493, %v1494
          %v1496 = vsel %vm886, %v1323, 0.0
          %v1497 = vadd.f32 %v1495, %v1496
          %v1498 = vsel %vm886, %v1340, 0.0
          %v1499 = vadd.f32 %v1497, %v1498
          %v1500 = vsel %vm886, %v1087, 0.0
          %v1501 = vsel %vm886, %v1104, 0.0
          %v1502 = vadd.f32 %v1500, %v1501
          %v1503 = vsel %vm886, %v1121, 0.0
          %v1504 = vadd.f32 %v1502, %v1503
          %v1505 = vsel %vm886, %v1138, 0.0
          %v1506 = vadd.f32 %v1504, %v1505
          %v1507 = vsel %vm886, %v1155, 0.0
          %v1508 = vadd.f32 %v1506, %v1507
          %v1509 = vsel %vm886, %v1172, 0.0
          %v1510 = vadd.f32 %v1508, %v1509
          %v1511 = vsel %vm886, %v1189, 0.0
          %v1512 = vadd.f32 %v1510, %v1511
          %v1513 = vsel %vm886, %v1206, 0.0
          %v1514 = vadd.f32 %v1512, %v1513
          %v1515 = vsel %vm886, %v1223, 0.0
          %v1516 = vadd.f32 %v1514, %v1515
          %v1517 = vsel %vm886, %v1240, 0.0
          %v1518 = vadd.f32 %v1516, %v1517
          %v1519 = vsel %vm886, %v1257, 0.0
          %v1520 = vadd.f32 %v1518, %v1519
          %v1521 = vsel %vm886, %v1274, 0.0
          %v1522 = vadd.f32 %v1520, %v1521
          %v1523 = vsel %vm886, %v1291, 0.0
          %v1524 = vadd.f32 %v1522, %v1523
          %v1525 = vsel %vm886, %v1308, 0.0
          %v1526 = vadd.f32 %v1524, %v1525
          %v1527 = vsel %vm886, %v1325, 0.0
          %v1528 = vadd.f32 %v1526, %v1527
          %v1529 = vsel %vm886, %v1342, 0.0
          %v1530 = vadd.f32 %v1528, %v1529
          %v1531 = vsel %vm886, %v1437, 0.0
          %v1532 = vrot.slane %v1531, 4
          %v1533 = vadd.f32 %v1531, %v1532
          %v1534 = vrot.slane %v1533, 2
          %v1535 = vadd.f32 %v1533, %v1534
          %v1536 = vrot.slane %v1535, 1
          %v1537 = vadd.f32 %v1535, %v1536
          %v1538 = vsel %vm886, %v1468, 0.0
          %v1539 = vrot.slane %v1538, 4
          %v1540 = vadd.f32 %v1538, %v1539
          %v1541 = vrot.slane %v1540, 2
          %v1542 = vadd.f32 %v1540, %v1541
          %v1543 = vrot.slane %v1542, 1
          %v1544 = vadd.f32 %v1542, %v1543
          %v1545 = vsel %vm886, %v1499, 0.0
          %v1546 = vrot.slane %v1545, 4
          %v1547 = vadd.f32 %v1545, %v1546
          %v1548 = vrot.slane %v1547, 2
          %v1549 = vadd.f32 %v1547, %v1548
          %v1550 = vrot.slane %v1549, 1
          %v1551 = vadd.f32 %v1549, %v1550
          %v1552 = vsel %vm886, %v1530, 0.0
          %v1553 = vrot.slane %v1552, 4
          %v1554 = vadd.f32 %v1552, %v1553
          %v1555 = vrot.slane %v1554, 2
          %v1556 = vadd.f32 %v1554, %v1555
          %v1557 = vrot.slane %v1556, 1
          %v1558 = vadd.f32 %v1556, %v1557
          %v1559 = vrcp.pop 32.0
          %v1560 = vmul.f32 %v1017, %v1559
          %v1561 = vmul.f32 %v1024, %v1559
          %v1562 = vmul.f32 %v1031, %v1559
          %v1563 = vmul.f32 %v1038, %v1559
          %v1564 = vmul.f32 %v1537, %v1559
          %v1565 = vmul.f32 %v1544, %v1559
          %v1566 = vmul.f32 %v1551, %v1559
          %v1567 = vmul.f32 %v1558, %v1559
          %v1568 = vmul.f32 %v1560, %v1560
          %v1569 = vmul.f32 %v1561, %v1561
          %v1570 = vmul.f32 %v1562, %v1562
          %v1571 = vmul.f32 %v1563, %v1563
          %v1572 = vsub.f32 %v1564, %v1568
          %v1573 = vsub.f32 %v1565, %v1569
          %v1574 = vsub.f32 %v1566, %v1570
          %v1575 = vsub.f32 %v1567, %v1571
          %v1576 = vadd.f32 %v1572, 1e-05
          %v1577 = vadd.f32 %v1573, 1e-05
          %v1578 = vadd.f32 %v1574, 1e-05
          %v1579 = vadd.f32 %v1575, 1e-05
          %v1580 = vrsqrt.pop %v1576
          %v1581 = vrsqrt.pop %v1577
          %v1582 = vrsqrt.pop %v1578
          %v1583 = vrsqrt.pop %v1579
          %v1584 = vld [vmem:[#allocation7] sm:$0xf]
          %v1586 = vlaneseq
          %v1587 = vshrl.u32 %v1586, 7
          %v1588 = vsub.s32 0, %v1587
          %v1589 = vrot.slane %v1584, %v1588
          %v1590 = vlaneseq
          %v1591 = vshrl.u32 %v1590, 7
          %v1592 = vsub.s32 1, %v1591
          %v1593 = vrot.slane %v1584, %v1592
          %v1594 = vlaneseq
          %v1595 = vshrl.u32 %v1594, 7
          %v1596 = vsub.s32 2, %v1595
          %v1597 = vrot.slane %v1584, %v1596
          %v1598 = vlaneseq
          %v1599 = vshrl.u32 %v1598, 7
          %v1600 = vsub.s32 3, %v1599
          %v1601 = vrot.slane %v1584, %v1600
          %v1606 = vmul.f32 %v1580, %v1589
          %v1607 = vmul.f32 %v1581, %v1593
          %v1608 = vmul.f32 %v1582, %v1597
          %v1609 = vmul.f32 %v1583, %v1601
          %v1614 = vcombine.low %v1560, %v1561
          %v1615 = vcombine.low %v1562, %v1563
          %v1617 = vunpack.c.l.s4 1983009808
          %v1618 = vunpack.c.0.s8 %v1617
          %v1619 = vlaneseq
          %v1620 = vshrl.u32 %v1619, 7
          %v1621 = vsub.s32 %v1618, %v1620
          %v1622 = vrot.slane %v1614, %v1621
          %v1624 = vunpack.c.l.s4 1983009808
          %v1625 = vunpack.c.0.s8 %v1624
          %v1626 = vlaneseq
          %v1627 = vshrl.u32 %v1626, 7
          %v1628 = vsub.s32 %v1625, %v1627
          %v1629 = vrot.slane %v1615, %v1628
          %v1630 = vcombine.low %v1622, %v1629
          %v1632 = vsub.f32 %v518, %v1630
          %v1633 = vsub.f32 %v519, %v1630
          %v1634 = vsub.f32 %v520, %v1630
          %v1635 = vsub.f32 %v521, %v1630
          %v1636 = vsub.f32 %v522, %v1630
          %v1637 = vsub.f32 %v523, %v1630
          %v1638 = vsub.f32 %v524, %v1630
          %v1639 = vsub.f32 %v525, %v1630
          %v1640 = vsub.f32 %v526, %v1630
          %v1641 = vsub.f32 %v527, %v1630
          %v1642 = vsub.f32 %v528, %v1630
          %v1643 = vsub.f32 %v529, %v1630
          %v1644 = vsub.f32 %v530, %v1630
          %v1645 = vsub.f32 %v531, %v1630
          %v1646 = vsub.f32 %v532, %v1630
          %v1647 = vsub.f32 %v533, %v1630
          %v1648 = vlaneseq
          %v1649 = vshrl.u32 %v1648, 7
          %v1650 = vsub.s32 0, %v1649
          %v1651 = vrot.slane %v1606, %v1650
          %v1652 = vlaneseq
          %v1653 = vshrl.u32 %v1652, 7
          %v1654 = vsub.s32 0, %v1653
          %v1655 = vrot.slane %v1607, %v1654
          %v1656 = vlaneseq
          %v1657 = vshrl.u32 %v1656, 7
          %v1658 = vsub.s32 0, %v1657
          %v1659 = vrot.slane %v1608, %v1658
          %v1660 = vlaneseq
          %v1661 = vshrl.u32 %v1660, 7
          %v1662 = vsub.s32 0, %v1661
          %v1663 = vrot.slane %v1609, %v1662
          %v1668 = vcombine.low %v1651, %v1655
          %v1669 = vcombine.low %v1659, %v1663
          %v1671 = vunpack.c.l.s4 1983009808
          %v1672 = vunpack.c.0.s8 %v1671
          %v1673 = vlaneseq
          %v1674 = vshrl.u32 %v1673, 7
          %v1675 = vsub.s32 %v1672, %v1674
          %v1676 = vrot.slane %v1668, %v1675
          %v1678 = vunpack.c.l.s4 1983009808
          %v1679 = vunpack.c.0.s8 %v1678
          %v1680 = vlaneseq
          %v1681 = vshrl.u32 %v1680, 7
          %v1682 = vsub.s32 %v1679, %v1681
          %v1683 = vrot.slane %v1669, %v1682
          %v1684 = vcombine.low %v1676, %v1683
          %v1686 = vmul.f32 %v1632, %v1684
          %v1687 = vmul.f32 %v1633, %v1684
          %v1688 = vmul.f32 %v1634, %v1684
          %v1689 = vmul.f32 %v1635, %v1684
          %v1690 = vmul.f32 %v1636, %v1684
          %v1691 = vmul.f32 %v1637, %v1684
          %v1692 = vmul.f32 %v1638, %v1684
          %v1693 = vmul.f32 %v1639, %v1684
          %v1694 = vmul.f32 %v1640, %v1684
          %v1695 = vmul.f32 %v1641, %v1684
          %v1696 = vmul.f32 %v1642, %v1684
          %v1697 = vmul.f32 %v1643, %v1684
          %v1698 = vmul.f32 %v1644, %v1684
          %v1699 = vmul.f32 %v1645, %v1684
          %v1700 = vmul.f32 %v1646, %v1684
          %v1701 = vmul.f32 %v1647, %v1684
          %v1702 = vld [vmem:[#allocation8] sm:$0xf]
          %v1704 = vlaneseq
          %v1705 = vshrl.u32 %v1704, 7
          %v1706 = vsub.s32 0, %v1705
          %v1707 = vrot.slane %v1702, %v1706
          %v1708 = vlaneseq
          %v1709 = vshrl.u32 %v1708, 7
          %v1710 = vsub.s32 1, %v1709
          %v1711 = vrot.slane %v1702, %v1710
          %v1712 = vlaneseq
          %v1713 = vshrl.u32 %v1712, 7
          %v1714 = vsub.s32 2, %v1713
          %v1715 = vrot.slane %v1702, %v1714
          %v1716 = vlaneseq
          %v1717 = vshrl.u32 %v1716, 7
          %v1718 = vsub.s32 3, %v1717
          %v1719 = vrot.slane %v1702, %v1718
          %v1720 = vcombine.low %v1707, %v1711
          %v1721 = vcombine.low %v1715, %v1719
          %v1723 = vunpack.c.l.s4 1983009808
          %v1724 = vunpack.c.0.s8 %v1723
          %v1725 = vlaneseq
          %v1726 = vshrl.u32 %v1725, 7
          %v1727 = vsub.s32 %v1724, %v1726
          %v1728 = vrot.slane %v1720, %v1727
          %v1730 = vunpack.c.l.s4 1983009808
          %v1731 = vunpack.c.0.s8 %v1730
          %v1732 = vlaneseq
          %v1733 = vshrl.u32 %v1732, 7
          %v1734 = vsub.s32 %v1731, %v1733
          %v1735 = vrot.slane %v1721, %v1734
          %v1736 = vcombine.low %v1728, %v1735
          %v1738 = vadd.f32 %v1686, %v1736
          %v1739 = vadd.f32 %v1687, %v1736
          %v1740 = vadd.f32 %v1688, %v1736
          %v1741 = vadd.f32 %v1689, %v1736
          %v1742 = vadd.f32 %v1690, %v1736
          %v1743 = vadd.f32 %v1691, %v1736
          %v1744 = vadd.f32 %v1692, %v1736
          %v1745 = vadd.f32 %v1693, %v1736
          %v1746 = vadd.f32 %v1694, %v1736
          %v1747 = vadd.f32 %v1695, %v1736
          %v1748 = vadd.f32 %v1696, %v1736
          %v1749 = vadd.f32 %v1697, %v1736
          %v1750 = vadd.f32 %v1698, %v1736
          %v1751 = vadd.f32 %v1699, %v1736
          %v1752 = vadd.f32 %v1700, %v1736
          %v1753 = vadd.f32 %v1701, %v1736
          %v1754 = vmax.f32 %v1738, 0.0
          %v1755 = vmax.f32 %v1739, 0.0
          %v1756 = vmax.f32 %v1740, 0.0
          %v1757 = vmax.f32 %v1741, 0.0
          %v1758 = vmax.f32 %v1742, 0.0
          %v1759 = vmax.f32 %v1743, 0.0
          %v1760 = vmax.f32 %v1744, 0.0
          %v1761 = vmax.f32 %v1745, 0.0
          %v1762 = vmax.f32 %v1746, 0.0
          %v1763 = vmax.f32 %v1747, 0.0
          %v1764 = vmax.f32 %v1748, 0.0
          %v1765 = vmax.f32 %v1749, 0.0
          %v1766 = vmax.f32 %v1750, 0.0
          %v1767 = vmax.f32 %v1751, 0.0
          %v1768 = vmax.f32 %v1752, 0.0
          %v1769 = vmax.f32 %v1753, 0.0
          %v1786 = vcombine.high %v1754, %v1754
          %v1788 = vunpack.c.l.s4 1983009808
          %v1789 = vunpack.c.0.s8 %v1788
          %v1790 = vlaneseq
          %v1791 = vshrl.u32 %v1790, 7
          %v1792 = vsub.s32 %v1789, %v1791
          %v1793 = vrot.slane %v1754, %v1792
          %v1795 = vunpack.c.l.s4 1983009808
          %v1796 = vunpack.c.0.s8 %v1795
          %v1797 = vlaneseq
          %v1798 = vshrl.u32 %v1797, 7
          %v1799 = vsub.s32 %v1796, %v1798
          %v1800 = vrot.slane %v1786, %v1799
          %v1801 = vcombine.high %v1793, %v1793
          %v1802 = vcombine.high %v1800, %v1800
          %v1803 = vcombine.high %v1755, %v1755
          %v1805 = vunpack.c.l.s4 1983009808
          %v1806 = vunpack.c.0.s8 %v1805
          %v1807 = vlaneseq
          %v1808 = vshrl.u32 %v1807, 7
          %v1809 = vsub.s32 %v1806, %v1808
          %v1810 = vrot.slane %v1755, %v1809
          %v1812 = vunpack.c.l.s4 1983009808
          %v1813 = vunpack.c.0.s8 %v1812
          %v1814 = vlaneseq
          %v1815 = vshrl.u32 %v1814, 7
          %v1816 = vsub.s32 %v1813, %v1815
          %v1817 = vrot.slane %v1803, %v1816
          %v1818 = vcombine.high %v1810, %v1810
          %v1819 = vcombine.high %v1817, %v1817
          %v1820 = vcombine.high %v1756, %v1756
          %v1822 = vunpack.c.l.s4 1983009808
          %v1823 = vunpack.c.0.s8 %v1822
          %v1824 = vlaneseq
          %v1825 = vshrl.u32 %v1824, 7
          %v1826 = vsub.s32 %v1823, %v1825
          %v1827 = vrot.slane %v1756, %v1826
          %v1829 = vunpack.c.l.s4 1983009808
          %v1830 = vunpack.c.0.s8 %v1829
          %v1831 = vlaneseq
          %v1832 = vshrl.u32 %v1831, 7
          %v1833 = vsub.s32 %v1830, %v1832
          %v1834 = vrot.slane %v1820, %v1833
          %v1835 = vcombine.high %v1827, %v1827
          %v1836 = vcombine.high %v1834, %v1834
          %v1837 = vcombine.high %v1757, %v1757
          %v1839 = vunpack.c.l.s4 1983009808
          %v1840 = vunpack.c.0.s8 %v1839
          %v1841 = vlaneseq
          %v1842 = vshrl.u32 %v1841, 7
          %v1843 = vsub.s32 %v1840, %v1842
          %v1844 = vrot.slane %v1757, %v1843
          %v1846 = vunpack.c.l.s4 1983009808
          %v1847 = vunpack.c.0.s8 %v1846
          %v1848 = vlaneseq
          %v1849 = vshrl.u32 %v1848, 7
          %v1850 = vsub.s32 %v1847, %v1849
          %v1851 = vrot.slane %v1837, %v1850
          %v1852 = vcombine.high %v1844, %v1844
          %v1853 = vcombine.high %v1851, %v1851
          %v1854 = vcombine.high %v1758, %v1758
          %v1856 = vunpack.c.l.s4 1983009808
          %v1857 = vunpack.c.0.s8 %v1856
          %v1858 = vlaneseq
          %v1859 = vshrl.u32 %v1858, 7
          %v1860 = vsub.s32 %v1857, %v1859
          %v1861 = vrot.slane %v1758, %v1860
          %v1863 = vunpack.c.l.s4 1983009808
          %v1864 = vunpack.c.0.s8 %v1863
          %v1865 = vlaneseq
          %v1866 = vshrl.u32 %v1865, 7
          %v1867 = vsub.s32 %v1864, %v1866
          %v1868 = vrot.slane %v1854, %v1867
          %v1869 = vcombine.high %v1861, %v1861
          %v1870 = vcombine.high %v1868, %v1868
          %v1871 = vcombine.high %v1759, %v1759
          %v1873 = vunpack.c.l.s4 1983009808
          %v1874 = vunpack.c.0.s8 %v1873
          %v1875 = vlaneseq
          %v1876 = vshrl.u32 %v1875, 7
          %v1877 = vsub.s32 %v1874, %v1876
          %v1878 = vrot.slane %v1759, %v1877
          %v1880 = vunpack.c.l.s4 1983009808
          %v1881 = vunpack.c.0.s8 %v1880
          %v1882 = vlaneseq
          %v1883 = vshrl.u32 %v1882, 7
          %v1884 = vsub.s32 %v1881, %v1883
          %v1885 = vrot.slane %v1871, %v1884
          %v1886 = vcombine.high %v1878, %v1878
          %v1887 = vcombine.high %v1885, %v1885
          %v1888 = vcombine.high %v1760, %v1760
          %v1890 = vunpack.c.l.s4 1983009808
          %v1891 = vunpack.c.0.s8 %v1890
          %v1892 = vlaneseq
          %v1893 = vshrl.u32 %v1892, 7
          %v1894 = vsub.s32 %v1891, %v1893
          %v1895 = vrot.slane %v1760, %v1894
          %v1897 = vunpack.c.l.s4 1983009808
          %v1898 = vunpack.c.0.s8 %v1897
          %v1899 = vlaneseq
          %v1900 = vshrl.u32 %v1899, 7
          %v1901 = vsub.s32 %v1898, %v1900
          %v1902 = vrot.slane %v1888, %v1901
          %v1903 = vcombine.high %v1895, %v1895
          %v1904 = vcombine.high %v1902, %v1902
          %v1905 = vcombine.high %v1761, %v1761
          %v1907 = vunpack.c.l.s4 1983009808
          %v1908 = vunpack.c.0.s8 %v1907
          %v1909 = vlaneseq
          %v1910 = vshrl.u32 %v1909, 7
          %v1911 = vsub.s32 %v1908, %v1910
          %v1912 = vrot.slane %v1761, %v1911
          %v1914 = vunpack.c.l.s4 1983009808
          %v1915 = vunpack.c.0.s8 %v1914
          %v1916 = vlaneseq
          %v1917 = vshrl.u32 %v1916, 7
          %v1918 = vsub.s32 %v1915, %v1917
          %v1919 = vrot.slane %v1905, %v1918
          %v1920 = vcombine.high %v1912, %v1912
          %v1921 = vcombine.high %v1919, %v1919
          %v1922 = vcombine.high %v1762, %v1762
          %v1924 = vunpack.c.l.s4 1983009808
          %v1925 = vunpack.c.0.s8 %v1924
          %v1926 = vlaneseq
          %v1927 = vshrl.u32 %v1926, 7
          %v1928 = vsub.s32 %v1925, %v1927
          %v1929 = vrot.slane %v1762, %v1928
          %v1931 = vunpack.c.l.s4 1983009808
          %v1932 = vunpack.c.0.s8 %v1931
          %v1933 = vlaneseq
          %v1934 = vshrl.u32 %v1933, 7
          %v1935 = vsub.s32 %v1932, %v1934
          %v1936 = vrot.slane %v1922, %v1935
          %v1937 = vcombine.high %v1929, %v1929
          %v1938 = vcombine.high %v1936, %v1936
          %v1939 = vcombine.high %v1763, %v1763
          %v1941 = vunpack.c.l.s4 1983009808
          %v1942 = vunpack.c.0.s8 %v1941
          %v1943 = vlaneseq
          %v1944 = vshrl.u32 %v1943, 7
          %v1945 = vsub.s32 %v1942, %v1944
          %v1946 = vrot.slane %v1763, %v1945
          %v1948 = vunpack.c.l.s4 1983009808
          %v1949 = vunpack.c.0.s8 %v1948
          %v1950 = vlaneseq
          %v1951 = vshrl.u32 %v1950, 7
          %v1952 = vsub.s32 %v1949, %v1951
          %v1953 = vrot.slane %v1939, %v1952
          %v1954 = vcombine.high %v1946, %v1946
          %v1955 = vcombine.high %v1953, %v1953
          %v1956 = vcombine.high %v1764, %v1764
          %v1958 = vunpack.c.l.s4 1983009808
          %v1959 = vunpack.c.0.s8 %v1958
          %v1960 = vlaneseq
          %v1961 = vshrl.u32 %v1960, 7
          %v1962 = vsub.s32 %v1959, %v1961
          %v1963 = vrot.slane %v1764, %v1962
          %v1965 = vunpack.c.l.s4 1983009808
          %v1966 = vunpack.c.0.s8 %v1965
          %v1967 = vlaneseq
          %v1968 = vshrl.u32 %v1967, 7
          %v1969 = vsub.s32 %v1966, %v1968
          %v1970 = vrot.slane %v1956, %v1969
          %v1971 = vcombine.high %v1963, %v1963
          %v1972 = vcombine.high %v1970, %v1970
          %v1973 = vcombine.high %v1765, %v1765
          %v1975 = vunpack.c.l.s4 1983009808
          %v1976 = vunpack.c.0.s8 %v1975
          %v1977 = vlaneseq
          %v1978 = vshrl.u32 %v1977, 7
          %v1979 = vsub.s32 %v1976, %v1978
          %v1980 = vrot.slane %v1765, %v1979
          %v1982 = vunpack.c.l.s4 1983009808
          %v1983 = vunpack.c.0.s8 %v1982
          %v1984 = vlaneseq
          %v1985 = vshrl.u32 %v1984, 7
          %v1986 = vsub.s32 %v1983, %v1985
          %v1987 = vrot.slane %v1973, %v1986
          %v1988 = vcombine.high %v1980, %v1980
          %v1989 = vcombine.high %v1987, %v1987
          %v1990 = vcombine.high %v1766, %v1766
          %v1992 = vunpack.c.l.s4 1983009808
          %v1993 = vunpack.c.0.s8 %v1992
          %v1994 = vlaneseq
          %v1995 = vshrl.u32 %v1994, 7
          %v1996 = vsub.s32 %v1993, %v1995
          %v1997 = vrot.slane %v1766, %v1996
          %v1999 = vunpack.c.l.s4 1983009808
          %v2000 = vunpack.c.0.s8 %v1999
          %v2001 = vlaneseq
          %v2002 = vshrl.u32 %v2001, 7
          %v2003 = vsub.s32 %v2000, %v2002
          %v2004 = vrot.slane %v1990, %v2003
          %v2005 = vcombine.high %v1997, %v1997
          %v2006 = vcombine.high %v2004, %v2004
          %v2007 = vcombine.high %v1767, %v1767
          %v2009 = vunpack.c.l.s4 1983009808
          %v2010 = vunpack.c.0.s8 %v2009
          %v2011 = vlaneseq
          %v2012 = vshrl.u32 %v2011, 7
          %v2013 = vsub.s32 %v2010, %v2012
          %v2014 = vrot.slane %v1767, %v2013
          %v2016 = vunpack.c.l.s4 1983009808
          %v2017 = vunpack.c.0.s8 %v2016
          %v2018 = vlaneseq
          %v2019 = vshrl.u32 %v2018, 7
          %v2020 = vsub.s32 %v2017, %v2019
          %v2021 = vrot.slane %v2007, %v2020
          %v2022 = vcombine.high %v2014, %v2014
          %v2023 = vcombine.high %v2021, %v2021
          %v2024 = vcombine.high %v1768, %v1768
          %v2026 = vunpack.c.l.s4 1983009808
          %v2027 = vunpack.c.0.s8 %v2026
          %v2028 = vlaneseq
          %v2029 = vshrl.u32 %v2028, 7
          %v2030 = vsub.s32 %v2027, %v2029
          %v2031 = vrot.slane %v1768, %v2030
          %v2033 = vunpack.c.l.s4 1983009808
          %v2034 = vunpack.c.0.s8 %v2033
          %v2035 = vlaneseq
          %v2036 = vshrl.u32 %v2035, 7
          %v2037 = vsub.s32 %v2034, %v2036
          %v2038 = vrot.slane %v2024, %v2037
          %v2039 = vcombine.high %v2031, %v2031
          %v2040 = vcombine.high %v2038, %v2038
          %v2041 = vcombine.high %v1769, %v1769
          %v2043 = vunpack.c.l.s4 1983009808
          %v2044 = vunpack.c.0.s8 %v2043
          %v2045 = vlaneseq
          %v2046 = vshrl.u32 %v2045, 7
          %v2047 = vsub.s32 %v2044, %v2046
          %v2048 = vrot.slane %v1769, %v2047
          %v2050 = vunpack.c.l.s4 1983009808
          %v2051 = vunpack.c.0.s8 %v2050
          %v2052 = vlaneseq
          %v2053 = vshrl.u32 %v2052, 7
          %v2054 = vsub.s32 %v2051, %v2053
          %v2055 = vrot.slane %v2041, %v2054
          %v2056 = vcombine.high %v2048, %v2048
          %v2057 = vcombine.high %v2055, %v2055
          %v2122 = vpack.c.bf16 %v1793, %v1793
          %v2123 = vpack.c.bf16 %v1801, %v1801
          %v2124 = vpack.c.bf16 %v1800, %v1800
          %v2125 = vpack.c.bf16 %v1802, %v1802
          %v2126 = vpack.c.bf16 %v1810, %v1810
          %v2127 = vpack.c.bf16 %v1818, %v1818
          %v2128 = vpack.c.bf16 %v1817, %v1817
          %v2129 = vpack.c.bf16 %v1819, %v1819
          %v2130 = vpack.c.bf16 %v1827, %v1827
          %v2131 = vpack.c.bf16 %v1835, %v1835
          %v2132 = vpack.c.bf16 %v1834, %v1834
          %v2133 = vpack.c.bf16 %v1836, %v1836
          %v2134 = vpack.c.bf16 %v1844, %v1844
          %v2135 = vpack.c.bf16 %v1852, %v1852
          %v2136 = vpack.c.bf16 %v1851, %v1851
          %v2137 = vpack.c.bf16 %v1853, %v1853
          %v2138 = vpack.c.bf16 %v1861, %v1861
          %v2139 = vpack.c.bf16 %v1869, %v1869
          %v2140 = vpack.c.bf16 %v1868, %v1868
          %v2141 = vpack.c.bf16 %v1870, %v1870
          %v2142 = vpack.c.bf16 %v1878, %v1878
          %v2143 = vpack.c.bf16 %v1886, %v1886
          %v2144 = vpack.c.bf16 %v1885, %v1885
          %v2145 = vpack.c.bf16 %v1887, %v1887
          %v2146 = vpack.c.bf16 %v1895, %v1895
          %v2147 = vpack.c.bf16 %v1903, %v1903
          %v2148 = vpack.c.bf16 %v1902, %v1902
          %v2149 = vpack.c.bf16 %v1904, %v1904
          %v2150 = vpack.c.bf16 %v1912, %v1912
          %v2151 = vpack.c.bf16 %v1920, %v1920
          %v2152 = vpack.c.bf16 %v1919, %v1919
          %v2153 = vpack.c.bf16 %v1921, %v1921
          %v2154 = vpack.c.bf16 %v1929, %v1929
          %v2155 = vpack.c.bf16 %v1937, %v1937
          %v2156 = vpack.c.bf16 %v1936, %v1936
          %v2157 = vpack.c.bf16 %v1938, %v1938
          %v2158 = vpack.c.bf16 %v1946, %v1946
          %v2159 = vpack.c.bf16 %v1954, %v1954
          %v2160 = vpack.c.bf16 %v1953, %v1953
          %v2161 = vpack.c.bf16 %v1955, %v1955
          %v2162 = vpack.c.bf16 %v1963, %v1963
          %v2163 = vpack.c.bf16 %v1971, %v1971
          %v2164 = vpack.c.bf16 %v1970, %v1970
          %v2165 = vpack.c.bf16 %v1972, %v1972
          %v2166 = vpack.c.bf16 %v1980, %v1980
          %v2167 = vpack.c.bf16 %v1988, %v1988
          %v2168 = vpack.c.bf16 %v1987, %v1987
          %v2169 = vpack.c.bf16 %v1989, %v1989
          %v2170 = vpack.c.bf16 %v1997, %v1997
          %v2171 = vpack.c.bf16 %v2005, %v2005
          %v2172 = vpack.c.bf16 %v2004, %v2004
          %v2173 = vpack.c.bf16 %v2006, %v2006
          %v2174 = vpack.c.bf16 %v2014, %v2014
          %v2175 = vpack.c.bf16 %v2022, %v2022
          %v2176 = vpack.c.bf16 %v2021, %v2021
          %v2177 = vpack.c.bf16 %v2023, %v2023
          %v2178 = vpack.c.bf16 %v2031, %v2031
          %v2179 = vpack.c.bf16 %v2039, %v2039
          %v2180 = vpack.c.bf16 %v2038, %v2038
          %v2181 = vpack.c.bf16 %v2040, %v2040
          %v2182 = vpack.c.bf16 %v2048, %v2048
          %v2183 = vpack.c.bf16 %v2056, %v2056
          %v2184 = vpack.c.bf16 %v2055, %v2055
          %v2185 = vpack.c.bf16 %v2057, %v2057
          %v2250 = vcombine.low %v2122, %v2123
          %v2251 = vcombine.low %v2124, %v2125
          %v2253 = vunpack.c.l.s4 1966171168
          %v2254 = vunpack.c.0.s8 %v2253
          %v2255 = vlaneseq
          %v2256 = vshrl.u32 %v2255, 7
          %v2257 = vsub.s32 %v2254, %v2256
          %v2258 = vrot.slane %v2250, %v2257
          %v2260 = vunpack.c.l.s4 1966171168
          %v2261 = vunpack.c.0.s8 %v2260
          %v2262 = vlaneseq
          %v2263 = vshrl.u32 %v2262, 7
          %v2264 = vsub.s32 %v2261, %v2263
          %v2265 = vrot.slane %v2251, %v2264
          %v2266 = vcombine.low %v2258, %v2265
          %v2268 = vunpack.c.l.s4 1966171168
          %v2269 = vunpack.c.0.s8 %v2268
          %v2270 = vlaneseq
          %v2271 = vshrl.u32 %v2270, 7
          %v2272 = vsub.s32 %v2269, %v2271
          %v2273 = vrot.slane %v2266, %v2272
          %v2274 = vcombine.low %v2126, %v2127
          %v2275 = vcombine.low %v2128, %v2129
          %v2277 = vunpack.c.l.s4 1966171168
          %v2278 = vunpack.c.0.s8 %v2277
          %v2279 = vlaneseq
          %v2280 = vshrl.u32 %v2279, 7
          %v2281 = vsub.s32 %v2278, %v2280
          %v2282 = vrot.slane %v2274, %v2281
          %v2284 = vunpack.c.l.s4 1966171168
          %v2285 = vunpack.c.0.s8 %v2284
          %v2286 = vlaneseq
          %v2287 = vshrl.u32 %v2286, 7
          %v2288 = vsub.s32 %v2285, %v2287
          %v2289 = vrot.slane %v2275, %v2288
          %v2290 = vcombine.low %v2282, %v2289
          %v2292 = vunpack.c.l.s4 1966171168
          %v2293 = vunpack.c.0.s8 %v2292
          %v2294 = vlaneseq
          %v2295 = vshrl.u32 %v2294, 7
          %v2296 = vsub.s32 %v2293, %v2295
          %v2297 = vrot.slane %v2290, %v2296
          %v2298 = vcombine.low %v2130, %v2131
          %v2299 = vcombine.low %v2132, %v2133
          %v2301 = vunpack.c.l.s4 1966171168
          %v2302 = vunpack.c.0.s8 %v2301
          %v2303 = vlaneseq
          %v2304 = vshrl.u32 %v2303, 7
          %v2305 = vsub.s32 %v2302, %v2304
          %v2306 = vrot.slane %v2298, %v2305
          %v2308 = vunpack.c.l.s4 1966171168
          %v2309 = vunpack.c.0.s8 %v2308
          %v2310 = vlaneseq
          %v2311 = vshrl.u32 %v2310, 7
          %v2312 = vsub.s32 %v2309, %v2311
          %v2313 = vrot.slane %v2299, %v2312
          %v2314 = vcombine.low %v2306, %v2313
          %v2316 = vunpack.c.l.s4 1966171168
          %v2317 = vunpack.c.0.s8 %v2316
          %v2318 = vlaneseq
          %v2319 = vshrl.u32 %v2318, 7
          %v2320 = vsub.s32 %v2317, %v2319
          %v2321 = vrot.slane %v2314, %v2320
          %v2322 = vcombine.low %v2134, %v2135
          %v2323 = vcombine.low %v2136, %v2137
          %v2325 = vunpack.c.l.s4 1966171168
          %v2326 = vunpack.c.0.s8 %v2325
          %v2327 = vlaneseq
          %v2328 = vshrl.u32 %v2327, 7
          %v2329 = vsub.s32 %v2326, %v2328
          %v2330 = vrot.slane %v2322, %v2329
          %v2332 = vunpack.c.l.s4 1966171168
          %v2333 = vunpack.c.0.s8 %v2332
          %v2334 = vlaneseq
          %v2335 = vshrl.u32 %v2334, 7
          %v2336 = vsub.s32 %v2333, %v2335
          %v2337 = vrot.slane %v2323, %v2336
          %v2338 = vcombine.low %v2330, %v2337
          %v2340 = vunpack.c.l.s4 1966171168
          %v2341 = vunpack.c.0.s8 %v2340
          %v2342 = vlaneseq
          %v2343 = vshrl.u32 %v2342, 7
          %v2344 = vsub.s32 %v2341, %v2343
          %v2345 = vrot.slane %v2338, %v2344
          %v2346 = vcombine.low %v2138, %v2139
          %v2347 = vcombine.low %v2140, %v2141
          %v2349 = vunpack.c.l.s4 1966171168
          %v2350 = vunpack.c.0.s8 %v2349
          %v2351 = vlaneseq
          %v2352 = vshrl.u32 %v2351, 7
          %v2353 = vsub.s32 %v2350, %v2352
          %v2354 = vrot.slane %v2346, %v2353
          %v2356 = vunpack.c.l.s4 1966171168
          %v2357 = vunpack.c.0.s8 %v2356
          %v2358 = vlaneseq
          %v2359 = vshrl.u32 %v2358, 7
          %v2360 = vsub.s32 %v2357, %v2359
          %v2361 = vrot.slane %v2347, %v2360
          %v2362 = vcombine.low %v2354, %v2361
          %v2364 = vunpack.c.l.s4 1966171168
          %v2365 = vunpack.c.0.s8 %v2364
          %v2366 = vlaneseq
          %v2367 = vshrl.u32 %v2366, 7
          %v2368 = vsub.s32 %v2365, %v2367
          %v2369 = vrot.slane %v2362, %v2368
          %v2370 = vcombine.low %v2142, %v2143
          %v2371 = vcombine.low %v2144, %v2145
          %v2373 = vunpack.c.l.s4 1966171168
          %v2374 = vunpack.c.0.s8 %v2373
          %v2375 = vlaneseq
          %v2376 = vshrl.u32 %v2375, 7
          %v2377 = vsub.s32 %v2374, %v2376
          %v2378 = vrot.slane %v2370, %v2377
          %v2380 = vunpack.c.l.s4 1966171168
          %v2381 = vunpack.c.0.s8 %v2380
          %v2382 = vlaneseq
          %v2383 = vshrl.u32 %v2382, 7
          %v2384 = vsub.s32 %v2381, %v2383
          %v2385 = vrot.slane %v2371, %v2384
          %v2386 = vcombine.low %v2378, %v2385
          %v2388 = vunpack.c.l.s4 1966171168
          %v2389 = vunpack.c.0.s8 %v2388
          %v2390 = vlaneseq
          %v2391 = vshrl.u32 %v2390, 7
          %v2392 = vsub.s32 %v2389, %v2391
          %v2393 = vrot.slane %v2386, %v2392
          %v2394 = vcombine.low %v2146, %v2147
          %v2395 = vcombine.low %v2148, %v2149
          %v2397 = vunpack.c.l.s4 1966171168
          %v2398 = vunpack.c.0.s8 %v2397
          %v2399 = vlaneseq
          %v2400 = vshrl.u32 %v2399, 7
          %v2401 = vsub.s32 %v2398, %v2400
          %v2402 = vrot.slane %v2394, %v2401
          %v2404 = vunpack.c.l.s4 1966171168
          %v2405 = vunpack.c.0.s8 %v2404
          %v2406 = vlaneseq
          %v2407 = vshrl.u32 %v2406, 7
          %v2408 = vsub.s32 %v2405, %v2407
          %v2409 = vrot.slane %v2395, %v2408
          %v2410 = vcombine.low %v2402, %v2409
          %v2412 = vunpack.c.l.s4 1966171168
          %v2413 = vunpack.c.0.s8 %v2412
          %v2414 = vlaneseq
          %v2415 = vshrl.u32 %v2414, 7
          %v2416 = vsub.s32 %v2413, %v2415
          %v2417 = vrot.slane %v2410, %v2416
          %v2418 = vcombine.low %v2150, %v2151
          %v2419 = vcombine.low %v2152, %v2153
          %v2421 = vunpack.c.l.s4 1966171168
          %v2422 = vunpack.c.0.s8 %v2421
          %v2423 = vlaneseq
          %v2424 = vshrl.u32 %v2423, 7
          %v2425 = vsub.s32 %v2422, %v2424
          %v2426 = vrot.slane %v2418, %v2425
          %v2428 = vunpack.c.l.s4 1966171168
          %v2429 = vunpack.c.0.s8 %v2428
          %v2430 = vlaneseq
          %v2431 = vshrl.u32 %v2430, 7
          %v2432 = vsub.s32 %v2429, %v2431
          %v2433 = vrot.slane %v2419, %v2432
          %v2434 = vcombine.low %v2426, %v2433
          %v2436 = vunpack.c.l.s4 1966171168
          %v2437 = vunpack.c.0.s8 %v2436
          %v2438 = vlaneseq
          %v2439 = vshrl.u32 %v2438, 7
          %v2440 = vsub.s32 %v2437, %v2439
          %v2441 = vrot.slane %v2434, %v2440
          %v2442 = vcombine.low %v2154, %v2155
          %v2443 = vcombine.low %v2156, %v2157
          %v2445 = vunpack.c.l.s4 1966171168
          %v2446 = vunpack.c.0.s8 %v2445
          %v2447 = vlaneseq
          %v2448 = vshrl.u32 %v2447, 7
          %v2449 = vsub.s32 %v2446, %v2448
          %v2450 = vrot.slane %v2442, %v2449
          %v2452 = vunpack.c.l.s4 1966171168
          %v2453 = vunpack.c.0.s8 %v2452
          %v2454 = vlaneseq
          %v2455 = vshrl.u32 %v2454, 7
          %v2456 = vsub.s32 %v2453, %v2455
          %v2457 = vrot.slane %v2443, %v2456
          %v2458 = vcombine.low %v2450, %v2457
          %v2460 = vunpack.c.l.s4 1966171168
          %v2461 = vunpack.c.0.s8 %v2460
          %v2462 = vlaneseq
          %v2463 = vshrl.u32 %v2462, 7
          %v2464 = vsub.s32 %v2461, %v2463
          %v2465 = vrot.slane %v2458, %v2464
          %v2466 = vcombine.low %v2158, %v2159
          %v2467 = vcombine.low %v2160, %v2161
          %v2469 = vunpack.c.l.s4 1966171168
          %v2470 = vunpack.c.0.s8 %v2469
          %v2471 = vlaneseq
          %v2472 = vshrl.u32 %v2471, 7
          %v2473 = vsub.s32 %v2470, %v2472
          %v2474 = vrot.slane %v2466, %v2473
          %v2476 = vunpack.c.l.s4 1966171168
          %v2477 = vunpack.c.0.s8 %v2476
          %v2478 = vlaneseq
          %v2479 = vshrl.u32 %v2478, 7
          %v2480 = vsub.s32 %v2477, %v2479
          %v2481 = vrot.slane %v2467, %v2480
          %v2482 = vcombine.low %v2474, %v2481
          %v2484 = vunpack.c.l.s4 1966171168
          %v2485 = vunpack.c.0.s8 %v2484
          %v2486 = vlaneseq
          %v2487 = vshrl.u32 %v2486, 7
          %v2488 = vsub.s32 %v2485, %v2487
          %v2489 = vrot.slane %v2482, %v2488
          %v2490 = vcombine.low %v2162, %v2163
          %v2491 = vcombine.low %v2164, %v2165
          %v2493 = vunpack.c.l.s4 1966171168
          %v2494 = vunpack.c.0.s8 %v2493
          %v2495 = vlaneseq
          %v2496 = vshrl.u32 %v2495, 7
          %v2497 = vsub.s32 %v2494, %v2496
          %v2498 = vrot.slane %v2490, %v2497
          %v2500 = vunpack.c.l.s4 1966171168
          %v2501 = vunpack.c.0.s8 %v2500
          %v2502 = vlaneseq
          %v2503 = vshrl.u32 %v2502, 7
          %v2504 = vsub.s32 %v2501, %v2503
          %v2505 = vrot.slane %v2491, %v2504
          %v2506 = vcombine.low %v2498, %v2505
          %v2508 = vunpack.c.l.s4 1966171168
          %v2509 = vunpack.c.0.s8 %v2508
          %v2510 = vlaneseq
          %v2511 = vshrl.u32 %v2510, 7
          %v2512 = vsub.s32 %v2509, %v2511
          %v2513 = vrot.slane %v2506, %v2512
          %v2514 = vcombine.low %v2166, %v2167
          %v2515 = vcombine.low %v2168, %v2169
          %v2517 = vunpack.c.l.s4 1966171168
          %v2518 = vunpack.c.0.s8 %v2517
          %v2519 = vlaneseq
          %v2520 = vshrl.u32 %v2519, 7
          %v2521 = vsub.s32 %v2518, %v2520
          %v2522 = vrot.slane %v2514, %v2521
          %v2524 = vunpack.c.l.s4 1966171168
          %v2525 = vunpack.c.0.s8 %v2524
          %v2526 = vlaneseq
          %v2527 = vshrl.u32 %v2526, 7
          %v2528 = vsub.s32 %v2525, %v2527
          %v2529 = vrot.slane %v2515, %v2528
          %v2530 = vcombine.low %v2522, %v2529
          %v2532 = vunpack.c.l.s4 1966171168
          %v2533 = vunpack.c.0.s8 %v2532
          %v2534 = vlaneseq
          %v2535 = vshrl.u32 %v2534, 7
          %v2536 = vsub.s32 %v2533, %v2535
          %v2537 = vrot.slane %v2530, %v2536
          %v2538 = vcombine.low %v2170, %v2171
          %v2539 = vcombine.low %v2172, %v2173
          %v2541 = vunpack.c.l.s4 1966171168
          %v2542 = vunpack.c.0.s8 %v2541
          %v2543 = vlaneseq
          %v2544 = vshrl.u32 %v2543, 7
          %v2545 = vsub.s32 %v2542, %v2544
          %v2546 = vrot.slane %v2538, %v2545
          %v2548 = vunpack.c.l.s4 1966171168
          %v2549 = vunpack.c.0.s8 %v2548
          %v2550 = vlaneseq
          %v2551 = vshrl.u32 %v2550, 7
          %v2552 = vsub.s32 %v2549, %v2551
          %v2553 = vrot.slane %v2539, %v2552
          %v2554 = vcombine.low %v2546, %v2553
          %v2556 = vunpack.c.l.s4 1966171168
          %v2557 = vunpack.c.0.s8 %v2556
          %v2558 = vlaneseq
          %v2559 = vshrl.u32 %v2558, 7
          %v2560 = vsub.s32 %v2557, %v2559
          %v2561 = vrot.slane %v2554, %v2560
          %v2562 = vcombine.low %v2174, %v2175
          %v2563 = vcombine.low %v2176, %v2177
          %v2565 = vunpack.c.l.s4 1966171168
          %v2566 = vunpack.c.0.s8 %v2565
          %v2567 = vlaneseq
          %v2568 = vshrl.u32 %v2567, 7
          %v2569 = vsub.s32 %v2566, %v2568
          %v2570 = vrot.slane %v2562, %v2569
          %v2572 = vunpack.c.l.s4 1966171168
          %v2573 = vunpack.c.0.s8 %v2572
          %v2574 = vlaneseq
          %v2575 = vshrl.u32 %v2574, 7
          %v2576 = vsub.s32 %v2573, %v2575
          %v2577 = vrot.slane %v2563, %v2576
          %v2578 = vcombine.low %v2570, %v2577
          %v2580 = vunpack.c.l.s4 1966171168
          %v2581 = vunpack.c.0.s8 %v2580
          %v2582 = vlaneseq
          %v2583 = vshrl.u32 %v2582, 7
          %v2584 = vsub.s32 %v2581, %v2583
          %v2585 = vrot.slane %v2578, %v2584
          %v2586 = vcombine.low %v2178, %v2179
          %v2587 = vcombine.low %v2180, %v2181
          %v2589 = vunpack.c.l.s4 1966171168
          %v2590 = vunpack.c.0.s8 %v2589
          %v2591 = vlaneseq
          %v2592 = vshrl.u32 %v2591, 7
          %v2593 = vsub.s32 %v2590, %v2592
          %v2594 = vrot.slane %v2586, %v2593
          %v2596 = vunpack.c.l.s4 1966171168
          %v2597 = vunpack.c.0.s8 %v2596
          %v2598 = vlaneseq
          %v2599 = vshrl.u32 %v2598, 7
          %v2600 = vsub.s32 %v2597, %v2599
          %v2601 = vrot.slane %v2587, %v2600
          %v2602 = vcombine.low %v2594, %v2601
          %v2604 = vunpack.c.l.s4 1966171168
          %v2605 = vunpack.c.0.s8 %v2604
          %v2606 = vlaneseq
          %v2607 = vshrl.u32 %v2606, 7
          %v2608 = vsub.s32 %v2605, %v2607
          %v2609 = vrot.slane %v2602, %v2608
          %v2610 = vcombine.low %v2182, %v2183
          %v2611 = vcombine.low %v2184, %v2185
          %v2613 = vunpack.c.l.s4 1966171168
          %v2614 = vunpack.c.0.s8 %v2613
          %v2615 = vlaneseq
          %v2616 = vshrl.u32 %v2615, 7
          %v2617 = vsub.s32 %v2614, %v2616
          %v2618 = vrot.slane %v2610, %v2617
          %v2620 = vunpack.c.l.s4 1966171168
          %v2621 = vunpack.c.0.s8 %v2620
          %v2622 = vlaneseq
          %v2623 = vshrl.u32 %v2622, 7
          %v2624 = vsub.s32 %v2621, %v2623
          %v2625 = vrot.slane %v2611, %v2624
          %v2626 = vcombine.low %v2618, %v2625
          %v2628 = vunpack.c.l.s4 1966171168
          %v2629 = vunpack.c.0.s8 %v2628
          %v2630 = vlaneseq
          %v2631 = vshrl.u32 %v2630, 7
          %v2632 = vsub.s32 %v2629, %v2631
          %v2633 = vrot.slane %v2626, %v2632
          %2650 = vst [vmem:[%s5] sm:$0xf] %v2273
          %2651 = vst [vmem:[%s5 + $0x4] sm:$0xf] %v2297
          %2652 = vst [vmem:[%s5 + $0x8] sm:$0xf] %v2321
          %2653 = vst [vmem:[%s5 + $0xc] sm:$0xf] %v2345
          %2654 = vst [vmem:[%s5 + $0x10] sm:$0xf] %v2369
          %2655 = vst [vmem:[%s5 + $0x14] sm:$0xf] %v2393
          %2656 = vst [vmem:[%s5 + $0x18] sm:$0xf] %v2417
          %2657 = vst [vmem:[%s5 + $0x1c] sm:$0xf] %v2441
          %2658 = vst [vmem:[%s5 + $0x20] sm:$0xf] %v2465
          %2659 = vst [vmem:[%s5 + $0x24] sm:$0xf] %v2489
          %2660 = vst [vmem:[%s5 + $0x28] sm:$0xf] %v2513
          %2661 = vst [vmem:[%s5 + $0x2c] sm:$0xf] %v2537
          %2662 = vst [vmem:[%s5 + $0x30] sm:$0xf] %v2561
          %2663 = vst [vmem:[%s5 + $0x34] sm:$0xf] %v2585
          %2664 = vst [vmem:[%s5 + $0x38] sm:$0xf] %v2609
          %2665 = vst [vmem:[%s5 + $0x3c] sm:$0xf] %v2633
        $region60: #{generator_forward.4} parent=39 // pred_fallthru
          _
        // Predicated region
        $region61: #{generator_forward.4} parent=39 // pred_check
          %p2666 = pneg %p149
        $region62: #{generator_forward.4} parent=39 // pred_check_branch
          %2668 = sbr.rel (%p2666) target = $region64
        $region63: #{generator_forward.4} parent=39 // pred_region
          _
        $region64: #{generator_forward.4} parent=39 // pred_fallthru
          _
        // Predicated region
        $region65: #{generator_forward.4} parent=39 // pred_check
          %p2669 = pneg %p149
        $region66: #{generator_forward.4} parent=39 // pred_check_branch
          %2671 = sbr.rel (%p2669) target = $region68
        $region67: #{generator_forward.4} parent=39 // pred_region
          _
        $region68: #{generator_forward.4} parent=39 // pred_fallthru
          _
      $region40: #{generator_forward.4} parent=5 // pred_fallthru
        _
      %p2672 = scmp.le.s32.totalorder 2, %s16
      // Predicated region
      $region69: #{generator_forward.4} parent=5 // pred_check
        %p2673 = pneg %p2672
      $region70: #{generator_forward.4} parent=5 // pred_check_branch
        %2675 = sbr.rel (%p2673) target = $region72
      $region71: #{generator_forward.4} parent=5 // pred_region
        %s2676 = ssub.s32 %s16, 2
      $region72: #{generator_forward.4} parent=5 // pred_fallthru
        _
    $region6: #{generator_forward.4} parent=1 // loop_footer
      %s20 = sadd.s32 1, %s16
    $region7: #{generator_forward.4} parent=1 // loop_footer_branch
      %15 = sbr.rel target = $region3
    $region8: #{generator_forward.4} parent=1 // loop_exit
      _
    %2677 = vsyncpa [#allocation4], 1
    %s2678 = scalar_lea.sflag [#allocation4], 1
    %2679 = vsyncpa %s2678, 1
    %2680 = vsyncpa [#allocation6], 1
    %2681 = vsyncpa [#allocation9], 1

// kernel: generator_forward.5
$region0: #{generator_forward.5}
  #allocation0 [shape = 'u32[]', space=smem, size = 0x4, offset = 0x4, fixed_abs, tag = 'smem constant byte address 0x4 - core index']
  #allocation1 [shape = 'u32[144,128]{1,0:T(1,128)}', space=vmem, size = 0x12000, scoped, tag = 'internal scratch']
  #allocation2 [shape = 'f32[4,32,128]{2,1,0:T(8,128)}', space=vmem, size = 0x10000, scoped, tag = 'scratch operand']
  %s0 = inlined_call_operand.vmem [shape: bf16[4,32,2048], index: 0, kind: input, shape index: {}]
  %s1 = inlined_call_operand.vmem [shape: bf16[4,2048,128], index: 1, kind: input, shape index: {}]
  %s2 = inlined_call_operand.vmem [shape: f32[1,128], index: 2, kind: input, shape index: {}]
  %s3 = inlined_call_operand.vmem [shape: f32[1,128], index: 3, kind: input, shape index: {}]
  %s4 = inlined_call_operand.vmem [shape: f32[1,128], index: 4, kind: input, shape index: {}]
  %s5 = inlined_call_operand.vmem [shape: bf16[4,32,128], index: 5, kind: output, shape index: {}]
  %s6 = sld [smem:[#allocation0]]
  $region57: #{generator_forward.5} parent=0
    _
  %s8 = ssub.s32 1, %s6
  %s9 = scalar_select 0, %s8, %s6
  loop: start=0, step=1, limit=6
  $region2: #{generator_forward.5} parent=0 // loop_pre_header
    _
  $region3: #{generator_forward.5} parent=0 // loop_header
    %s11 = sphi 0, %s15
    %p12 = scmp.ge.s32.totalorder %s11, 6
    %s21 = sphi 0, %s23
    %s24 = sphi 0, %s21
    %s25 = sphi 0, %s24
    %s41 = sphi 0, %s25
    %s47 = sphi 0, %s49
    %s50 = sphi 0, %s47
    %s51 = sphi 0, %s50
    %s67 = sphi 0, %s51
    %s71 = sphi 0, %s71
    %s73 = sphi 0, %s71
    %s74 = sphi 0, %s73
    %s88 = sphi 0, %s74
    %s92 = sphi 0, %s92
    %s94 = sphi 0, %s92
    %s95 = sphi 0, %s94
    %s109 = sphi 0, %s95
    %s113 = sphi 0, %s113
    %s115 = sphi 0, %s113
    %s116 = sphi 0, %s115
    %s130 = sphi 0, %s116
    %s134 = sphi 0, %s134
    %s136 = sphi 0, %s134
    %s137 = sphi 0, %s136
    %s151 = sphi 0, %s137
  $region4: #{generator_forward.5} parent=0 // loop_header_branch
    %14 = sbr.rel (%p12) target = $region8
  $region5: #{generator_forward.5} parent=0 // loop_body
    %s16 = ssub.s32 %s11, 1
    %s17 = ssub.s32 %s11, 2
    %s18 = sadd.s32 %s11, 1
    %s19 = ssub.s32 %s11, %s18
    %p20 = scmp.eq.s32.totalorder %s19, 0
    %s22 = sadd.s32 %s21, 1
    %s23 = scalar_select %p20, %s21, %s22
    %p26 = pneg %p20
    %p27 = scmp.eq.s32.totalorder %s11, 3
    %p28 = por %p26, %p27
    %p29 = scmp.ne.s32.totalorder %s21, %s24
    %p30 = scmp.eq.s32.totalorder %s11, 0
    %p31 = por %p29, %p30
    %p32 = scmp.ne.s32.totalorder %s21, %s24
    %p33 = scmp.eq.s32.totalorder %s16, 3
    %p34 = por %p32, %p33
    %p35 = scmp.ne.s32.totalorder %s24, %s25
    %p36 = scmp.eq.s32.totalorder %s16, 0
    %p37 = por %p35, %p36
    %p38 = scmp.ne.s32.totalorder %s24, %s25
    %p39 = scmp.eq.s32.totalorder %s17, 3
    %p40 = por %p38, %p39
    %p42 = scmp.ne.s32.totalorder %s25, %s41
    %p43 = scmp.eq.s32.totalorder %s17, 0
    %p44 = por %p42, %p43
    %s45 = ssub.s32 %s11, %s18
    %p46 = scmp.eq.s32.totalorder %s45, 0
    %s48 = sadd.s32 %s47, 1
    %s49 = scalar_select %p46, %s47, %s48
    %p52 = pneg %p46
    %p53 = scmp.eq.s32.totalorder %s11, 3
    %p54 = por %p52, %p53
    %p55 = scmp.ne.s32.totalorder %s47, %s50
    %p56 = scmp.eq.s32.totalorder %s11, 0
    %p57 = por %p55, %p56
    %p58 = scmp.ne.s32.totalorder %s47, %s50
    %p59 = scmp.eq.s32.totalorder %s16, 3
    %p60 = por %p58, %p59
    %p61 = scmp.ne.s32.totalorder %s50, %s51
    %p62 = scmp.eq.s32.totalorder %s16, 0
    %p63 = por %p61, %p62
    %p64 = scmp.ne.s32.totalorder %s50, %s51
    %p65 = scmp.eq.s32.totalorder %s17, 3
    %p66 = por %p64, %p65
    %p68 = scmp.ne.s32.totalorder %s51, %s67
    %p69 = scmp.eq.s32.totalorder %s17, 0
    %p70 = por %p68, %p69
    %s72 = sadd.s32 %s71, 1
    %p75 = scmp.eq.s32.totalorder %s11, 3
    %p76 = scmp.ne.s32.totalorder %s71, %s73
    %p77 = scmp.eq.s32.totalorder %s11, 0
    %p78 = por %p76, %p77
    %p79 = scmp.ne.s32.totalorder %s71, %s73
    %p80 = scmp.eq.s32.totalorder %s16, 3
    %p81 = por %p79, %p80
    %p82 = scmp.ne.s32.totalorder %s73, %s74
    %p83 = scmp.eq.s32.totalorder %s16, 0
    %p84 = por %p82, %p83
    %p85 = scmp.ne.s32.totalorder %s73, %s74
    %p86 = scmp.eq.s32.totalorder %s17, 3
    %p87 = por %p85, %p86
    %p89 = scmp.ne.s32.totalorder %s74, %s88
    %p90 = scmp.eq.s32.totalorder %s17, 0
    %p91 = por %p89, %p90
    %s93 = sadd.s32 %s92, 1
    %p96 = scmp.eq.s32.totalorder %s11, 3
    %p97 = scmp.ne.s32.totalorder %s92, %s94
    %p98 = scmp.eq.s32.totalorder %s11, 0
    %p99 = por %p97, %p98
    %p100 = scmp.ne.s32.totalorder %s92, %s94
    %p101 = scmp.eq.s32.totalorder %s16, 3
    %p102 = por %p100, %p101
    %p103 = scmp.ne.s32.totalorder %s94, %s95
    %p104 = scmp.eq.s32.totalorder %s16, 0
    %p105 = por %p103, %p104
    %p106 = scmp.ne.s32.totalorder %s94, %s95
    %p107 = scmp.eq.s32.totalorder %s17, 3
    %p108 = por %p106, %p107
    %p110 = scmp.ne.s32.totalorder %s95, %s109
    %p111 = scmp.eq.s32.totalorder %s17, 0
    %p112 = por %p110, %p111
    %s114 = sadd.s32 %s113, 1
    %p117 = scmp.eq.s32.totalorder %s11, 3
    %p118 = scmp.ne.s32.totalorder %s113, %s115
    %p119 = scmp.eq.s32.totalorder %s11, 0
    %p120 = por %p118, %p119
    %p121 = scmp.ne.s32.totalorder %s113, %s115
    %p122 = scmp.eq.s32.totalorder %s16, 3
    %p123 = por %p121, %p122
    %p124 = scmp.ne.s32.totalorder %s115, %s116
    %p125 = scmp.eq.s32.totalorder %s16, 0
    %p126 = por %p124, %p125
    %p127 = scmp.ne.s32.totalorder %s115, %s116
    %p128 = scmp.eq.s32.totalorder %s17, 3
    %p129 = por %p127, %p128
    %p131 = scmp.ne.s32.totalorder %s116, %s130
    %p132 = scmp.eq.s32.totalorder %s17, 0
    %p133 = por %p131, %p132
    %s135 = sadd.s32 %s134, 1
    %p138 = scmp.eq.s32.totalorder %s11, 3
    %p139 = scmp.ne.s32.totalorder %s134, %s136
    %p140 = scmp.eq.s32.totalorder %s11, 0
    %p141 = por %p139, %p140
    %p142 = scmp.ne.s32.totalorder %s134, %s136
    %p143 = scmp.eq.s32.totalorder %s16, 3
    %p144 = por %p142, %p143
    %p145 = scmp.ne.s32.totalorder %s136, %s137
    %p146 = scmp.eq.s32.totalorder %s16, 0
    %p147 = por %p145, %p146
    %p148 = scmp.ne.s32.totalorder %s136, %s137
    %p149 = scmp.eq.s32.totalorder %s17, 3
    %p150 = por %p148, %p149
    %p152 = scmp.ne.s32.totalorder %s137, %s151
    %p153 = scmp.eq.s32.totalorder %s17, 0
    %p154 = por %p152, %p153
    %p155 = scmp.le.s32.totalorder 1, %s11
    %p156 = scmp.lt.s32.totalorder %s11, 5
    %p157 = pnand %p155, %p156
    %p158 = pneg %p157
    // Predicated region
    $region9: #{generator_forward.5} parent=5 // pred_check
      _
    $region10: #{generator_forward.5} parent=5 // pred_check_branch
      %160 = sbr.rel (%p157) target = $region12
    $region11: #{generator_forward.5} parent=5 // pred_region
      %s161 = ssub.s32 %s11, 1
      // Predicated region
      $region13: #{generator_forward.5} parent=11 // pred_check
        %p162 = pneg %p84
      $region14: #{generator_forward.5} parent=11 // pred_check_branch
        %164 = sbr.rel (%p162) target = $region16
      $region15: #{generator_forward.5} parent=11 // pred_region
        _
      $region16: #{generator_forward.5} parent=11 // pred_fallthru
        _
      // Predicated region
      $region17: #{generator_forward.5} parent=11 // pred_check
        %p165 = pneg %p105
      $region18: #{generator_forward.5} parent=11 // pred_check_branch
        %167 = sbr.rel (%p165) target = $region20
      $region19: #{generator_forward.5} parent=11 // pred_region
        _
      $region20: #{generator_forward.5} parent=11 // pred_fallthru
        _
      // Predicated region
      $region21: #{generator_forward.5} parent=11 // pred_check
        %p168 = pneg %p126
      $region22: #{generator_forward.5} parent=11 // pred_check_branch
        %170 = sbr.rel (%p168) target = $region24
      $region23: #{generator_forward.5} parent=11 // pred_region
        _
      $region24: #{generator_forward.5} parent=11 // pred_fallthru
        _
    $region12: #{generator_forward.5} parent=5 // pred_fallthru
      _
    %p171 = scmp.lt.s32.totalorder %s11, 4
    // Predicated region
    $region25: #{generator_forward.5} parent=5 // pred_check
      %p172 = pneg %p171
    $region26: #{generator_forward.5} parent=5 // pred_check_branch
      %174 = sbr.rel (%p172) target = $region28
    $region27: #{generator_forward.5} parent=5 // pred_region
      // Predicated region
      $region29: #{generator_forward.5} parent=27 // pred_check
        %p175 = pneg %p31
      $region30: #{generator_forward.5} parent=27 // pred_check_branch
        %177 = sbr.rel (%p175) target = $region32
      $region31: #{generator_forward.5} parent=27 // pred_region
        %p178 = scmp.lt.s32.totalorder %s11, 3
        %s179 = scalar_select %p178, %s11, 3
        %s180 = smul.addr %s179, 64
        %s181 = smul.addr %s180, 4
        %s182 = scalar_lea.vmem %s0, %s181
      $region32: #{generator_forward.5} parent=27 // pred_fallthru
        _
      // Predicated region
      $region33: #{generator_forward.5} parent=27 // pred_check
        %p183 = pneg %p57
      $region34: #{generator_forward.5} parent=27 // pred_check_branch
        %185 = sbr.rel (%p183) target = $region36
      $region35: #{generator_forward.5} parent=27 // pred_region
        %p186 = scmp.lt.s32.totalorder %s11, 3
        %s187 = scalar_select %p186, %s11, 3
        %s188 = smul.addr %s187, 256
        %s189 = smul.addr %s188, 4
        %s190 = scalar_lea.vmem %s1, %s189
      $region36: #{generator_forward.5} parent=27 // pred_fallthru
        _
    $region28: #{generator_forward.5} parent=5 // pred_fallthru
      _
    %p191 = scmp.le.s32.totalorder 1, %s11
    %p192 = scmp.lt.s32.totalorder %s11, 5
    %p193 = pnand %p191, %p192
    %p194 = pneg %p193
    // Predicated region
    $region37: #{generator_forward.5} parent=5 // pred_check
      _
    $region38: #{generator_forward.5} parent=5 // pred_check_branch
      %196 = sbr.rel (%p193) target = $region40
    $region39: #{generator_forward.5} parent=5 // pred_region
      %s197 = ssub.s32 %s11, 1
      %p198 = scmp.lt.s32.totalorder %s16, 3
      %s199 = scalar_select %p198, %s16, 3
      %s200 = smul.addr %s199, 64
      %s201 = smul.addr %s200, 4
      %s202 = scalar_lea.vmem %s0, %s201
      %p203 = pneg %p37
      %p204 = pneg %p34
      %p205 = scmp.lt.s32.totalorder %s16, 3
      %s206 = scalar_select %p205, %s16, 3
      %s207 = smul.addr %s206, 256
      %s208 = smul.addr %s207, 4
      %s209 = scalar_lea.vmem %s1, %s208
      %p210 = pneg %p63
      %p211 = pneg %p60
      %p212 = pneg %p84
      %p213 = pneg %p81
      %p214 = pneg %p105
      %p215 = pneg %p102
      %p216 = pneg %p126
      %p217 = pneg %p123
      %p218 = pneg %p147
      %p219 = pneg %p144
      %p220 = scmp.lt.s32.totalorder %s16, 3
      %s221 = scalar_select %p220, %s16, 3
      %s222 = smul.addr %s221, 64
      %s223 = smul.addr %s222, 4
      %s224 = scalar_lea.vmem %s0, %s223
      %p225 = scmp.lt.s32.totalorder %s16, 3
      %s226 = scalar_select %p225, %s16, 3
      %s227 = smul.addr %s226, 256
      %s228 = smul.addr %s227, 4
      %s229 = scalar_lea.vmem %s1, %s228
      %v231 = vld [vmem:[%s224] sm:$0xff]
      %v232 = vld [vmem:[%s224 + $0x8] sm:$0xff]
      %v233 = vld [vmem:[%s224 + $0x10] sm:$0xff]
      %v234 = vld [vmem:[%s224 + $0x18] sm:$0xff]
      %v235 = vld [vmem:[%s224 + $0x20] sm:$0xff]
      %v236 = vld [vmem:[%s224 + $0x28] sm:$0xff]
      %v237 = vld [vmem:[%s224 + $0x30] sm:$0xff]
      %v238 = vld [vmem:[%s224 + $0x38] sm:$0xff]
      %v239 = vld [vmem:[%s224 + $0x40] sm:$0xff]
      %v240 = vld [vmem:[%s224 + $0x48] sm:$0xff]
      %v241 = vld [vmem:[%s224 + $0x50] sm:$0xff]
      %v242 = vld [vmem:[%s224 + $0x58] sm:$0xff]
      %v243 = vld [vmem:[%s224 + $0x60] sm:$0xff]
      %v244 = vld [vmem:[%s224 + $0x68] sm:$0xff]
      %v245 = vld [vmem:[%s224 + $0x70] sm:$0xff]
      %v246 = vld [vmem:[%s224 + $0x78] sm:$0xff]
      %v247 = vld [vmem:[%s224 + $0x80] sm:$0xff]
      %v248 = vld [vmem:[%s224 + $0x88] sm:$0xff]
      %v249 = vld [vmem:[%s224 + $0x90] sm:$0xff]
      %v250 = vld [vmem:[%s224 + $0x98] sm:$0xff]
      %v251 = vld [vmem:[%s224 + $0xa0] sm:$0xff]
      %v252 = vld [vmem:[%s224 + $0xa8] sm:$0xff]
      %v253 = vld [vmem:[%s224 + $0xb0] sm:$0xff]
      %v254 = vld [vmem:[%s224 + $0xb8] sm:$0xff]
      %v255 = vld [vmem:[%s224 + $0xc0] sm:$0xff]
      %v256 = vld [vmem:[%s224 + $0xc8] sm:$0xff]
      %v257 = vld [vmem:[%s224 + $0xd0] sm:$0xff]
      %v258 = vld [vmem:[%s224 + $0xd8] sm:$0xff]
      %v259 = vld [vmem:[%s224 + $0xe0] sm:$0xff]
      %v260 = vld [vmem:[%s224 + $0xe8] sm:$0xff]
      %v261 = vld [vmem:[%s224 + $0xf0] sm:$0xff]
      %v262 = vld [vmem:[%s224 + $0xf8] sm:$0xff]
      %v263 = vld [vmem:[%s229] sm:$0xf]
      %v264 = vld [vmem:[%s229 + $0x4] sm:$0xf]
      %v265 = vld [vmem:[%s229 + $0x8] sm:$0xf]
      %v266 = vld [vmem:[%s229 + $0xc] sm:$0xf]
      %v267 = vld [vmem:[%s229 + $0x10] sm:$0xf]
      %v268 = vld [vmem:[%s229 + $0x14] sm:$0xf]
      %v269 = vld [vmem:[%s229 + $0x18] sm:$0xf]
      %v270 = vld [vmem:[%s229 + $0x1c] sm:$0xf]
      %v271 = vld [vmem:[%s229 + $0x20] sm:$0xf]
      %v272 = vld [vmem:[%s229 + $0x24] sm:$0xf]
      %v273 = vld [vmem:[%s229 + $0x28] sm:$0xf]
      %v274 = vld [vmem:[%s229 + $0x2c] sm:$0xf]
      %v275 = vld [vmem:[%s229 + $0x30] sm:$0xf]
      %v276 = vld [vmem:[%s229 + $0x34] sm:$0xf]
      %v277 = vld [vmem:[%s229 + $0x38] sm:$0xf]
      %v278 = vld [vmem:[%s229 + $0x3c] sm:$0xf]
      %v279 = vld [vmem:[%s229 + $0x40] sm:$0xf]
      %v280 = vld [vmem:[%s229 + $0x44] sm:$0xf]
      %v281 = vld [vmem:[%s229 + $0x48] sm:$0xf]
      %v282 = vld [vmem:[%s229 + $0x4c] sm:$0xf]
      %v283 = vld [vmem:[%s229 + $0x50] sm:$0xf]
      %v284 = vld [vmem:[%s229 + $0x54] sm:$0xf]
      %v285 = vld [vmem:[%s229 + $0x58] sm:$0xf]
      %v286 = vld [vmem:[%s229 + $0x5c] sm:$0xf]
      %v287 = vld [vmem:[%s229 + $0x60] sm:$0xf]
      %v288 = vld [vmem:[%s229 + $0x64] sm:$0xf]
      %v289 = vld [vmem:[%s229 + $0x68] sm:$0xf]
      %v290 = vld [vmem:[%s229 + $0x6c] sm:$0xf]
      %v291 = vld [vmem:[%s229 + $0x70] sm:$0xf]
      %v292 = vld [vmem:[%s229 + $0x74] sm:$0xf]
      %v293 = vld [vmem:[%s229 + $0x78] sm:$0xf]
      %v294 = vld [vmem:[%s229 + $0x7c] sm:$0xf]
      %v295 = vld [vmem:[%s229 + $0x80] sm:$0xf]
      %v296 = vld [vmem:[%s229 + $0x84] sm:$0xf]
      %v297 = vld [vmem:[%s229 + $0x88] sm:$0xf]
      %v298 = vld [vmem:[%s229 + $0x8c] sm:$0xf]
      %v299 = vld [vmem:[%s229 + $0x90] sm:$0xf]
      %v300 = vld [vmem:[%s229 + $0x94] sm:$0xf]
      %v301 = vld [vmem:[%s229 + $0x98] sm:$0xf]
      %v302 = vld [vmem:[%s229 + $0x9c] sm:$0xf]
      %v303 = vld [vmem:[%s229 + $0xa0] sm:$0xf]
      %v304 = vld [vmem:[%s229 + $0xa4] sm:$0xf]
      %v305 = vld [vmem:[%s229 + $0xa8] sm:$0xf]
      %v306 = vld [vmem:[%s229 + $0xac] sm:$0xf]
      %v307 = vld [vmem:[%s229 + $0xb0] sm:$0xf]
      %v308 = vld [vmem:[%s229 + $0xb4] sm:$0xf]
      %v309 = vld [vmem:[%s229 + $0xb8] sm:$0xf]
      %v310 = vld [vmem:[%s229 + $0xbc] sm:$0xf]
      %v311 = vld [vmem:[%s229 + $0xc0] sm:$0xf]
      %v312 = vld [vmem:[%s229 + $0xc4] sm:$0xf]
      %v313 = vld [vmem:[%s229 + $0xc8] sm:$0xf]
      %v314 = vld [vmem:[%s229 + $0xcc] sm:$0xf]
      %v315 = vld [vmem:[%s229 + $0xd0] sm:$0xf]
      %v316 = vld [vmem:[%s229 + $0xd4] sm:$0xf]
      %v317 = vld [vmem:[%s229 + $0xd8] sm:$0xf]
      %v318 = vld [vmem:[%s229 + $0xdc] sm:$0xf]
      %v319 = vld [vmem:[%s229 + $0xe0] sm:$0xf]
      %v320 = vld [vmem:[%s229 + $0xe4] sm:$0xf]
      %v321 = vld [vmem:[%s229 + $0xe8] sm:$0xf]
      %v322 = vld [vmem:[%s229 + $0xec] sm:$0xf]
      %v323 = vld [vmem:[%s229 + $0xf0] sm:$0xf]
      %v324 = vld [vmem:[%s229 + $0xf4] sm:$0xf]
      %v325 = vld [vmem:[%s229 + $0xf8] sm:$0xf]
      %v326 = vld [vmem:[%s229 + $0xfc] sm:$0xf]
      %v327 = vld [vmem:[%s229 + $0x100] sm:$0xf]
      %v328 = vld [vmem:[%s229 + $0x104] sm:$0xf]
      %v329 = vld [vmem:[%s229 + $0x108] sm:$0xf]
      %v330 = vld [vmem:[%s229 + $0x10c] sm:$0xf]
      %v331 = vld [vmem:[%s229 + $0x110] sm:$0xf]
      %v332 = vld [vmem:[%s229 + $0x114] sm:$0xf]
      %v333 = vld [vmem:[%s229 + $0x118] sm:$0xf]
      %v334 = vld [vmem:[%s229 + $0x11c] sm:$0xf]
      %v335 = vld [vmem:[%s229 + $0x120] sm:$0xf]
      %v336 = vld [vmem:[%s229 + $0x124] sm:$0xf]
      %v337 = vld [vmem:[%s229 + $0x128] sm:$0xf]
      %v338 = vld [vmem:[%s229 + $0x12c] sm:$0xf]
      %v339 = vld [vmem:[%s229 + $0x130] sm:$0xf]
      %v340 = vld [vmem:[%s229 + $0x134] sm:$0xf]
      %v341 = vld [vmem:[%s229 + $0x138] sm:$0xf]
      %v342 = vld [vmem:[%s229 + $0x13c] sm:$0xf]
      %v343 = vld [vmem:[%s229 + $0x140] sm:$0xf]
      %v344 = vld [vmem:[%s229 + $0x144] sm:$0xf]
      %v345 = vld [vmem:[%s229 + $0x148] sm:$0xf]
      %v346 = vld [vmem:[%s229 + $0x14c] sm:$0xf]
      %v347 = vld [vmem:[%s229 + $0x150] sm:$0xf]
      %v348 = vld [vmem:[%s229 + $0x154] sm:$0xf]
      %v349 = vld [vmem:[%s229 + $0x158] sm:$0xf]
      %v350 = vld [vmem:[%s229 + $0x15c] sm:$0xf]
      %v351 = vld [vmem:[%s229 + $0x160] sm:$0xf]
      %v352 = vld [vmem:[%s229 + $0x164] sm:$0xf]
      %v353 = vld [vmem:[%s229 + $0x168] sm:$0xf]
      %v354 = vld [vmem:[%s229 + $0x16c] sm:$0xf]
      %v355 = vld [vmem:[%s229 + $0x170] sm:$0xf]
      %v356 = vld [vmem:[%s229 + $0x174] sm:$0xf]
      %v357 = vld [vmem:[%s229 + $0x178] sm:$0xf]
      %v358 = vld [vmem:[%s229 + $0x17c] sm:$0xf]
      %v359 = vld [vmem:[%s229 + $0x180] sm:$0xf]
      %v360 = vld [vmem:[%s229 + $0x184] sm:$0xf]
      %v361 = vld [vmem:[%s229 + $0x188] sm:$0xf]
      %v362 = vld [vmem:[%s229 + $0x18c] sm:$0xf]
      %v363 = vld [vmem:[%s229 + $0x190] sm:$0xf]
      %v364 = vld [vmem:[%s229 + $0x194] sm:$0xf]
      %v365 = vld [vmem:[%s229 + $0x198] sm:$0xf]
      %v366 = vld [vmem:[%s229 + $0x19c] sm:$0xf]
      %v367 = vld [vmem:[%s229 + $0x1a0] sm:$0xf]
      %v368 = vld [vmem:[%s229 + $0x1a4] sm:$0xf]
      %v369 = vld [vmem:[%s229 + $0x1a8] sm:$0xf]
      %v370 = vld [vmem:[%s229 + $0x1ac] sm:$0xf]
      %v371 = vld [vmem:[%s229 + $0x1b0] sm:$0xf]
      %v372 = vld [vmem:[%s229 + $0x1b4] sm:$0xf]
      %v373 = vld [vmem:[%s229 + $0x1b8] sm:$0xf]
      %v374 = vld [vmem:[%s229 + $0x1bc] sm:$0xf]
      %v375 = vld [vmem:[%s229 + $0x1c0] sm:$0xf]
      %v376 = vld [vmem:[%s229 + $0x1c4] sm:$0xf]
      %v377 = vld [vmem:[%s229 + $0x1c8] sm:$0xf]
      %v378 = vld [vmem:[%s229 + $0x1cc] sm:$0xf]
      %v379 = vld [vmem:[%s229 + $0x1d0] sm:$0xf]
      %v380 = vld [vmem:[%s229 + $0x1d4] sm:$0xf]
      %v381 = vld [vmem:[%s229 + $0x1d8] sm:$0xf]
      %v382 = vld [vmem:[%s229 + $0x1dc] sm:$0xf]
      %v383 = vld [vmem:[%s229 + $0x1e0] sm:$0xf]
      %v384 = vld [vmem:[%s229 + $0x1e4] sm:$0xf]
      %v385 = vld [vmem:[%s229 + $0x1e8] sm:$0xf]
      %v386 = vld [vmem:[%s229 + $0x1ec] sm:$0xf]
      %v387 = vld [vmem:[%s229 + $0x1f0] sm:$0xf]
      %v388 = vld [vmem:[%s229 + $0x1f4] sm:$0xf]
      %v389 = vld [vmem:[%s229 + $0x1f8] sm:$0xf]
      %v390 = vld [vmem:[%s229 + $0x1fc] sm:$0xf]
      %v391 = vld [vmem:[%s229 + $0x200] sm:$0xf]
      %v392 = vld [vmem:[%s229 + $0x204] sm:$0xf]
      %v393 = vld [vmem:[%s229 + $0x208] sm:$0xf]
      %v394 = vld [vmem:[%s229 + $0x20c] sm:$0xf]
      %v395 = vld [vmem:[%s229 + $0x210] sm:$0xf]
      %v396 = vld [vmem:[%s229 + $0x214] sm:$0xf]
      %v397 = vld [vmem:[%s229 + $0x218] sm:$0xf]
      %v398 = vld [vmem:[%s229 + $0x21c] sm:$0xf]
      %v399 = vld [vmem:[%s229 + $0x220] sm:$0xf]
      %v400 = vld [vmem:[%s229 + $0x224] sm:$0xf]
      %v401 = vld [vmem:[%s229 + $0x228] sm:$0xf]
      %v402 = vld [vmem:[%s229 + $0x22c] sm:$0xf]
      %v403 = vld [vmem:[%s229 + $0x230] sm:$0xf]
      %v404 = vld [vmem:[%s229 + $0x234] sm:$0xf]
      %v405 = vld [vmem:[%s229 + $0x238] sm:$0xf]
      %v406 = vld [vmem:[%s229 + $0x23c] sm:$0xf]
      %v407 = vld [vmem:[%s229 + $0x240] sm:$0xf]
      %v408 = vld [vmem:[%s229 + $0x244] sm:$0xf]
      %v409 = vld [vmem:[%s229 + $0x248] sm:$0xf]
      %v410 = vld [vmem:[%s229 + $0x24c] sm:$0xf]
      %v411 = vld [vmem:[%s229 + $0x250] sm:$0xf]
      %v412 = vld [vmem:[%s229 + $0x254] sm:$0xf]
      %v413 = vld [vmem:[%s229 + $0x258] sm:$0xf]
      %v414 = vld [vmem:[%s229 + $0x25c] sm:$0xf]
      %v415 = vld [vmem:[%s229 + $0x260] sm:$0xf]
      %v416 = vld [vmem:[%s229 + $0x264] sm:$0xf]
      %v417 = vld [vmem:[%s229 + $0x268] sm:$0xf]
      %v418 = vld [vmem:[%s229 + $0x26c] sm:$0xf]
      %v419 = vld [vmem:[%s229 + $0x270] sm:$0xf]
      %v420 = vld [vmem:[%s229 + $0x274] sm:$0xf]
      %v421 = vld [vmem:[%s229 + $0x278] sm:$0xf]
      %v422 = vld [vmem:[%s229 + $0x27c] sm:$0xf]
      %v423 = vld [vmem:[%s229 + $0x280] sm:$0xf]
      %v424 = vld [vmem:[%s229 + $0x284] sm:$0xf]
      %v425 = vld [vmem:[%s229 + $0x288] sm:$0xf]
      %v426 = vld [vmem:[%s229 + $0x28c] sm:$0xf]
      %v427 = vld [vmem:[%s229 + $0x290] sm:$0xf]
      %v428 = vld [vmem:[%s229 + $0x294] sm:$0xf]
      %v429 = vld [vmem:[%s229 + $0x298] sm:$0xf]
      %v430 = vld [vmem:[%s229 + $0x29c] sm:$0xf]
      %v431 = vld [vmem:[%s229 + $0x2a0] sm:$0xf]
      %v432 = vld [vmem:[%s229 + $0x2a4] sm:$0xf]
      %v433 = vld [vmem:[%s229 + $0x2a8] sm:$0xf]
      %v434 = vld [vmem:[%s229 + $0x2ac] sm:$0xf]
      %v435 = vld [vmem:[%s229 + $0x2b0] sm:$0xf]
      %v436 = vld [vmem:[%s229 + $0x2b4] sm:$0xf]
      %v437 = vld [vmem:[%s229 + $0x2b8] sm:$0xf]
      %v438 = vld [vmem:[%s229 + $0x2bc] sm:$0xf]
      %v439 = vld [vmem:[%s229 + $0x2c0] sm:$0xf]
      %v440 = vld [vmem:[%s229 + $0x2c4] sm:$0xf]
      %v441 = vld [vmem:[%s229 + $0x2c8] sm:$0xf]
      %v442 = vld [vmem:[%s229 + $0x2cc] sm:$0xf]
      %v443 = vld [vmem:[%s229 + $0x2d0] sm:$0xf]
      %v444 = vld [vmem:[%s229 + $0x2d4] sm:$0xf]
      %v445 = vld [vmem:[%s229 + $0x2d8] sm:$0xf]
      %v446 = vld [vmem:[%s229 + $0x2dc] sm:$0xf]
      %v447 = vld [vmem:[%s229 + $0x2e0] sm:$0xf]
      %v448 = vld [vmem:[%s229 + $0x2e4] sm:$0xf]
      %v449 = vld [vmem:[%s229 + $0x2e8] sm:$0xf]
      %v450 = vld [vmem:[%s229 + $0x2ec] sm:$0xf]
      %v451 = vld [vmem:[%s229 + $0x2f0] sm:$0xf]
      %v452 = vld [vmem:[%s229 + $0x2f4] sm:$0xf]
      %v453 = vld [vmem:[%s229 + $0x2f8] sm:$0xf]
      %v454 = vld [vmem:[%s229 + $0x2fc] sm:$0xf]
      %v455 = vld [vmem:[%s229 + $0x300] sm:$0xf]
      %v456 = vld [vmem:[%s229 + $0x304] sm:$0xf]
      %v457 = vld [vmem:[%s229 + $0x308] sm:$0xf]
      %v458 = vld [vmem:[%s229 + $0x30c] sm:$0xf]
      %v459 = vld [vmem:[%s229 + $0x310] sm:$0xf]
      %v460 = vld [vmem:[%s229 + $0x314] sm:$0xf]
      %v461 = vld [vmem:[%s229 + $0x318] sm:$0xf]
      %v462 = vld [vmem:[%s229 + $0x31c] sm:$0xf]
      %v463 = vld [vmem:[%s229 + $0x320] sm:$0xf]
      %v464 = vld [vmem:[%s229 + $0x324] sm:$0xf]
      %v465 = vld [vmem:[%s229 + $0x328] sm:$0xf]
      %v466 = vld [vmem:[%s229 + $0x32c] sm:$0xf]
      %v467 = vld [vmem:[%s229 + $0x330] sm:$0xf]
      %v468 = vld [vmem:[%s229 + $0x334] sm:$0xf]
      %v469 = vld [vmem:[%s229 + $0x338] sm:$0xf]
      %v470 = vld [vmem:[%s229 + $0x33c] sm:$0xf]
      %v471 = vld [vmem:[%s229 + $0x340] sm:$0xf]
      %v472 = vld [vmem:[%s229 + $0x344] sm:$0xf]
      %v473 = vld [vmem:[%s229 + $0x348] sm:$0xf]
      %v474 = vld [vmem:[%s229 + $0x34c] sm:$0xf]
      %v475 = vld [vmem:[%s229 + $0x350] sm:$0xf]
      %v476 = vld [vmem:[%s229 + $0x354] sm:$0xf]
      %v477 = vld [vmem:[%s229 + $0x358] sm:$0xf]
      %v478 = vld [vmem:[%s229 + $0x35c] sm:$0xf]
      %v479 = vld [vmem:[%s229 + $0x360] sm:$0xf]
      %v480 = vld [vmem:[%s229 + $0x364] sm:$0xf]
      %v481 = vld [vmem:[%s229 + $0x368] sm:$0xf]
      %v482 = vld [vmem:[%s229 + $0x36c] sm:$0xf]
      %v483 = vld [vmem:[%s229 + $0x370] sm:$0xf]
      %v484 = vld [vmem:[%s229 + $0x374] sm:$0xf]
      %v485 = vld [vmem:[%s229 + $0x378] sm:$0xf]
      %v486 = vld [vmem:[%s229 + $0x37c] sm:$0xf]
      %v487 = vld [vmem:[%s229 + $0x380] sm:$0xf]
      %v488 = vld [vmem:[%s229 + $0x384] sm:$0xf]
      %v489 = vld [vmem:[%s229 + $0x388] sm:$0xf]
      %v490 = vld [vmem:[%s229 + $0x38c] sm:$0xf]
      %v491 = vld [vmem:[%s229 + $0x390] sm:$0xf]
      %v492 = vld [vmem:[%s229 + $0x394] sm:$0xf]
      %v493 = vld [vmem:[%s229 + $0x398] sm:$0xf]
      %v494 = vld [vmem:[%s229 + $0x39c] sm:$0xf]
      %v495 = vld [vmem:[%s229 + $0x3a0] sm:$0xf]
      %v496 = vld [vmem:[%s229 + $0x3a4] sm:$0xf]
      %v497 = vld [vmem:[%s229 + $0x3a8] sm:$0xf]
      %v498 = vld [vmem:[%s229 + $0x3ac] sm:$0xf]
      %v499 = vld [vmem:[%s229 + $0x3b0] sm:$0xf]
      %v500 = vld [vmem:[%s229 + $0x3b4] sm:$0xf]
      %v501 = vld [vmem:[%s229 + $0x3b8] sm:$0xf]
      %v502 = vld [vmem:[%s229 + $0x3bc] sm:$0xf]
      %v503 = vld [vmem:[%s229 + $0x3c0] sm:$0xf]
      %v504 = vld [vmem:[%s229 + $0x3c4] sm:$0xf]
      %v505 = vld [vmem:[%s229 + $0x3c8] sm:$0xf]
      %v506 = vld [vmem:[%s229 + $0x3cc] sm:$0xf]
      %v507 = vld [vmem:[%s229 + $0x3d0] sm:$0xf]
      %v508 = vld [vmem:[%s229 + $0x3d4] sm:$0xf]
      %v509 = vld [vmem:[%s229 + $0x3d8] sm:$0xf]
      %v510 = vld [vmem:[%s229 + $0x3dc] sm:$0xf]
      %v511 = vld [vmem:[%s229 + $0x3e0] sm:$0xf]
      %v512 = vld [vmem:[%s229 + $0x3e4] sm:$0xf]
      %v513 = vld [vmem:[%s229 + $0x3e8] sm:$0xf]
      %v514 = vld [vmem:[%s229 + $0x3ec] sm:$0xf]
      %v515 = vld [vmem:[%s229 + $0x3f0] sm:$0xf]
      %v516 = vld [vmem:[%s229 + $0x3f4] sm:$0xf]
      %v517 = vld [vmem:[%s229 + $0x3f8] sm:$0xf]
      %v518 = vld [vmem:[%s229 + $0x3fc] sm:$0xf]
      %v519 = vld [vmem:[%s2] sm:$0x1]
      %v521 = vlaneseq
      %v522 = vshrl.u32 %v521, 7
      %v523 = vsub.s32 0, %v522
      %v524 = vrot.slane %v519, %v523
      %v558 = vunpack.c.l.b16 %v231
      %v559 = vunpack.c.h.b16 %v231
      %v560 = vunpack.c.l.b16 %v232
      %v561 = vunpack.c.h.b16 %v232
      %v562 = vunpack.c.l.b16 %v233
      %v563 = vunpack.c.h.b16 %v233
      %v564 = vunpack.c.l.b16 %v234
      %v565 = vunpack.c.h.b16 %v234
      %v566 = vunpack.c.l.b16 %v235
      %v567 = vunpack.c.h.b16 %v235
      %v568 = vunpack.c.l.b16 %v236
      %v569 = vunpack.c.h.b16 %v236
      %v570 = vunpack.c.l.b16 %v237
      %v571 = vunpack.c.h.b16 %v237
      %v572 = vunpack.c.l.b16 %v238
      %v573 = vunpack.c.h.b16 %v238
      %v574 = vunpack.c.l.b16 %v239
      %v575 = vunpack.c.h.b16 %v239
      %v576 = vunpack.c.l.b16 %v240
      %v577 = vunpack.c.h.b16 %v240
      %v578 = vunpack.c.l.b16 %v241
      %v579 = vunpack.c.h.b16 %v241
      %v580 = vunpack.c.l.b16 %v242
      %v581 = vunpack.c.h.b16 %v242
      %v582 = vunpack.c.l.b16 %v243
      %v583 = vunpack.c.h.b16 %v243
      %v584 = vunpack.c.l.b16 %v244
      %v585 = vunpack.c.h.b16 %v244
      %v586 = vunpack.c.l.b16 %v245
      %v587 = vunpack.c.h.b16 %v245
      %v588 = vunpack.c.l.b16 %v246
      %v589 = vunpack.c.h.b16 %v246
      %v590 = vunpack.c.l.b16 %v247
      %v591 = vunpack.c.h.b16 %v247
      %v592 = vunpack.c.l.b16 %v248
      %v593 = vunpack.c.h.b16 %v248
      %v594 = vunpack.c.l.b16 %v249
      %v595 = vunpack.c.h.b16 %v249
      %v596 = vunpack.c.l.b16 %v250
      %v597 = vunpack.c.h.b16 %v250
      %v598 = vunpack.c.l.b16 %v251
      %v599 = vunpack.c.h.b16 %v251
      %v600 = vunpack.c.l.b16 %v252
      %v601 = vunpack.c.h.b16 %v252
      %v602 = vunpack.c.l.b16 %v253
      %v603 = vunpack.c.h.b16 %v253
      %v604 = vunpack.c.l.b16 %v254
      %v605 = vunpack.c.h.b16 %v254
      %v606 = vunpack.c.l.b16 %v255
      %v607 = vunpack.c.h.b16 %v255
      %v608 = vunpack.c.l.b16 %v256
      %v609 = vunpack.c.h.b16 %v256
      %v610 = vunpack.c.l.b16 %v257
      %v611 = vunpack.c.h.b16 %v257
      %v612 = vunpack.c.l.b16 %v258
      %v613 = vunpack.c.h.b16 %v258
      %v614 = vunpack.c.l.b16 %v259
      %v615 = vunpack.c.h.b16 %v259
      %v616 = vunpack.c.l.b16 %v260
      %v617 = vunpack.c.h.b16 %v260
      %v618 = vunpack.c.l.b16 %v261
      %v619 = vunpack.c.h.b16 %v261
      %v620 = vunpack.c.l.b16 %v262
      %v621 = vunpack.c.h.b16 %v262
      %v622 = vpack.c.b16 %v574, %v558
      %v623 = vpack.c.b16 %v575, %v559
      %v624 = vpack.c.b16 %v576, %v560
      %v625 = vpack.c.b16 %v577, %v561
      %v626 = vpack.c.b16 %v578, %v562
      %v627 = vpack.c.b16 %v579, %v563
      %v628 = vpack.c.b16 %v580, %v564
      %v629 = vpack.c.b16 %v581, %v565
      %v630 = vpack.c.b16 %v582, %v566
      %v631 = vpack.c.b16 %v583, %v567
      %v632 = vpack.c.b16 %v584, %v568
      %v633 = vpack.c.b16 %v585, %v569
      %v634 = vpack.c.b16 %v586, %v570
      %v635 = vpack.c.b16 %v587, %v571
      %v636 = vpack.c.b16 %v588, %v572
      %v637 = vpack.c.b16 %v589, %v573
      %v638 = vpack.c.b16 %v606, %v590
      %v639 = vpack.c.b16 %v607, %v591
      %v640 = vpack.c.b16 %v608, %v592
      %v641 = vpack.c.b16 %v609, %v593
      %v642 = vpack.c.b16 %v610, %v594
      %v643 = vpack.c.b16 %v611, %v595
      %v644 = vpack.c.b16 %v612, %v596
      %v645 = vpack.c.b16 %v613, %v597
      %v646 = vpack.c.b16 %v614, %v598
      %v647 = vpack.c.b16 %v615, %v599
      %v648 = vpack.c.b16 %v616, %v600
      %v649 = vpack.c.b16 %v617, %v601
      %v650 = vpack.c.b16 %v618, %v602
      %v651 = vpack.c.b16 %v619, %v603
      %v652 = vpack.c.b16 %v620, %v604
      %v653 = vpack.c.b16 %v621, %v605
      %v942 = vunpack.c.l.b16 %v263
      %v943 = vunpack.c.l.b16 %v264
      %v944 = vunpack.c.l.b16 %v265
      %v945 = vunpack.c.l.b16 %v266
      %v946 = vunpack.c.l.b16 %v267
      %v947 = vunpack.c.l.b16 %v268
      %v948 = vunpack.c.l.b16 %v269
      %v949 = vunpack.c.l.b16 %v270
      %v950 = vunpack.c.l.b16 %v271
      %v951 = vunpack.c.l.b16 %v272
      %v952 = vunpack.c.l.b16 %v273
      %v953 = vunpack.c.l.b16 %v274
      %v954 = vunpack.c.l.b16 %v275
      %v955 = vunpack.c.l.b16 %v276
      %v956 = vunpack.c.l.b16 %v277
      %v957 = vunpack.c.l.b16 %v278
      %v958 = vunpack.c.l.b16 %v279
      %v959 = vunpack.c.l.b16 %v280
      %v960 = vunpack.c.l.b16 %v281
      %v961 = vunpack.c.l.b16 %v282
      %v962 = vunpack.c.l.b16 %v283
      %v963 = vunpack.c.l.b16 %v284
      %v964 = vunpack.c.l.b16 %v285
      %v965 = vunpack.c.l.b16 %v286
      %v966 = vunpack.c.l.b16 %v287
      %v967 = vunpack.c.l.b16 %v288
      %v968 = vunpack.c.l.b16 %v289
      %v969 = vunpack.c.l.b16 %v290
      %v970 = vunpack.c.l.b16 %v291
      %v971 = vunpack.c.l.b16 %v292
      %v972 = vunpack.c.l.b16 %v293
      %v973 = vunpack.c.l.b16 %v294
      %v974 = vunpack.c.l.b16 %v295
      %v975 = vunpack.c.l.b16 %v296
      %v976 = vunpack.c.l.b16 %v297
      %v977 = vunpack.c.l.b16 %v298
      %v978 = vunpack.c.l.b16 %v299
      %v979 = vunpack.c.l.b16 %v300
      %v980 = vunpack.c.l.b16 %v301
      %v981 = vunpack.c.l.b16 %v302
      %v982 = vunpack.c.l.b16 %v303
      %v983 = vunpack.c.l.b16 %v304
      %v984 = vunpack.c.l.b16 %v305
      %v985 = vunpack.c.l.b16 %v306
      %v986 = vunpack.c.l.b16 %v307
      %v987 = vunpack.c.l.b16 %v308
      %v988 = vunpack.c.l.b16 %v309
      %v989 = vunpack.c.l.b16 %v310
      %v990 = vunpack.c.l.b16 %v311
      %v991 = vunpack.c.l.b16 %v312
      %v992 = vunpack.c.l.b16 %v313
      %v993 = vunpack.c.l.b16 %v314
      %v994 = vunpack.c.l.b16 %v315
      %v995 = vunpack.c.l.b16 %v316
      %v996 = vunpack.c.l.b16 %v317
      %v997 = vunpack.c.l.b16 %v318
      %v998 = vunpack.c.l.b16 %v319
      %v999 = vunpack.c.l.b16 %v320
      %v1000 = vunpack.c.l.b16 %v321
      %v1001 = vunpack.c.l.b16 %v322
      %v1002 = vunpack.c.l.b16 %v323
      %v1003 = vunpack.c.l.b16 %v324
      %v1004 = vunpack.c.l.b16 %v325
      %v1005 = vunpack.c.l.b16 %v326
      %v1006 = vunpack.c.l.b16 %v327
      %v1007 = vunpack.c.l.b16 %v328
      %v1008 = vunpack.c.l.b16 %v329
      %v1009 = vunpack.c.l.b16 %v330
      %v1010 = vunpack.c.l.b16 %v331
      %v1011 = vunpack.c.l.b16 %v332
      %v1012 = vunpack.c.l.b16 %v333
      %v1013 = vunpack.c.l.b16 %v334
      %v1014 = vunpack.c.l.b16 %v335
      %v1015 = vunpack.c.l.b16 %v336
      %v1016 = vunpack.c.l.b16 %v337
      %v1017 = vunpack.c.l.b16 %v338
      %v1018 = vunpack.c.l.b16 %v339
      %v1019 = vunpack.c.l.b16 %v340
      %v1020 = vunpack.c.l.b16 %v341
      %v1021 = vunpack.c.l.b16 %v342
      %v1022 = vunpack.c.l.b16 %v343
      %v1023 = vunpack.c.l.b16 %v344
      %v1024 = vunpack.c.l.b16 %v345
      %v1025 = vunpack.c.l.b16 %v346
      %v1026 = vunpack.c.l.b16 %v347
      %v1027 = vunpack.c.l.b16 %v348
      %v1028 = vunpack.c.l.b16 %v349
      %v1029 = vunpack.c.l.b16 %v350
      %v1030 = vunpack.c.l.b16 %v351
      %v1031 = vunpack.c.l.b16 %v352
      %v1032 = vunpack.c.l.b16 %v353
      %v1033 = vunpack.c.l.b16 %v354
      %v1034 = vunpack.c.l.b16 %v355
      %v1035 = vunpack.c.l.b16 %v356
      %v1036 = vunpack.c.l.b16 %v357
      %v1037 = vunpack.c.l.b16 %v358
      %v1038 = vunpack.c.l.b16 %v359
      %v1039 = vunpack.c.l.b16 %v360
      %v1040 = vunpack.c.l.b16 %v361
      %v1041 = vunpack.c.l.b16 %v362
      %v1042 = vunpack.c.l.b16 %v363
      %v1043 = vunpack.c.l.b16 %v364
      %v1044 = vunpack.c.l.b16 %v365
      %v1045 = vunpack.c.l.b16 %v366
      %v1046 = vunpack.c.l.b16 %v367
      %v1047 = vunpack.c.l.b16 %v368
      %v1048 = vunpack.c.l.b16 %v369
      %v1049 = vunpack.c.l.b16 %v370
      %v1050 = vunpack.c.l.b16 %v371
      %v1051 = vunpack.c.l.b16 %v372
      %v1052 = vunpack.c.l.b16 %v373
      %v1053 = vunpack.c.l.b16 %v374
      %v1054 = vunpack.c.l.b16 %v375
      %v1055 = vunpack.c.l.b16 %v376
      %v1056 = vunpack.c.l.b16 %v377
      %v1057 = vunpack.c.l.b16 %v378
      %v1058 = vunpack.c.l.b16 %v379
      %v1059 = vunpack.c.l.b16 %v380
      %v1060 = vunpack.c.l.b16 %v381
      %v1061 = vunpack.c.l.b16 %v382
      %v1062 = vunpack.c.l.b16 %v383
      %v1063 = vunpack.c.l.b16 %v384
      %v1064 = vunpack.c.l.b16 %v385
      %v1065 = vunpack.c.l.b16 %v386
      %v1066 = vunpack.c.l.b16 %v387
      %v1067 = vunpack.c.l.b16 %v388
      %v1068 = vunpack.c.l.b16 %v389
      %v1069 = vunpack.c.l.b16 %v390
      %v1070 = vunpack.c.l.b16 %v391
      %v1071 = vunpack.c.l.b16 %v392
      %v1072 = vunpack.c.l.b16 %v393
      %v1073 = vunpack.c.l.b16 %v394
      %v1074 = vunpack.c.l.b16 %v395
      %v1075 = vunpack.c.l.b16 %v396
      %v1076 = vunpack.c.l.b16 %v397
      %v1077 = vunpack.c.l.b16 %v398
      %v1078 = vunpack.c.l.b16 %v399
      %v1079 = vunpack.c.l.b16 %v400
      %v1080 = vunpack.c.l.b16 %v401
      %v1081 = vunpack.c.l.b16 %v402
      %v1082 = vunpack.c.l.b16 %v403
      %v1083 = vunpack.c.l.b16 %v404
      %v1084 = vunpack.c.l.b16 %v405
      %v1085 = vunpack.c.l.b16 %v406
      %v1086 = vunpack.c.l.b16 %v407
      %v1087 = vunpack.c.l.b16 %v408
      %v1088 = vunpack.c.l.b16 %v409
      %v1089 = vunpack.c.l.b16 %v410
      %v1090 = vunpack.c.l.b16 %v411
      %v1091 = vunpack.c.l.b16 %v412
      %v1092 = vunpack.c.l.b16 %v413
      %v1093 = vunpack.c.l.b16 %v414
      %v1094 = vunpack.c.l.b16 %v415
      %v1095 = vunpack.c.l.b16 %v416
      %v1096 = vunpack.c.l.b16 %v417
      %v1097 = vunpack.c.l.b16 %v418
      %v1098 = vunpack.c.l.b16 %v419
      %v1099 = vunpack.c.l.b16 %v420
      %v1100 = vunpack.c.l.b16 %v421
      %v1101 = vunpack.c.l.b16 %v422
      %v1102 = vunpack.c.l.b16 %v423
      %v1103 = vunpack.c.l.b16 %v424
      %v1104 = vunpack.c.l.b16 %v425
      %v1105 = vunpack.c.l.b16 %v426
      %v1106 = vunpack.c.l.b16 %v427
      %v1107 = vunpack.c.l.b16 %v428
      %v1108 = vunpack.c.l.b16 %v429
      %v1109 = vunpack.c.l.b16 %v430
      %v1110 = vunpack.c.l.b16 %v431
      %v1111 = vunpack.c.l.b16 %v432
      %v1112 = vunpack.c.l.b16 %v433
      %v1113 = vunpack.c.l.b16 %v434
      %v1114 = vunpack.c.l.b16 %v435
      %v1115 = vunpack.c.l.b16 %v436
      %v1116 = vunpack.c.l.b16 %v437
      %v1117 = vunpack.c.l.b16 %v438
      %v1118 = vunpack.c.l.b16 %v439
      %v1119 = vunpack.c.l.b16 %v440
      %v1120 = vunpack.c.l.b16 %v441
      %v1121 = vunpack.c.l.b16 %v442
      %v1122 = vunpack.c.l.b16 %v443
      %v1123 = vunpack.c.l.b16 %v444
      %v1124 = vunpack.c.l.b16 %v445
      %v1125 = vunpack.c.l.b16 %v446
      %v1126 = vunpack.c.l.b16 %v447
      %v1127 = vunpack.c.l.b16 %v448
      %v1128 = vunpack.c.l.b16 %v449
      %v1129 = vunpack.c.l.b16 %v450
      %v1130 = vunpack.c.l.b16 %v451
      %v1131 = vunpack.c.l.b16 %v452
      %v1132 = vunpack.c.l.b16 %v453
      %v1133 = vunpack.c.l.b16 %v454
      %v1134 = vunpack.c.l.b16 %v455
      %v1135 = vunpack.c.l.b16 %v456
      %v1136 = vunpack.c.l.b16 %v457
      %v1137 = vunpack.c.l.b16 %v458
      %v1138 = vunpack.c.l.b16 %v459
      %v1139 = vunpack.c.l.b16 %v460
      %v1140 = vunpack.c.l.b16 %v461
      %v1141 = vunpack.c.l.b16 %v462
      %v1142 = vunpack.c.l.b16 %v463
      %v1143 = vunpack.c.l.b16 %v464
      %v1144 = vunpack.c.l.b16 %v465
      %v1145 = vunpack.c.l.b16 %v466
      %v1146 = vunpack.c.l.b16 %v467
      %v1147 = vunpack.c.l.b16 %v468
      %v1148 = vunpack.c.l.b16 %v469
      %v1149 = vunpack.c.l.b16 %v470
      %v1150 = vunpack.c.l.b16 %v471
      %v1151 = vunpack.c.l.b16 %v472
      %v1152 = vunpack.c.l.b16 %v473
      %v1153 = vunpack.c.l.b16 %v474
      %v1154 = vunpack.c.l.b16 %v475
      %v1155 = vunpack.c.l.b16 %v476
      %v1156 = vunpack.c.l.b16 %v477
      %v1157 = vunpack.c.l.b16 %v478
      %v1158 = vunpack.c.l.b16 %v479
      %v1159 = vunpack.c.l.b16 %v480
      %v1160 = vunpack.c.l.b16 %v481
      %v1161 = vunpack.c.l.b16 %v482
      %v1162 = vunpack.c.l.b16 %v483
      %v1163 = vunpack.c.l.b16 %v484
      %v1164 = vunpack.c.l.b16 %v485
      %v1165 = vunpack.c.l.b16 %v486
      %v1166 = vunpack.c.l.b16 %v487
      %v1167 = vunpack.c.l.b16 %v488
      %v1168 = vunpack.c.l.b16 %v489
      %v1169 = vunpack.c.l.b16 %v490
      %v1170 = vunpack.c.l.b16 %v491
      %v1171 = vunpack.c.l.b16 %v492
      %v1172 = vunpack.c.l.b16 %v493
      %v1173 = vunpack.c.l.b16 %v494
      %v1174 = vunpack.c.l.b16 %v495
      %v1175 = vunpack.c.l.b16 %v496
      %v1176 = vunpack.c.l.b16 %v497
      %v1177 = vunpack.c.l.b16 %v498
      %v1178 = vunpack.c.l.b16 %v499
      %v1179 = vunpack.c.l.b16 %v500
      %v1180 = vunpack.c.l.b16 %v501
      %v1181 = vunpack.c.l.b16 %v502
      %v1182 = vunpack.c.l.b16 %v503
      %v1183 = vunpack.c.l.b16 %v504
      %v1184 = vunpack.c.l.b16 %v505
      %v1185 = vunpack.c.l.b16 %v506
      %v1186 = vunpack.c.l.b16 %v507
      %v1187 = vunpack.c.l.b16 %v508
      %v1188 = vunpack.c.l.b16 %v509
      %v1189 = vunpack.c.l.b16 %v510
      %v1190 = vunpack.c.l.b16 %v511
      %v1191 = vunpack.c.l.b16 %v512
      %v1192 = vunpack.c.l.b16 %v513
      %v1193 = vunpack.c.l.b16 %v514
      %v1194 = vunpack.c.l.b16 %v515
      %v1195 = vunpack.c.l.b16 %v516
      %v1196 = vunpack.c.l.b16 %v517
      %v1197 = vunpack.c.l.b16 %v518
      %v1198 = vpack.c.b16 %v943, %v942
      %v1199 = vpack.c.b16 %v945, %v944
      %v1200 = vpack.c.b16 %v947, %v946
      %v1201 = vpack.c.b16 %v949, %v948
      %v1202 = vpack.c.b16 %v951, %v950
      %v1203 = vpack.c.b16 %v953, %v952
      %v1204 = vpack.c.b16 %v955, %v954
      %v1205 = vpack.c.b16 %v957, %v956
      %v1206 = vpack.c.b16 %v959, %v958
      %v1207 = vpack.c.b16 %v961, %v960
      %v1208 = vpack.c.b16 %v963, %v962
      %v1209 = vpack.c.b16 %v965, %v964
      %v1210 = vpack.c.b16 %v967, %v966
      %v1211 = vpack.c.b16 %v969, %v968
      %v1212 = vpack.c.b16 %v971, %v970
      %v1213 = vpack.c.b16 %v973, %v972
      %v1214 = vpack.c.b16 %v975, %v974
      %v1215 = vpack.c.b16 %v977, %v976
      %v1216 = vpack.c.b16 %v979, %v978
      %v1217 = vpack.c.b16 %v981, %v980
      %v1218 = vpack.c.b16 %v983, %v982
      %v1219 = vpack.c.b16 %v985, %v984
      %v1220 = vpack.c.b16 %v987, %v986
      %v1221 = vpack.c.b16 %v989, %v988
      %v1222 = vpack.c.b16 %v991, %v990
      %v1223 = vpack.c.b16 %v993, %v992
      %v1224 = vpack.c.b16 %v995, %v994
      %v1225 = vpack.c.b16 %v997, %v996
      %v1226 = vpack.c.b16 %v999, %v998
      %v1227 = vpack.c.b16 %v1001, %v1000
      %v1228 = vpack.c.b16 %v1003, %v1002
      %v1229 = vpack.c.b16 %v1005, %v1004
      %v1230 = vpack.c.b16 %v1007, %v1006
      %v1231 = vpack.c.b16 %v1009, %v1008
      %v1232 = vpack.c.b16 %v1011, %v1010
      %v1233 = vpack.c.b16 %v1013, %v1012
      %v1234 = vpack.c.b16 %v1015, %v1014
      %v1235 = vpack.c.b16 %v1017, %v1016
      %v1236 = vpack.c.b16 %v1019, %v1018
      %v1237 = vpack.c.b16 %v1021, %v1020
      %v1238 = vpack.c.b16 %v1023, %v1022
      %v1239 = vpack.c.b16 %v1025, %v1024
      %v1240 = vpack.c.b16 %v1027, %v1026
      %v1241 = vpack.c.b16 %v1029, %v1028
      %v1242 = vpack.c.b16 %v1031, %v1030
      %v1243 = vpack.c.b16 %v1033, %v1032
      %v1244 = vpack.c.b16 %v1035, %v1034
      %v1245 = vpack.c.b16 %v1037, %v1036
      %v1246 = vpack.c.b16 %v1039, %v1038
      %v1247 = vpack.c.b16 %v1041, %v1040
      %v1248 = vpack.c.b16 %v1043, %v1042
      %v1249 = vpack.c.b16 %v1045, %v1044
      %v1250 = vpack.c.b16 %v1047, %v1046
      %v1251 = vpack.c.b16 %v1049, %v1048
      %v1252 = vpack.c.b16 %v1051, %v1050
      %v1253 = vpack.c.b16 %v1053, %v1052
      %v1254 = vpack.c.b16 %v1055, %v1054
      %v1255 = vpack.c.b16 %v1057, %v1056
      %v1256 = vpack.c.b16 %v1059, %v1058
      %v1257 = vpack.c.b16 %v1061, %v1060
      %v1258 = vpack.c.b16 %v1063, %v1062
      %v1259 = vpack.c.b16 %v1065, %v1064
      %v1260 = vpack.c.b16 %v1067, %v1066
      %v1261 = vpack.c.b16 %v1069, %v1068
      %v1262 = vpack.c.b16 %v1071, %v1070
      %v1263 = vpack.c.b16 %v1073, %v1072
      %v1264 = vpack.c.b16 %v1075, %v1074
      %v1265 = vpack.c.b16 %v1077, %v1076
      %v1266 = vpack.c.b16 %v1079, %v1078
      %v1267 = vpack.c.b16 %v1081, %v1080
      %v1268 = vpack.c.b16 %v1083, %v1082
      %v1269 = vpack.c.b16 %v1085, %v1084
      %v1270 = vpack.c.b16 %v1087, %v1086
      %v1271 = vpack.c.b16 %v1089, %v1088
      %v1272 = vpack.c.b16 %v1091, %v1090
      %v1273 = vpack.c.b16 %v1093, %v1092
      %v1274 = vpack.c.b16 %v1095, %v1094
      %v1275 = vpack.c.b16 %v1097, %v1096
      %v1276 = vpack.c.b16 %v1099, %v1098
      %v1277 = vpack.c.b16 %v1101, %v1100
      %v1278 = vpack.c.b16 %v1103, %v1102
      %v1279 = vpack.c.b16 %v1105, %v1104
      %v1280 = vpack.c.b16 %v1107, %v1106
      %v1281 = vpack.c.b16 %v1109, %v1108
      %v1282 = vpack.c.b16 %v1111, %v1110
      %v1283 = vpack.c.b16 %v1113, %v1112
      %v1284 = vpack.c.b16 %v1115, %v1114
      %v1285 = vpack.c.b16 %v1117, %v1116
      %v1286 = vpack.c.b16 %v1119, %v1118
      %v1287 = vpack.c.b16 %v1121, %v1120
      %v1288 = vpack.c.b16 %v1123, %v1122
      %v1289 = vpack.c.b16 %v1125, %v1124
      %v1290 = vpack.c.b16 %v1127, %v1126
      %v1291 = vpack.c.b16 %v1129, %v1128
      %v1292 = vpack.c.b16 %v1131, %v1130
      %v1293 = vpack.c.b16 %v1133, %v1132
      %v1294 = vpack.c.b16 %v1135, %v1134
      %v1295 = vpack.c.b16 %v1137, %v1136
      %v1296 = vpack.c.b16 %v1139, %v1138
      %v1297 = vpack.c.b16 %v1141, %v1140
      %v1298 = vpack.c.b16 %v1143, %v1142
      %v1299 = vpack.c.b16 %v1145, %v1144
      %v1300 = vpack.c.b16 %v1147, %v1146
      %v1301 = vpack.c.b16 %v1149, %v1148
      %v1302 = vpack.c.b16 %v1151, %v1150
      %v1303 = vpack.c.b16 %v1153, %v1152
      %v1304 = vpack.c.b16 %v1155, %v1154
      %v1305 = vpack.c.b16 %v1157, %v1156
      %v1306 = vpack.c.b16 %v1159, %v1158
      %v1307 = vpack.c.b16 %v1161, %v1160
      %v1308 = vpack.c.b16 %v1163, %v1162
      %v1309 = vpack.c.b16 %v1165, %v1164
      %v1310 = vpack.c.b16 %v1167, %v1166
      %v1311 = vpack.c.b16 %v1169, %v1168
      %v1312 = vpack.c.b16 %v1171, %v1170
      %v1313 = vpack.c.b16 %v1173, %v1172
      %v1314 = vpack.c.b16 %v1175, %v1174
      %v1315 = vpack.c.b16 %v1177, %v1176
      %v1316 = vpack.c.b16 %v1179, %v1178
      %v1317 = vpack.c.b16 %v1181, %v1180
      %v1318 = vpack.c.b16 %v1183, %v1182
      %v1319 = vpack.c.b16 %v1185, %v1184
      %v1320 = vpack.c.b16 %v1187, %v1186
      %v1321 = vpack.c.b16 %v1189, %v1188
      %v1322 = vpack.c.b16 %v1191, %v1190
      %v1323 = vpack.c.b16 %v1193, %v1192
      %v1324 = vpack.c.b16 %v1195, %v1194
      %v1325 = vpack.c.b16 %v1197, %v1196
      %1454 = vmatprep.subr.bf16.mxu0 0
      %1455 = vmatpush1.bf16.msra.mxu0 %v1198
      %1456 = vmatprep.subr.bf16.mxu0 0
      %1457 = vmatpush1.bf16.msra.mxu0 %v1199
      %1458 = vmatprep.subr.bf16.mxu0 0
      %1459 = vmatpush1.bf16.msra.mxu0 %v1200
      %1460 = vmatprep.subr.bf16.mxu0 0
      %1461 = vmatpush1.bf16.msra.mxu0 %v1201
      %1462 = vmatprep.subr.bf16.mxu0 0
      %1463 = vmatpush1.bf16.msra.mxu0 %v1202
      %1464 = vmatprep.subr.bf16.mxu0 0
      %1465 = vmatpush1.bf16.msra.mxu0 %v1203
      %1466 = vmatprep.subr.bf16.mxu0 0
      %1467 = vmatpush1.bf16.msra.mxu0 %v1204
      %1468 = vmatprep.subr.bf16.mxu0 0
      %1469 = vmatpush1.bf16.msra.mxu0 %v1205
      %1470 = vmatprep.subr.bf16.mxu0 0
      %1471 = vmatpush1.bf16.msra.mxu0 %v1206
      %1472 = vmatprep.subr.bf16.mxu0 0
      %1473 = vmatpush1.bf16.msra.mxu0 %v1207
      %1474 = vmatprep.subr.bf16.mxu0 0
      %1475 = vmatpush1.bf16.msra.mxu0 %v1208
      %1476 = vmatprep.subr.bf16.mxu0 0
      %1477 = vmatpush1.bf16.msra.mxu0 %v1209
      %1478 = vmatprep.subr.bf16.mxu0 0
      %1479 = vmatpush1.bf16.msra.mxu0 %v1210
      %1480 = vmatprep.subr.bf16.mxu0 0
      %1481 = vmatpush1.bf16.msra.mxu0 %v1211
      %1482 = vmatprep.subr.bf16.mxu0 0
      %1483 = vmatpush1.bf16.msra.mxu0 %v1212
      %1484 = vmatprep.subr.bf16.mxu0 0
      %1485 = vmatpush1.bf16.msra.mxu0 %v1213
      %1486 = vmatprep.mubr.bf16.mxu0 %v623
      %1487 = vmatmul.mubr.bf16.gmra.mrb[0].mxu0 %v622
      %v1488 = vpop.f32.mrb[0].mxu0
      %v1489 = vadd.f32 %v524, %v1488
      %v1490 = vpop.f32.mrb[0].mxu0
      %v1491 = vpop.f32.mrb[0].mxu0
      %v1492 = vadd.f32 %v524, %v1491
      %v1493 = vpop.f32.mrb[0].mxu0
      %1494 = vmatprep.mubr.bf16.mxu0 %v639
      %1495 = vmatmul.mubr.bf16.gmra.mrb[0].mxu0 %v638
      %v1496 = vpop.f32.mrb[0].mxu0
      %v1497 = vadd.f32 %v524, %v1496
      %v1498 = vpop.f32.mrb[0].mxu0
      %v1499 = vpop.f32.mrb[0].mxu0
      %v1500 = vadd.f32 %v524, %v1499
      %v1501 = vpop.f32.mrb[0].mxu0
      %1502 = vdwg.mxu0
      %1503 = vmatprep.subr.bf16.mxu0 0
      %1504 = vmatpush1.bf16.msra.mxu0 %v1214
      %1505 = vmatprep.subr.bf16.mxu0 0
      %1506 = vmatpush1.bf16.msra.mxu0 %v1215
      %1507 = vmatprep.subr.bf16.mxu0 0
      %1508 = vmatpush1.bf16.msra.mxu0 %v1216
      %1509 = vmatprep.subr.bf16.mxu0 0
      %1510 = vmatpush1.bf16.msra.mxu0 %v1217
      %1511 = vmatprep.subr.bf16.mxu0 0
      %1512 = vmatpush1.bf16.msra.mxu0 %v1218
      %1513 = vmatprep.subr.bf16.mxu0 0
      %1514 = vmatpush1.bf16.msra.mxu0 %v1219
      %1515 = vmatprep.subr.bf16.mxu0 0
      %1516 = vmatpush1.bf16.msra.mxu0 %v1220
      %1517 = vmatprep.subr.bf16.mxu0 0
      %1518 = vmatpush1.bf16.msra.mxu0 %v1221
      %1519 = vmatprep.subr.bf16.mxu0 0
      %1520 = vmatpush1.bf16.msra.mxu0 %v1222
      %1521 = vmatprep.subr.bf16.mxu0 0
      %1522 = vmatpush1.bf16.msra.mxu0 %v1223
      %1523 = vmatprep.subr.bf16.mxu0 0
      %1524 = vmatpush1.bf16.msra.mxu0 %v1224
      %1525 = vmatprep.subr.bf16.mxu0 0
      %1526 = vmatpush1.bf16.msra.mxu0 %v1225
      %1527 = vmatprep.subr.bf16.mxu0 0
      %1528 = vmatpush1.bf16.msra.mxu0 %v1226
      %1529 = vmatprep.subr.bf16.mxu0 0
      %1530 = vmatpush1.bf16.msra.mxu0 %v1227
      %1531 = vmatprep.subr.bf16.mxu0 0
      %1532 = vmatpush1.bf16.msra.mxu0 %v1228
      %1533 = vmatprep.subr.bf16.mxu0 0
      %1534 = vmatpush1.bf16.msra.mxu0 %v1229
      %1535 = vmatprep.mubr.bf16.mxu0 %v625
      %1536 = vmatmul.mubr.bf16.gmra.mrb[0].mxu0 %v624
      %v1537 = vpop.f32.mrb[0].mxu0
      %v1538 = vadd.f32 %v1489, %v1537
      %v1539 = vpop.f32.mrb[0].mxu0
      %v1540 = vpop.f32.mrb[0].mxu0
      %v1541 = vadd.f32 %v1492, %v1540
      %v1542 = vpop.f32.mrb[0].mxu0
      %1543 = vmatprep.mubr.bf16.mxu0 %v641
      %1544 = vmatmul.mubr.bf16.gmra.mrb[0].mxu0 %v640
      %v1545 = vpop.f32.mrb[0].mxu0
      %v1546 = vadd.f32 %v1497, %v1545
      %v1547 = vpop.f32.mrb[0].mxu0
      %v1548 = vpop.f32.mrb[0].mxu0
      %v1549 = vadd.f32 %v1500, %v1548
      %v1550 = vpop.f32.mrb[0].mxu0
      %1551 = vdwg.mxu0
      %1552 = vmatprep.subr.bf16.mxu0 0
      %1553 = vmatpush1.bf16.msra.mxu0 %v1230
      %1554 = vmatprep.subr.bf16.mxu0 0
      %1555 = vmatpush1.bf16.msra.mxu0 %v1231
      %1556 = vmatprep.subr.bf16.mxu0 0
      %1557 = vmatpush1.bf16.msra.mxu0 %v1232
      %1558 = vmatprep.subr.bf16.mxu0 0
      %1559 = vmatpush1.bf16.msra.mxu0 %v1233
      %1560 = vmatprep.subr.bf16.mxu0 0
      %1561 = vmatpush1.bf16.msra.mxu0 %v1234
      %1562 = vmatprep.subr.bf16.mxu0 0
      %1563 = vmatpush1.bf16.msra.mxu0 %v1235
      %1564 = vmatprep.subr.bf16.mxu0 0
      %1565 = vmatpush1.bf16.msra.mxu0 %v1236
      %1566 = vmatprep.subr.bf16.mxu0 0
      %1567 = vmatpush1.bf16.msra.mxu0 %v1237
      %1568 = vmatprep.subr.bf16.mxu0 0
      %1569 = vmatpush1.bf16.msra.mxu0 %v1238
      %1570 = vmatprep.subr.bf16.mxu0 0
      %1571 = vmatpush1.bf16.msra.mxu0 %v1239
      %1572 = vmatprep.subr.bf16.mxu0 0
      %1573 = vmatpush1.bf16.msra.mxu0 %v1240
      %1574 = vmatprep.subr.bf16.mxu0 0
      %1575 = vmatpush1.bf16.msra.mxu0 %v1241
      %1576 = vmatprep.subr.bf16.mxu0 0
      %1577 = vmatpush1.bf16.msra.mxu0 %v1242
      %1578 = vmatprep.subr.bf16.mxu0 0
      %1579 = vmatpush1.bf16.msra.mxu0 %v1243
      %1580 = vmatprep.subr.bf16.mxu0 0
      %1581 = vmatpush1.bf16.msra.mxu0 %v1244
      %1582 = vmatprep.subr.bf16.mxu0 0
      %1583 = vmatpush1.bf16.msra.mxu0 %v1245
      %1584 = vmatprep.mubr.bf16.mxu0 %v627
      %1585 = vmatmul.mubr.bf16.gmra.mrb[0].mxu0 %v626
      %v1586 = vpop.f32.mrb[0].mxu0
      %v1587 = vadd.f32 %v1538, %v1586
      %v1588 = vpop.f32.mrb[0].mxu0
      %v1589 = vpop.f32.mrb[0].mxu0
      %v1590 = vadd.f32 %v1541, %v1589
      %v1591 = vpop.f32.mrb[0].mxu0
      %1592 = vmatprep.mubr.bf16.mxu0 %v643
      %1593 = vmatmul.mubr.bf16.gmra.mrb[0].mxu0 %v642
      %v1594 = vpop.f32.mrb[0].mxu0
      %v1595 = vadd.f32 %v1546, %v1594
      %v1596 = vpop.f32.mrb[0].mxu0
      %v1597 = vpop.f32.mrb[0].mxu0
      %v1598 = vadd.f32 %v1549, %v1597
      %v1599 = vpop.f32.mrb[0].mxu0
      %1600 = vdwg.mxu0
      %1601 = vmatprep.subr.bf16.mxu0 0
      %1602 = vmatpush1.bf16.msra.mxu0 %v1246
      %1603 = vmatprep.subr.bf16.mxu0 0
      %1604 = vmatpush1.bf16.msra.mxu0 %v1247
      %1605 = vmatprep.subr.bf16.mxu0 0
      %1606 = vmatpush1.bf16.msra.mxu0 %v1248
      %1607 = vmatprep.subr.bf16.mxu0 0
      %1608 = vmatpush1.bf16.msra.mxu0 %v1249
      %1609 = vmatprep.subr.bf16.mxu0 0
      %1610 = vmatpush1.bf16.msra.mxu0 %v1250
      %1611 = vmatprep.subr.bf16.mxu0 0
      %1612 = vmatpush1.bf16.msra.mxu0 %v1251
      %1613 = vmatprep.subr.bf16.mxu0 0
      %1614 = vmatpush1.bf16.msra.mxu0 %v1252
      %1615 = vmatprep.subr.bf16.mxu0 0
      %1616 = vmatpush1.bf16.msra.mxu0 %v1253
      %1617 = vmatprep.subr.bf16.mxu0 0
      %1618 = vmatpush1.bf16.msra.mxu0 %v1254
      %1619 = vmatprep.subr.bf16.mxu0 0
      %1620 = vmatpush1.bf16.msra.mxu0 %v1255
      %1621 = vmatprep.subr.bf16.mxu0 0
      %1622 = vmatpush1.bf16.msra.mxu0 %v1256
      %1623 = vmatprep.subr.bf16.mxu0 0
      %1624 = vmatpush1.bf16.msra.mxu0 %v1257
      %1625 = vmatprep.subr.bf16.mxu0 0
      %1626 = vmatpush1.bf16.msra.mxu0 %v1258
      %1627 = vmatprep.subr.bf16.mxu0 0
      %1628 = vmatpush1.bf16.msra.mxu0 %v1259
      %1629 = vmatprep.subr.bf16.mxu0 0
      %1630 = vmatpush1.bf16.msra.mxu0 %v1260
      %1631 = vmatprep.subr.bf16.mxu0 0
      %1632 = vmatpush1.bf16.msra.mxu0 %v1261
      %1633 = vmatprep.mubr.bf16.mxu0 %v629
      %1634 = vmatmul.mubr.bf16.gmra.mrb[0].mxu0 %v628
      %v1635 = vpop.f32.mrb[0].mxu0
      %v1636 = vadd.f32 %v1587, %v1635
      %v1637 = vpop.f32.mrb[0].mxu0
      %v1638 = vpop.f32.mrb[0].mxu0
      %v1639 = vadd.f32 %v1590, %v1638
      %v1640 = vpop.f32.mrb[0].mxu0
      %1641 = vmatprep.mubr.bf16.mxu0 %v645
      %1642 = vmatmul.mubr.bf16.gmra.mrb[0].mxu0 %v644
      %v1643 = vpop.f32.mrb[0].mxu0
      %v1644 = vadd.f32 %v1595, %v1643
      %v1645 = vpop.f32.mrb[0].mxu0
      %v1646 = vpop.f32.mrb[0].mxu0
      %v1647 = vadd.f32 %v1598, %v1646
      %v1648 = vpop.f32.mrb[0].mxu0
      %1649 = vdwg.mxu0
      %1650 = vmatprep.subr.bf16.mxu0 0
      %1651 = vmatpush1.bf16.msra.mxu0 %v1262
      %1652 = vmatprep.subr.bf16.mxu0 0
      %1653 = vmatpush1.bf16.msra.mxu0 %v1263
      %1654 = vmatprep.subr.bf16.mxu0 0
      %1655 = vmatpush1.bf16.msra.mxu0 %v1264
      %1656 = vmatprep.subr.bf16.mxu0 0
      %1657 = vmatpush1.bf16.msra.mxu0 %v1265
      %1658 = vmatprep.subr.bf16.mxu0 0
      %1659 = vmatpush1.bf16.msra.mxu0 %v1266
      %1660 = vmatprep.subr.bf16.mxu0 0
      %1661 = vmatpush1.bf16.msra.mxu0 %v1267
      %1662 = vmatprep.subr.bf16.mxu0 0
      %1663 = vmatpush1.bf16.msra.mxu0 %v1268
      %1664 = vmatprep.subr.bf16.mxu0 0
      %1665 = vmatpush1.bf16.msra.mxu0 %v1269
      %1666 = vmatprep.subr.bf16.mxu0 0
      %1667 = vmatpush1.bf16.msra.mxu0 %v1270
      %1668 = vmatprep.subr.bf16.mxu0 0
      %1669 = vmatpush1.bf16.msra.mxu0 %v1271
      %1670 = vmatprep.subr.bf16.mxu0 0
      %1671 = vmatpush1.bf16.msra.mxu0 %v1272
      %1672 = vmatprep.subr.bf16.mxu0 0
      %1673 = vmatpush1.bf16.msra.mxu0 %v1273
      %1674 = vmatprep.subr.bf16.mxu0 0
      %1675 = vmatpush1.bf16.msra.mxu0 %v1274
      %1676 = vmatprep.subr.bf16.mxu0 0
      %1677 = vmatpush1.bf16.msra.mxu0 %v1275
      %1678 = vmatprep.subr.bf16.mxu0 0
      %1679 = vmatpush1.bf16.msra.mxu0 %v1276
      %1680 = vmatprep.subr.bf16.mxu0 0
      %1681 = vmatpush1.bf16.msra.mxu0 %v1277
      %1682 = vmatprep.mubr.bf16.mxu0 %v631
      %1683 = vmatmul.mubr.bf16.gmra.mrb[0].mxu0 %v630
      %v1684 = vpop.f32.mrb[0].mxu0
      %v1685 = vadd.f32 %v1636, %v1684
      %v1686 = vpop.f32.mrb[0].mxu0
      %v1687 = vpop.f32.mrb[0].mxu0
      %v1688 = vadd.f32 %v1639, %v1687
      %v1689 = vpop.f32.mrb[0].mxu0
      %1690 = vmatprep.mubr.bf16.mxu0 %v647
      %1691 = vmatmul.mubr.bf16.gmra.mrb[0].mxu0 %v646
      %v1692 = vpop.f32.mrb[0].mxu0
      %v1693 = vadd.f32 %v1644, %v1692
      %v1694 = vpop.f32.mrb[0].mxu0
      %v1695 = vpop.f32.mrb[0].mxu0
      %v1696 = vadd.f32 %v1647, %v1695
      %v1697 = vpop.f32.mrb[0].mxu0
      %1698 = vdwg.mxu0
      %1699 = vmatprep.subr.bf16.mxu0 0
      %1700 = vmatpush1.bf16.msra.mxu0 %v1278
      %1701 = vmatprep.subr.bf16.mxu0 0
      %1702 = vmatpush1.bf16.msra.mxu0 %v1279
      %1703 = vmatprep.subr.bf16.mxu0 0
      %1704 = vmatpush1.bf16.msra.mxu0 %v1280
      %1705 = vmatprep.subr.bf16.mxu0 0
      %1706 = vmatpush1.bf16.msra.mxu0 %v1281
      %1707 = vmatprep.subr.bf16.mxu0 0
      %1708 = vmatpush1.bf16.msra.mxu0 %v1282
      %1709 = vmatprep.subr.bf16.mxu0 0
      %1710 = vmatpush1.bf16.msra.mxu0 %v1283
      %1711 = vmatprep.subr.bf16.mxu0 0
      %1712 = vmatpush1.bf16.msra.mxu0 %v1284
      %1713 = vmatprep.subr.bf16.mxu0 0
      %1714 = vmatpush1.bf16.msra.mxu0 %v1285
      %1715 = vmatprep.subr.bf16.mxu0 0
      %1716 = vmatpush1.bf16.msra.mxu0 %v1286
      %1717 = vmatprep.subr.bf16.mxu0 0
      %1718 = vmatpush1.bf16.msra.mxu0 %v1287
      %1719 = vmatprep.subr.bf16.mxu0 0
      %1720 = vmatpush1.bf16.msra.mxu0 %v1288
      %1721 = vmatprep.subr.bf16.mxu0 0
      %1722 = vmatpush1.bf16.msra.mxu0 %v1289
      %1723 = vmatprep.subr.bf16.mxu0 0
      %1724 = vmatpush1.bf16.msra.mxu0 %v1290
      %1725 = vmatprep.subr.bf16.mxu0 0
      %1726 = vmatpush1.bf16.msra.mxu0 %v1291
      %1727 = vmatprep.subr.bf16.mxu0 0
      %1728 = vmatpush1.bf16.msra.mxu0 %v1292
      %1729 = vmatprep.subr.bf16.mxu0 0
      %1730 = vmatpush1.bf16.msra.mxu0 %v1293
      %1731 = vmatprep.mubr.bf16.mxu0 %v633
      %1732 = vmatmul.mubr.bf16.gmra.mrb[0].mxu0 %v632
      %v1733 = vpop.f32.mrb[0].mxu0
      %v1734 = vadd.f32 %v1685, %v1733
      %v1735 = vpop.f32.mrb[0].mxu0
      %v1736 = vpop.f32.mrb[0].mxu0
      %v1737 = vadd.f32 %v1688, %v1736
      %v1738 = vpop.f32.mrb[0].mxu0
      %1739 = vmatprep.mubr.bf16.mxu0 %v649
      %1740 = vmatmul.mubr.bf16.gmra.mrb[0].mxu0 %v648
      %v1741 = vpop.f32.mrb[0].mxu0
      %v1742 = vadd.f32 %v1693, %v1741
      %v1743 = vpop.f32.mrb[0].mxu0
      %v1744 = vpop.f32.mrb[0].mxu0
      %v1745 = vadd.f32 %v1696, %v1744
      %v1746 = vpop.f32.mrb[0].mxu0
      %1747 = vdwg.mxu0
      %1748 = vmatprep.subr.bf16.mxu0 0
      %1749 = vmatpush1.bf16.msra.mxu0 %v1294
      %1750 = vmatprep.subr.bf16.mxu0 0
      %1751 = vmatpush1.bf16.msra.mxu0 %v1295
      %1752 = vmatprep.subr.bf16.mxu0 0
      %1753 = vmatpush1.bf16.msra.mxu0 %v1296
      %1754 = vmatprep.subr.bf16.mxu0 0
      %1755 = vmatpush1.bf16.msra.mxu0 %v1297
      %1756 = vmatprep.subr.bf16.mxu0 0
      %1757 = vmatpush1.bf16.msra.mxu0 %v1298
      %1758 = vmatprep.subr.bf16.mxu0 0
      %1759 = vmatpush1.bf16.msra.mxu0 %v1299
      %1760 = vmatprep.subr.bf16.mxu0 0
      %1761 = vmatpush1.bf16.msra.mxu0 %v1300
      %1762 = vmatprep.subr.bf16.mxu0 0
      %1763 = vmatpush1.bf16.msra.mxu0 %v1301
      %1764 = vmatprep.subr.bf16.mxu0 0
      %1765 = vmatpush1.bf16.msra.mxu0 %v1302
      %1766 = vmatprep.subr.bf16.mxu0 0
      %1767 = vmatpush1.bf16.msra.mxu0 %v1303
      %1768 = vmatprep.subr.bf16.mxu0 0
      %1769 = vmatpush1.bf16.msra.mxu0 %v1304
      %1770 = vmatprep.subr.bf16.mxu0 0
      %1771 = vmatpush1.bf16.msra.mxu0 %v1305
      %1772 = vmatprep.subr.bf16.mxu0 0
      %1773 = vmatpush1.bf16.msra.mxu0 %v1306
      %1774 = vmatprep.subr.bf16.mxu0 0
      %1775 = vmatpush1.bf16.msra.mxu0 %v1307
      %1776 = vmatprep.subr.bf16.mxu0 0
      %1777 = vmatpush1.bf16.msra.mxu0 %v1308
      %1778 = vmatprep.subr.bf16.mxu0 0
      %1779 = vmatpush1.bf16.msra.mxu0 %v1309
      %1780 = vmatprep.mubr.bf16.mxu0 %v635
      %1781 = vmatmul.mubr.bf16.gmra.mrb[0].mxu0 %v634
      %v1782 = vpop.f32.mrb[0].mxu0
      %v1783 = vadd.f32 %v1734, %v1782
      %v1784 = vpop.f32.mrb[0].mxu0
      %v1785 = vpop.f32.mrb[0].mxu0
      %v1786 = vadd.f32 %v1737, %v1785
      %v1787 = vpop.f32.mrb[0].mxu0
      %1788 = vmatprep.mubr.bf16.mxu0 %v651
      %1789 = vmatmul.mubr.bf16.gmra.mrb[0].mxu0 %v650
      %v1790 = vpop.f32.mrb[0].mxu0
      %v1791 = vadd.f32 %v1742, %v1790
      %v1792 = vpop.f32.mrb[0].mxu0
      %v1793 = vpop.f32.mrb[0].mxu0
      %v1794 = vadd.f32 %v1745, %v1793
      %v1795 = vpop.f32.mrb[0].mxu0
      %1796 = vdwg.mxu0
      %1797 = vmatprep.subr.bf16.mxu0 0
      %1798 = vmatpush1.bf16.msra.mxu0 %v1310
      %1799 = vmatprep.subr.bf16.mxu0 0
      %1800 = vmatpush1.bf16.msra.mxu0 %v1311
      %1801 = vmatprep.subr.bf16.mxu0 0
      %1802 = vmatpush1.bf16.msra.mxu0 %v1312
      %1803 = vmatprep.subr.bf16.mxu0 0
      %1804 = vmatpush1.bf16.msra.mxu0 %v1313
      %1805 = vmatprep.subr.bf16.mxu0 0
      %1806 = vmatpush1.bf16.msra.mxu0 %v1314
      %1807 = vmatprep.subr.bf16.mxu0 0
      %1808 = vmatpush1.bf16.msra.mxu0 %v1315
      %1809 = vmatprep.subr.bf16.mxu0 0
      %1810 = vmatpush1.bf16.msra.mxu0 %v1316
      %1811 = vmatprep.subr.bf16.mxu0 0
      %1812 = vmatpush1.bf16.msra.mxu0 %v1317
      %1813 = vmatprep.subr.bf16.mxu0 0
      %1814 = vmatpush1.bf16.msra.mxu0 %v1318
      %1815 = vmatprep.subr.bf16.mxu0 0
      %1816 = vmatpush1.bf16.msra.mxu0 %v1319
      %1817 = vmatprep.subr.bf16.mxu0 0
      %1818 = vmatpush1.bf16.msra.mxu0 %v1320
      %1819 = vmatprep.subr.bf16.mxu0 0
      %1820 = vmatpush1.bf16.msra.mxu0 %v1321
      %1821 = vmatprep.subr.bf16.mxu0 0
      %1822 = vmatpush1.bf16.msra.mxu0 %v1322
      %1823 = vmatprep.subr.bf16.mxu0 0
      %1824 = vmatpush1.bf16.msra.mxu0 %v1323
      %1825 = vmatprep.subr.bf16.mxu0 0
      %1826 = vmatpush1.bf16.msra.mxu0 %v1324
      %1827 = vmatprep.subr.bf16.mxu0 0
      %1828 = vmatpush1.bf16.msra.mxu0 %v1325
      %1829 = vmatprep.mubr.bf16.mxu0 %v637
      %1830 = vmatmul.mubr.bf16.gmra.mrb[0].mxu0 %v636
      %v1831 = vpop.f32.mrb[0].mxu0
      %v1832 = vadd.f32 %v1783, %v1831
      %v1833 = vpop.f32.mrb[0].mxu0
      %v1834 = vpop.f32.mrb[0].mxu0
      %v1835 = vadd.f32 %v1786, %v1834
      %v1836 = vpop.f32.mrb[0].mxu0
      %1837 = vmatprep.mubr.bf16.mxu0 %v653
      %1838 = vmatmul.mubr.bf16.gmra.mrb[0].mxu0 %v652
      %v1839 = vpop.f32.mrb[0].mxu0
      %v1840 = vadd.f32 %v1791, %v1839
      %v1841 = vpop.f32.mrb[0].mxu0
      %v1842 = vpop.f32.mrb[0].mxu0
      %v1843 = vadd.f32 %v1794, %v1842
      %v1844 = vpop.f32.mrb[0].mxu0
      %1845 = vdwg.mxu0
      %s1846 = smul.u32 %s16, 32
      %s1847 = scalar_lea.vmem [#allocation2], %s1846
      %1848 = vst [vmem:[%s1847] sm:$0xff] %v1832
      %1849 = vst [vmem:[%s1847 + $0x8] sm:$0xff] %v1835
      %1850 = vst [vmem:[%s1847 + $0x10] sm:$0xff] %v1840
      %1851 = vst [vmem:[%s1847 + $0x18] sm:$0xff] %v1843
      %p1852 = scmp.eq.s32.totalorder %s16, 3
      // Predicated region
      $region41: #{generator_forward.5} parent=39 // pred_check
        %p1853 = pneg %p1852
      $region42: #{generator_forward.5} parent=39 // pred_check_branch
        %1855 = sbr.rel (%p1853) target = $region44
      $region43: #{generator_forward.5} parent=39 // pred_region
        %v1856 = vld [vmem:[#allocation2] sm:$0xff]
        %v1857 = vld [vmem:[#allocation2 + $0x8] sm:$0xff]
        %v1858 = vld [vmem:[#allocation2 + $0x10] sm:$0xff]
        %v1859 = vld [vmem:[#allocation2 + $0x18] sm:$0xff]
        %v1860 = vld [vmem:[#allocation2 + $0x20] sm:$0xff]
        %v1861 = vld [vmem:[#allocation2 + $0x28] sm:$0xff]
        %v1862 = vld [vmem:[#allocation2 + $0x30] sm:$0xff]
        %v1863 = vld [vmem:[#allocation2 + $0x38] sm:$0xff]
        %v1864 = vld [vmem:[#allocation2 + $0x40] sm:$0xff]
        %v1865 = vld [vmem:[#allocation2 + $0x48] sm:$0xff]
        %v1866 = vld [vmem:[#allocation2 + $0x50] sm:$0xff]
        %v1867 = vld [vmem:[#allocation2 + $0x58] sm:$0xff]
        %v1868 = vld [vmem:[#allocation2 + $0x60] sm:$0xff]
        %v1869 = vld [vmem:[#allocation2 + $0x68] sm:$0xff]
        %v1870 = vld [vmem:[#allocation2 + $0x70] sm:$0xff]
        %v1871 = vld [vmem:[#allocation2 + $0x78] sm:$0xff]
        %v1872 = vadd.f32 %v1856, %v1860
        %v1873 = vadd.f32 %v1872, %v1864
        %v1874 = vadd.f32 %v1873, %v1868
        %v1875 = vadd.f32 %v1857, %v1861
        %v1876 = vadd.f32 %v1875, %v1865
        %v1877 = vadd.f32 %v1876, %v1869
        %v1878 = vadd.f32 %v1858, %v1862
        %v1879 = vadd.f32 %v1878, %v1866
        %v1880 = vadd.f32 %v1879, %v1870
        %v1881 = vadd.f32 %v1859, %v1863
        %v1882 = vadd.f32 %v1881, %v1867
        %v1883 = vadd.f32 %v1882, %v1871
        %v1884 = vadd.f32 %v1874, %v1877
        %v1885 = vadd.f32 %v1884, %v1880
        %v1886 = vadd.f32 %v1885, %v1883
        %v1887 = vrot.slane %v1886, 4
        %v1888 = vadd.f32 %v1886, %v1887
        %v1889 = vrot.slane %v1888, 2
        %v1890 = vadd.f32 %v1888, %v1889
        %v1891 = vrot.slane %v1890, 1
        %v1892 = vadd.f32 %v1890, %v1891
        %v1893 = vmul.f32 %v1856, %v1856
        %v1894 = vmul.f32 %v1857, %v1857
        %v1895 = vmul.f32 %v1858, %v1858
        %v1896 = vmul.f32 %v1859, %v1859
        %v1897 = vmul.f32 %v1860, %v1860
        %v1898 = vmul.f32 %v1861, %v1861
        %v1899 = vmul.f32 %v1862, %v1862
        %v1900 = vmul.f32 %v1863, %v1863
        %v1901 = vmul.f32 %v1864, %v1864
        %v1902 = vmul.f32 %v1865, %v1865
        %v1903 = vmul.f32 %v1866, %v1866
        %v1904 = vmul.f32 %v1867, %v1867
        %v1905 = vmul.f32 %v1868, %v1868
        %v1906 = vmul.f32 %v1869, %v1869
        %v1907 = vmul.f32 %v1870, %v1870
        %v1908 = vmul.f32 %v1871, %v1871
        %v1909 = vadd.f32 %v1893, %v1897
        %v1910 = vadd.f32 %v1909, %v1901
        %v1911 = vadd.f32 %v1910, %v1905
        %v1912 = vadd.f32 %v1894, %v1898
        %v1913 = vadd.f32 %v1912, %v1902
        %v1914 = vadd.f32 %v1913, %v1906
        %v1915 = vadd.f32 %v1895, %v1899
        %v1916 = vadd.f32 %v1915, %v1903
        %v1917 = vadd.f32 %v1916, %v1907
        %v1918 = vadd.f32 %v1896, %v1900
        %v1919 = vadd.f32 %v1918, %v1904
        %v1920 = vadd.f32 %v1919, %v1908
        %v1921 = vadd.f32 %v1911, %v1914
        %v1922 = vadd.f32 %v1921, %v1917
        %v1923 = vadd.f32 %v1922, %v1920
        %v1924 = vrot.slane %v1923, 4
        %v1925 = vadd.f32 %v1923, %v1924
        %v1926 = vrot.slane %v1925, 2
        %v1927 = vadd.f32 %v1925, %v1926
        %v1928 = vrot.slane %v1927, 1
        %v1929 = vadd.f32 %v1927, %v1928
        %v1930 = vrcp.pop 128.0
        %v1931 = vmul.f32 %v1892, %v1930
        %v1932 = vmul.f32 %v1929, %v1930
        %v1933 = vmul.f32 %v1931, %v1931
        %v1934 = vsub.f32 %v1932, %v1933
        %v1935 = vadd.f32 %v1934, 1e-05
        %v1936 = vrsqrt.pop %v1935
        %v1937 = vld [vmem:[%s3] sm:$0x1]
        %v1938 = vmul.f32 %v1936, %v1937
        %v1939 = vsub.f32 %v1856, %v1931
        %v1940 = vsub.f32 %v1857, %v1931
        %v1941 = vsub.f32 %v1858, %v1931
        %v1942 = vsub.f32 %v1859, %v1931
        %v1943 = vsub.f32 %v1860, %v1931
        %v1944 = vsub.f32 %v1861, %v1931
        %v1945 = vsub.f32 %v1862, %v1931
        %v1946 = vsub.f32 %v1863, %v1931
        %v1947 = vsub.f32 %v1864, %v1931
        %v1948 = vsub.f32 %v1865, %v1931
        %v1949 = vsub.f32 %v1866, %v1931
        %v1950 = vsub.f32 %v1867, %v1931
        %v1951 = vsub.f32 %v1868, %v1931
        %v1952 = vsub.f32 %v1869, %v1931
        %v1953 = vsub.f32 %v1870, %v1931
        %v1954 = vsub.f32 %v1871, %v1931
        %v1955 = vlaneseq
        %v1956 = vshrl.u32 %v1955, 7
        %v1957 = vsub.s32 0, %v1956
        %v1958 = vrot.slane %v1938, %v1957
        %v1959 = vmul.f32 %v1939, %v1958
        %v1960 = vmul.f32 %v1940, %v1958
        %v1961 = vmul.f32 %v1941, %v1958
        %v1962 = vmul.f32 %v1942, %v1958
        %v1963 = vmul.f32 %v1943, %v1958
        %v1964 = vmul.f32 %v1944, %v1958
        %v1965 = vmul.f32 %v1945, %v1958
        %v1966 = vmul.f32 %v1946, %v1958
        %v1967 = vmul.f32 %v1947, %v1958
        %v1968 = vmul.f32 %v1948, %v1958
        %v1969 = vmul.f32 %v1949, %v1958
        %v1970 = vmul.f32 %v1950, %v1958
        %v1971 = vmul.f32 %v1951, %v1958
        %v1972 = vmul.f32 %v1952, %v1958
        %v1973 = vmul.f32 %v1953, %v1958
        %v1974 = vmul.f32 %v1954, %v1958
        %v1975 = vld [vmem:[%s4] sm:$0x1]
        %v1977 = vlaneseq
        %v1978 = vshrl.u32 %v1977, 7
        %v1979 = vsub.s32 0, %v1978
        %v1980 = vrot.slane %v1975, %v1979
        %v1982 = vadd.f32 %v1959, %v1980
        %v1983 = vadd.f32 %v1960, %v1980
        %v1984 = vadd.f32 %v1961, %v1980
        %v1985 = vadd.f32 %v1962, %v1980
        %v1986 = vadd.f32 %v1963, %v1980
        %v1987 = vadd.f32 %v1964, %v1980
        %v1988 = vadd.f32 %v1965, %v1980
        %v1989 = vadd.f32 %v1966, %v1980
        %v1990 = vadd.f32 %v1967, %v1980
        %v1991 = vadd.f32 %v1968, %v1980
        %v1992 = vadd.f32 %v1969, %v1980
        %v1993 = vadd.f32 %v1970, %v1980
        %v1994 = vadd.f32 %v1971, %v1980
        %v1995 = vadd.f32 %v1972, %v1980
        %v1996 = vadd.f32 %v1973, %v1980
        %v1997 = vadd.f32 %v1974, %v1980
        %v1998 = vmax.f32 %v1982, 0.0
        %v1999 = vmax.f32 %v1983, 0.0
        %v2000 = vmax.f32 %v1984, 0.0
        %v2001 = vmax.f32 %v1985, 0.0
        %v2002 = vmax.f32 %v1986, 0.0
        %v2003 = vmax.f32 %v1987, 0.0
        %v2004 = vmax.f32 %v1988, 0.0
        %v2005 = vmax.f32 %v1989, 0.0
        %v2006 = vmax.f32 %v1990, 0.0
        %v2007 = vmax.f32 %v1991, 0.0
        %v2008 = vmax.f32 %v1992, 0.0
        %v2009 = vmax.f32 %v1993, 0.0
        %v2010 = vmax.f32 %v1994, 0.0
        %v2011 = vmax.f32 %v1995, 0.0
        %v2012 = vmax.f32 %v1996, 0.0
        %v2013 = vmax.f32 %v1997, 0.0
        %v2014 = vpack.c.bf16 %v1999, %v1998
        %v2015 = vpack.c.bf16 %v2001, %v2000
        %v2016 = vpack.c.bf16 %v2003, %v2002
        %v2017 = vpack.c.bf16 %v2005, %v2004
        %v2018 = vpack.c.bf16 %v2007, %v2006
        %v2019 = vpack.c.bf16 %v2009, %v2008
        %v2020 = vpack.c.bf16 %v2011, %v2010
        %v2021 = vpack.c.bf16 %v2013, %v2012
        %v2030 = vunpack.c.l.b16 %v2014
        %v2031 = vunpack.c.h.b16 %v2014
        %v2032 = vunpack.c.l.b16 %v2015
        %v2033 = vunpack.c.h.b16 %v2015
        %v2034 = vunpack.c.l.b16 %v2016
        %v2035 = vunpack.c.h.b16 %v2016
        %v2036 = vunpack.c.l.b16 %v2017
        %v2037 = vunpack.c.h.b16 %v2017
        %v2038 = vunpack.c.l.b16 %v2018
        %v2039 = vunpack.c.h.b16 %v2018
        %v2040 = vunpack.c.l.b16 %v2019
        %v2041 = vunpack.c.h.b16 %v2019
        %v2042 = vunpack.c.l.b16 %v2020
        %v2043 = vunpack.c.h.b16 %v2020
        %v2044 = vunpack.c.l.b16 %v2021
        %v2045 = vunpack.c.h.b16 %v2021
        %v2046 = vpack.c.b16 %v2030, %v2030
        %v2047 = vpack.c.b16 %v2031, %v2031
        %v2048 = vpack.c.b16 %v2032, %v2032
        %v2049 = vpack.c.b16 %v2033, %v2033
        %v2050 = vpack.c.b16 %v2034, %v2034
        %v2051 = vpack.c.b16 %v2035, %v2035
        %v2052 = vpack.c.b16 %v2036, %v2036
        %v2053 = vpack.c.b16 %v2037, %v2037
        %v2054 = vpack.c.b16 %v2038, %v2038
        %v2055 = vpack.c.b16 %v2039, %v2039
        %v2056 = vpack.c.b16 %v2040, %v2040
        %v2057 = vpack.c.b16 %v2041, %v2041
        %v2058 = vpack.c.b16 %v2042, %v2042
        %v2059 = vpack.c.b16 %v2043, %v2043
        %v2060 = vpack.c.b16 %v2044, %v2044
        %v2061 = vpack.c.b16 %v2045, %v2045
        %2078 = vst [vmem:[%s5] sm:$0xf] %v2046
        %2079 = vst [vmem:[%s5 + $0x4] sm:$0xf] %v2047
        %2080 = vst [vmem:[%s5 + $0x8] sm:$0xf] %v2048
        %2081 = vst [vmem:[%s5 + $0xc] sm:$0xf] %v2049
        %2082 = vst [vmem:[%s5 + $0x10] sm:$0xf] %v2050
        %2083 = vst [vmem:[%s5 + $0x14] sm:$0xf] %v2051
        %2084 = vst [vmem:[%s5 + $0x18] sm:$0xf] %v2052
        %2085 = vst [vmem:[%s5 + $0x1c] sm:$0xf] %v2053
        %2086 = vst [vmem:[%s5 + $0x20] sm:$0xf] %v2054
        %2087 = vst [vmem:[%s5 + $0x24] sm:$0xf] %v2055
        %2088 = vst [vmem:[%s5 + $0x28] sm:$0xf] %v2056
        %2089 = vst [vmem:[%s5 + $0x2c] sm:$0xf] %v2057
        %2090 = vst [vmem:[%s5 + $0x30] sm:$0xf] %v2058
        %2091 = vst [vmem:[%s5 + $0x34] sm:$0xf] %v2059
        %2092 = vst [vmem:[%s5 + $0x38] sm:$0xf] %v2060
        %2093 = vst [vmem:[%s5 + $0x3c] sm:$0xf] %v2061
      $region44: #{generator_forward.5} parent=39 // pred_fallthru
        _
      // Predicated region
      $region45: #{generator_forward.5} parent=39 // pred_check
        %p2094 = pneg %p144
      $region46: #{generator_forward.5} parent=39 // pred_check_branch
        %2096 = sbr.rel (%p2094) target = $region48
      $region47: #{generator_forward.5} parent=39 // pred_region
        _
      $region48: #{generator_forward.5} parent=39 // pred_fallthru
        _
      // Predicated region
      $region49: #{generator_forward.5} parent=39 // pred_check
        %p2097 = pneg %p144
      $region50: #{generator_forward.5} parent=39 // pred_check_branch
        %2099 = sbr.rel (%p2097) target = $region52
      $region51: #{generator_forward.5} parent=39 // pred_region
        _
      $region52: #{generator_forward.5} parent=39 // pred_fallthru
        _
    $region40: #{generator_forward.5} parent=5 // pred_fallthru
      _
    %p2100 = scmp.le.s32.totalorder 2, %s11
    // Predicated region
    $region53: #{generator_forward.5} parent=5 // pred_check
      %p2101 = pneg %p2100
    $region54: #{generator_forward.5} parent=5 // pred_check_branch
      %2103 = sbr.rel (%p2101) target = $region56
    $region55: #{generator_forward.5} parent=5 // pred_region
      %s2104 = ssub.s32 %s11, 2
    $region56: #{generator_forward.5} parent=5 // pred_fallthru
      _
  $region6: #{generator_forward.5} parent=0 // loop_footer
    %s15 = sadd.s32 1, %s11
  $region7: #{generator_forward.5} parent=0 // loop_footer_branch
    %10 = sbr.rel target = $region3
  $region8: #{generator_forward.5} parent=0 // loop_exit
    _

// kernel: generator_forward.6
$region0: #{generator_forward.6}
  #allocation0 [shape = 'u32[]', space=smem, size = 0x4, offset = 0x4, fixed_abs, tag = 'smem constant byte address 0x4 - core index']
  #allocation1 [shape = 'u32[144,128]{1,0:T(1,128)}', space=vmem, size = 0x12000, scoped, tag = 'internal scratch']
  #allocation2 [shape = 'f32[4,128,128]{2,1,0:T(8,128)}', space=vmem, size = 0x40000, scoped, tag = 'scratch operand']
  %s0 = inlined_call_operand.vmem [shape: bf16[4,128,512], index: 0, kind: input, shape index: {}]
  %s1 = inlined_call_operand.vmem [shape: bf16[4,512,128], index: 1, kind: input, shape index: {}]
  %s2 = inlined_call_operand.vmem [shape: f32[1,128], index: 2, kind: input, shape index: {}]
  %s3 = inlined_call_operand.vmem [shape: f32[1,128], index: 3, kind: input, shape index: {}]
  %s4 = inlined_call_operand.vmem [shape: f32[1,128], index: 4, kind: input, shape index: {}]
  %s5 = inlined_call_operand.vmem [shape: bf16[4,128,128], index: 5, kind: output, shape index: {}]
  %s6 = sld [smem:[#allocation0]]
  $region57: #{generator_forward.6} parent=0
    _
  %s8 = ssub.s32 1, %s6
  %s9 = scalar_select 0, %s8, %s6
  loop: start=0, step=1, limit=6
  $region2: #{generator_forward.6} parent=0 // loop_pre_header
    _
  $region3: #{generator_forward.6} parent=0 // loop_header
    %s11 = sphi 0, %s15
    %p12 = scmp.ge.s32.totalorder %s11, 6
    %s21 = sphi 0, %s23
    %s24 = sphi 0, %s21
    %s25 = sphi 0, %s24
    %s41 = sphi 0, %s25
    %s47 = sphi 0, %s49
    %s50 = sphi 0, %s47
    %s51 = sphi 0, %s50
    %s67 = sphi 0, %s51
    %s71 = sphi 0, %s71
    %s73 = sphi 0, %s71
    %s74 = sphi 0, %s73
    %s88 = sphi 0, %s74
    %s92 = sphi 0, %s92
    %s94 = sphi 0, %s92
    %s95 = sphi 0, %s94
    %s109 = sphi 0, %s95
    %s113 = sphi 0, %s113
    %s115 = sphi 0, %s113
    %s116 = sphi 0, %s115
    %s130 = sphi 0, %s116
    %s134 = sphi 0, %s134
    %s136 = sphi 0, %s134
    %s137 = sphi 0, %s136
    %s151 = sphi 0, %s137
  $region4: #{generator_forward.6} parent=0 // loop_header_branch
    %14 = sbr.rel (%p12) target = $region8
  $region5: #{generator_forward.6} parent=0 // loop_body
    %s16 = ssub.s32 %s11, 1
    %s17 = ssub.s32 %s11, 2
    %s18 = sadd.s32 %s11, 1
    %s19 = ssub.s32 %s11, %s18
    %p20 = scmp.eq.s32.totalorder %s19, 0
    %s22 = sadd.s32 %s21, 1
    %s23 = scalar_select %p20, %s21, %s22
    %p26 = pneg %p20
    %p27 = scmp.eq.s32.totalorder %s11, 3
    %p28 = por %p26, %p27
    %p29 = scmp.ne.s32.totalorder %s21, %s24
    %p30 = scmp.eq.s32.totalorder %s11, 0
    %p31 = por %p29, %p30
    %p32 = scmp.ne.s32.totalorder %s21, %s24
    %p33 = scmp.eq.s32.totalorder %s16, 3
    %p34 = por %p32, %p33
    %p35 = scmp.ne.s32.totalorder %s24, %s25
    %p36 = scmp.eq.s32.totalorder %s16, 0
    %p37 = por %p35, %p36
    %p38 = scmp.ne.s32.totalorder %s24, %s25
    %p39 = scmp.eq.s32.totalorder %s17, 3
    %p40 = por %p38, %p39
    %p42 = scmp.ne.s32.totalorder %s25, %s41
    %p43 = scmp.eq.s32.totalorder %s17, 0
    %p44 = por %p42, %p43
    %s45 = ssub.s32 %s11, %s18
    %p46 = scmp.eq.s32.totalorder %s45, 0
    %s48 = sadd.s32 %s47, 1
    %s49 = scalar_select %p46, %s47, %s48
    %p52 = pneg %p46
    %p53 = scmp.eq.s32.totalorder %s11, 3
    %p54 = por %p52, %p53
    %p55 = scmp.ne.s32.totalorder %s47, %s50
    %p56 = scmp.eq.s32.totalorder %s11, 0
    %p57 = por %p55, %p56
    %p58 = scmp.ne.s32.totalorder %s47, %s50
    %p59 = scmp.eq.s32.totalorder %s16, 3
    %p60 = por %p58, %p59
    %p61 = scmp.ne.s32.totalorder %s50, %s51
    %p62 = scmp.eq.s32.totalorder %s16, 0
    %p63 = por %p61, %p62
    %p64 = scmp.ne.s32.totalorder %s50, %s51
    %p65 = scmp.eq.s32.totalorder %s17, 3
    %p66 = por %p64, %p65
    %p68 = scmp.ne.s32.totalorder %s51, %s67
    %p69 = scmp.eq.s32.totalorder %s17, 0
    %p70 = por %p68, %p69
    %s72 = sadd.s32 %s71, 1
    %p75 = scmp.eq.s32.totalorder %s11, 3
    %p76 = scmp.ne.s32.totalorder %s71, %s73
    %p77 = scmp.eq.s32.totalorder %s11, 0
    %p78 = por %p76, %p77
    %p79 = scmp.ne.s32.totalorder %s71, %s73
    %p80 = scmp.eq.s32.totalorder %s16, 3
    %p81 = por %p79, %p80
    %p82 = scmp.ne.s32.totalorder %s73, %s74
    %p83 = scmp.eq.s32.totalorder %s16, 0
    %p84 = por %p82, %p83
    %p85 = scmp.ne.s32.totalorder %s73, %s74
    %p86 = scmp.eq.s32.totalorder %s17, 3
    %p87 = por %p85, %p86
    %p89 = scmp.ne.s32.totalorder %s74, %s88
    %p90 = scmp.eq.s32.totalorder %s17, 0
    %p91 = por %p89, %p90
    %s93 = sadd.s32 %s92, 1
    %p96 = scmp.eq.s32.totalorder %s11, 3
    %p97 = scmp.ne.s32.totalorder %s92, %s94
    %p98 = scmp.eq.s32.totalorder %s11, 0
    %p99 = por %p97, %p98
    %p100 = scmp.ne.s32.totalorder %s92, %s94
    %p101 = scmp.eq.s32.totalorder %s16, 3
    %p102 = por %p100, %p101
    %p103 = scmp.ne.s32.totalorder %s94, %s95
    %p104 = scmp.eq.s32.totalorder %s16, 0
    %p105 = por %p103, %p104
    %p106 = scmp.ne.s32.totalorder %s94, %s95
    %p107 = scmp.eq.s32.totalorder %s17, 3
    %p108 = por %p106, %p107
    %p110 = scmp.ne.s32.totalorder %s95, %s109
    %p111 = scmp.eq.s32.totalorder %s17, 0
    %p112 = por %p110, %p111
    %s114 = sadd.s32 %s113, 1
    %p117 = scmp.eq.s32.totalorder %s11, 3
    %p118 = scmp.ne.s32.totalorder %s113, %s115
    %p119 = scmp.eq.s32.totalorder %s11, 0
    %p120 = por %p118, %p119
    %p121 = scmp.ne.s32.totalorder %s113, %s115
    %p122 = scmp.eq.s32.totalorder %s16, 3
    %p123 = por %p121, %p122
    %p124 = scmp.ne.s32.totalorder %s115, %s116
    %p125 = scmp.eq.s32.totalorder %s16, 0
    %p126 = por %p124, %p125
    %p127 = scmp.ne.s32.totalorder %s115, %s116
    %p128 = scmp.eq.s32.totalorder %s17, 3
    %p129 = por %p127, %p128
    %p131 = scmp.ne.s32.totalorder %s116, %s130
    %p132 = scmp.eq.s32.totalorder %s17, 0
    %p133 = por %p131, %p132
    %s135 = sadd.s32 %s134, 1
    %p138 = scmp.eq.s32.totalorder %s11, 3
    %p139 = scmp.ne.s32.totalorder %s134, %s136
    %p140 = scmp.eq.s32.totalorder %s11, 0
    %p141 = por %p139, %p140
    %p142 = scmp.ne.s32.totalorder %s134, %s136
    %p143 = scmp.eq.s32.totalorder %s16, 3
    %p144 = por %p142, %p143
    %p145 = scmp.ne.s32.totalorder %s136, %s137
    %p146 = scmp.eq.s32.totalorder %s16, 0
    %p147 = por %p145, %p146
    %p148 = scmp.ne.s32.totalorder %s136, %s137
    %p149 = scmp.eq.s32.totalorder %s17, 3
    %p150 = por %p148, %p149
    %p152 = scmp.ne.s32.totalorder %s137, %s151
    %p153 = scmp.eq.s32.totalorder %s17, 0
    %p154 = por %p152, %p153
    %p155 = scmp.le.s32.totalorder 1, %s11
    %p156 = scmp.lt.s32.totalorder %s11, 5
    %p157 = pnand %p155, %p156
    %p158 = pneg %p157
    // Predicated region
    $region9: #{generator_forward.6} parent=5 // pred_check
      _
    $region10: #{generator_forward.6} parent=5 // pred_check_branch
      %160 = sbr.rel (%p157) target = $region12
    $region11: #{generator_forward.6} parent=5 // pred_region
      %s161 = ssub.s32 %s11, 1
      // Predicated region
      $region13: #{generator_forward.6} parent=11 // pred_check
        %p162 = pneg %p84
      $region14: #{generator_forward.6} parent=11 // pred_check_branch
        %164 = sbr.rel (%p162) target = $region16
      $region15: #{generator_forward.6} parent=11 // pred_region
        _
      $region16: #{generator_forward.6} parent=11 // pred_fallthru
        _
      // Predicated region
      $region17: #{generator_forward.6} parent=11 // pred_check
        %p165 = pneg %p105
      $region18: #{generator_forward.6} parent=11 // pred_check_branch
        %167 = sbr.rel (%p165) target = $region20
      $region19: #{generator_forward.6} parent=11 // pred_region
        _
      $region20: #{generator_forward.6} parent=11 // pred_fallthru
        _
      // Predicated region
      $region21: #{generator_forward.6} parent=11 // pred_check
        %p168 = pneg %p126
      $region22: #{generator_forward.6} parent=11 // pred_check_branch
        %170 = sbr.rel (%p168) target = $region24
      $region23: #{generator_forward.6} parent=11 // pred_region
        _
      $region24: #{generator_forward.6} parent=11 // pred_fallthru
        _
    $region12: #{generator_forward.6} parent=5 // pred_fallthru
      _
    %p171 = scmp.lt.s32.totalorder %s11, 4
    // Predicated region
    $region25: #{generator_forward.6} parent=5 // pred_check
      %p172 = pneg %p171
    $region26: #{generator_forward.6} parent=5 // pred_check_branch
      %174 = sbr.rel (%p172) target = $region28
    $region27: #{generator_forward.6} parent=5 // pred_region
      // Predicated region
      $region29: #{generator_forward.6} parent=27 // pred_check
        %p175 = pneg %p31
      $region30: #{generator_forward.6} parent=27 // pred_check_branch
        %177 = sbr.rel (%p175) target = $region32
      $region31: #{generator_forward.6} parent=27 // pred_region
        %p178 = scmp.lt.s32.totalorder %s11, 3
        %s179 = scalar_select %p178, %s11, 3
        %s180 = smul.addr %s179, 64
        %s181 = smul.addr %s180, 4
        %s182 = scalar_lea.vmem %s0, %s181
      $region32: #{generator_forward.6} parent=27 // pred_fallthru
        _
      // Predicated region
      $region33: #{generator_forward.6} parent=27 // pred_check
        %p183 = pneg %p57
      $region34: #{generator_forward.6} parent=27 // pred_check_branch
        %185 = sbr.rel (%p183) target = $region36
      $region35: #{generator_forward.6} parent=27 // pred_region
        %p186 = scmp.lt.s32.totalorder %s11, 3
        %s187 = scalar_select %p186, %s11, 3
        %s188 = smul.addr %s187, 64
        %s189 = smul.addr %s188, 4
        %s190 = scalar_lea.vmem %s1, %s189
      $region36: #{generator_forward.6} parent=27 // pred_fallthru
        _
    $region28: #{generator_forward.6} parent=5 // pred_fallthru
      _
    %p191 = scmp.le.s32.totalorder 1, %s11
    %p192 = scmp.lt.s32.totalorder %s11, 5
    %p193 = pnand %p191, %p192
    %p194 = pneg %p193
    // Predicated region
    $region37: #{generator_forward.6} parent=5 // pred_check
      _
    $region38: #{generator_forward.6} parent=5 // pred_check_branch
      %196 = sbr.rel (%p193) target = $region40
    $region39: #{generator_forward.6} parent=5 // pred_region
      %s197 = ssub.s32 %s11, 1
      %p198 = scmp.lt.s32.totalorder %s16, 3
      %s199 = scalar_select %p198, %s16, 3
      %s200 = smul.addr %s199, 64
      %s201 = smul.addr %s200, 4
      %s202 = scalar_lea.vmem %s0, %s201
      %p203 = pneg %p37
      %p204 = pneg %p34
      %p205 = scmp.lt.s32.totalorder %s16, 3
      %s206 = scalar_select %p205, %s16, 3
      %s207 = smul.addr %s206, 64
      %s208 = smul.addr %s207, 4
      %s209 = scalar_lea.vmem %s1, %s208
      %p210 = pneg %p63
      %p211 = pneg %p60
      %p212 = pneg %p84
      %p213 = pneg %p81
      %p214 = pneg %p105
      %p215 = pneg %p102
      %p216 = pneg %p126
      %p217 = pneg %p123
      %p218 = pneg %p147
      %p219 = pneg %p144
      %p220 = scmp.lt.s32.totalorder %s16, 3
      %s221 = scalar_select %p220, %s16, 3
      %s222 = smul.addr %s221, 64
      %s223 = smul.addr %s222, 4
      %s224 = scalar_lea.vmem %s0, %s223
      %p225 = scmp.lt.s32.totalorder %s16, 3
      %s226 = scalar_select %p225, %s16, 3
      %s227 = smul.addr %s226, 64
      %s228 = smul.addr %s227, 4
      %s229 = scalar_lea.vmem %s1, %s228
      %v231 = vld [vmem:[%s224] sm:$0xff]
      %v232 = vld [vmem:[%s224 + $0x8] sm:$0xff]
      %v233 = vld [vmem:[%s224 + $0x10] sm:$0xff]
      %v234 = vld [vmem:[%s224 + $0x18] sm:$0xff]
      %v235 = vld [vmem:[%s224 + $0x20] sm:$0xff]
      %v236 = vld [vmem:[%s224 + $0x28] sm:$0xff]
      %v237 = vld [vmem:[%s224 + $0x30] sm:$0xff]
      %v238 = vld [vmem:[%s224 + $0x38] sm:$0xff]
      %v239 = vld [vmem:[%s224 + $0x40] sm:$0xff]
      %v240 = vld [vmem:[%s224 + $0x48] sm:$0xff]
      %v241 = vld [vmem:[%s224 + $0x50] sm:$0xff]
      %v242 = vld [vmem:[%s224 + $0x58] sm:$0xff]
      %v243 = vld [vmem:[%s224 + $0x60] sm:$0xff]
      %v244 = vld [vmem:[%s224 + $0x68] sm:$0xff]
      %v245 = vld [vmem:[%s224 + $0x70] sm:$0xff]
      %v246 = vld [vmem:[%s224 + $0x78] sm:$0xff]
      %v247 = vld [vmem:[%s224 + $0x80] sm:$0xff]
      %v248 = vld [vmem:[%s224 + $0x88] sm:$0xff]
      %v249 = vld [vmem:[%s224 + $0x90] sm:$0xff]
      %v250 = vld [vmem:[%s224 + $0x98] sm:$0xff]
      %v251 = vld [vmem:[%s224 + $0xa0] sm:$0xff]
      %v252 = vld [vmem:[%s224 + $0xa8] sm:$0xff]
      %v253 = vld [vmem:[%s224 + $0xb0] sm:$0xff]
      %v254 = vld [vmem:[%s224 + $0xb8] sm:$0xff]
      %v255 = vld [vmem:[%s224 + $0xc0] sm:$0xff]
      %v256 = vld [vmem:[%s224 + $0xc8] sm:$0xff]
      %v257 = vld [vmem:[%s224 + $0xd0] sm:$0xff]
      %v258 = vld [vmem:[%s224 + $0xd8] sm:$0xff]
      %v259 = vld [vmem:[%s224 + $0xe0] sm:$0xff]
      %v260 = vld [vmem:[%s224 + $0xe8] sm:$0xff]
      %v261 = vld [vmem:[%s224 + $0xf0] sm:$0xff]
      %v262 = vld [vmem:[%s224 + $0xf8] sm:$0xff]
      %v263 = vld [vmem:[%s229] sm:$0xf]
      %v264 = vld [vmem:[%s229 + $0x4] sm:$0xf]
      %v265 = vld [vmem:[%s229 + $0x8] sm:$0xf]
      %v266 = vld [vmem:[%s229 + $0xc] sm:$0xf]
      %v267 = vld [vmem:[%s229 + $0x10] sm:$0xf]
      %v268 = vld [vmem:[%s229 + $0x14] sm:$0xf]
      %v269 = vld [vmem:[%s229 + $0x18] sm:$0xf]
      %v270 = vld [vmem:[%s229 + $0x1c] sm:$0xf]
      %v271 = vld [vmem:[%s229 + $0x20] sm:$0xf]
      %v272 = vld [vmem:[%s229 + $0x24] sm:$0xf]
      %v273 = vld [vmem:[%s229 + $0x28] sm:$0xf]
      %v274 = vld [vmem:[%s229 + $0x2c] sm:$0xf]
      %v275 = vld [vmem:[%s229 + $0x30] sm:$0xf]
      %v276 = vld [vmem:[%s229 + $0x34] sm:$0xf]
      %v277 = vld [vmem:[%s229 + $0x38] sm:$0xf]
      %v278 = vld [vmem:[%s229 + $0x3c] sm:$0xf]
      %v279 = vld [vmem:[%s229 + $0x40] sm:$0xf]
      %v280 = vld [vmem:[%s229 + $0x44] sm:$0xf]
      %v281 = vld [vmem:[%s229 + $0x48] sm:$0xf]
      %v282 = vld [vmem:[%s229 + $0x4c] sm:$0xf]
      %v283 = vld [vmem:[%s229 + $0x50] sm:$0xf]
      %v284 = vld [vmem:[%s229 + $0x54] sm:$0xf]
      %v285 = vld [vmem:[%s229 + $0x58] sm:$0xf]
      %v286 = vld [vmem:[%s229 + $0x5c] sm:$0xf]
      %v287 = vld [vmem:[%s229 + $0x60] sm:$0xf]
      %v288 = vld [vmem:[%s229 + $0x64] sm:$0xf]
      %v289 = vld [vmem:[%s229 + $0x68] sm:$0xf]
      %v290 = vld [vmem:[%s229 + $0x6c] sm:$0xf]
      %v291 = vld [vmem:[%s229 + $0x70] sm:$0xf]
      %v292 = vld [vmem:[%s229 + $0x74] sm:$0xf]
      %v293 = vld [vmem:[%s229 + $0x78] sm:$0xf]
      %v294 = vld [vmem:[%s229 + $0x7c] sm:$0xf]
      %v295 = vld [vmem:[%s229 + $0x80] sm:$0xf]
      %v296 = vld [vmem:[%s229 + $0x84] sm:$0xf]
      %v297 = vld [vmem:[%s229 + $0x88] sm:$0xf]
      %v298 = vld [vmem:[%s229 + $0x8c] sm:$0xf]
      %v299 = vld [vmem:[%s229 + $0x90] sm:$0xf]
      %v300 = vld [vmem:[%s229 + $0x94] sm:$0xf]
      %v301 = vld [vmem:[%s229 + $0x98] sm:$0xf]
      %v302 = vld [vmem:[%s229 + $0x9c] sm:$0xf]
      %v303 = vld [vmem:[%s229 + $0xa0] sm:$0xf]
      %v304 = vld [vmem:[%s229 + $0xa4] sm:$0xf]
      %v305 = vld [vmem:[%s229 + $0xa8] sm:$0xf]
      %v306 = vld [vmem:[%s229 + $0xac] sm:$0xf]
      %v307 = vld [vmem:[%s229 + $0xb0] sm:$0xf]
      %v308 = vld [vmem:[%s229 + $0xb4] sm:$0xf]
      %v309 = vld [vmem:[%s229 + $0xb8] sm:$0xf]
      %v310 = vld [vmem:[%s229 + $0xbc] sm:$0xf]
      %v311 = vld [vmem:[%s229 + $0xc0] sm:$0xf]
      %v312 = vld [vmem:[%s229 + $0xc4] sm:$0xf]
      %v313 = vld [vmem:[%s229 + $0xc8] sm:$0xf]
      %v314 = vld [vmem:[%s229 + $0xcc] sm:$0xf]
      %v315 = vld [vmem:[%s229 + $0xd0] sm:$0xf]
      %v316 = vld [vmem:[%s229 + $0xd4] sm:$0xf]
      %v317 = vld [vmem:[%s229 + $0xd8] sm:$0xf]
      %v318 = vld [vmem:[%s229 + $0xdc] sm:$0xf]
      %v319 = vld [vmem:[%s229 + $0xe0] sm:$0xf]
      %v320 = vld [vmem:[%s229 + $0xe4] sm:$0xf]
      %v321 = vld [vmem:[%s229 + $0xe8] sm:$0xf]
      %v322 = vld [vmem:[%s229 + $0xec] sm:$0xf]
      %v323 = vld [vmem:[%s229 + $0xf0] sm:$0xf]
      %v324 = vld [vmem:[%s229 + $0xf4] sm:$0xf]
      %v325 = vld [vmem:[%s229 + $0xf8] sm:$0xf]
      %v326 = vld [vmem:[%s229 + $0xfc] sm:$0xf]
      %v327 = vld [vmem:[%s2] sm:$0x1]
      %v329 = vlaneseq
      %v330 = vshrl.u32 %v329, 7
      %v331 = vsub.s32 0, %v330
      %v332 = vrot.slane %v327, %v331
      %v366 = vunpack.c.l.b16 %v231
      %v367 = vunpack.c.h.b16 %v231
      %v368 = vunpack.c.l.b16 %v232
      %v369 = vunpack.c.h.b16 %v232
      %v370 = vunpack.c.l.b16 %v233
      %v371 = vunpack.c.h.b16 %v233
      %v372 = vunpack.c.l.b16 %v234
      %v373 = vunpack.c.h.b16 %v234
      %v374 = vunpack.c.l.b16 %v235
      %v375 = vunpack.c.h.b16 %v235
      %v376 = vunpack.c.l.b16 %v236
      %v377 = vunpack.c.h.b16 %v236
      %v378 = vunpack.c.l.b16 %v237
      %v379 = vunpack.c.h.b16 %v237
      %v380 = vunpack.c.l.b16 %v238
      %v381 = vunpack.c.h.b16 %v238
      %v382 = vunpack.c.l.b16 %v239
      %v383 = vunpack.c.h.b16 %v239
      %v384 = vunpack.c.l.b16 %v240
      %v385 = vunpack.c.h.b16 %v240
      %v386 = vunpack.c.l.b16 %v241
      %v387 = vunpack.c.h.b16 %v241
      %v388 = vunpack.c.l.b16 %v242
      %v389 = vunpack.c.h.b16 %v242
      %v390 = vunpack.c.l.b16 %v243
      %v391 = vunpack.c.h.b16 %v243
      %v392 = vunpack.c.l.b16 %v244
      %v393 = vunpack.c.h.b16 %v244
      %v394 = vunpack.c.l.b16 %v245
      %v395 = vunpack.c.h.b16 %v245
      %v396 = vunpack.c.l.b16 %v246
      %v397 = vunpack.c.h.b16 %v246
      %v398 = vunpack.c.l.b16 %v247
      %v399 = vunpack.c.h.b16 %v247
      %v400 = vunpack.c.l.b16 %v248
      %v401 = vunpack.c.h.b16 %v248
      %v402 = vunpack.c.l.b16 %v249
      %v403 = vunpack.c.h.b16 %v249
      %v404 = vunpack.c.l.b16 %v250
      %v405 = vunpack.c.h.b16 %v250
      %v406 = vunpack.c.l.b16 %v251
      %v407 = vunpack.c.h.b16 %v251
      %v408 = vunpack.c.l.b16 %v252
      %v409 = vunpack.c.h.b16 %v252
      %v410 = vunpack.c.l.b16 %v253
      %v411 = vunpack.c.h.b16 %v253
      %v412 = vunpack.c.l.b16 %v254
      %v413 = vunpack.c.h.b16 %v254
      %v414 = vunpack.c.l.b16 %v255
      %v415 = vunpack.c.h.b16 %v255
      %v416 = vunpack.c.l.b16 %v256
      %v417 = vunpack.c.h.b16 %v256
      %v418 = vunpack.c.l.b16 %v257
      %v419 = vunpack.c.h.b16 %v257
      %v420 = vunpack.c.l.b16 %v258
      %v421 = vunpack.c.h.b16 %v258
      %v422 = vunpack.c.l.b16 %v259
      %v423 = vunpack.c.h.b16 %v259
      %v424 = vunpack.c.l.b16 %v260
      %v425 = vunpack.c.h.b16 %v260
      %v426 = vunpack.c.l.b16 %v261
      %v427 = vunpack.c.h.b16 %v261
      %v428 = vunpack.c.l.b16 %v262
      %v429 = vunpack.c.h.b16 %v262
      %v430 = vpack.c.b16 %v370, %v366
      %v431 = vpack.c.b16 %v371, %v367
      %v432 = vpack.c.b16 %v372, %v368
      %v433 = vpack.c.b16 %v373, %v369
      %v434 = vpack.c.b16 %v378, %v374
      %v435 = vpack.c.b16 %v379, %v375
      %v436 = vpack.c.b16 %v380, %v376
      %v437 = vpack.c.b16 %v381, %v377
      %v438 = vpack.c.b16 %v386, %v382
      %v439 = vpack.c.b16 %v387, %v383
      %v440 = vpack.c.b16 %v388, %v384
      %v441 = vpack.c.b16 %v389, %v385
      %v442 = vpack.c.b16 %v394, %v390
      %v443 = vpack.c.b16 %v395, %v391
      %v444 = vpack.c.b16 %v396, %v392
      %v445 = vpack.c.b16 %v397, %v393
      %v446 = vpack.c.b16 %v402, %v398
      %v447 = vpack.c.b16 %v403, %v399
      %v448 = vpack.c.b16 %v404, %v400
      %v449 = vpack.c.b16 %v405, %v401
      %v450 = vpack.c.b16 %v410, %v406
      %v451 = vpack.c.b16 %v411, %v407
      %v452 = vpack.c.b16 %v412, %v408
      %v453 = vpack.c.b16 %v413, %v409
      %v454 = vpack.c.b16 %v418, %v414
      %v455 = vpack.c.b16 %v419, %v415
      %v456 = vpack.c.b16 %v420, %v416
      %v457 = vpack.c.b16 %v421, %v417
      %v458 = vpack.c.b16 %v426, %v422
      %v459 = vpack.c.b16 %v427, %v423
      %v460 = vpack.c.b16 %v428, %v424
      %v461 = vpack.c.b16 %v429, %v425
      %v558 = vunpack.c.l.b16 %v263
      %v559 = vunpack.c.l.b16 %v264
      %v560 = vunpack.c.l.b16 %v265
      %v561 = vunpack.c.l.b16 %v266
      %v562 = vunpack.c.l.b16 %v267
      %v563 = vunpack.c.l.b16 %v268
      %v564 = vunpack.c.l.b16 %v269
      %v565 = vunpack.c.l.b16 %v270
      %v566 = vunpack.c.l.b16 %v271
      %v567 = vunpack.c.l.b16 %v272
      %v568 = vunpack.c.l.b16 %v273
      %v569 = vunpack.c.l.b16 %v274
      %v570 = vunpack.c.l.b16 %v275
      %v571 = vunpack.c.l.b16 %v276
      %v572 = vunpack.c.l.b16 %v277
      %v573 = vunpack.c.l.b16 %v278
      %v574 = vunpack.c.l.b16 %v279
      %v575 = vunpack.c.l.b16 %v280
      %v576 = vunpack.c.l.b16 %v281
      %v577 = vunpack.c.l.b16 %v282
      %v578 = vunpack.c.l.b16 %v283
      %v579 = vunpack.c.l.b16 %v284
      %v580 = vunpack.c.l.b16 %v285
      %v581 = vunpack.c.l.b16 %v286
      %v582 = vunpack.c.l.b16 %v287
      %v583 = vunpack.c.l.b16 %v288
      %v584 = vunpack.c.l.b16 %v289
      %v585 = vunpack.c.l.b16 %v290
      %v586 = vunpack.c.l.b16 %v291
      %v587 = vunpack.c.l.b16 %v292
      %v588 = vunpack.c.l.b16 %v293
      %v589 = vunpack.c.l.b16 %v294
      %v590 = vunpack.c.l.b16 %v295
      %v591 = vunpack.c.l.b16 %v296
      %v592 = vunpack.c.l.b16 %v297
      %v593 = vunpack.c.l.b16 %v298
      %v594 = vunpack.c.l.b16 %v299
      %v595 = vunpack.c.l.b16 %v300
      %v596 = vunpack.c.l.b16 %v301
      %v597 = vunpack.c.l.b16 %v302
      %v598 = vunpack.c.l.b16 %v303
      %v599 = vunpack.c.l.b16 %v304
      %v600 = vunpack.c.l.b16 %v305
      %v601 = vunpack.c.l.b16 %v306
      %v602 = vunpack.c.l.b16 %v307
      %v603 = vunpack.c.l.b16 %v308
      %v604 = vunpack.c.l.b16 %v309
      %v605 = vunpack.c.l.b16 %v310
      %v606 = vunpack.c.l.b16 %v311
      %v607 = vunpack.c.l.b16 %v312
      %v608 = vunpack.c.l.b16 %v313
      %v609 = vunpack.c.l.b16 %v314
      %v610 = vunpack.c.l.b16 %v315
      %v611 = vunpack.c.l.b16 %v316
      %v612 = vunpack.c.l.b16 %v317
      %v613 = vunpack.c.l.b16 %v318
      %v614 = vunpack.c.l.b16 %v319
      %v615 = vunpack.c.l.b16 %v320
      %v616 = vunpack.c.l.b16 %v321
      %v617 = vunpack.c.l.b16 %v322
      %v618 = vunpack.c.l.b16 %v323
      %v619 = vunpack.c.l.b16 %v324
      %v620 = vunpack.c.l.b16 %v325
      %v621 = vunpack.c.l.b16 %v326
      %v622 = vpack.c.b16 %v559, %v558
      %v623 = vpack.c.b16 %v561, %v560
      %v624 = vpack.c.b16 %v563, %v562
      %v625 = vpack.c.b16 %v565, %v564
      %v626 = vpack.c.b16 %v567, %v566
      %v627 = vpack.c.b16 %v569, %v568
      %v628 = vpack.c.b16 %v571, %v570
      %v629 = vpack.c.b16 %v573, %v572
      %v630 = vpack.c.b16 %v575, %v574
      %v631 = vpack.c.b16 %v577, %v576
      %v632 = vpack.c.b16 %v579, %v578
      %v633 = vpack.c.b16 %v581, %v580
      %v634 = vpack.c.b16 %v583, %v582
      %v635 = vpack.c.b16 %v585, %v584
      %v636 = vpack.c.b16 %v587, %v586
      %v637 = vpack.c.b16 %v589, %v588
      %v638 = vpack.c.b16 %v591, %v590
      %v639 = vpack.c.b16 %v593, %v592
      %v640 = vpack.c.b16 %v595, %v594
      %v641 = vpack.c.b16 %v597, %v596
      %v642 = vpack.c.b16 %v599, %v598
      %v643 = vpack.c.b16 %v601, %v600
      %v644 = vpack.c.b16 %v603, %v602
      %v645 = vpack.c.b16 %v605, %v604
      %v646 = vpack.c.b16 %v607, %v606
      %v647 = vpack.c.b16 %v609, %v608
      %v648 = vpack.c.b16 %v611, %v610
      %v649 = vpack.c.b16 %v613, %v612
      %v650 = vpack.c.b16 %v615, %v614
      %v651 = vpack.c.b16 %v617, %v616
      %v652 = vpack.c.b16 %v619, %v618
      %v653 = vpack.c.b16 %v621, %v620
      %686 = vmatprep.subr.bf16.mxu0 0
      %687 = vmatpush1.bf16.msra.mxu0 %v622
      %688 = vmatprep.subr.bf16.mxu0 0
      %689 = vmatpush1.bf16.msra.mxu0 %v623
      %690 = vmatprep.subr.bf16.mxu0 0
      %691 = vmatpush1.bf16.msra.mxu0 %v624
      %692 = vmatprep.subr.bf16.mxu0 0
      %693 = vmatpush1.bf16.msra.mxu0 %v625
      %694 = vmatprep.subr.bf16.mxu0 0
      %695 = vmatpush1.bf16.msra.mxu0 %v626
      %696 = vmatprep.subr.bf16.mxu0 0
      %697 = vmatpush1.bf16.msra.mxu0 %v627
      %698 = vmatprep.subr.bf16.mxu0 0
      %699 = vmatpush1.bf16.msra.mxu0 %v628
      %700 = vmatprep.subr.bf16.mxu0 0
      %701 = vmatpush1.bf16.msra.mxu0 %v629
      %702 = vmatprep.subr.bf16.mxu0 0
      %703 = vmatpush1.bf16.msra.mxu0 %v630
      %704 = vmatprep.subr.bf16.mxu0 0
      %705 = vmatpush1.bf16.msra.mxu0 %v631
      %706 = vmatprep.subr.bf16.mxu0 0
      %707 = vmatpush1.bf16.msra.mxu0 %v632
      %708 = vmatprep.subr.bf16.mxu0 0
      %709 = vmatpush1.bf16.msra.mxu0 %v633
      %710 = vmatprep.subr.bf16.mxu0 0
      %711 = vmatpush1.bf16.msra.mxu0 %v634
      %712 = vmatprep.subr.bf16.mxu0 0
      %713 = vmatpush1.bf16.msra.mxu0 %v635
      %714 = vmatprep.subr.bf16.mxu0 0
      %715 = vmatpush1.bf16.msra.mxu0 %v636
      %716 = vmatprep.subr.bf16.mxu0 0
      %717 = vmatpush1.bf16.msra.mxu0 %v637
      %718 = vmatprep.mubr.bf16.mxu0 %v431
      %719 = vmatmul.mubr.bf16.gmra.mrb[0].mxu0 %v430
      %v720 = vpop.f32.mrb[0].mxu0
      %v721 = vadd.f32 %v332, %v720
      %v722 = vpop.f32.mrb[0].mxu0
      %v723 = vpop.f32.mrb[0].mxu0
      %v724 = vadd.f32 %v332, %v723
      %v725 = vpop.f32.mrb[0].mxu0
      %726 = vmatprep.mubr.bf16.mxu0 %v435
      %727 = vmatmul.mubr.bf16.gmra.mrb[0].mxu0 %v434
      %v728 = vpop.f32.mrb[0].mxu0
      %v729 = vadd.f32 %v332, %v728
      %v730 = vpop.f32.mrb[0].mxu0
      %v731 = vpop.f32.mrb[0].mxu0
      %v732 = vadd.f32 %v332, %v731
      %v733 = vpop.f32.mrb[0].mxu0
      %734 = vmatprep.mubr.bf16.mxu0 %v439
      %735 = vmatmul.mubr.bf16.gmra.mrb[0].mxu0 %v438
      %v736 = vpop.f32.mrb[0].mxu0
      %v737 = vadd.f32 %v332, %v736
      %v738 = vpop.f32.mrb[0].mxu0
      %v739 = vpop.f32.mrb[0].mxu0
      %v740 = vadd.f32 %v332, %v739
      %v741 = vpop.f32.mrb[0].mxu0
      %742 = vmatprep.mubr.bf16.mxu0 %v443
      %743 = vmatmul.mubr.bf16.gmra.mrb[0].mxu0 %v442
      %v744 = vpop.f32.mrb[0].mxu0
      %v745 = vadd.f32 %v332, %v744
      %v746 = vpop.f32.mrb[0].mxu0
      %v747 = vpop.f32.mrb[0].mxu0
      %v748 = vadd.f32 %v332, %v747
      %v749 = vpop.f32.mrb[0].mxu0
      %750 = vmatprep.mubr.bf16.mxu0 %v447
      %751 = vmatmul.mubr.bf16.gmra.mrb[0].mxu0 %v446
      %v752 = vpop.f32.mrb[0].mxu0
      %v753 = vadd.f32 %v332, %v752
      %v754 = vpop.f32.mrb[0].mxu0
      %v755 = vpop.f32.mrb[0].mxu0
      %v756 = vadd.f32 %v332, %v755
      %v757 = vpop.f32.mrb[0].mxu0
      %758 = vmatprep.mubr.bf16.mxu0 %v451
      %759 = vmatmul.mubr.bf16.gmra.mrb[0].mxu0 %v450
      %v760 = vpop.f32.mrb[0].mxu0
      %v761 = vadd.f32 %v332, %v760
      %v762 = vpop.f32.mrb[0].mxu0
      %v763 = vpop.f32.mrb[0].mxu0
      %v764 = vadd.f32 %v332, %v763
      %v765 = vpop.f32.mrb[0].mxu0
      %766 = vmatprep.mubr.bf16.mxu0 %v455
      %767 = vmatmul.mubr.bf16.gmra.mrb[0].mxu0 %v454
      %v768 = vpop.f32.mrb[0].mxu0
      %v769 = vadd.f32 %v332, %v768
      %v770 = vpop.f32.mrb[0].mxu0
      %v771 = vpop.f32.mrb[0].mxu0
      %v772 = vadd.f32 %v332, %v771
      %v773 = vpop.f32.mrb[0].mxu0
      %774 = vmatprep.mubr.bf16.mxu0 %v459
      %775 = vmatmul.mubr.bf16.gmra.mrb[0].mxu0 %v458
      %v776 = vpop.f32.mrb[0].mxu0
      %v777 = vadd.f32 %v332, %v776
      %v778 = vpop.f32.mrb[0].mxu0
      %v779 = vpop.f32.mrb[0].mxu0
      %v780 = vadd.f32 %v332, %v779
      %v781 = vpop.f32.mrb[0].mxu0
      %782 = vdwg.mxu0
      %783 = vmatprep.subr.bf16.mxu0 0
      %784 = vmatpush1.bf16.msra.mxu0 %v638
      %785 = vmatprep.subr.bf16.mxu0 0
      %786 = vmatpush1.bf16.msra.mxu0 %v639
      %787 = vmatprep.subr.bf16.mxu0 0
      %788 = vmatpush1.bf16.msra.mxu0 %v640
      %789 = vmatprep.subr.bf16.mxu0 0
      %790 = vmatpush1.bf16.msra.mxu0 %v641
      %791 = vmatprep.subr.bf16.mxu0 0
      %792 = vmatpush1.bf16.msra.mxu0 %v642
      %793 = vmatprep.subr.bf16.mxu0 0
      %794 = vmatpush1.bf16.msra.mxu0 %v643
      %795 = vmatprep.subr.bf16.mxu0 0
      %796 = vmatpush1.bf16.msra.mxu0 %v644
      %797 = vmatprep.subr.bf16.mxu0 0
      %798 = vmatpush1.bf16.msra.mxu0 %v645
      %799 = vmatprep.subr.bf16.mxu0 0
      %800 = vmatpush1.bf16.msra.mxu0 %v646
      %801 = vmatprep.subr.bf16.mxu0 0
      %802 = vmatpush1.bf16.msra.mxu0 %v647
      %803 = vmatprep.subr.bf16.mxu0 0
      %804 = vmatpush1.bf16.msra.mxu0 %v648
      %805 = vmatprep.subr.bf16.mxu0 0
      %806 = vmatpush1.bf16.msra.mxu0 %v649
      %807 = vmatprep.subr.bf16.mxu0 0
      %808 = vmatpush1.bf16.msra.mxu0 %v650
      %809 = vmatprep.subr.bf16.mxu0 0
      %810 = vmatpush1.bf16.msra.mxu0 %v651
      %811 = vmatprep.subr.bf16.mxu0 0
      %812 = vmatpush1.bf16.msra.mxu0 %v652
      %813 = vmatprep.subr.bf16.mxu0 0
      %814 = vmatpush1.bf16.msra.mxu0 %v653
      %815 = vmatprep.mubr.bf16.mxu0 %v433
      %816 = vmatmul.mubr.bf16.gmra.mrb[0].mxu0 %v432
      %v817 = vpop.f32.mrb[0].mxu0
      %v818 = vadd.f32 %v721, %v817
      %v819 = vpop.f32.mrb[0].mxu0
      %v820 = vpop.f32.mrb[0].mxu0
      %v821 = vadd.f32 %v724, %v820
      %v822 = vpop.f32.mrb[0].mxu0
      %823 = vmatprep.mubr.bf16.mxu0 %v437
      %824 = vmatmul.mubr.bf16.gmra.mrb[0].mxu0 %v436
      %v825 = vpop.f32.mrb[0].mxu0
      %v826 = vadd.f32 %v729, %v825
      %v827 = vpop.f32.mrb[0].mxu0
      %v828 = vpop.f32.mrb[0].mxu0
      %v829 = vadd.f32 %v732, %v828
      %v830 = vpop.f32.mrb[0].mxu0
      %831 = vmatprep.mubr.bf16.mxu0 %v441
      %832 = vmatmul.mubr.bf16.gmra.mrb[0].mxu0 %v440
      %v833 = vpop.f32.mrb[0].mxu0
      %v834 = vadd.f32 %v737, %v833
      %v835 = vpop.f32.mrb[0].mxu0
      %v836 = vpop.f32.mrb[0].mxu0
      %v837 = vadd.f32 %v740, %v836
      %v838 = vpop.f32.mrb[0].mxu0
      %839 = vmatprep.mubr.bf16.mxu0 %v445
      %840 = vmatmul.mubr.bf16.gmra.mrb[0].mxu0 %v444
      %v841 = vpop.f32.mrb[0].mxu0
      %v842 = vadd.f32 %v745, %v841
      %v843 = vpop.f32.mrb[0].mxu0
      %v844 = vpop.f32.mrb[0].mxu0
      %v845 = vadd.f32 %v748, %v844
      %v846 = vpop.f32.mrb[0].mxu0
      %847 = vmatprep.mubr.bf16.mxu0 %v449
      %848 = vmatmul.mubr.bf16.gmra.mrb[0].mxu0 %v448
      %v849 = vpop.f32.mrb[0].mxu0
      %v850 = vadd.f32 %v753, %v849
      %v851 = vpop.f32.mrb[0].mxu0
      %v852 = vpop.f32.mrb[0].mxu0
      %v853 = vadd.f32 %v756, %v852
      %v854 = vpop.f32.mrb[0].mxu0
      %855 = vmatprep.mubr.bf16.mxu0 %v453
      %856 = vmatmul.mubr.bf16.gmra.mrb[0].mxu0 %v452
      %v857 = vpop.f32.mrb[0].mxu0
      %v858 = vadd.f32 %v761, %v857
      %v859 = vpop.f32.mrb[0].mxu0
      %v860 = vpop.f32.mrb[0].mxu0
      %v861 = vadd.f32 %v764, %v860
      %v862 = vpop.f32.mrb[0].mxu0
      %863 = vmatprep.mubr.bf16.mxu0 %v457
      %864 = vmatmul.mubr.bf16.gmra.mrb[0].mxu0 %v456
      %v865 = vpop.f32.mrb[0].mxu0
      %v866 = vadd.f32 %v769, %v865
      %v867 = vpop.f32.mrb[0].mxu0
      %v868 = vpop.f32.mrb[0].mxu0
      %v869 = vadd.f32 %v772, %v868
      %v870 = vpop.f32.mrb[0].mxu0
      %871 = vmatprep.mubr.bf16.mxu0 %v461
      %872 = vmatmul.mubr.bf16.gmra.mrb[0].mxu0 %v460
      %v873 = vpop.f32.mrb[0].mxu0
      %v874 = vadd.f32 %v777, %v873
      %v875 = vpop.f32.mrb[0].mxu0
      %v876 = vpop.f32.mrb[0].mxu0
      %v877 = vadd.f32 %v780, %v876
      %v878 = vpop.f32.mrb[0].mxu0
      %879 = vdwg.mxu0
      %s880 = smul.u32 %s16, 128
      %s881 = scalar_lea.vmem [#allocation2], %s880
      %882 = vst [vmem:[%s881] sm:$0xff] %v818
      %883 = vst [vmem:[%s881 + $0x8] sm:$0xff] %v821
      %884 = vst [vmem:[%s881 + $0x10] sm:$0xff] %v826
      %885 = vst [vmem:[%s881 + $0x18] sm:$0xff] %v829
      %886 = vst [vmem:[%s881 + $0x20] sm:$0xff] %v834
      %887 = vst [vmem:[%s881 + $0x28] sm:$0xff] %v837
      %888 = vst [vmem:[%s881 + $0x30] sm:$0xff] %v842
      %889 = vst [vmem:[%s881 + $0x38] sm:$0xff] %v845
      %890 = vst [vmem:[%s881 + $0x40] sm:$0xff] %v850
      %891 = vst [vmem:[%s881 + $0x48] sm:$0xff] %v853
      %892 = vst [vmem:[%s881 + $0x50] sm:$0xff] %v858
      %893 = vst [vmem:[%s881 + $0x58] sm:$0xff] %v861
      %894 = vst [vmem:[%s881 + $0x60] sm:$0xff] %v866
      %895 = vst [vmem:[%s881 + $0x68] sm:$0xff] %v869
      %896 = vst [vmem:[%s881 + $0x70] sm:$0xff] %v874
      %897 = vst [vmem:[%s881 + $0x78] sm:$0xff] %v877
      %p898 = scmp.eq.s32.totalorder %s16, 3
      // Predicated region
      $region41: #{generator_forward.6} parent=39 // pred_check
        %p899 = pneg %p898
      $region42: #{generator_forward.6} parent=39 // pred_check_branch
        %901 = sbr.rel (%p899) target = $region44
      $region43: #{generator_forward.6} parent=39 // pred_region
        %v902 = vld [vmem:[#allocation2] sm:$0xff]
        %v903 = vld [vmem:[#allocation2 + $0x8] sm:$0xff]
        %v904 = vld [vmem:[#allocation2 + $0x10] sm:$0xff]
        %v905 = vld [vmem:[#allocation2 + $0x18] sm:$0xff]
        %v906 = vld [vmem:[#allocation2 + $0x20] sm:$0xff]
        %v907 = vld [vmem:[#allocation2 + $0x28] sm:$0xff]
        %v908 = vld [vmem:[#allocation2 + $0x30] sm:$0xff]
        %v909 = vld [vmem:[#allocation2 + $0x38] sm:$0xff]
        %v910 = vld [vmem:[#allocation2 + $0x40] sm:$0xff]
        %v911 = vld [vmem:[#allocation2 + $0x48] sm:$0xff]
        %v912 = vld [vmem:[#allocation2 + $0x50] sm:$0xff]
        %v913 = vld [vmem:[#allocation2 + $0x58] sm:$0xff]
        %v914 = vld [vmem:[#allocation2 + $0x60] sm:$0xff]
        %v915 = vld [vmem:[#allocation2 + $0x68] sm:$0xff]
        %v916 = vld [vmem:[#allocation2 + $0x70] sm:$0xff]
        %v917 = vld [vmem:[#allocation2 + $0x78] sm:$0xff]
        %v918 = vld [vmem:[#allocation2 + $0x80] sm:$0xff]
        %v919 = vld [vmem:[#allocation2 + $0x88] sm:$0xff]
        %v920 = vld [vmem:[#allocation2 + $0x90] sm:$0xff]
        %v921 = vld [vmem:[#allocation2 + $0x98] sm:$0xff]
        %v922 = vld [vmem:[#allocation2 + $0xa0] sm:$0xff]
        %v923 = vld [vmem:[#allocation2 + $0xa8] sm:$0xff]
        %v924 = vld [vmem:[#allocation2 + $0xb0] sm:$0xff]
        %v925 = vld [vmem:[#allocation2 + $0xb8] sm:$0xff]
        %v926 = vld [vmem:[#allocation2 + $0xc0] sm:$0xff]
        %v927 = vld [vmem:[#allocation2 + $0xc8] sm:$0xff]
        %v928 = vld [vmem:[#allocation2 + $0xd0] sm:$0xff]
        %v929 = vld [vmem:[#allocation2 + $0xd8] sm:$0xff]
        %v930 = vld [vmem:[#allocation2 + $0xe0] sm:$0xff]
        %v931 = vld [vmem:[#allocation2 + $0xe8] sm:$0xff]
        %v932 = vld [vmem:[#allocation2 + $0xf0] sm:$0xff]
        %v933 = vld [vmem:[#allocation2 + $0xf8] sm:$0xff]
        %v934 = vld [vmem:[#allocation2 + $0x100] sm:$0xff]
        %v935 = vld [vmem:[#allocation2 + $0x108] sm:$0xff]
        %v936 = vld [vmem:[#allocation2 + $0x110] sm:$0xff]
        %v937 = vld [vmem:[#allocation2 + $0x118] sm:$0xff]
        %v938 = vld [vmem:[#allocation2 + $0x120] sm:$0xff]
        %v939 = vld [vmem:[#allocation2 + $0x128] sm:$0xff]
        %v940 = vld [vmem:[#allocation2 + $0x130] sm:$0xff]
        %v941 = vld [vmem:[#allocation2 + $0x138] sm:$0xff]
        %v942 = vld [vmem:[#allocation2 + $0x140] sm:$0xff]
        %v943 = vld [vmem:[#allocation2 + $0x148] sm:$0xff]
        %v944 = vld [vmem:[#allocation2 + $0x150] sm:$0xff]
        %v945 = vld [vmem:[#allocation2 + $0x158] sm:$0xff]
        %v946 = vld [vmem:[#allocation2 + $0x160] sm:$0xff]
        %v947 = vld [vmem:[#allocation2 + $0x168] sm:$0xff]
        %v948 = vld [vmem:[#allocation2 + $0x170] sm:$0xff]
        %v949 = vld [vmem:[#allocation2 + $0x178] sm:$0xff]
        %v950 = vld [vmem:[#allocation2 + $0x180] sm:$0xff]
        %v951 = vld [vmem:[#allocation2 + $0x188] sm:$0xff]
        %v952 = vld [vmem:[#allocation2 + $0x190] sm:$0xff]
        %v953 = vld [vmem:[#allocation2 + $0x198] sm:$0xff]
        %v954 = vld [vmem:[#allocation2 + $0x1a0] sm:$0xff]
        %v955 = vld [vmem:[#allocation2 + $0x1a8] sm:$0xff]
        %v956 = vld [vmem:[#allocation2 + $0x1b0] sm:$0xff]
        %v957 = vld [vmem:[#allocation2 + $0x1b8] sm:$0xff]
        %v958 = vld [vmem:[#allocation2 + $0x1c0] sm:$0xff]
        %v959 = vld [vmem:[#allocation2 + $0x1c8] sm:$0xff]
        %v960 = vld [vmem:[#allocation2 + $0x1d0] sm:$0xff]
        %v961 = vld [vmem:[#allocation2 + $0x1d8] sm:$0xff]
        %v962 = vld [vmem:[#allocation2 + $0x1e0] sm:$0xff]
        %v963 = vld [vmem:[#allocation2 + $0x1e8] sm:$0xff]
        %v964 = vld [vmem:[#allocation2 + $0x1f0] sm:$0xff]
        %v965 = vld [vmem:[#allocation2 + $0x1f8] sm:$0xff]
        %v966 = vadd.f32 %v902, %v918
        %v967 = vadd.f32 %v966, %v934
        %v968 = vadd.f32 %v967, %v950
        %v969 = vadd.f32 %v903, %v919
        %v970 = vadd.f32 %v969, %v935
        %v971 = vadd.f32 %v970, %v951
        %v972 = vadd.f32 %v904, %v920
        %v973 = vadd.f32 %v972, %v936
        %v974 = vadd.f32 %v973, %v952
        %v975 = vadd.f32 %v905, %v921
        %v976 = vadd.f32 %v975, %v937
        %v977 = vadd.f32 %v976, %v953
        %v978 = vadd.f32 %v906, %v922
        %v979 = vadd.f32 %v978, %v938
        %v980 = vadd.f32 %v979, %v954
        %v981 = vadd.f32 %v907, %v923
        %v982 = vadd.f32 %v981, %v939
        %v983 = vadd.f32 %v982, %v955
        %v984 = vadd.f32 %v908, %v924
        %v985 = vadd.f32 %v984, %v940
        %v986 = vadd.f32 %v985, %v956
        %v987 = vadd.f32 %v909, %v925
        %v988 = vadd.f32 %v987, %v941
        %v989 = vadd.f32 %v988, %v957
        %v990 = vadd.f32 %v910, %v926
        %v991 = vadd.f32 %v990, %v942
        %v992 = vadd.f32 %v991, %v958
        %v993 = vadd.f32 %v911, %v927
        %v994 = vadd.f32 %v993, %v943
        %v995 = vadd.f32 %v994, %v959
        %v996 = vadd.f32 %v912, %v928
        %v997 = vadd.f32 %v996, %v944
        %v998 = vadd.f32 %v997, %v960
        %v999 = vadd.f32 %v913, %v929
        %v1000 = vadd.f32 %v999, %v945
        %v1001 = vadd.f32 %v1000, %v961
        %v1002 = vadd.f32 %v914, %v930
        %v1003 = vadd.f32 %v1002, %v946
        %v1004 = vadd.f32 %v1003, %v962
        %v1005 = vadd.f32 %v915, %v931
        %v1006 = vadd.f32 %v1005, %v947
        %v1007 = vadd.f32 %v1006, %v963
        %v1008 = vadd.f32 %v916, %v932
        %v1009 = vadd.f32 %v1008, %v948
        %v1010 = vadd.f32 %v1009, %v964
        %v1011 = vadd.f32 %v917, %v933
        %v1012 = vadd.f32 %v1011, %v949
        %v1013 = vadd.f32 %v1012, %v965
        %v1014 = vadd.f32 %v968, %v971
        %v1015 = vadd.f32 %v1014, %v974
        %v1016 = vadd.f32 %v1015, %v977
        %v1017 = vadd.f32 %v1016, %v980
        %v1018 = vadd.f32 %v1017, %v983
        %v1019 = vadd.f32 %v1018, %v986
        %v1020 = vadd.f32 %v1019, %v989
        %v1021 = vadd.f32 %v1020, %v992
        %v1022 = vadd.f32 %v1021, %v995
        %v1023 = vadd.f32 %v1022, %v998
        %v1024 = vadd.f32 %v1023, %v1001
        %v1025 = vadd.f32 %v1024, %v1004
        %v1026 = vadd.f32 %v1025, %v1007
        %v1027 = vadd.f32 %v1026, %v1010
        %v1028 = vadd.f32 %v1027, %v1013
        %v1029 = vrot.slane %v1028, 4
        %v1030 = vadd.f32 %v1028, %v1029
        %v1031 = vrot.slane %v1030, 2
        %v1032 = vadd.f32 %v1030, %v1031
        %v1033 = vrot.slane %v1032, 1
        %v1034 = vadd.f32 %v1032, %v1033
        %v1035 = vmul.f32 %v902, %v902
        %v1036 = vmul.f32 %v903, %v903
        %v1037 = vmul.f32 %v904, %v904
        %v1038 = vmul.f32 %v905, %v905
        %v1039 = vmul.f32 %v906, %v906
        %v1040 = vmul.f32 %v907, %v907
        %v1041 = vmul.f32 %v908, %v908
        %v1042 = vmul.f32 %v909, %v909
        %v1043 = vmul.f32 %v910, %v910
        %v1044 = vmul.f32 %v911, %v911
        %v1045 = vmul.f32 %v912, %v912
        %v1046 = vmul.f32 %v913, %v913
        %v1047 = vmul.f32 %v914, %v914
        %v1048 = vmul.f32 %v915, %v915
        %v1049 = vmul.f32 %v916, %v916
        %v1050 = vmul.f32 %v917, %v917
        %v1051 = vmul.f32 %v918, %v918
        %v1052 = vmul.f32 %v919, %v919
        %v1053 = vmul.f32 %v920, %v920
        %v1054 = vmul.f32 %v921, %v921
        %v1055 = vmul.f32 %v922, %v922
        %v1056 = vmul.f32 %v923, %v923
        %v1057 = vmul.f32 %v924, %v924
        %v1058 = vmul.f32 %v925, %v925
        %v1059 = vmul.f32 %v926, %v926
        %v1060 = vmul.f32 %v927, %v927
        %v1061 = vmul.f32 %v928, %v928
        %v1062 = vmul.f32 %v929, %v929
        %v1063 = vmul.f32 %v930, %v930
        %v1064 = vmul.f32 %v931, %v931
        %v1065 = vmul.f32 %v932, %v932
        %v1066 = vmul.f32 %v933, %v933
        %v1067 = vmul.f32 %v934, %v934
        %v1068 = vmul.f32 %v935, %v935
        %v1069 = vmul.f32 %v936, %v936
        %v1070 = vmul.f32 %v937, %v937
        %v1071 = vmul.f32 %v938, %v938
        %v1072 = vmul.f32 %v939, %v939
        %v1073 = vmul.f32 %v940, %v940
        %v1074 = vmul.f32 %v941, %v941
        %v1075 = vmul.f32 %v942, %v942
        %v1076 = vmul.f32 %v943, %v943
        %v1077 = vmul.f32 %v944, %v944
        %v1078 = vmul.f32 %v945, %v945
        %v1079 = vmul.f32 %v946, %v946
        %v1080 = vmul.f32 %v947, %v947
        %v1081 = vmul.f32 %v948, %v948
        %v1082 = vmul.f32 %v949, %v949
        %v1083 = vmul.f32 %v950, %v950
        %v1084 = vmul.f32 %v951, %v951
        %v1085 = vmul.f32 %v952, %v952
        %v1086 = vmul.f32 %v953, %v953
        %v1087 = vmul.f32 %v954, %v954
        %v1088 = vmul.f32 %v955, %v955
        %v1089 = vmul.f32 %v956, %v956
        %v1090 = vmul.f32 %v957, %v957
        %v1091 = vmul.f32 %v958, %v958
        %v1092 = vmul.f32 %v959, %v959
        %v1093 = vmul.f32 %v960, %v960
        %v1094 = vmul.f32 %v961, %v961
        %v1095 = vmul.f32 %v962, %v962
        %v1096 = vmul.f32 %v963, %v963
        %v1097 = vmul.f32 %v964, %v964
        %v1098 = vmul.f32 %v965, %v965
        %v1099 = vadd.f32 %v1035, %v1051
        %v1100 = vadd.f32 %v1099, %v1067
        %v1101 = vadd.f32 %v1100, %v1083
        %v1102 = vadd.f32 %v1036, %v1052
        %v1103 = vadd.f32 %v1102, %v1068
        %v1104 = vadd.f32 %v1103, %v1084
        %v1105 = vadd.f32 %v1037, %v1053
        %v1106 = vadd.f32 %v1105, %v1069
        %v1107 = vadd.f32 %v1106, %v1085
        %v1108 = vadd.f32 %v1038, %v1054
        %v1109 = vadd.f32 %v1108, %v1070
        %v1110 = vadd.f32 %v1109, %v1086
        %v1111 = vadd.f32 %v1039, %v1055
        %v1112 = vadd.f32 %v1111, %v1071
        %v1113 = vadd.f32 %v1112, %v1087
        %v1114 = vadd.f32 %v1040, %v1056
        %v1115 = vadd.f32 %v1114, %v1072
        %v1116 = vadd.f32 %v1115, %v1088
        %v1117 = vadd.f32 %v1041, %v1057
        %v1118 = vadd.f32 %v1117, %v1073
        %v1119 = vadd.f32 %v1118, %v1089
        %v1120 = vadd.f32 %v1042, %v1058
        %v1121 = vadd.f32 %v1120, %v1074
        %v1122 = vadd.f32 %v1121, %v1090
        %v1123 = vadd.f32 %v1043, %v1059
        %v1124 = vadd.f32 %v1123, %v1075
        %v1125 = vadd.f32 %v1124, %v1091
        %v1126 = vadd.f32 %v1044, %v1060
        %v1127 = vadd.f32 %v1126, %v1076
        %v1128 = vadd.f32 %v1127, %v1092
        %v1129 = vadd.f32 %v1045, %v1061
        %v1130 = vadd.f32 %v1129, %v1077
        %v1131 = vadd.f32 %v1130, %v1093
        %v1132 = vadd.f32 %v1046, %v1062
        %v1133 = vadd.f32 %v1132, %v1078
        %v1134 = vadd.f32 %v1133, %v1094
        %v1135 = vadd.f32 %v1047, %v1063
        %v1136 = vadd.f32 %v1135, %v1079
        %v1137 = vadd.f32 %v1136, %v1095
        %v1138 = vadd.f32 %v1048, %v1064
        %v1139 = vadd.f32 %v1138, %v1080
        %v1140 = vadd.f32 %v1139, %v1096
        %v1141 = vadd.f32 %v1049, %v1065
        %v1142 = vadd.f32 %v1141, %v1081
        %v1143 = vadd.f32 %v1142, %v1097
        %v1144 = vadd.f32 %v1050, %v1066
        %v1145 = vadd.f32 %v1144, %v1082
        %v1146 = vadd.f32 %v1145, %v1098
        %v1147 = vadd.f32 %v1101, %v1104
        %v1148 = vadd.f32 %v1147, %v1107
        %v1149 = vadd.f32 %v1148, %v1110
        %v1150 = vadd.f32 %v1149, %v1113
        %v1151 = vadd.f32 %v1150, %v1116
        %v1152 = vadd.f32 %v1151, %v1119
        %v1153 = vadd.f32 %v1152, %v1122
        %v1154 = vadd.f32 %v1153, %v1125
        %v1155 = vadd.f32 %v1154, %v1128
        %v1156 = vadd.f32 %v1155, %v1131
        %v1157 = vadd.f32 %v1156, %v1134
        %v1158 = vadd.f32 %v1157, %v1137
        %v1159 = vadd.f32 %v1158, %v1140
        %v1160 = vadd.f32 %v1159, %v1143
        %v1161 = vadd.f32 %v1160, %v1146
        %v1162 = vrot.slane %v1161, 4
        %v1163 = vadd.f32 %v1161, %v1162
        %v1164 = vrot.slane %v1163, 2
        %v1165 = vadd.f32 %v1163, %v1164
        %v1166 = vrot.slane %v1165, 1
        %v1167 = vadd.f32 %v1165, %v1166
        %v1168 = vrcp.pop 512.0
        %v1169 = vmul.f32 %v1034, %v1168
        %v1170 = vmul.f32 %v1167, %v1168
        %v1171 = vmul.f32 %v1169, %v1169
        %v1172 = vsub.f32 %v1170, %v1171
        %v1173 = vadd.f32 %v1172, 1e-05
        %v1174 = vrsqrt.pop %v1173
        %v1175 = vld [vmem:[%s3] sm:$0x1]
        %v1176 = vmul.f32 %v1174, %v1175
        %v1177 = vsub.f32 %v902, %v1169
        %v1178 = vsub.f32 %v903, %v1169
        %v1179 = vsub.f32 %v904, %v1169
        %v1180 = vsub.f32 %v905, %v1169
        %v1181 = vsub.f32 %v906, %v1169
        %v1182 = vsub.f32 %v907, %v1169
        %v1183 = vsub.f32 %v908, %v1169
        %v1184 = vsub.f32 %v909, %v1169
        %v1185 = vsub.f32 %v910, %v1169
        %v1186 = vsub.f32 %v911, %v1169
        %v1187 = vsub.f32 %v912, %v1169
        %v1188 = vsub.f32 %v913, %v1169
        %v1189 = vsub.f32 %v914, %v1169
        %v1190 = vsub.f32 %v915, %v1169
        %v1191 = vsub.f32 %v916, %v1169
        %v1192 = vsub.f32 %v917, %v1169
        %v1193 = vsub.f32 %v918, %v1169
        %v1194 = vsub.f32 %v919, %v1169
        %v1195 = vsub.f32 %v920, %v1169
        %v1196 = vsub.f32 %v921, %v1169
        %v1197 = vsub.f32 %v922, %v1169
        %v1198 = vsub.f32 %v923, %v1169
        %v1199 = vsub.f32 %v924, %v1169
        %v1200 = vsub.f32 %v925, %v1169
        %v1201 = vsub.f32 %v926, %v1169
        %v1202 = vsub.f32 %v927, %v1169
        %v1203 = vsub.f32 %v928, %v1169
        %v1204 = vsub.f32 %v929, %v1169
        %v1205 = vsub.f32 %v930, %v1169
        %v1206 = vsub.f32 %v931, %v1169
        %v1207 = vsub.f32 %v932, %v1169
        %v1208 = vsub.f32 %v933, %v1169
        %v1209 = vsub.f32 %v934, %v1169
        %v1210 = vsub.f32 %v935, %v1169
        %v1211 = vsub.f32 %v936, %v1169
        %v1212 = vsub.f32 %v937, %v1169
        %v1213 = vsub.f32 %v938, %v1169
        %v1214 = vsub.f32 %v939, %v1169
        %v1215 = vsub.f32 %v940, %v1169
        %v1216 = vsub.f32 %v941, %v1169
        %v1217 = vsub.f32 %v942, %v1169
        %v1218 = vsub.f32 %v943, %v1169
        %v1219 = vsub.f32 %v944, %v1169
        %v1220 = vsub.f32 %v945, %v1169
        %v1221 = vsub.f32 %v946, %v1169
        %v1222 = vsub.f32 %v947, %v1169
        %v1223 = vsub.f32 %v948, %v1169
        %v1224 = vsub.f32 %v949, %v1169
        %v1225 = vsub.f32 %v950, %v1169
        %v1226 = vsub.f32 %v951, %v1169
        %v1227 = vsub.f32 %v952, %v1169
        %v1228 = vsub.f32 %v953, %v1169
        %v1229 = vsub.f32 %v954, %v1169
        %v1230 = vsub.f32 %v955, %v1169
        %v1231 = vsub.f32 %v956, %v1169
        %v1232 = vsub.f32 %v957, %v1169
        %v1233 = vsub.f32 %v958, %v1169
        %v1234 = vsub.f32 %v959, %v1169
        %v1235 = vsub.f32 %v960, %v1169
        %v1236 = vsub.f32 %v961, %v1169
        %v1237 = vsub.f32 %v962, %v1169
        %v1238 = vsub.f32 %v963, %v1169
        %v1239 = vsub.f32 %v964, %v1169
        %v1240 = vsub.f32 %v965, %v1169
        %v1241 = vlaneseq
        %v1242 = vshrl.u32 %v1241, 7
        %v1243 = vsub.s32 0, %v1242
        %v1244 = vrot.slane %v1176, %v1243
        %v1245 = vmul.f32 %v1177, %v1244
        %v1246 = vmul.f32 %v1178, %v1244
        %v1247 = vmul.f32 %v1179, %v1244
        %v1248 = vmul.f32 %v1180, %v1244
        %v1249 = vmul.f32 %v1181, %v1244
        %v1250 = vmul.f32 %v1182, %v1244
        %v1251 = vmul.f32 %v1183, %v1244
        %v1252 = vmul.f32 %v1184, %v1244
        %v1253 = vmul.f32 %v1185, %v1244
        %v1254 = vmul.f32 %v1186, %v1244
        %v1255 = vmul.f32 %v1187, %v1244
        %v1256 = vmul.f32 %v1188, %v1244
        %v1257 = vmul.f32 %v1189, %v1244
        %v1258 = vmul.f32 %v1190, %v1244
        %v1259 = vmul.f32 %v1191, %v1244
        %v1260 = vmul.f32 %v1192, %v1244
        %v1261 = vmul.f32 %v1193, %v1244
        %v1262 = vmul.f32 %v1194, %v1244
        %v1263 = vmul.f32 %v1195, %v1244
        %v1264 = vmul.f32 %v1196, %v1244
        %v1265 = vmul.f32 %v1197, %v1244
        %v1266 = vmul.f32 %v1198, %v1244
        %v1267 = vmul.f32 %v1199, %v1244
        %v1268 = vmul.f32 %v1200, %v1244
        %v1269 = vmul.f32 %v1201, %v1244
        %v1270 = vmul.f32 %v1202, %v1244
        %v1271 = vmul.f32 %v1203, %v1244
        %v1272 = vmul.f32 %v1204, %v1244
        %v1273 = vmul.f32 %v1205, %v1244
        %v1274 = vmul.f32 %v1206, %v1244
        %v1275 = vmul.f32 %v1207, %v1244
        %v1276 = vmul.f32 %v1208, %v1244
        %v1277 = vmul.f32 %v1209, %v1244
        %v1278 = vmul.f32 %v1210, %v1244
        %v1279 = vmul.f32 %v1211, %v1244
        %v1280 = vmul.f32 %v1212, %v1244
        %v1281 = vmul.f32 %v1213, %v1244
        %v1282 = vmul.f32 %v1214, %v1244
        %v1283 = vmul.f32 %v1215, %v1244
        %v1284 = vmul.f32 %v1216, %v1244
        %v1285 = vmul.f32 %v1217, %v1244
        %v1286 = vmul.f32 %v1218, %v1244
        %v1287 = vmul.f32 %v1219, %v1244
        %v1288 = vmul.f32 %v1220, %v1244
        %v1289 = vmul.f32 %v1221, %v1244
        %v1290 = vmul.f32 %v1222, %v1244
        %v1291 = vmul.f32 %v1223, %v1244
        %v1292 = vmul.f32 %v1224, %v1244
        %v1293 = vmul.f32 %v1225, %v1244
        %v1294 = vmul.f32 %v1226, %v1244
        %v1295 = vmul.f32 %v1227, %v1244
        %v1296 = vmul.f32 %v1228, %v1244
        %v1297 = vmul.f32 %v1229, %v1244
        %v1298 = vmul.f32 %v1230, %v1244
        %v1299 = vmul.f32 %v1231, %v1244
        %v1300 = vmul.f32 %v1232, %v1244
        %v1301 = vmul.f32 %v1233, %v1244
        %v1302 = vmul.f32 %v1234, %v1244
        %v1303 = vmul.f32 %v1235, %v1244
        %v1304 = vmul.f32 %v1236, %v1244
        %v1305 = vmul.f32 %v1237, %v1244
        %v1306 = vmul.f32 %v1238, %v1244
        %v1307 = vmul.f32 %v1239, %v1244
        %v1308 = vmul.f32 %v1240, %v1244
        %v1309 = vld [vmem:[%s4] sm:$0x1]
        %v1311 = vlaneseq
        %v1312 = vshrl.u32 %v1311, 7
        %v1313 = vsub.s32 0, %v1312
        %v1314 = vrot.slane %v1309, %v1313
        %v1316 = vadd.f32 %v1245, %v1314
        %v1317 = vadd.f32 %v1246, %v1314
        %v1318 = vadd.f32 %v1247, %v1314
        %v1319 = vadd.f32 %v1248, %v1314
        %v1320 = vadd.f32 %v1249, %v1314
        %v1321 = vadd.f32 %v1250, %v1314
        %v1322 = vadd.f32 %v1251, %v1314
        %v1323 = vadd.f32 %v1252, %v1314
        %v1324 = vadd.f32 %v1253, %v1314
        %v1325 = vadd.f32 %v1254, %v1314
        %v1326 = vadd.f32 %v1255, %v1314
        %v1327 = vadd.f32 %v1256, %v1314
        %v1328 = vadd.f32 %v1257, %v1314
        %v1329 = vadd.f32 %v1258, %v1314
        %v1330 = vadd.f32 %v1259, %v1314
        %v1331 = vadd.f32 %v1260, %v1314
        %v1332 = vadd.f32 %v1261, %v1314
        %v1333 = vadd.f32 %v1262, %v1314
        %v1334 = vadd.f32 %v1263, %v1314
        %v1335 = vadd.f32 %v1264, %v1314
        %v1336 = vadd.f32 %v1265, %v1314
        %v1337 = vadd.f32 %v1266, %v1314
        %v1338 = vadd.f32 %v1267, %v1314
        %v1339 = vadd.f32 %v1268, %v1314
        %v1340 = vadd.f32 %v1269, %v1314
        %v1341 = vadd.f32 %v1270, %v1314
        %v1342 = vadd.f32 %v1271, %v1314
        %v1343 = vadd.f32 %v1272, %v1314
        %v1344 = vadd.f32 %v1273, %v1314
        %v1345 = vadd.f32 %v1274, %v1314
        %v1346 = vadd.f32 %v1275, %v1314
        %v1347 = vadd.f32 %v1276, %v1314
        %v1348 = vadd.f32 %v1277, %v1314
        %v1349 = vadd.f32 %v1278, %v1314
        %v1350 = vadd.f32 %v1279, %v1314
        %v1351 = vadd.f32 %v1280, %v1314
        %v1352 = vadd.f32 %v1281, %v1314
        %v1353 = vadd.f32 %v1282, %v1314
        %v1354 = vadd.f32 %v1283, %v1314
        %v1355 = vadd.f32 %v1284, %v1314
        %v1356 = vadd.f32 %v1285, %v1314
        %v1357 = vadd.f32 %v1286, %v1314
        %v1358 = vadd.f32 %v1287, %v1314
        %v1359 = vadd.f32 %v1288, %v1314
        %v1360 = vadd.f32 %v1289, %v1314
        %v1361 = vadd.f32 %v1290, %v1314
        %v1362 = vadd.f32 %v1291, %v1314
        %v1363 = vadd.f32 %v1292, %v1314
        %v1364 = vadd.f32 %v1293, %v1314
        %v1365 = vadd.f32 %v1294, %v1314
        %v1366 = vadd.f32 %v1295, %v1314
        %v1367 = vadd.f32 %v1296, %v1314
        %v1368 = vadd.f32 %v1297, %v1314
        %v1369 = vadd.f32 %v1298, %v1314
        %v1370 = vadd.f32 %v1299, %v1314
        %v1371 = vadd.f32 %v1300, %v1314
        %v1372 = vadd.f32 %v1301, %v1314
        %v1373 = vadd.f32 %v1302, %v1314
        %v1374 = vadd.f32 %v1303, %v1314
        %v1375 = vadd.f32 %v1304, %v1314
        %v1376 = vadd.f32 %v1305, %v1314
        %v1377 = vadd.f32 %v1306, %v1314
        %v1378 = vadd.f32 %v1307, %v1314
        %v1379 = vadd.f32 %v1308, %v1314
        %v1380 = vmax.f32 %v1316, 0.0
        %v1381 = vmax.f32 %v1317, 0.0
        %v1382 = vmax.f32 %v1318, 0.0
        %v1383 = vmax.f32 %v1319, 0.0
        %v1384 = vmax.f32 %v1320, 0.0
        %v1385 = vmax.f32 %v1321, 0.0
        %v1386 = vmax.f32 %v1322, 0.0
        %v1387 = vmax.f32 %v1323, 0.0
        %v1388 = vmax.f32 %v1324, 0.0
        %v1389 = vmax.f32 %v1325, 0.0
        %v1390 = vmax.f32 %v1326, 0.0
        %v1391 = vmax.f32 %v1327, 0.0
        %v1392 = vmax.f32 %v1328, 0.0
        %v1393 = vmax.f32 %v1329, 0.0
        %v1394 = vmax.f32 %v1330, 0.0
        %v1395 = vmax.f32 %v1331, 0.0
        %v1396 = vmax.f32 %v1332, 0.0
        %v1397 = vmax.f32 %v1333, 0.0
        %v1398 = vmax.f32 %v1334, 0.0
        %v1399 = vmax.f32 %v1335, 0.0
        %v1400 = vmax.f32 %v1336, 0.0
        %v1401 = vmax.f32 %v1337, 0.0
        %v1402 = vmax.f32 %v1338, 0.0
        %v1403 = vmax.f32 %v1339, 0.0
        %v1404 = vmax.f32 %v1340, 0.0
        %v1405 = vmax.f32 %v1341, 0.0
        %v1406 = vmax.f32 %v1342, 0.0
        %v1407 = vmax.f32 %v1343, 0.0
        %v1408 = vmax.f32 %v1344, 0.0
        %v1409 = vmax.f32 %v1345, 0.0
        %v1410 = vmax.f32 %v1346, 0.0
        %v1411 = vmax.f32 %v1347, 0.0
        %v1412 = vmax.f32 %v1348, 0.0
        %v1413 = vmax.f32 %v1349, 0.0
        %v1414 = vmax.f32 %v1350, 0.0
        %v1415 = vmax.f32 %v1351, 0.0
        %v1416 = vmax.f32 %v1352, 0.0
        %v1417 = vmax.f32 %v1353, 0.0
        %v1418 = vmax.f32 %v1354, 0.0
        %v1419 = vmax.f32 %v1355, 0.0
        %v1420 = vmax.f32 %v1356, 0.0
        %v1421 = vmax.f32 %v1357, 0.0
        %v1422 = vmax.f32 %v1358, 0.0
        %v1423 = vmax.f32 %v1359, 0.0
        %v1424 = vmax.f32 %v1360, 0.0
        %v1425 = vmax.f32 %v1361, 0.0
        %v1426 = vmax.f32 %v1362, 0.0
        %v1427 = vmax.f32 %v1363, 0.0
        %v1428 = vmax.f32 %v1364, 0.0
        %v1429 = vmax.f32 %v1365, 0.0
        %v1430 = vmax.f32 %v1366, 0.0
        %v1431 = vmax.f32 %v1367, 0.0
        %v1432 = vmax.f32 %v1368, 0.0
        %v1433 = vmax.f32 %v1369, 0.0
        %v1434 = vmax.f32 %v1370, 0.0
        %v1435 = vmax.f32 %v1371, 0.0
        %v1436 = vmax.f32 %v1372, 0.0
        %v1437 = vmax.f32 %v1373, 0.0
        %v1438 = vmax.f32 %v1374, 0.0
        %v1439 = vmax.f32 %v1375, 0.0
        %v1440 = vmax.f32 %v1376, 0.0
        %v1441 = vmax.f32 %v1377, 0.0
        %v1442 = vmax.f32 %v1378, 0.0
        %v1443 = vmax.f32 %v1379, 0.0
        %v1444 = vpack.c.bf16 %v1381, %v1380
        %v1445 = vpack.c.bf16 %v1383, %v1382
        %v1446 = vpack.c.bf16 %v1385, %v1384
        %v1447 = vpack.c.bf16 %v1387, %v1386
        %v1448 = vpack.c.bf16 %v1389, %v1388
        %v1449 = vpack.c.bf16 %v1391, %v1390
        %v1450 = vpack.c.bf16 %v1393, %v1392
        %v1451 = vpack.c.bf16 %v1395, %v1394
        %v1452 = vpack.c.bf16 %v1397, %v1396
        %v1453 = vpack.c.bf16 %v1399, %v1398
        %v1454 = vpack.c.bf16 %v1401, %v1400
        %v1455 = vpack.c.bf16 %v1403, %v1402
        %v1456 = vpack.c.bf16 %v1405, %v1404
        %v1457 = vpack.c.bf16 %v1407, %v1406
        %v1458 = vpack.c.bf16 %v1409, %v1408
        %v1459 = vpack.c.bf16 %v1411, %v1410
        %v1460 = vpack.c.bf16 %v1413, %v1412
        %v1461 = vpack.c.bf16 %v1415, %v1414
        %v1462 = vpack.c.bf16 %v1417, %v1416
        %v1463 = vpack.c.bf16 %v1419, %v1418
        %v1464 = vpack.c.bf16 %v1421, %v1420
        %v1465 = vpack.c.bf16 %v1423, %v1422
        %v1466 = vpack.c.bf16 %v1425, %v1424
        %v1467 = vpack.c.bf16 %v1427, %v1426
        %v1468 = vpack.c.bf16 %v1429, %v1428
        %v1469 = vpack.c.bf16 %v1431, %v1430
        %v1470 = vpack.c.bf16 %v1433, %v1432
        %v1471 = vpack.c.bf16 %v1435, %v1434
        %v1472 = vpack.c.bf16 %v1437, %v1436
        %v1473 = vpack.c.bf16 %v1439, %v1438
        %v1474 = vpack.c.bf16 %v1441, %v1440
        %v1475 = vpack.c.bf16 %v1443, %v1442
        %v1508 = vunpack.c.l.b16 %v1444
        %v1509 = vunpack.c.h.b16 %v1444
        %v1510 = vunpack.c.l.b16 %v1445
        %v1511 = vunpack.c.h.b16 %v1445
        %v1512 = vunpack.c.l.b16 %v1446
        %v1513 = vunpack.c.h.b16 %v1446
        %v1514 = vunpack.c.l.b16 %v1447
        %v1515 = vunpack.c.h.b16 %v1447
        %v1516 = vunpack.c.l.b16 %v1448
        %v1517 = vunpack.c.h.b16 %v1448
        %v1518 = vunpack.c.l.b16 %v1449
        %v1519 = vunpack.c.h.b16 %v1449
        %v1520 = vunpack.c.l.b16 %v1450
        %v1521 = vunpack.c.h.b16 %v1450
        %v1522 = vunpack.c.l.b16 %v1451
        %v1523 = vunpack.c.h.b16 %v1451
        %v1524 = vunpack.c.l.b16 %v1452
        %v1525 = vunpack.c.h.b16 %v1452
        %v1526 = vunpack.c.l.b16 %v1453
        %v1527 = vunpack.c.h.b16 %v1453
        %v1528 = vunpack.c.l.b16 %v1454
        %v1529 = vunpack.c.h.b16 %v1454
        %v1530 = vunpack.c.l.b16 %v1455
        %v1531 = vunpack.c.h.b16 %v1455
        %v1532 = vunpack.c.l.b16 %v1456
        %v1533 = vunpack.c.h.b16 %v1456
        %v1534 = vunpack.c.l.b16 %v1457
        %v1535 = vunpack.c.h.b16 %v1457
        %v1536 = vunpack.c.l.b16 %v1458
        %v1537 = vunpack.c.h.b16 %v1458
        %v1538 = vunpack.c.l.b16 %v1459
        %v1539 = vunpack.c.h.b16 %v1459
        %v1540 = vunpack.c.l.b16 %v1460
        %v1541 = vunpack.c.h.b16 %v1460
        %v1542 = vunpack.c.l.b16 %v1461
        %v1543 = vunpack.c.h.b16 %v1461
        %v1544 = vunpack.c.l.b16 %v1462
        %v1545 = vunpack.c.h.b16 %v1462
        %v1546 = vunpack.c.l.b16 %v1463
        %v1547 = vunpack.c.h.b16 %v1463
        %v1548 = vunpack.c.l.b16 %v1464
        %v1549 = vunpack.c.h.b16 %v1464
        %v1550 = vunpack.c.l.b16 %v1465
        %v1551 = vunpack.c.h.b16 %v1465
        %v1552 = vunpack.c.l.b16 %v1466
        %v1553 = vunpack.c.h.b16 %v1466
        %v1554 = vunpack.c.l.b16 %v1467
        %v1555 = vunpack.c.h.b16 %v1467
        %v1556 = vunpack.c.l.b16 %v1468
        %v1557 = vunpack.c.h.b16 %v1468
        %v1558 = vunpack.c.l.b16 %v1469
        %v1559 = vunpack.c.h.b16 %v1469
        %v1560 = vunpack.c.l.b16 %v1470
        %v1561 = vunpack.c.h.b16 %v1470
        %v1562 = vunpack.c.l.b16 %v1471
        %v1563 = vunpack.c.h.b16 %v1471
        %v1564 = vunpack.c.l.b16 %v1472
        %v1565 = vunpack.c.h.b16 %v1472
        %v1566 = vunpack.c.l.b16 %v1473
        %v1567 = vunpack.c.h.b16 %v1473
        %v1568 = vunpack.c.l.b16 %v1474
        %v1569 = vunpack.c.h.b16 %v1474
        %v1570 = vunpack.c.l.b16 %v1475
        %v1571 = vunpack.c.h.b16 %v1475
        %v1572 = vpack.c.b16 %v1508, %v1508
        %v1573 = vpack.c.b16 %v1509, %v1509
        %v1574 = vpack.c.b16 %v1510, %v1510
        %v1575 = vpack.c.b16 %v1511, %v1511
        %v1576 = vpack.c.b16 %v1512, %v1512
        %v1577 = vpack.c.b16 %v1513, %v1513
        %v1578 = vpack.c.b16 %v1514, %v1514
        %v1579 = vpack.c.b16 %v1515, %v1515
        %v1580 = vpack.c.b16 %v1516, %v1516
        %v1581 = vpack.c.b16 %v1517, %v1517
        %v1582 = vpack.c.b16 %v1518, %v1518
        %v1583 = vpack.c.b16 %v1519, %v1519
        %v1584 = vpack.c.b16 %v1520, %v1520
        %v1585 = vpack.c.b16 %v1521, %v1521
        %v1586 = vpack.c.b16 %v1522, %v1522
        %v1587 = vpack.c.b16 %v1523, %v1523
        %v1588 = vpack.c.b16 %v1524, %v1524
        %v1589 = vpack.c.b16 %v1525, %v1525
        %v1590 = vpack.c.b16 %v1526, %v1526
        %v1591 = vpack.c.b16 %v1527, %v1527
        %v1592 = vpack.c.b16 %v1528, %v1528
        %v1593 = vpack.c.b16 %v1529, %v1529
        %v1594 = vpack.c.b16 %v1530, %v1530
        %v1595 = vpack.c.b16 %v1531, %v1531
        %v1596 = vpack.c.b16 %v1532, %v1532
        %v1597 = vpack.c.b16 %v1533, %v1533
        %v1598 = vpack.c.b16 %v1534, %v1534
        %v1599 = vpack.c.b16 %v1535, %v1535
        %v1600 = vpack.c.b16 %v1536, %v1536
        %v1601 = vpack.c.b16 %v1537, %v1537
        %v1602 = vpack.c.b16 %v1538, %v1538
        %v1603 = vpack.c.b16 %v1539, %v1539
        %v1604 = vpack.c.b16 %v1540, %v1540
        %v1605 = vpack.c.b16 %v1541, %v1541
        %v1606 = vpack.c.b16 %v1542, %v1542
        %v1607 = vpack.c.b16 %v1543, %v1543
        %v1608 = vpack.c.b16 %v1544, %v1544
        %v1609 = vpack.c.b16 %v1545, %v1545
        %v1610 = vpack.c.b16 %v1546, %v1546
        %v1611 = vpack.c.b16 %v1547, %v1547
        %v1612 = vpack.c.b16 %v1548, %v1548
        %v1613 = vpack.c.b16 %v1549, %v1549
        %v1614 = vpack.c.b16 %v1550, %v1550
        %v1615 = vpack.c.b16 %v1551, %v1551
        %v1616 = vpack.c.b16 %v1552, %v1552
        %v1617 = vpack.c.b16 %v1553, %v1553
        %v1618 = vpack.c.b16 %v1554, %v1554
        %v1619 = vpack.c.b16 %v1555, %v1555
        %v1620 = vpack.c.b16 %v1556, %v1556
        %v1621 = vpack.c.b16 %v1557, %v1557
        %v1622 = vpack.c.b16 %v1558, %v1558
        %v1623 = vpack.c.b16 %v1559, %v1559
        %v1624 = vpack.c.b16 %v1560, %v1560
        %v1625 = vpack.c.b16 %v1561, %v1561
        %v1626 = vpack.c.b16 %v1562, %v1562
        %v1627 = vpack.c.b16 %v1563, %v1563
        %v1628 = vpack.c.b16 %v1564, %v1564
        %v1629 = vpack.c.b16 %v1565, %v1565
        %v1630 = vpack.c.b16 %v1566, %v1566
        %v1631 = vpack.c.b16 %v1567, %v1567
        %v1632 = vpack.c.b16 %v1568, %v1568
        %v1633 = vpack.c.b16 %v1569, %v1569
        %v1634 = vpack.c.b16 %v1570, %v1570
        %v1635 = vpack.c.b16 %v1571, %v1571
        %1700 = vst [vmem:[%s5] sm:$0xf] %v1572
        %1701 = vst [vmem:[%s5 + $0x4] sm:$0xf] %v1573
        %1702 = vst [vmem:[%s5 + $0x8] sm:$0xf] %v1574
        %1703 = vst [vmem:[%s5 + $0xc] sm:$0xf] %v1575
        %1704 = vst [vmem:[%s5 + $0x10] sm:$0xf] %v1576
        %1705 = vst [vmem:[%s5 + $0x14] sm:$0xf] %v1577
        %1706 = vst [vmem:[%s5 + $0x18] sm:$0xf] %v1578
        %1707 = vst [vmem:[%s5 + $0x1c] sm:$0xf] %v1579
        %1708 = vst [vmem:[%s5 + $0x20] sm:$0xf] %v1580
        %1709 = vst [vmem:[%s5 + $0x24] sm:$0xf] %v1581
        %1710 = vst [vmem:[%s5 + $0x28] sm:$0xf] %v1582
        %1711 = vst [vmem:[%s5 + $0x2c] sm:$0xf] %v1583
        %1712 = vst [vmem:[%s5 + $0x30] sm:$0xf] %v1584
        %1713 = vst [vmem:[%s5 + $0x34] sm:$0xf] %v1585
        %1714 = vst [vmem:[%s5 + $0x38] sm:$0xf] %v1586
        %1715 = vst [vmem:[%s5 + $0x3c] sm:$0xf] %v1587
        %1716 = vst [vmem:[%s5 + $0x40] sm:$0xf] %v1588
        %1717 = vst [vmem:[%s5 + $0x44] sm:$0xf] %v1589
        %1718 = vst [vmem:[%s5 + $0x48] sm:$0xf] %v1590
        %1719 = vst [vmem:[%s5 + $0x4c] sm:$0xf] %v1591
        %1720 = vst [vmem:[%s5 + $0x50] sm:$0xf] %v1592
        %1721 = vst [vmem:[%s5 + $0x54] sm:$0xf] %v1593
        %1722 = vst [vmem:[%s5 + $0x58] sm:$0xf] %v1594
        %1723 = vst [vmem:[%s5 + $0x5c] sm:$0xf] %v1595
        %1724 = vst [vmem:[%s5 + $0x60] sm:$0xf] %v1596
        %1725 = vst [vmem:[%s5 + $0x64] sm:$0xf] %v1597
        %1726 = vst [vmem:[%s5 + $0x68] sm:$0xf] %v1598
        %1727 = vst [vmem:[%s5 + $0x6c] sm:$0xf] %v1599
        %1728 = vst [vmem:[%s5 + $0x70] sm:$0xf] %v1600
        %1729 = vst [vmem:[%s5 + $0x74] sm:$0xf] %v1601
        %1730 = vst [vmem:[%s5 + $0x78] sm:$0xf] %v1602
        %1731 = vst [vmem:[%s5 + $0x7c] sm:$0xf] %v1603
        %1732 = vst [vmem:[%s5 + $0x80] sm:$0xf] %v1604
        %1733 = vst [vmem:[%s5 + $0x84] sm:$0xf] %v1605
        %1734 = vst [vmem:[%s5 + $0x88] sm:$0xf] %v1606
        %1735 = vst [vmem:[%s5 + $0x8c] sm:$0xf] %v1607
        %1736 = vst [vmem:[%s5 + $0x90] sm:$0xf] %v1608
        %1737 = vst [vmem:[%s5 + $0x94] sm:$0xf] %v1609
        %1738 = vst [vmem:[%s5 + $0x98] sm:$0xf] %v1610
        %1739 = vst [vmem:[%s5 + $0x9c] sm:$0xf] %v1611
        %1740 = vst [vmem:[%s5 + $0xa0] sm:$0xf] %v1612
        %1741 = vst [vmem:[%s5 + $0xa4] sm:$0xf] %v1613
        %1742 = vst [vmem:[%s5 + $0xa8] sm:$0xf] %v1614
        %1743 = vst [vmem:[%s5 + $0xac] sm:$0xf] %v1615
        %1744 = vst [vmem:[%s5 + $0xb0] sm:$0xf] %v1616
        %1745 = vst [vmem:[%s5 + $0xb4] sm:$0xf] %v1617
        %1746 = vst [vmem:[%s5 + $0xb8] sm:$0xf] %v1618
        %1747 = vst [vmem:[%s5 + $0xbc] sm:$0xf] %v1619
        %1748 = vst [vmem:[%s5 + $0xc0] sm:$0xf] %v1620
        %1749 = vst [vmem:[%s5 + $0xc4] sm:$0xf] %v1621
        %1750 = vst [vmem:[%s5 + $0xc8] sm:$0xf] %v1622
        %1751 = vst [vmem:[%s5 + $0xcc] sm:$0xf] %v1623
        %1752 = vst [vmem:[%s5 + $0xd0] sm:$0xf] %v1624
        %1753 = vst [vmem:[%s5 + $0xd4] sm:$0xf] %v1625
        %1754 = vst [vmem:[%s5 + $0xd8] sm:$0xf] %v1626
        %1755 = vst [vmem:[%s5 + $0xdc] sm:$0xf] %v1627
        %1756 = vst [vmem:[%s5 + $0xe0] sm:$0xf] %v1628
        %1757 = vst [vmem:[%s5 + $0xe4] sm:$0xf] %v1629
        %1758 = vst [vmem:[%s5 + $0xe8] sm:$0xf] %v1630
        %1759 = vst [vmem:[%s5 + $0xec] sm:$0xf] %v1631
        %1760 = vst [vmem:[%s5 + $0xf0] sm:$0xf] %v1632
        %1761 = vst [vmem:[%s5 + $0xf4] sm:$0xf] %v1633
        %1762 = vst [vmem:[%s5 + $0xf8] sm:$0xf] %v1634
        %1763 = vst [vmem:[%s5 + $0xfc] sm:$0xf] %v1635
      $region44: #{generator_forward.6} parent=39 // pred_fallthru
        _
      // Predicated region
      $region45: #{generator_forward.6} parent=39 // pred_check
        %p1764 = pneg %p144
      $region46: #{generator_forward.6} parent=39 // pred_check_branch
        %1766 = sbr.rel (%p1764) target = $region48
      $region47: #{generator_forward.6} parent=39 // pred_region
        _
      $region48: #{generator_forward.6} parent=39 // pred_fallthru
        _
      // Predicated region
      $region49: #{generator_forward.6} parent=39 // pred_check
        %p1767 = pneg %p144
      $region50: #{generator_forward.6} parent=39 // pred_check_branch
        %1769 = sbr.rel (%p1767) target = $region52
      $region51: #{generator_forward.6} parent=39 // pred_region
        _
      $region52: #{generator_forward.6} parent=39 // pred_fallthru
        _
    $region40: #{generator_forward.6} parent=5 // pred_fallthru
      _
    %p1770 = scmp.le.s32.totalorder 2, %s11
    // Predicated region
    $region53: #{generator_forward.6} parent=5 // pred_check
      %p1771 = pneg %p1770
    $region54: #{generator_forward.6} parent=5 // pred_check_branch
      %1773 = sbr.rel (%p1771) target = $region56
    $region55: #{generator_forward.6} parent=5 // pred_region
      %s1774 = ssub.s32 %s11, 2
    $region56: #{generator_forward.6} parent=5 // pred_fallthru
      _
  $region6: #{generator_forward.6} parent=0 // loop_footer
    %s15 = sadd.s32 1, %s11
  $region7: #{generator_forward.6} parent=0 // loop_footer_branch
    %10 = sbr.rel target = $region3
  $region8: #{generator_forward.6} parent=0 // loop_exit
    _

// kernel: generator_forward.7
$region0: #{generator_forward.7}
  #allocation0 [shape = 'u32[]', space=smem, size = 0x4, offset = 0x4, fixed_abs, tag = 'smem constant byte address 0x4 - core index']
  #allocation1 [shape = 'u32[144,128]{1,0:T(1,128)}', space=vmem, size = 0x12000, scoped, tag = 'internal scratch']
  %s0 = inlined_call_operand.vmem [shape: bf16[4,512,512], index: 0, kind: input, shape index: {}]
  %s1 = inlined_call_operand.vmem [shape: bf16[4,512,128], index: 1, kind: input, shape index: {}]
  %s2 = inlined_call_operand.vmem [shape: f32[1,128], index: 2, kind: input, shape index: {}]
  %s3 = inlined_call_operand.vmem [shape: f32[4,512,128], index: 3, kind: output, shape index: {}]
  %s4 = sld [smem:[#allocation0]]
  $region45: #{generator_forward.7} parent=0
    _
  %s6 = ssub.s32 1, %s4
  %s7 = scalar_select 0, %s6, %s4
  loop: start=0, step=1, limit=6
  $region2: #{generator_forward.7} parent=0 // loop_pre_header
    _
  $region3: #{generator_forward.7} parent=0 // loop_header
    %s9 = sphi 0, %s13
    %p10 = scmp.ge.s32.totalorder %s9, 6
    %s19 = sphi 0, %s21
    %s22 = sphi 0, %s19
    %s23 = sphi 0, %s22
    %s39 = sphi 0, %s23
    %s45 = sphi 0, %s47
    %s48 = sphi 0, %s45
    %s49 = sphi 0, %s48
    %s65 = sphi 0, %s49
    %s69 = sphi 0, %s69
    %s71 = sphi 0, %s69
    %s72 = sphi 0, %s71
    %s86 = sphi 0, %s72
    %s92 = sphi 0, %s94
    %s95 = sphi 0, %s92
    %s96 = sphi 0, %s95
    %s112 = sphi 0, %s96
  $region4: #{generator_forward.7} parent=0 // loop_header_branch
    %12 = sbr.rel (%p10) target = $region8
  $region5: #{generator_forward.7} parent=0 // loop_body
    %s14 = ssub.s32 %s9, 1
    %s15 = ssub.s32 %s9, 2
    %s16 = sadd.s32 %s9, 1
    %s17 = ssub.s32 %s9, %s16
    %p18 = scmp.eq.s32.totalorder %s17, 0
    %s20 = sadd.s32 %s19, 1
    %s21 = scalar_select %p18, %s19, %s20
    %p24 = pneg %p18
    %p25 = scmp.eq.s32.totalorder %s9, 3
    %p26 = por %p24, %p25
    %p27 = scmp.ne.s32.totalorder %s19, %s22
    %p28 = scmp.eq.s32.totalorder %s9, 0
    %p29 = por %p27, %p28
    %p30 = scmp.ne.s32.totalorder %s19, %s22
    %p31 = scmp.eq.s32.totalorder %s14, 3
    %p32 = por %p30, %p31
    %p33 = scmp.ne.s32.totalorder %s22, %s23
    %p34 = scmp.eq.s32.totalorder %s14, 0
    %p35 = por %p33, %p34
    %p36 = scmp.ne.s32.totalorder %s22, %s23
    %p37 = scmp.eq.s32.totalorder %s15, 3
    %p38 = por %p36, %p37
    %p40 = scmp.ne.s32.totalorder %s23, %s39
    %p41 = scmp.eq.s32.totalorder %s15, 0
    %p42 = por %p40, %p41
    %s43 = ssub.s32 %s9, %s16
    %p44 = scmp.eq.s32.totalorder %s43, 0
    %s46 = sadd.s32 %s45, 1
    %s47 = scalar_select %p44, %s45, %s46
    %p50 = pneg %p44
    %p51 = scmp.eq.s32.totalorder %s9, 3
    %p52 = por %p50, %p51
    %p53 = scmp.ne.s32.totalorder %s45, %s48
    %p54 = scmp.eq.s32.totalorder %s9, 0
    %p55 = por %p53, %p54
    %p56 = scmp.ne.s32.totalorder %s45, %s48
    %p57 = scmp.eq.s32.totalorder %s14, 3
    %p58 = por %p56, %p57
    %p59 = scmp.ne.s32.totalorder %s48, %s49
    %p60 = scmp.eq.s32.totalorder %s14, 0
    %p61 = por %p59, %p60
    %p62 = scmp.ne.s32.totalorder %s48, %s49
    %p63 = scmp.eq.s32.totalorder %s15, 3
    %p64 = por %p62, %p63
    %p66 = scmp.ne.s32.totalorder %s49, %s65
    %p67 = scmp.eq.s32.totalorder %s15, 0
    %p68 = por %p66, %p67
    %s70 = sadd.s32 %s69, 1
    %p73 = scmp.eq.s32.totalorder %s9, 3
    %p74 = scmp.ne.s32.totalorder %s69, %s71
    %p75 = scmp.eq.s32.totalorder %s9, 0
    %p76 = por %p74, %p75
    %p77 = scmp.ne.s32.totalorder %s69, %s71
    %p78 = scmp.eq.s32.totalorder %s14, 3
    %p79 = por %p77, %p78
    %p80 = scmp.ne.s32.totalorder %s71, %s72
    %p81 = scmp.eq.s32.totalorder %s14, 0
    %p82 = por %p80, %p81
    %p83 = scmp.ne.s32.totalorder %s71, %s72
    %p84 = scmp.eq.s32.totalorder %s15, 3
    %p85 = por %p83, %p84
    %p87 = scmp.ne.s32.totalorder %s72, %s86
    %p88 = scmp.eq.s32.totalorder %s15, 0
    %p89 = por %p87, %p88
    %s90 = ssub.s32 %s9, %s16
    %p91 = scmp.eq.s32.totalorder %s90, 0
    %s93 = sadd.s32 %s92, 1
    %s94 = scalar_select %p91, %s92, %s93
    %p97 = pneg %p91
    %p98 = scmp.eq.s32.totalorder %s9, 3
    %p99 = por %p97, %p98
    %p100 = scmp.ne.s32.totalorder %s92, %s95
    %p101 = scmp.eq.s32.totalorder %s9, 0
    %p102 = por %p100, %p101
    %p103 = scmp.ne.s32.totalorder %s92, %s95
    %p104 = scmp.eq.s32.totalorder %s14, 3
    %p105 = por %p103, %p104
    %p106 = scmp.ne.s32.totalorder %s95, %s96
    %p107 = scmp.eq.s32.totalorder %s14, 0
    %p108 = por %p106, %p107
    %p109 = scmp.ne.s32.totalorder %s95, %s96
    %p110 = scmp.eq.s32.totalorder %s15, 3
    %p111 = por %p109, %p110
    %p113 = scmp.ne.s32.totalorder %s96, %s112
    %p114 = scmp.eq.s32.totalorder %s15, 0
    %p115 = por %p113, %p114
    %p116 = scmp.le.s32.totalorder 1, %s9
    %p117 = scmp.lt.s32.totalorder %s9, 5
    %p118 = pnand %p116, %p117
    %p119 = pneg %p118
    // Predicated region
    $region9: #{generator_forward.7} parent=5 // pred_check
      _
    $region10: #{generator_forward.7} parent=5 // pred_check_branch
      %121 = sbr.rel (%p118) target = $region12
    $region11: #{generator_forward.7} parent=5 // pred_region
      %s122 = ssub.s32 %s9, 1
      // Predicated region
      $region13: #{generator_forward.7} parent=11 // pred_check
        %p123 = pneg %p82
      $region14: #{generator_forward.7} parent=11 // pred_check_branch
        %125 = sbr.rel (%p123) target = $region16
      $region15: #{generator_forward.7} parent=11 // pred_region
        _
      $region16: #{generator_forward.7} parent=11 // pred_fallthru
        _
    $region12: #{generator_forward.7} parent=5 // pred_fallthru
      _
    %p126 = scmp.lt.s32.totalorder %s9, 4
    // Predicated region
    $region17: #{generator_forward.7} parent=5 // pred_check
      %p127 = pneg %p126
    $region18: #{generator_forward.7} parent=5 // pred_check_branch
      %129 = sbr.rel (%p127) target = $region20
    $region19: #{generator_forward.7} parent=5 // pred_region
      // Predicated region
      $region21: #{generator_forward.7} parent=19 // pred_check
        %p130 = pneg %p29
      $region22: #{generator_forward.7} parent=19 // pred_check_branch
        %132 = sbr.rel (%p130) target = $region24
      $region23: #{generator_forward.7} parent=19 // pred_region
        %p133 = scmp.lt.s32.totalorder %s9, 3
        %s134 = scalar_select %p133, %s9, 3
        %s135 = smul.addr %s134, 256
        %s136 = smul.addr %s135, 4
        %s137 = scalar_lea.vmem %s0, %s136
      $region24: #{generator_forward.7} parent=19 // pred_fallthru
        _
      // Predicated region
      $region25: #{generator_forward.7} parent=19 // pred_check
        %p138 = pneg %p55
      $region26: #{generator_forward.7} parent=19 // pred_check_branch
        %140 = sbr.rel (%p138) target = $region28
      $region27: #{generator_forward.7} parent=19 // pred_region
        %p141 = scmp.lt.s32.totalorder %s9, 3
        %s142 = scalar_select %p141, %s9, 3
        %s143 = smul.addr %s142, 64
        %s144 = smul.addr %s143, 4
        %s145 = scalar_lea.vmem %s1, %s144
      $region28: #{generator_forward.7} parent=19 // pred_fallthru
        _
    $region20: #{generator_forward.7} parent=5 // pred_fallthru
      _
    %p146 = scmp.le.s32.totalorder 1, %s9
    %p147 = scmp.lt.s32.totalorder %s9, 5
    %p148 = pnand %p146, %p147
    %p149 = pneg %p148
    // Predicated region
    $region29: #{generator_forward.7} parent=5 // pred_check
      _
    $region30: #{generator_forward.7} parent=5 // pred_check_branch
      %151 = sbr.rel (%p148) target = $region32
    $region31: #{generator_forward.7} parent=5 // pred_region
      %s152 = ssub.s32 %s9, 1
      %p153 = scmp.lt.s32.totalorder %s14, 3
      %s154 = scalar_select %p153, %s14, 3
      %s155 = smul.addr %s154, 256
      %s156 = smul.addr %s155, 4
      %s157 = scalar_lea.vmem %s0, %s156
      %p158 = pneg %p35
      %p159 = pneg %p32
      %p160 = scmp.lt.s32.totalorder %s14, 3
      %s161 = scalar_select %p160, %s14, 3
      %s162 = smul.addr %s161, 64
      %s163 = smul.addr %s162, 4
      %s164 = scalar_lea.vmem %s1, %s163
      %p165 = pneg %p61
      %p166 = pneg %p58
      %p167 = pneg %p82
      %p168 = pneg %p79
      %p169 = pneg %p108
      %p170 = pneg %p105
      %p171 = scmp.lt.s32.totalorder %s14, 3
      %s172 = scalar_select %p171, %s14, 3
      %s173 = smul.addr %s172, 64
      %s174 = smul.addr %s173, 8
      %s175 = scalar_lea.vmem %s3, %s174
      %p176 = scmp.lt.s32.totalorder %s14, 3
      %s177 = scalar_select %p176, %s14, 3
      %s178 = smul.addr %s177, 256
      %s179 = smul.addr %s178, 4
      %s180 = scalar_lea.vmem %s0, %s179
      %p181 = scmp.lt.s32.totalorder %s14, 3
      %s182 = scalar_select %p181, %s14, 3
      %s183 = smul.addr %s182, 64
      %s184 = smul.addr %s183, 4
      %s185 = scalar_lea.vmem %s1, %s184
      %p186 = scmp.lt.s32.totalorder %s14, 3
      %s187 = scalar_select %p186, %s14, 3
      %s188 = smul.addr %s187, 64
      %s189 = smul.addr %s188, 8
      %s190 = scalar_lea.vmem %s3, %s189
      %v192 = vld [vmem:[%s180] sm:$0xff]
      %v193 = vld [vmem:[%s180 + $0x8] sm:$0xff]
      %v194 = vld [vmem:[%s180 + $0x10] sm:$0xff]
      %v195 = vld [vmem:[%s180 + $0x18] sm:$0xff]
      %v196 = vld [vmem:[%s180 + $0x20] sm:$0xff]
      %v197 = vld [vmem:[%s180 + $0x28] sm:$0xff]
      %v198 = vld [vmem:[%s180 + $0x30] sm:$0xff]
      %v199 = vld [vmem:[%s180 + $0x38] sm:$0xff]
      %v200 = vld [vmem:[%s180 + $0x40] sm:$0xff]
      %v201 = vld [vmem:[%s180 + $0x48] sm:$0xff]
      %v202 = vld [vmem:[%s180 + $0x50] sm:$0xff]
      %v203 = vld [vmem:[%s180 + $0x58] sm:$0xff]
      %v204 = vld [vmem:[%s180 + $0x60] sm:$0xff]
      %v205 = vld [vmem:[%s180 + $0x68] sm:$0xff]
      %v206 = vld [vmem:[%s180 + $0x70] sm:$0xff]
      %v207 = vld [vmem:[%s180 + $0x78] sm:$0xff]
      %v208 = vld [vmem:[%s180 + $0x80] sm:$0xff]
      %v209 = vld [vmem:[%s180 + $0x88] sm:$0xff]
      %v210 = vld [vmem:[%s180 + $0x90] sm:$0xff]
      %v211 = vld [vmem:[%s180 + $0x98] sm:$0xff]
      %v212 = vld [vmem:[%s180 + $0xa0] sm:$0xff]
      %v213 = vld [vmem:[%s180 + $0xa8] sm:$0xff]
      %v214 = vld [vmem:[%s180 + $0xb0] sm:$0xff]
      %v215 = vld [vmem:[%s180 + $0xb8] sm:$0xff]
      %v216 = vld [vmem:[%s180 + $0xc0] sm:$0xff]
      %v217 = vld [vmem:[%s180 + $0xc8] sm:$0xff]
      %v218 = vld [vmem:[%s180 + $0xd0] sm:$0xff]
      %v219 = vld [vmem:[%s180 + $0xd8] sm:$0xff]
      %v220 = vld [vmem:[%s180 + $0xe0] sm:$0xff]
      %v221 = vld [vmem:[%s180 + $0xe8] sm:$0xff]
      %v222 = vld [vmem:[%s180 + $0xf0] sm:$0xff]
      %v223 = vld [vmem:[%s180 + $0xf8] sm:$0xff]
      %v224 = vld [vmem:[%s180 + $0x100] sm:$0xff]
      %v225 = vld [vmem:[%s180 + $0x108] sm:$0xff]
      %v226 = vld [vmem:[%s180 + $0x110] sm:$0xff]
      %v227 = vld [vmem:[%s180 + $0x118] sm:$0xff]
      %v228 = vld [vmem:[%s180 + $0x120] sm:$0xff]
      %v229 = vld [vmem:[%s180 + $0x128] sm:$0xff]
      %v230 = vld [vmem:[%s180 + $0x130] sm:$0xff]
      %v231 = vld [vmem:[%s180 + $0x138] sm:$0xff]
      %v232 = vld [vmem:[%s180 + $0x140] sm:$0xff]
      %v233 = vld [vmem:[%s180 + $0x148] sm:$0xff]
      %v234 = vld [vmem:[%s180 + $0x150] sm:$0xff]
      %v235 = vld [vmem:[%s180 + $0x158] sm:$0xff]
      %v236 = vld [vmem:[%s180 + $0x160] sm:$0xff]
      %v237 = vld [vmem:[%s180 + $0x168] sm:$0xff]
      %v238 = vld [vmem:[%s180 + $0x170] sm:$0xff]
      %v239 = vld [vmem:[%s180 + $0x178] sm:$0xff]
      %v240 = vld [vmem:[%s180 + $0x180] sm:$0xff]
      %v241 = vld [vmem:[%s180 + $0x188] sm:$0xff]
      %v242 = vld [vmem:[%s180 + $0x190] sm:$0xff]
      %v243 = vld [vmem:[%s180 + $0x198] sm:$0xff]
      %v244 = vld [vmem:[%s180 + $0x1a0] sm:$0xff]
      %v245 = vld [vmem:[%s180 + $0x1a8] sm:$0xff]
      %v246 = vld [vmem:[%s180 + $0x1b0] sm:$0xff]
      %v247 = vld [vmem:[%s180 + $0x1b8] sm:$0xff]
      %v248 = vld [vmem:[%s180 + $0x1c0] sm:$0xff]
      %v249 = vld [vmem:[%s180 + $0x1c8] sm:$0xff]
      %v250 = vld [vmem:[%s180 + $0x1d0] sm:$0xff]
      %v251 = vld [vmem:[%s180 + $0x1d8] sm:$0xff]
      %v252 = vld [vmem:[%s180 + $0x1e0] sm:$0xff]
      %v253 = vld [vmem:[%s180 + $0x1e8] sm:$0xff]
      %v254 = vld [vmem:[%s180 + $0x1f0] sm:$0xff]
      %v255 = vld [vmem:[%s180 + $0x1f8] sm:$0xff]
      %v256 = vld [vmem:[%s180 + $0x200] sm:$0xff]
      %v257 = vld [vmem:[%s180 + $0x208] sm:$0xff]
      %v258 = vld [vmem:[%s180 + $0x210] sm:$0xff]
      %v259 = vld [vmem:[%s180 + $0x218] sm:$0xff]
      %v260 = vld [vmem:[%s180 + $0x220] sm:$0xff]
      %v261 = vld [vmem:[%s180 + $0x228] sm:$0xff]
      %v262 = vld [vmem:[%s180 + $0x230] sm:$0xff]
      %v263 = vld [vmem:[%s180 + $0x238] sm:$0xff]
      %v264 = vld [vmem:[%s180 + $0x240] sm:$0xff]
      %v265 = vld [vmem:[%s180 + $0x248] sm:$0xff]
      %v266 = vld [vmem:[%s180 + $0x250] sm:$0xff]
      %v267 = vld [vmem:[%s180 + $0x258] sm:$0xff]
      %v268 = vld [vmem:[%s180 + $0x260] sm:$0xff]
      %v269 = vld [vmem:[%s180 + $0x268] sm:$0xff]
      %v270 = vld [vmem:[%s180 + $0x270] sm:$0xff]
      %v271 = vld [vmem:[%s180 + $0x278] sm:$0xff]
      %v272 = vld [vmem:[%s180 + $0x280] sm:$0xff]
      %v273 = vld [vmem:[%s180 + $0x288] sm:$0xff]
      %v274 = vld [vmem:[%s180 + $0x290] sm:$0xff]
      %v275 = vld [vmem:[%s180 + $0x298] sm:$0xff]
      %v276 = vld [vmem:[%s180 + $0x2a0] sm:$0xff]
      %v277 = vld [vmem:[%s180 + $0x2a8] sm:$0xff]
      %v278 = vld [vmem:[%s180 + $0x2b0] sm:$0xff]
      %v279 = vld [vmem:[%s180 + $0x2b8] sm:$0xff]
      %v280 = vld [vmem:[%s180 + $0x2c0] sm:$0xff]
      %v281 = vld [vmem:[%s180 + $0x2c8] sm:$0xff]
      %v282 = vld [vmem:[%s180 + $0x2d0] sm:$0xff]
      %v283 = vld [vmem:[%s180 + $0x2d8] sm:$0xff]
      %v284 = vld [vmem:[%s180 + $0x2e0] sm:$0xff]
      %v285 = vld [vmem:[%s180 + $0x2e8] sm:$0xff]
      %v286 = vld [vmem:[%s180 + $0x2f0] sm:$0xff]
      %v287 = vld [vmem:[%s180 + $0x2f8] sm:$0xff]
      %v288 = vld [vmem:[%s180 + $0x300] sm:$0xff]
      %v289 = vld [vmem:[%s180 + $0x308] sm:$0xff]
      %v290 = vld [vmem:[%s180 + $0x310] sm:$0xff]
      %v291 = vld [vmem:[%s180 + $0x318] sm:$0xff]
      %v292 = vld [vmem:[%s180 + $0x320] sm:$0xff]
      %v293 = vld [vmem:[%s180 + $0x328] sm:$0xff]
      %v294 = vld [vmem:[%s180 + $0x330] sm:$0xff]
      %v295 = vld [vmem:[%s180 + $0x338] sm:$0xff]
      %v296 = vld [vmem:[%s180 + $0x340] sm:$0xff]
      %v297 = vld [vmem:[%s180 + $0x348] sm:$0xff]
      %v298 = vld [vmem:[%s180 + $0x350] sm:$0xff]
      %v299 = vld [vmem:[%s180 + $0x358] sm:$0xff]
      %v300 = vld [vmem:[%s180 + $0x360] sm:$0xff]
      %v301 = vld [vmem:[%s180 + $0x368] sm:$0xff]
      %v302 = vld [vmem:[%s180 + $0x370] sm:$0xff]
      %v303 = vld [vmem:[%s180 + $0x378] sm:$0xff]
      %v304 = vld [vmem:[%s180 + $0x380] sm:$0xff]
      %v305 = vld [vmem:[%s180 + $0x388] sm:$0xff]
      %v306 = vld [vmem:[%s180 + $0x390] sm:$0xff]
      %v307 = vld [vmem:[%s180 + $0x398] sm:$0xff]
      %v308 = vld [vmem:[%s180 + $0x3a0] sm:$0xff]
      %v309 = vld [vmem:[%s180 + $0x3a8] sm:$0xff]
      %v310 = vld [vmem:[%s180 + $0x3b0] sm:$0xff]
      %v311 = vld [vmem:[%s180 + $0x3b8] sm:$0xff]
      %v312 = vld [vmem:[%s180 + $0x3c0] sm:$0xff]
      %v313 = vld [vmem:[%s180 + $0x3c8] sm:$0xff]
      %v314 = vld [vmem:[%s180 + $0x3d0] sm:$0xff]
      %v315 = vld [vmem:[%s180 + $0x3d8] sm:$0xff]
      %v316 = vld [vmem:[%s180 + $0x3e0] sm:$0xff]
      %v317 = vld [vmem:[%s180 + $0x3e8] sm:$0xff]
      %v318 = vld [vmem:[%s180 + $0x3f0] sm:$0xff]
      %v319 = vld [vmem:[%s180 + $0x3f8] sm:$0xff]
      %v320 = vld [vmem:[%s185] sm:$0xf]
      %v321 = vld [vmem:[%s185 + $0x4] sm:$0xf]
      %v322 = vld [vmem:[%s185 + $0x8] sm:$0xf]
      %v323 = vld [vmem:[%s185 + $0xc] sm:$0xf]
      %v324 = vld [vmem:[%s185 + $0x10] sm:$0xf]
      %v325 = vld [vmem:[%s185 + $0x14] sm:$0xf]
      %v326 = vld [vmem:[%s185 + $0x18] sm:$0xf]
      %v327 = vld [vmem:[%s185 + $0x1c] sm:$0xf]
      %v328 = vld [vmem:[%s185 + $0x20] sm:$0xf]
      %v329 = vld [vmem:[%s185 + $0x24] sm:$0xf]
      %v330 = vld [vmem:[%s185 + $0x28] sm:$0xf]
      %v331 = vld [vmem:[%s185 + $0x2c] sm:$0xf]
      %v332 = vld [vmem:[%s185 + $0x30] sm:$0xf]
      %v333 = vld [vmem:[%s185 + $0x34] sm:$0xf]
      %v334 = vld [vmem:[%s185 + $0x38] sm:$0xf]
      %v335 = vld [vmem:[%s185 + $0x3c] sm:$0xf]
      %v336 = vld [vmem:[%s185 + $0x40] sm:$0xf]
      %v337 = vld [vmem:[%s185 + $0x44] sm:$0xf]
      %v338 = vld [vmem:[%s185 + $0x48] sm:$0xf]
      %v339 = vld [vmem:[%s185 + $0x4c] sm:$0xf]
      %v340 = vld [vmem:[%s185 + $0x50] sm:$0xf]
      %v341 = vld [vmem:[%s185 + $0x54] sm:$0xf]
      %v342 = vld [vmem:[%s185 + $0x58] sm:$0xf]
      %v343 = vld [vmem:[%s185 + $0x5c] sm:$0xf]
      %v344 = vld [vmem:[%s185 + $0x60] sm:$0xf]
      %v345 = vld [vmem:[%s185 + $0x64] sm:$0xf]
      %v346 = vld [vmem:[%s185 + $0x68] sm:$0xf]
      %v347 = vld [vmem:[%s185 + $0x6c] sm:$0xf]
      %v348 = vld [vmem:[%s185 + $0x70] sm:$0xf]
      %v349 = vld [vmem:[%s185 + $0x74] sm:$0xf]
      %v350 = vld [vmem:[%s185 + $0x78] sm:$0xf]
      %v351 = vld [vmem:[%s185 + $0x7c] sm:$0xf]
      %v352 = vld [vmem:[%s185 + $0x80] sm:$0xf]
      %v353 = vld [vmem:[%s185 + $0x84] sm:$0xf]
      %v354 = vld [vmem:[%s185 + $0x88] sm:$0xf]
      %v355 = vld [vmem:[%s185 + $0x8c] sm:$0xf]
      %v356 = vld [vmem:[%s185 + $0x90] sm:$0xf]
      %v357 = vld [vmem:[%s185 + $0x94] sm:$0xf]
      %v358 = vld [vmem:[%s185 + $0x98] sm:$0xf]
      %v359 = vld [vmem:[%s185 + $0x9c] sm:$0xf]
      %v360 = vld [vmem:[%s185 + $0xa0] sm:$0xf]
      %v361 = vld [vmem:[%s185 + $0xa4] sm:$0xf]
      %v362 = vld [vmem:[%s185 + $0xa8] sm:$0xf]
      %v363 = vld [vmem:[%s185 + $0xac] sm:$0xf]
      %v364 = vld [vmem:[%s185 + $0xb0] sm:$0xf]
      %v365 = vld [vmem:[%s185 + $0xb4] sm:$0xf]
      %v366 = vld [vmem:[%s185 + $0xb8] sm:$0xf]
      %v367 = vld [vmem:[%s185 + $0xbc] sm:$0xf]
      %v368 = vld [vmem:[%s185 + $0xc0] sm:$0xf]
      %v369 = vld [vmem:[%s185 + $0xc4] sm:$0xf]
      %v370 = vld [vmem:[%s185 + $0xc8] sm:$0xf]
      %v371 = vld [vmem:[%s185 + $0xcc] sm:$0xf]
      %v372 = vld [vmem:[%s185 + $0xd0] sm:$0xf]
      %v373 = vld [vmem:[%s185 + $0xd4] sm:$0xf]
      %v374 = vld [vmem:[%s185 + $0xd8] sm:$0xf]
      %v375 = vld [vmem:[%s185 + $0xdc] sm:$0xf]
      %v376 = vld [vmem:[%s185 + $0xe0] sm:$0xf]
      %v377 = vld [vmem:[%s185 + $0xe4] sm:$0xf]
      %v378 = vld [vmem:[%s185 + $0xe8] sm:$0xf]
      %v379 = vld [vmem:[%s185 + $0xec] sm:$0xf]
      %v380 = vld [vmem:[%s185 + $0xf0] sm:$0xf]
      %v381 = vld [vmem:[%s185 + $0xf4] sm:$0xf]
      %v382 = vld [vmem:[%s185 + $0xf8] sm:$0xf]
      %v383 = vld [vmem:[%s185 + $0xfc] sm:$0xf]
      %v384 = vld [vmem:[%s2] sm:$0x1]
      %v386 = vlaneseq
      %v387 = vshrl.u32 %v386, 7
      %v388 = vsub.s32 0, %v387
      %v389 = vrot.slane %v384, %v388
      %v519 = vunpack.c.l.b16 %v192
      %v520 = vunpack.c.h.b16 %v192
      %v521 = vunpack.c.l.b16 %v193
      %v522 = vunpack.c.h.b16 %v193
      %v523 = vunpack.c.l.b16 %v194
      %v524 = vunpack.c.h.b16 %v194
      %v525 = vunpack.c.l.b16 %v195
      %v526 = vunpack.c.h.b16 %v195
      %v527 = vunpack.c.l.b16 %v196
      %v528 = vunpack.c.h.b16 %v196
      %v529 = vunpack.c.l.b16 %v197
      %v530 = vunpack.c.h.b16 %v197
      %v531 = vunpack.c.l.b16 %v198
      %v532 = vunpack.c.h.b16 %v198
      %v533 = vunpack.c.l.b16 %v199
      %v534 = vunpack.c.h.b16 %v199
      %v535 = vunpack.c.l.b16 %v200
      %v536 = vunpack.c.h.b16 %v200
      %v537 = vunpack.c.l.b16 %v201
      %v538 = vunpack.c.h.b16 %v201
      %v539 = vunpack.c.l.b16 %v202
      %v540 = vunpack.c.h.b16 %v202
      %v541 = vunpack.c.l.b16 %v203
      %v542 = vunpack.c.h.b16 %v203
      %v543 = vunpack.c.l.b16 %v204
      %v544 = vunpack.c.h.b16 %v204
      %v545 = vunpack.c.l.b16 %v205
      %v546 = vunpack.c.h.b16 %v205
      %v547 = vunpack.c.l.b16 %v206
      %v548 = vunpack.c.h.b16 %v206
      %v549 = vunpack.c.l.b16 %v207
      %v550 = vunpack.c.h.b16 %v207
      %v551 = vunpack.c.l.b16 %v208
      %v552 = vunpack.c.h.b16 %v208
      %v553 = vunpack.c.l.b16 %v209
      %v554 = vunpack.c.h.b16 %v209
      %v555 = vunpack.c.l.b16 %v210
      %v556 = vunpack.c.h.b16 %v210
      %v557 = vunpack.c.l.b16 %v211
      %v558 = vunpack.c.h.b16 %v211
      %v559 = vunpack.c.l.b16 %v212
      %v560 = vunpack.c.h.b16 %v212
      %v561 = vunpack.c.l.b16 %v213
      %v562 = vunpack.c.h.b16 %v213
      %v563 = vunpack.c.l.b16 %v214
      %v564 = vunpack.c.h.b16 %v214
      %v565 = vunpack.c.l.b16 %v215
      %v566 = vunpack.c.h.b16 %v215
      %v567 = vunpack.c.l.b16 %v216
      %v568 = vunpack.c.h.b16 %v216
      %v569 = vunpack.c.l.b16 %v217
      %v570 = vunpack.c.h.b16 %v217
      %v571 = vunpack.c.l.b16 %v218
      %v572 = vunpack.c.h.b16 %v218
      %v573 = vunpack.c.l.b16 %v219
      %v574 = vunpack.c.h.b16 %v219
      %v575 = vunpack.c.l.b16 %v220
      %v576 = vunpack.c.h.b16 %v220
      %v577 = vunpack.c.l.b16 %v221
      %v578 = vunpack.c.h.b16 %v221
      %v579 = vunpack.c.l.b16 %v222
      %v580 = vunpack.c.h.b16 %v222
      %v581 = vunpack.c.l.b16 %v223
      %v582 = vunpack.c.h.b16 %v223
      %v583 = vunpack.c.l.b16 %v224
      %v584 = vunpack.c.h.b16 %v224
      %v585 = vunpack.c.l.b16 %v225
      %v586 = vunpack.c.h.b16 %v225
      %v587 = vunpack.c.l.b16 %v226
      %v588 = vunpack.c.h.b16 %v226
      %v589 = vunpack.c.l.b16 %v227
      %v590 = vunpack.c.h.b16 %v227
      %v591 = vunpack.c.l.b16 %v228
      %v592 = vunpack.c.h.b16 %v228
      %v593 = vunpack.c.l.b16 %v229
      %v594 = vunpack.c.h.b16 %v229
      %v595 = vunpack.c.l.b16 %v230
      %v596 = vunpack.c.h.b16 %v230
      %v597 = vunpack.c.l.b16 %v231
      %v598 = vunpack.c.h.b16 %v231
      %v599 = vunpack.c.l.b16 %v232
      %v600 = vunpack.c.h.b16 %v232
      %v601 = vunpack.c.l.b16 %v233
      %v602 = vunpack.c.h.b16 %v233
      %v603 = vunpack.c.l.b16 %v234
      %v604 = vunpack.c.h.b16 %v234
      %v605 = vunpack.c.l.b16 %v235
      %v606 = vunpack.c.h.b16 %v235
      %v607 = vunpack.c.l.b16 %v236
      %v608 = vunpack.c.h.b16 %v236
      %v609 = vunpack.c.l.b16 %v237
      %v610 = vunpack.c.h.b16 %v237
      %v611 = vunpack.c.l.b16 %v238
      %v612 = vunpack.c.h.b16 %v238
      %v613 = vunpack.c.l.b16 %v239
      %v614 = vunpack.c.h.b16 %v239
      %v615 = vunpack.c.l.b16 %v240
      %v616 = vunpack.c.h.b16 %v240
      %v617 = vunpack.c.l.b16 %v241
      %v618 = vunpack.c.h.b16 %v241
      %v619 = vunpack.c.l.b16 %v242
      %v620 = vunpack.c.h.b16 %v242
      %v621 = vunpack.c.l.b16 %v243
      %v622 = vunpack.c.h.b16 %v243
      %v623 = vunpack.c.l.b16 %v244
      %v624 = vunpack.c.h.b16 %v244
      %v625 = vunpack.c.l.b16 %v245
      %v626 = vunpack.c.h.b16 %v245
      %v627 = vunpack.c.l.b16 %v246
      %v628 = vunpack.c.h.b16 %v246
      %v629 = vunpack.c.l.b16 %v247
      %v630 = vunpack.c.h.b16 %v247
      %v631 = vunpack.c.l.b16 %v248
      %v632 = vunpack.c.h.b16 %v248
      %v633 = vunpack.c.l.b16 %v249
      %v634 = vunpack.c.h.b16 %v249
      %v635 = vunpack.c.l.b16 %v250
      %v636 = vunpack.c.h.b16 %v250
      %v637 = vunpack.c.l.b16 %v251
      %v638 = vunpack.c.h.b16 %v251
      %v639 = vunpack.c.l.b16 %v252
      %v640 = vunpack.c.h.b16 %v252
      %v641 = vunpack.c.l.b16 %v253
      %v642 = vunpack.c.h.b16 %v253
      %v643 = vunpack.c.l.b16 %v254
      %v644 = vunpack.c.h.b16 %v254
      %v645 = vunpack.c.l.b16 %v255
      %v646 = vunpack.c.h.b16 %v255
      %v647 = vunpack.c.l.b16 %v256
      %v648 = vunpack.c.h.b16 %v256
      %v649 = vunpack.c.l.b16 %v257
      %v650 = vunpack.c.h.b16 %v257
      %v651 = vunpack.c.l.b16 %v258
      %v652 = vunpack.c.h.b16 %v258
      %v653 = vunpack.c.l.b16 %v259
      %v654 = vunpack.c.h.b16 %v259
      %v655 = vunpack.c.l.b16 %v260
      %v656 = vunpack.c.h.b16 %v260
      %v657 = vunpack.c.l.b16 %v261
      %v658 = vunpack.c.h.b16 %v261
      %v659 = vunpack.c.l.b16 %v262
      %v660 = vunpack.c.h.b16 %v262
      %v661 = vunpack.c.l.b16 %v263
      %v662 = vunpack.c.h.b16 %v263
      %v663 = vunpack.c.l.b16 %v264
      %v664 = vunpack.c.h.b16 %v264
      %v665 = vunpack.c.l.b16 %v265
      %v666 = vunpack.c.h.b16 %v265
      %v667 = vunpack.c.l.b16 %v266
      %v668 = vunpack.c.h.b16 %v266
      %v669 = vunpack.c.l.b16 %v267
      %v670 = vunpack.c.h.b16 %v267
      %v671 = vunpack.c.l.b16 %v268
      %v672 = vunpack.c.h.b16 %v268
      %v673 = vunpack.c.l.b16 %v269
      %v674 = vunpack.c.h.b16 %v269
      %v675 = vunpack.c.l.b16 %v270
      %v676 = vunpack.c.h.b16 %v270
      %v677 = vunpack.c.l.b16 %v271
      %v678 = vunpack.c.h.b16 %v271
      %v679 = vunpack.c.l.b16 %v272
      %v680 = vunpack.c.h.b16 %v272
      %v681 = vunpack.c.l.b16 %v273
      %v682 = vunpack.c.h.b16 %v273
      %v683 = vunpack.c.l.b16 %v274
      %v684 = vunpack.c.h.b16 %v274
      %v685 = vunpack.c.l.b16 %v275
      %v686 = vunpack.c.h.b16 %v275
      %v687 = vunpack.c.l.b16 %v276
      %v688 = vunpack.c.h.b16 %v276
      %v689 = vunpack.c.l.b16 %v277
      %v690 = vunpack.c.h.b16 %v277
      %v691 = vunpack.c.l.b16 %v278
      %v692 = vunpack.c.h.b16 %v278
      %v693 = vunpack.c.l.b16 %v279
      %v694 = vunpack.c.h.b16 %v279
      %v695 = vunpack.c.l.b16 %v280
      %v696 = vunpack.c.h.b16 %v280
      %v697 = vunpack.c.l.b16 %v281
      %v698 = vunpack.c.h.b16 %v281
      %v699 = vunpack.c.l.b16 %v282
      %v700 = vunpack.c.h.b16 %v282
      %v701 = vunpack.c.l.b16 %v283
      %v702 = vunpack.c.h.b16 %v283
      %v703 = vunpack.c.l.b16 %v284
      %v704 = vunpack.c.h.b16 %v284
      %v705 = vunpack.c.l.b16 %v285
      %v706 = vunpack.c.h.b16 %v285
      %v707 = vunpack.c.l.b16 %v286
      %v708 = vunpack.c.h.b16 %v286
      %v709 = vunpack.c.l.b16 %v287
      %v710 = vunpack.c.h.b16 %v287
      %v711 = vunpack.c.l.b16 %v288
      %v712 = vunpack.c.h.b16 %v288
      %v713 = vunpack.c.l.b16 %v289
      %v714 = vunpack.c.h.b16 %v289
      %v715 = vunpack.c.l.b16 %v290
      %v716 = vunpack.c.h.b16 %v290
      %v717 = vunpack.c.l.b16 %v291
      %v718 = vunpack.c.h.b16 %v291
      %v719 = vunpack.c.l.b16 %v292
      %v720 = vunpack.c.h.b16 %v292
      %v721 = vunpack.c.l.b16 %v293
      %v722 = vunpack.c.h.b16 %v293
      %v723 = vunpack.c.l.b16 %v294
      %v724 = vunpack.c.h.b16 %v294
      %v725 = vunpack.c.l.b16 %v295
      %v726 = vunpack.c.h.b16 %v295
      %v727 = vunpack.c.l.b16 %v296
      %v728 = vunpack.c.h.b16 %v296
      %v729 = vunpack.c.l.b16 %v297
      %v730 = vunpack.c.h.b16 %v297
      %v731 = vunpack.c.l.b16 %v298
      %v732 = vunpack.c.h.b16 %v298
      %v733 = vunpack.c.l.b16 %v299
      %v734 = vunpack.c.h.b16 %v299
      %v735 = vunpack.c.l.b16 %v300
      %v736 = vunpack.c.h.b16 %v300
      %v737 = vunpack.c.l.b16 %v301
      %v738 = vunpack.c.h.b16 %v301
      %v739 = vunpack.c.l.b16 %v302
      %v740 = vunpack.c.h.b16 %v302
      %v741 = vunpack.c.l.b16 %v303
      %v742 = vunpack.c.h.b16 %v303
      %v743 = vunpack.c.l.b16 %v304
      %v744 = vunpack.c.h.b16 %v304
      %v745 = vunpack.c.l.b16 %v305
      %v746 = vunpack.c.h.b16 %v305
      %v747 = vunpack.c.l.b16 %v306
      %v748 = vunpack.c.h.b16 %v306
      %v749 = vunpack.c.l.b16 %v307
      %v750 = vunpack.c.h.b16 %v307
      %v751 = vunpack.c.l.b16 %v308
      %v752 = vunpack.c.h.b16 %v308
      %v753 = vunpack.c.l.b16 %v309
      %v754 = vunpack.c.h.b16 %v309
      %v755 = vunpack.c.l.b16 %v310
      %v756 = vunpack.c.h.b16 %v310
      %v757 = vunpack.c.l.b16 %v311
      %v758 = vunpack.c.h.b16 %v311
      %v759 = vunpack.c.l.b16 %v312
      %v760 = vunpack.c.h.b16 %v312
      %v761 = vunpack.c.l.b16 %v313
      %v762 = vunpack.c.h.b16 %v313
      %v763 = vunpack.c.l.b16 %v314
      %v764 = vunpack.c.h.b16 %v314
      %v765 = vunpack.c.l.b16 %v315
      %v766 = vunpack.c.h.b16 %v315
      %v767 = vunpack.c.l.b16 %v316
      %v768 = vunpack.c.h.b16 %v316
      %v769 = vunpack.c.l.b16 %v317
      %v770 = vunpack.c.h.b16 %v317
      %v771 = vunpack.c.l.b16 %v318
      %v772 = vunpack.c.h.b16 %v318
      %v773 = vunpack.c.l.b16 %v319
      %v774 = vunpack.c.h.b16 %v319
      %v775 = vpack.c.b16 %v523, %v519
      %v776 = vpack.c.b16 %v524, %v520
      %v777 = vpack.c.b16 %v525, %v521
      %v778 = vpack.c.b16 %v526, %v522
      %v779 = vpack.c.b16 %v531, %v527
      %v780 = vpack.c.b16 %v532, %v528
      %v781 = vpack.c.b16 %v533, %v529
      %v782 = vpack.c.b16 %v534, %v530
      %v783 = vpack.c.b16 %v539, %v535
      %v784 = vpack.c.b16 %v540, %v536
      %v785 = vpack.c.b16 %v541, %v537
      %v786 = vpack.c.b16 %v542, %v538
      %v787 = vpack.c.b16 %v547, %v543
      %v788 = vpack.c.b16 %v548, %v544
      %v789 = vpack.c.b16 %v549, %v545
      %v790 = vpack.c.b16 %v550, %v546
      %v791 = vpack.c.b16 %v555, %v551
      %v792 = vpack.c.b16 %v556, %v552
      %v793 = vpack.c.b16 %v557, %v553
      %v794 = vpack.c.b16 %v558, %v554
      %v795 = vpack.c.b16 %v563, %v559
      %v796 = vpack.c.b16 %v564, %v560
      %v797 = vpack.c.b16 %v565, %v561
      %v798 = vpack.c.b16 %v566, %v562
      %v799 = vpack.c.b16 %v571, %v567
      %v800 = vpack.c.b16 %v572, %v568
      %v801 = vpack.c.b16 %v573, %v569
      %v802 = vpack.c.b16 %v574, %v570
      %v803 = vpack.c.b16 %v579, %v575
      %v804 = vpack.c.b16 %v580, %v576
      %v805 = vpack.c.b16 %v581, %v577
      %v806 = vpack.c.b16 %v582, %v578
      %v807 = vpack.c.b16 %v587, %v583
      %v808 = vpack.c.b16 %v588, %v584
      %v809 = vpack.c.b16 %v589, %v585
      %v810 = vpack.c.b16 %v590, %v586
      %v811 = vpack.c.b16 %v595, %v591
      %v812 = vpack.c.b16 %v596, %v592
      %v813 = vpack.c.b16 %v597, %v593
      %v814 = vpack.c.b16 %v598, %v594
      %v815 = vpack.c.b16 %v603, %v599
      %v816 = vpack.c.b16 %v604, %v600
      %v817 = vpack.c.b16 %v605, %v601
      %v818 = vpack.c.b16 %v606, %v602
      %v819 = vpack.c.b16 %v611, %v607
      %v820 = vpack.c.b16 %v612, %v608
      %v821 = vpack.c.b16 %v613, %v609
      %v822 = vpack.c.b16 %v614, %v610
      %v823 = vpack.c.b16 %v619, %v615
      %v824 = vpack.c.b16 %v620, %v616
      %v825 = vpack.c.b16 %v621, %v617
      %v826 = vpack.c.b16 %v622, %v618
      %v827 = vpack.c.b16 %v627, %v623
      %v828 = vpack.c.b16 %v628, %v624
      %v829 = vpack.c.b16 %v629, %v625
      %v830 = vpack.c.b16 %v630, %v626
      %v831 = vpack.c.b16 %v635, %v631
      %v832 = vpack.c.b16 %v636, %v632
      %v833 = vpack.c.b16 %v637, %v633
      %v834 = vpack.c.b16 %v638, %v634
      %v835 = vpack.c.b16 %v643, %v639
      %v836 = vpack.c.b16 %v644, %v640
      %v837 = vpack.c.b16 %v645, %v641
      %v838 = vpack.c.b16 %v646, %v642
      %v839 = vpack.c.b16 %v651, %v647
      %v840 = vpack.c.b16 %v652, %v648
      %v841 = vpack.c.b16 %v653, %v649
      %v842 = vpack.c.b16 %v654, %v650
      %v843 = vpack.c.b16 %v659, %v655
      %v844 = vpack.c.b16 %v660, %v656
      %v845 = vpack.c.b16 %v661, %v657
      %v846 = vpack.c.b16 %v662, %v658
      %v847 = vpack.c.b16 %v667, %v663
      %v848 = vpack.c.b16 %v668, %v664
      %v849 = vpack.c.b16 %v669, %v665
      %v850 = vpack.c.b16 %v670, %v666
      %v851 = vpack.c.b16 %v675, %v671
      %v852 = vpack.c.b16 %v676, %v672
      %v853 = vpack.c.b16 %v677, %v673
      %v854 = vpack.c.b16 %v678, %v674
      %v855 = vpack.c.b16 %v683, %v679
      %v856 = vpack.c.b16 %v684, %v680
      %v857 = vpack.c.b16 %v685, %v681
      %v858 = vpack.c.b16 %v686, %v682
      %v859 = vpack.c.b16 %v691, %v687
      %v860 = vpack.c.b16 %v692, %v688
      %v861 = vpack.c.b16 %v693, %v689
      %v862 = vpack.c.b16 %v694, %v690
      %v863 = vpack.c.b16 %v699, %v695
      %v864 = vpack.c.b16 %v700, %v696
      %v865 = vpack.c.b16 %v701, %v697
      %v866 = vpack.c.b16 %v702, %v698
      %v867 = vpack.c.b16 %v707, %v703
      %v868 = vpack.c.b16 %v708, %v704
      %v869 = vpack.c.b16 %v709, %v705
      %v870 = vpack.c.b16 %v710, %v706
      %v871 = vpack.c.b16 %v715, %v711
      %v872 = vpack.c.b16 %v716, %v712
      %v873 = vpack.c.b16 %v717, %v713
      %v874 = vpack.c.b16 %v718, %v714
      %v875 = vpack.c.b16 %v723, %v719
      %v876 = vpack.c.b16 %v724, %v720
      %v877 = vpack.c.b16 %v725, %v721
      %v878 = vpack.c.b16 %v726, %v722
      %v879 = vpack.c.b16 %v731, %v727
      %v880 = vpack.c.b16 %v732, %v728
      %v881 = vpack.c.b16 %v733, %v729
      %v882 = vpack.c.b16 %v734, %v730
      %v883 = vpack.c.b16 %v739, %v735
      %v884 = vpack.c.b16 %v740, %v736
      %v885 = vpack.c.b16 %v741, %v737
      %v886 = vpack.c.b16 %v742, %v738
      %v887 = vpack.c.b16 %v747, %v743
      %v888 = vpack.c.b16 %v748, %v744
      %v889 = vpack.c.b16 %v749, %v745
      %v890 = vpack.c.b16 %v750, %v746
      %v891 = vpack.c.b16 %v755, %v751
      %v892 = vpack.c.b16 %v756, %v752
      %v893 = vpack.c.b16 %v757, %v753
      %v894 = vpack.c.b16 %v758, %v754
      %v895 = vpack.c.b16 %v763, %v759
      %v896 = vpack.c.b16 %v764, %v760
      %v897 = vpack.c.b16 %v765, %v761
      %v898 = vpack.c.b16 %v766, %v762
      %v899 = vpack.c.b16 %v771, %v767
      %v900 = vpack.c.b16 %v772, %v768
      %v901 = vpack.c.b16 %v773, %v769
      %v902 = vpack.c.b16 %v774, %v770
      %v1095 = vunpack.c.l.b16 %v320
      %v1096 = vunpack.c.l.b16 %v321
      %v1097 = vunpack.c.l.b16 %v322
      %v1098 = vunpack.c.l.b16 %v323
      %v1099 = vunpack.c.l.b16 %v324
      %v1100 = vunpack.c.l.b16 %v325
      %v1101 = vunpack.c.l.b16 %v326
      %v1102 = vunpack.c.l.b16 %v327
      %v1103 = vunpack.c.l.b16 %v328
      %v1104 = vunpack.c.l.b16 %v329
      %v1105 = vunpack.c.l.b16 %v330
      %v1106 = vunpack.c.l.b16 %v331
      %v1107 = vunpack.c.l.b16 %v332
      %v1108 = vunpack.c.l.b16 %v333
      %v1109 = vunpack.c.l.b16 %v334
      %v1110 = vunpack.c.l.b16 %v335
      %v1111 = vunpack.c.l.b16 %v336
      %v1112 = vunpack.c.l.b16 %v337
      %v1113 = vunpack.c.l.b16 %v338
      %v1114 = vunpack.c.l.b16 %v339
      %v1115 = vunpack.c.l.b16 %v340
      %v1116 = vunpack.c.l.b16 %v341
      %v1117 = vunpack.c.l.b16 %v342
      %v1118 = vunpack.c.l.b16 %v343
      %v1119 = vunpack.c.l.b16 %v344
      %v1120 = vunpack.c.l.b16 %v345
      %v1121 = vunpack.c.l.b16 %v346
      %v1122 = vunpack.c.l.b16 %v347
      %v1123 = vunpack.c.l.b16 %v348
      %v1124 = vunpack.c.l.b16 %v349
      %v1125 = vunpack.c.l.b16 %v350
      %v1126 = vunpack.c.l.b16 %v351
      %v1127 = vunpack.c.l.b16 %v352
      %v1128 = vunpack.c.l.b16 %v353
      %v1129 = vunpack.c.l.b16 %v354
      %v1130 = vunpack.c.l.b16 %v355
      %v1131 = vunpack.c.l.b16 %v356
      %v1132 = vunpack.c.l.b16 %v357
      %v1133 = vunpack.c.l.b16 %v358
      %v1134 = vunpack.c.l.b16 %v359
      %v1135 = vunpack.c.l.b16 %v360
      %v1136 = vunpack.c.l.b16 %v361
      %v1137 = vunpack.c.l.b16 %v362
      %v1138 = vunpack.c.l.b16 %v363
      %v1139 = vunpack.c.l.b16 %v364
      %v1140 = vunpack.c.l.b16 %v365
      %v1141 = vunpack.c.l.b16 %v366
      %v1142 = vunpack.c.l.b16 %v367
      %v1143 = vunpack.c.l.b16 %v368
      %v1144 = vunpack.c.l.b16 %v369
      %v1145 = vunpack.c.l.b16 %v370
      %v1146 = vunpack.c.l.b16 %v371
      %v1147 = vunpack.c.l.b16 %v372
      %v1148 = vunpack.c.l.b16 %v373
      %v1149 = vunpack.c.l.b16 %v374
      %v1150 = vunpack.c.l.b16 %v375
      %v1151 = vunpack.c.l.b16 %v376
      %v1152 = vunpack.c.l.b16 %v377
      %v1153 = vunpack.c.l.b16 %v378
      %v1154 = vunpack.c.l.b16 %v379
      %v1155 = vunpack.c.l.b16 %v380
      %v1156 = vunpack.c.l.b16 %v381
      %v1157 = vunpack.c.l.b16 %v382
      %v1158 = vunpack.c.l.b16 %v383
      %v1159 = vpack.c.b16 %v1096, %v1095
      %v1160 = vpack.c.b16 %v1098, %v1097
      %v1161 = vpack.c.b16 %v1100, %v1099
      %v1162 = vpack.c.b16 %v1102, %v1101
      %v1163 = vpack.c.b16 %v1104, %v1103
      %v1164 = vpack.c.b16 %v1106, %v1105
      %v1165 = vpack.c.b16 %v1108, %v1107
      %v1166 = vpack.c.b16 %v1110, %v1109
      %v1167 = vpack.c.b16 %v1112, %v1111
      %v1168 = vpack.c.b16 %v1114, %v1113
      %v1169 = vpack.c.b16 %v1116, %v1115
      %v1170 = vpack.c.b16 %v1118, %v1117
      %v1171 = vpack.c.b16 %v1120, %v1119
      %v1172 = vpack.c.b16 %v1122, %v1121
      %v1173 = vpack.c.b16 %v1124, %v1123
      %v1174 = vpack.c.b16 %v1126, %v1125
      %v1175 = vpack.c.b16 %v1128, %v1127
      %v1176 = vpack.c.b16 %v1130, %v1129
      %v1177 = vpack.c.b16 %v1132, %v1131
      %v1178 = vpack.c.b16 %v1134, %v1133
      %v1179 = vpack.c.b16 %v1136, %v1135
      %v1180 = vpack.c.b16 %v1138, %v1137
      %v1181 = vpack.c.b16 %v1140, %v1139
      %v1182 = vpack.c.b16 %v1142, %v1141
      %v1183 = vpack.c.b16 %v1144, %v1143
      %v1184 = vpack.c.b16 %v1146, %v1145
      %v1185 = vpack.c.b16 %v1148, %v1147
      %v1186 = vpack.c.b16 %v1150, %v1149
      %v1187 = vpack.c.b16 %v1152, %v1151
      %v1188 = vpack.c.b16 %v1154, %v1153
      %v1189 = vpack.c.b16 %v1156, %v1155
      %v1190 = vpack.c.b16 %v1158, %v1157
      %1223 = vmatprep.subr.bf16.mxu0 0
      %1224 = vmatpush1.bf16.msra.mxu0 %v1159
      %1225 = vmatprep.subr.bf16.mxu0 0
      %1226 = vmatpush1.bf16.msra.mxu0 %v1160
      %1227 = vmatprep.subr.bf16.mxu0 0
      %1228 = vmatpush1.bf16.msra.mxu0 %v1161
      %1229 = vmatprep.subr.bf16.mxu0 0
      %1230 = vmatpush1.bf16.msra.mxu0 %v1162
      %1231 = vmatprep.subr.bf16.mxu0 0
      %1232 = vmatpush1.bf16.msra.mxu0 %v1163
      %1233 = vmatprep.subr.bf16.mxu0 0
      %1234 = vmatpush1.bf16.msra.mxu0 %v1164
      %1235 = vmatprep.subr.bf16.mxu0 0
      %1236 = vmatpush1.bf16.msra.mxu0 %v1165
      %1237 = vmatprep.subr.bf16.mxu0 0
      %1238 = vmatpush1.bf16.msra.mxu0 %v1166
      %1239 = vmatprep.subr.bf16.mxu0 0
      %1240 = vmatpush1.bf16.msra.mxu0 %v1167
      %1241 = vmatprep.subr.bf16.mxu0 0
      %1242 = vmatpush1.bf16.msra.mxu0 %v1168
      %1243 = vmatprep.subr.bf16.mxu0 0
      %1244 = vmatpush1.bf16.msra.mxu0 %v1169
      %1245 = vmatprep.subr.bf16.mxu0 0
      %1246 = vmatpush1.bf16.msra.mxu0 %v1170
      %1247 = vmatprep.subr.bf16.mxu0 0
      %1248 = vmatpush1.bf16.msra.mxu0 %v1171
      %1249 = vmatprep.subr.bf16.mxu0 0
      %1250 = vmatpush1.bf16.msra.mxu0 %v1172
      %1251 = vmatprep.subr.bf16.mxu0 0
      %1252 = vmatpush1.bf16.msra.mxu0 %v1173
      %1253 = vmatprep.subr.bf16.mxu0 0
      %1254 = vmatpush1.bf16.msra.mxu0 %v1174
      %1255 = vmatprep.mubr.bf16.mxu0 %v776
      %1256 = vmatmul.mubr.bf16.gmra.mrb[0].mxu0 %v775
      %v1257 = vpop.f32.mrb[0].mxu0
      %v1258 = vadd.f32 %v389, %v1257
      %v1259 = vpop.f32.mrb[0].mxu0
      %v1260 = vpop.f32.mrb[0].mxu0
      %v1261 = vadd.f32 %v389, %v1260
      %v1262 = vpop.f32.mrb[0].mxu0
      %1263 = vmatprep.mubr.bf16.mxu0 %v780
      %1264 = vmatmul.mubr.bf16.gmra.mrb[0].mxu0 %v779
      %v1265 = vpop.f32.mrb[0].mxu0
      %v1266 = vadd.f32 %v389, %v1265
      %v1267 = vpop.f32.mrb[0].mxu0
      %v1268 = vpop.f32.mrb[0].mxu0
      %v1269 = vadd.f32 %v389, %v1268
      %v1270 = vpop.f32.mrb[0].mxu0
      %1271 = vmatprep.mubr.bf16.mxu0 %v784
      %1272 = vmatmul.mubr.bf16.gmra.mrb[0].mxu0 %v783
      %v1273 = vpop.f32.mrb[0].mxu0
      %v1274 = vadd.f32 %v389, %v1273
      %v1275 = vpop.f32.mrb[0].mxu0
      %v1276 = vpop.f32.mrb[0].mxu0
      %v1277 = vadd.f32 %v389, %v1276
      %v1278 = vpop.f32.mrb[0].mxu0
      %1279 = vmatprep.mubr.bf16.mxu0 %v788
      %1280 = vmatmul.mubr.bf16.gmra.mrb[0].mxu0 %v787
      %v1281 = vpop.f32.mrb[0].mxu0
      %v1282 = vadd.f32 %v389, %v1281
      %v1283 = vpop.f32.mrb[0].mxu0
      %v1284 = vpop.f32.mrb[0].mxu0
      %v1285 = vadd.f32 %v389, %v1284
      %v1286 = vpop.f32.mrb[0].mxu0
      %1287 = vmatprep.mubr.bf16.mxu0 %v792
      %1288 = vmatmul.mubr.bf16.gmra.mrb[0].mxu0 %v791
      %v1289 = vpop.f32.mrb[0].mxu0
      %v1290 = vadd.f32 %v389, %v1289
      %v1291 = vpop.f32.mrb[0].mxu0
      %v1292 = vpop.f32.mrb[0].mxu0
      %v1293 = vadd.f32 %v389, %v1292
      %v1294 = vpop.f32.mrb[0].mxu0
      %1295 = vmatprep.mubr.bf16.mxu0 %v796
      %1296 = vmatmul.mubr.bf16.gmra.mrb[0].mxu0 %v795
      %v1297 = vpop.f32.mrb[0].mxu0
      %v1298 = vadd.f32 %v389, %v1297
      %v1299 = vpop.f32.mrb[0].mxu0
      %v1300 = vpop.f32.mrb[0].mxu0
      %v1301 = vadd.f32 %v389, %v1300
      %v1302 = vpop.f32.mrb[0].mxu0
      %1303 = vmatprep.mubr.bf16.mxu0 %v800
      %1304 = vmatmul.mubr.bf16.gmra.mrb[0].mxu0 %v799
      %v1305 = vpop.f32.mrb[0].mxu0
      %v1306 = vadd.f32 %v389, %v1305
      %v1307 = vpop.f32.mrb[0].mxu0
      %v1308 = vpop.f32.mrb[0].mxu0
      %v1309 = vadd.f32 %v389, %v1308
      %v1310 = vpop.f32.mrb[0].mxu0
      %1311 = vmatprep.mubr.bf16.mxu0 %v804
      %1312 = vmatmul.mubr.bf16.gmra.mrb[0].mxu0 %v803
      %v1313 = vpop.f32.mrb[0].mxu0
      %v1314 = vadd.f32 %v389, %v1313
      %v1315 = vpop.f32.mrb[0].mxu0
      %v1316 = vpop.f32.mrb[0].mxu0
      %v1317 = vadd.f32 %v389, %v1316
      %v1318 = vpop.f32.mrb[0].mxu0
      %1319 = vmatprep.mubr.bf16.mxu0 %v808
      %1320 = vmatmul.mubr.bf16.gmra.mrb[0].mxu0 %v807
      %v1321 = vpop.f32.mrb[0].mxu0
      %v1322 = vadd.f32 %v389, %v1321
      %v1323 = vpop.f32.mrb[0].mxu0
      %v1324 = vpop.f32.mrb[0].mxu0
      %v1325 = vadd.f32 %v389, %v1324
      %v1326 = vpop.f32.mrb[0].mxu0
      %1327 = vmatprep.mubr.bf16.mxu0 %v812
      %1328 = vmatmul.mubr.bf16.gmra.mrb[0].mxu0 %v811
      %v1329 = vpop.f32.mrb[0].mxu0
      %v1330 = vadd.f32 %v389, %v1329
      %v1331 = vpop.f32.mrb[0].mxu0
      %v1332 = vpop.f32.mrb[0].mxu0
      %v1333 = vadd.f32 %v389, %v1332
      %v1334 = vpop.f32.mrb[0].mxu0
      %1335 = vmatprep.mubr.bf16.mxu0 %v816
      %1336 = vmatmul.mubr.bf16.gmra.mrb[0].mxu0 %v815
      %v1337 = vpop.f32.mrb[0].mxu0
      %v1338 = vadd.f32 %v389, %v1337
      %v1339 = vpop.f32.mrb[0].mxu0
      %v1340 = vpop.f32.mrb[0].mxu0
      %v1341 = vadd.f32 %v389, %v1340
      %v1342 = vpop.f32.mrb[0].mxu0
      %1343 = vmatprep.mubr.bf16.mxu0 %v820
      %1344 = vmatmul.mubr.bf16.gmra.mrb[0].mxu0 %v819
      %v1345 = vpop.f32.mrb[0].mxu0
      %v1346 = vadd.f32 %v389, %v1345
      %v1347 = vpop.f32.mrb[0].mxu0
      %v1348 = vpop.f32.mrb[0].mxu0
      %v1349 = vadd.f32 %v389, %v1348
      %v1350 = vpop.f32.mrb[0].mxu0
      %1351 = vmatprep.mubr.bf16.mxu0 %v824
      %1352 = vmatmul.mubr.bf16.gmra.mrb[0].mxu0 %v823
      %v1353 = vpop.f32.mrb[0].mxu0
      %v1354 = vadd.f32 %v389, %v1353
      %v1355 = vpop.f32.mrb[0].mxu0
      %v1356 = vpop.f32.mrb[0].mxu0
      %v1357 = vadd.f32 %v389, %v1356
      %v1358 = vpop.f32.mrb[0].mxu0
      %1359 = vmatprep.mubr.bf16.mxu0 %v828
      %1360 = vmatmul.mubr.bf16.gmra.mrb[0].mxu0 %v827
      %v1361 = vpop.f32.mrb[0].mxu0
      %v1362 = vadd.f32 %v389, %v1361
      %v1363 = vpop.f32.mrb[0].mxu0
      %v1364 = vpop.f32.mrb[0].mxu0
      %v1365 = vadd.f32 %v389, %v1364
      %v1366 = vpop.f32.mrb[0].mxu0
      %1367 = vmatprep.mubr.bf16.mxu0 %v832
      %1368 = vmatmul.mubr.bf16.gmra.mrb[0].mxu0 %v831
      %v1369 = vpop.f32.mrb[0].mxu0
      %v1370 = vadd.f32 %v389, %v1369
      %v1371 = vpop.f32.mrb[0].mxu0
      %v1372 = vpop.f32.mrb[0].mxu0
      %v1373 = vadd.f32 %v389, %v1372
      %v1374 = vpop.f32.mrb[0].mxu0
      %1375 = vmatprep.mubr.bf16.mxu0 %v836
      %1376 = vmatmul.mubr.bf16.gmra.mrb[0].mxu0 %v835
      %v1377 = vpop.f32.mrb[0].mxu0
      %v1378 = vadd.f32 %v389, %v1377
      %v1379 = vpop.f32.mrb[0].mxu0
      %v1380 = vpop.f32.mrb[0].mxu0
      %v1381 = vadd.f32 %v389, %v1380
      %v1382 = vpop.f32.mrb[0].mxu0
      %1383 = vmatprep.mubr.bf16.mxu0 %v840
      %1384 = vmatmul.mubr.bf16.gmra.mrb[0].mxu0 %v839
      %v1385 = vpop.f32.mrb[0].mxu0
      %v1386 = vadd.f32 %v389, %v1385
      %v1387 = vpop.f32.mrb[0].mxu0
      %v1388 = vpop.f32.mrb[0].mxu0
      %v1389 = vadd.f32 %v389, %v1388
      %v1390 = vpop.f32.mrb[0].mxu0
      %1391 = vmatprep.mubr.bf16.mxu0 %v844
      %1392 = vmatmul.mubr.bf16.gmra.mrb[0].mxu0 %v843
      %v1393 = vpop.f32.mrb[0].mxu0
      %v1394 = vadd.f32 %v389, %v1393
      %v1395 = vpop.f32.mrb[0].mxu0
      %v1396 = vpop.f32.mrb[0].mxu0
      %v1397 = vadd.f32 %v389, %v1396
      %v1398 = vpop.f32.mrb[0].mxu0
      %1399 = vmatprep.mubr.bf16.mxu0 %v848
      %1400 = vmatmul.mubr.bf16.gmra.mrb[0].mxu0 %v847
      %v1401 = vpop.f32.mrb[0].mxu0
      %v1402 = vadd.f32 %v389, %v1401
      %v1403 = vpop.f32.mrb[0].mxu0
      %v1404 = vpop.f32.mrb[0].mxu0
      %v1405 = vadd.f32 %v389, %v1404
      %v1406 = vpop.f32.mrb[0].mxu0
      %1407 = vmatprep.mubr.bf16.mxu0 %v852
      %1408 = vmatmul.mubr.bf16.gmra.mrb[0].mxu0 %v851
      %v1409 = vpop.f32.mrb[0].mxu0
      %v1410 = vadd.f32 %v389, %v1409
      %v1411 = vpop.f32.mrb[0].mxu0
      %v1412 = vpop.f32.mrb[0].mxu0
      %v1413 = vadd.f32 %v389, %v1412
      %v1414 = vpop.f32.mrb[0].mxu0
      %1415 = vmatprep.mubr.bf16.mxu0 %v856
      %1416 = vmatmul.mubr.bf16.gmra.mrb[0].mxu0 %v855
      %v1417 = vpop.f32.mrb[0].mxu0
      %v1418 = vadd.f32 %v389, %v1417
      %v1419 = vpop.f32.mrb[0].mxu0
      %v1420 = vpop.f32.mrb[0].mxu0
      %v1421 = vadd.f32 %v389, %v1420
      %v1422 = vpop.f32.mrb[0].mxu0
      %1423 = vmatprep.mubr.bf16.mxu0 %v860
      %1424 = vmatmul.mubr.bf16.gmra.mrb[0].mxu0 %v859
      %v1425 = vpop.f32.mrb[0].mxu0
      %v1426 = vadd.f32 %v389, %v1425
      %v1427 = vpop.f32.mrb[0].mxu0
      %v1428 = vpop.f32.mrb[0].mxu0
      %v1429 = vadd.f32 %v389, %v1428
      %v1430 = vpop.f32.mrb[0].mxu0
      %1431 = vmatprep.mubr.bf16.mxu0 %v864
      %1432 = vmatmul.mubr.bf16.gmra.mrb[0].mxu0 %v863
      %v1433 = vpop.f32.mrb[0].mxu0
      %v1434 = vadd.f32 %v389, %v1433
      %v1435 = vpop.f32.mrb[0].mxu0
      %v1436 = vpop.f32.mrb[0].mxu0
      %v1437 = vadd.f32 %v389, %v1436
      %v1438 = vpop.f32.mrb[0].mxu0
      %1439 = vmatprep.mubr.bf16.mxu0 %v868
      %1440 = vmatmul.mubr.bf16.gmra.mrb[0].mxu0 %v867
      %v1441 = vpop.f32.mrb[0].mxu0
      %v1442 = vadd.f32 %v389, %v1441
      %v1443 = vpop.f32.mrb[0].mxu0
      %v1444 = vpop.f32.mrb[0].mxu0
      %v1445 = vadd.f32 %v389, %v1444
      %v1446 = vpop.f32.mrb[0].mxu0
      %1447 = vmatprep.mubr.bf16.mxu0 %v872
      %1448 = vmatmul.mubr.bf16.gmra.mrb[0].mxu0 %v871
      %v1449 = vpop.f32.mrb[0].mxu0
      %v1450 = vadd.f32 %v389, %v1449
      %v1451 = vpop.f32.mrb[0].mxu0
      %v1452 = vpop.f32.mrb[0].mxu0
      %v1453 = vadd.f32 %v389, %v1452
      %v1454 = vpop.f32.mrb[0].mxu0
      %1455 = vmatprep.mubr.bf16.mxu0 %v876
      %1456 = vmatmul.mubr.bf16.gmra.mrb[0].mxu0 %v875
      %v1457 = vpop.f32.mrb[0].mxu0
      %v1458 = vadd.f32 %v389, %v1457
      %v1459 = vpop.f32.mrb[0].mxu0
      %v1460 = vpop.f32.mrb[0].mxu0
      %v1461 = vadd.f32 %v389, %v1460
      %v1462 = vpop.f32.mrb[0].mxu0
      %1463 = vmatprep.mubr.bf16.mxu0 %v880
      %1464 = vmatmul.mubr.bf16.gmra.mrb[0].mxu0 %v879
      %v1465 = vpop.f32.mrb[0].mxu0
      %v1466 = vadd.f32 %v389, %v1465
      %v1467 = vpop.f32.mrb[0].mxu0
      %v1468 = vpop.f32.mrb[0].mxu0
      %v1469 = vadd.f32 %v389, %v1468
      %v1470 = vpop.f32.mrb[0].mxu0
      %1471 = vmatprep.mubr.bf16.mxu0 %v884
      %1472 = vmatmul.mubr.bf16.gmra.mrb[0].mxu0 %v883
      %v1473 = vpop.f32.mrb[0].mxu0
      %v1474 = vadd.f32 %v389, %v1473
      %v1475 = vpop.f32.mrb[0].mxu0
      %v1476 = vpop.f32.mrb[0].mxu0
      %v1477 = vadd.f32 %v389, %v1476
      %v1478 = vpop.f32.mrb[0].mxu0
      %1479 = vmatprep.mubr.bf16.mxu0 %v888
      %1480 = vmatmul.mubr.bf16.gmra.mrb[0].mxu0 %v887
      %v1481 = vpop.f32.mrb[0].mxu0
      %v1482 = vadd.f32 %v389, %v1481
      %v1483 = vpop.f32.mrb[0].mxu0
      %v1484 = vpop.f32.mrb[0].mxu0
      %v1485 = vadd.f32 %v389, %v1484
      %v1486 = vpop.f32.mrb[0].mxu0
      %1487 = vmatprep.mubr.bf16.mxu0 %v892
      %1488 = vmatmul.mubr.bf16.gmra.mrb[0].mxu0 %v891
      %v1489 = vpop.f32.mrb[0].mxu0
      %v1490 = vadd.f32 %v389, %v1489
      %v1491 = vpop.f32.mrb[0].mxu0
      %v1492 = vpop.f32.mrb[0].mxu0
      %v1493 = vadd.f32 %v389, %v1492
      %v1494 = vpop.f32.mrb[0].mxu0
      %1495 = vmatprep.mubr.bf16.mxu0 %v896
      %1496 = vmatmul.mubr.bf16.gmra.mrb[0].mxu0 %v895
      %v1497 = vpop.f32.mrb[0].mxu0
      %v1498 = vadd.f32 %v389, %v1497
      %v1499 = vpop.f32.mrb[0].mxu0
      %v1500 = vpop.f32.mrb[0].mxu0
      %v1501 = vadd.f32 %v389, %v1500
      %v1502 = vpop.f32.mrb[0].mxu0
      %1503 = vmatprep.mubr.bf16.mxu0 %v900
      %1504 = vmatmul.mubr.bf16.gmra.mrb[0].mxu0 %v899
      %v1505 = vpop.f32.mrb[0].mxu0
      %v1506 = vadd.f32 %v389, %v1505
      %v1507 = vpop.f32.mrb[0].mxu0
      %v1508 = vpop.f32.mrb[0].mxu0
      %v1509 = vadd.f32 %v389, %v1508
      %v1510 = vpop.f32.mrb[0].mxu0
      %1511 = vdwg.mxu0
      %1512 = vmatprep.subr.bf16.mxu0 0
      %1513 = vmatpush1.bf16.msra.mxu0 %v1175
      %1514 = vmatprep.subr.bf16.mxu0 0
      %1515 = vmatpush1.bf16.msra.mxu0 %v1176
      %1516 = vmatprep.subr.bf16.mxu0 0
      %1517 = vmatpush1.bf16.msra.mxu0 %v1177
      %1518 = vmatprep.subr.bf16.mxu0 0
      %1519 = vmatpush1.bf16.msra.mxu0 %v1178
      %1520 = vmatprep.subr.bf16.mxu0 0
      %1521 = vmatpush1.bf16.msra.mxu0 %v1179
      %1522 = vmatprep.subr.bf16.mxu0 0
      %1523 = vmatpush1.bf16.msra.mxu0 %v1180
      %1524 = vmatprep.subr.bf16.mxu0 0
      %1525 = vmatpush1.bf16.msra.mxu0 %v1181
      %1526 = vmatprep.subr.bf16.mxu0 0
      %1527 = vmatpush1.bf16.msra.mxu0 %v1182
      %1528 = vmatprep.subr.bf16.mxu0 0
      %1529 = vmatpush1.bf16.msra.mxu0 %v1183
      %1530 = vmatprep.subr.bf16.mxu0 0
      %1531 = vmatpush1.bf16.msra.mxu0 %v1184
      %1532 = vmatprep.subr.bf16.mxu0 0
      %1533 = vmatpush1.bf16.msra.mxu0 %v1185
      %1534 = vmatprep.subr.bf16.mxu0 0
      %1535 = vmatpush1.bf16.msra.mxu0 %v1186
      %1536 = vmatprep.subr.bf16.mxu0 0
      %1537 = vmatpush1.bf16.msra.mxu0 %v1187
      %1538 = vmatprep.subr.bf16.mxu0 0
      %1539 = vmatpush1.bf16.msra.mxu0 %v1188
      %1540 = vmatprep.subr.bf16.mxu0 0
      %1541 = vmatpush1.bf16.msra.mxu0 %v1189
      %1542 = vmatprep.subr.bf16.mxu0 0
      %1543 = vmatpush1.bf16.msra.mxu0 %v1190
      %1544 = vmatprep.mubr.bf16.mxu0 %v778
      %1545 = vmatmul.mubr.bf16.gmra.mrb[0].mxu0 %v777
      %v1546 = vpop.f32.mrb[0].mxu0
      %v1547 = vadd.f32 %v1258, %v1546
      %v1548 = vpop.f32.mrb[0].mxu0
      %v1549 = vpop.f32.mrb[0].mxu0
      %v1550 = vadd.f32 %v1261, %v1549
      %v1551 = vpop.f32.mrb[0].mxu0
      %1552 = vmatprep.mubr.bf16.mxu0 %v782
      %1553 = vmatmul.mubr.bf16.gmra.mrb[0].mxu0 %v781
      %v1554 = vpop.f32.mrb[0].mxu0
      %v1555 = vadd.f32 %v1266, %v1554
      %v1556 = vpop.f32.mrb[0].mxu0
      %v1557 = vpop.f32.mrb[0].mxu0
      %v1558 = vadd.f32 %v1269, %v1557
      %v1559 = vpop.f32.mrb[0].mxu0
      %1560 = vmatprep.mubr.bf16.mxu0 %v786
      %1561 = vmatmul.mubr.bf16.gmra.mrb[0].mxu0 %v785
      %v1562 = vpop.f32.mrb[0].mxu0
      %v1563 = vadd.f32 %v1274, %v1562
      %v1564 = vpop.f32.mrb[0].mxu0
      %v1565 = vpop.f32.mrb[0].mxu0
      %v1566 = vadd.f32 %v1277, %v1565
      %v1567 = vpop.f32.mrb[0].mxu0
      %1568 = vmatprep.mubr.bf16.mxu0 %v790
      %1569 = vmatmul.mubr.bf16.gmra.mrb[0].mxu0 %v789
      %v1570 = vpop.f32.mrb[0].mxu0
      %v1571 = vadd.f32 %v1282, %v1570
      %v1572 = vpop.f32.mrb[0].mxu0
      %v1573 = vpop.f32.mrb[0].mxu0
      %v1574 = vadd.f32 %v1285, %v1573
      %v1575 = vpop.f32.mrb[0].mxu0
      %1576 = vmatprep.mubr.bf16.mxu0 %v794
      %1577 = vmatmul.mubr.bf16.gmra.mrb[0].mxu0 %v793
      %v1578 = vpop.f32.mrb[0].mxu0
      %v1579 = vadd.f32 %v1290, %v1578
      %v1580 = vpop.f32.mrb[0].mxu0
      %v1581 = vpop.f32.mrb[0].mxu0
      %v1582 = vadd.f32 %v1293, %v1581
      %v1583 = vpop.f32.mrb[0].mxu0
      %1584 = vmatprep.mubr.bf16.mxu0 %v798
      %1585 = vmatmul.mubr.bf16.gmra.mrb[0].mxu0 %v797
      %v1586 = vpop.f32.mrb[0].mxu0
      %v1587 = vadd.f32 %v1298, %v1586
      %v1588 = vpop.f32.mrb[0].mxu0
      %v1589 = vpop.f32.mrb[0].mxu0
      %v1590 = vadd.f32 %v1301, %v1589
      %v1591 = vpop.f32.mrb[0].mxu0
      %1592 = vmatprep.mubr.bf16.mxu0 %v802
      %1593 = vmatmul.mubr.bf16.gmra.mrb[0].mxu0 %v801
      %v1594 = vpop.f32.mrb[0].mxu0
      %v1595 = vadd.f32 %v1306, %v1594
      %v1596 = vpop.f32.mrb[0].mxu0
      %v1597 = vpop.f32.mrb[0].mxu0
      %v1598 = vadd.f32 %v1309, %v1597
      %v1599 = vpop.f32.mrb[0].mxu0
      %1600 = vmatprep.mubr.bf16.mxu0 %v806
      %1601 = vmatmul.mubr.bf16.gmra.mrb[0].mxu0 %v805
      %v1602 = vpop.f32.mrb[0].mxu0
      %v1603 = vadd.f32 %v1314, %v1602
      %v1604 = vpop.f32.mrb[0].mxu0
      %v1605 = vpop.f32.mrb[0].mxu0
      %v1606 = vadd.f32 %v1317, %v1605
      %v1607 = vpop.f32.mrb[0].mxu0
      %1608 = vmatprep.mubr.bf16.mxu0 %v810
      %1609 = vmatmul.mubr.bf16.gmra.mrb[0].mxu0 %v809
      %v1610 = vpop.f32.mrb[0].mxu0
      %v1611 = vadd.f32 %v1322, %v1610
      %v1612 = vpop.f32.mrb[0].mxu0
      %v1613 = vpop.f32.mrb[0].mxu0
      %v1614 = vadd.f32 %v1325, %v1613
      %v1615 = vpop.f32.mrb[0].mxu0
      %1616 = vmatprep.mubr.bf16.mxu0 %v814
      %1617 = vmatmul.mubr.bf16.gmra.mrb[0].mxu0 %v813
      %v1618 = vpop.f32.mrb[0].mxu0
      %v1619 = vadd.f32 %v1330, %v1618
      %v1620 = vpop.f32.mrb[0].mxu0
      %v1621 = vpop.f32.mrb[0].mxu0
      %v1622 = vadd.f32 %v1333, %v1621
      %v1623 = vpop.f32.mrb[0].mxu0
      %1624 = vmatprep.mubr.bf16.mxu0 %v818
      %1625 = vmatmul.mubr.bf16.gmra.mrb[0].mxu0 %v817
      %v1626 = vpop.f32.mrb[0].mxu0
      %v1627 = vadd.f32 %v1338, %v1626
      %v1628 = vpop.f32.mrb[0].mxu0
      %v1629 = vpop.f32.mrb[0].mxu0
      %v1630 = vadd.f32 %v1341, %v1629
      %v1631 = vpop.f32.mrb[0].mxu0
      %1632 = vmatprep.mubr.bf16.mxu0 %v822
      %1633 = vmatmul.mubr.bf16.gmra.mrb[0].mxu0 %v821
      %v1634 = vpop.f32.mrb[0].mxu0
      %v1635 = vadd.f32 %v1346, %v1634
      %v1636 = vpop.f32.mrb[0].mxu0
      %v1637 = vpop.f32.mrb[0].mxu0
      %v1638 = vadd.f32 %v1349, %v1637
      %v1639 = vpop.f32.mrb[0].mxu0
      %1640 = vmatprep.mubr.bf16.mxu0 %v826
      %1641 = vmatmul.mubr.bf16.gmra.mrb[0].mxu0 %v825
      %v1642 = vpop.f32.mrb[0].mxu0
      %v1643 = vadd.f32 %v1354, %v1642
      %v1644 = vpop.f32.mrb[0].mxu0
      %v1645 = vpop.f32.mrb[0].mxu0
      %v1646 = vadd.f32 %v1357, %v1645
      %v1647 = vpop.f32.mrb[0].mxu0
      %1648 = vmatprep.mubr.bf16.mxu0 %v830
      %1649 = vmatmul.mubr.bf16.gmra.mrb[0].mxu0 %v829
      %v1650 = vpop.f32.mrb[0].mxu0
      %v1651 = vadd.f32 %v1362, %v1650
      %v1652 = vpop.f32.mrb[0].mxu0
      %v1653 = vpop.f32.mrb[0].mxu0
      %v1654 = vadd.f32 %v1365, %v1653
      %v1655 = vpop.f32.mrb[0].mxu0
      %1656 = vmatprep.mubr.bf16.mxu0 %v834
      %1657 = vmatmul.mubr.bf16.gmra.mrb[0].mxu0 %v833
      %v1658 = vpop.f32.mrb[0].mxu0
      %v1659 = vadd.f32 %v1370, %v1658
      %v1660 = vpop.f32.mrb[0].mxu0
      %v1661 = vpop.f32.mrb[0].mxu0
      %v1662 = vadd.f32 %v1373, %v1661
      %v1663 = vpop.f32.mrb[0].mxu0
      %1664 = vmatprep.mubr.bf16.mxu0 %v838
      %1665 = vmatmul.mubr.bf16.gmra.mrb[0].mxu0 %v837
      %v1666 = vpop.f32.mrb[0].mxu0
      %v1667 = vadd.f32 %v1378, %v1666
      %v1668 = vpop.f32.mrb[0].mxu0
      %v1669 = vpop.f32.mrb[0].mxu0
      %v1670 = vadd.f32 %v1381, %v1669
      %v1671 = vpop.f32.mrb[0].mxu0
      %1672 = vmatprep.mubr.bf16.mxu0 %v842
      %1673 = vmatmul.mubr.bf16.gmra.mrb[0].mxu0 %v841
      %v1674 = vpop.f32.mrb[0].mxu0
      %v1675 = vadd.f32 %v1386, %v1674
      %v1676 = vpop.f32.mrb[0].mxu0
      %v1677 = vpop.f32.mrb[0].mxu0
      %v1678 = vadd.f32 %v1389, %v1677
      %v1679 = vpop.f32.mrb[0].mxu0
      %1680 = vmatprep.mubr.bf16.mxu0 %v846
      %1681 = vmatmul.mubr.bf16.gmra.mrb[0].mxu0 %v845
      %v1682 = vpop.f32.mrb[0].mxu0
      %v1683 = vadd.f32 %v1394, %v1682
      %v1684 = vpop.f32.mrb[0].mxu0
      %v1685 = vpop.f32.mrb[0].mxu0
      %v1686 = vadd.f32 %v1397, %v1685
      %v1687 = vpop.f32.mrb[0].mxu0
      %1688 = vmatprep.mubr.bf16.mxu0 %v850
      %1689 = vmatmul.mubr.bf16.gmra.mrb[0].mxu0 %v849
      %v1690 = vpop.f32.mrb[0].mxu0
      %v1691 = vadd.f32 %v1402, %v1690
      %v1692 = vpop.f32.mrb[0].mxu0
      %v1693 = vpop.f32.mrb[0].mxu0
      %v1694 = vadd.f32 %v1405, %v1693
      %v1695 = vpop.f32.mrb[0].mxu0
      %1696 = vmatprep.mubr.bf16.mxu0 %v854
      %1697 = vmatmul.mubr.bf16.gmra.mrb[0].mxu0 %v853
      %v1698 = vpop.f32.mrb[0].mxu0
      %v1699 = vadd.f32 %v1410, %v1698
      %v1700 = vpop.f32.mrb[0].mxu0
      %v1701 = vpop.f32.mrb[0].mxu0
      %v1702 = vadd.f32 %v1413, %v1701
      %v1703 = vpop.f32.mrb[0].mxu0
      %1704 = vmatprep.mubr.bf16.mxu0 %v858
      %1705 = vmatmul.mubr.bf16.gmra.mrb[0].mxu0 %v857
      %v1706 = vpop.f32.mrb[0].mxu0
      %v1707 = vadd.f32 %v1418, %v1706
      %v1708 = vpop.f32.mrb[0].mxu0
      %v1709 = vpop.f32.mrb[0].mxu0
      %v1710 = vadd.f32 %v1421, %v1709
      %v1711 = vpop.f32.mrb[0].mxu0
      %1712 = vmatprep.mubr.bf16.mxu0 %v862
      %1713 = vmatmul.mubr.bf16.gmra.mrb[0].mxu0 %v861
      %v1714 = vpop.f32.mrb[0].mxu0
      %v1715 = vadd.f32 %v1426, %v1714
      %v1716 = vpop.f32.mrb[0].mxu0
      %v1717 = vpop.f32.mrb[0].mxu0
      %v1718 = vadd.f32 %v1429, %v1717
      %v1719 = vpop.f32.mrb[0].mxu0
      %1720 = vmatprep.mubr.bf16.mxu0 %v866
      %1721 = vmatmul.mubr.bf16.gmra.mrb[0].mxu0 %v865
      %v1722 = vpop.f32.mrb[0].mxu0
      %v1723 = vadd.f32 %v1434, %v1722
      %v1724 = vpop.f32.mrb[0].mxu0
      %v1725 = vpop.f32.mrb[0].mxu0
      %v1726 = vadd.f32 %v1437, %v1725
      %v1727 = vpop.f32.mrb[0].mxu0
      %1728 = vmatprep.mubr.bf16.mxu0 %v870
      %1729 = vmatmul.mubr.bf16.gmra.mrb[0].mxu0 %v869
      %v1730 = vpop.f32.mrb[0].mxu0
      %v1731 = vadd.f32 %v1442, %v1730
      %v1732 = vpop.f32.mrb[0].mxu0
      %v1733 = vpop.f32.mrb[0].mxu0
      %v1734 = vadd.f32 %v1445, %v1733
      %v1735 = vpop.f32.mrb[0].mxu0
      %1736 = vmatprep.mubr.bf16.mxu0 %v874
      %1737 = vmatmul.mubr.bf16.gmra.mrb[0].mxu0 %v873
      %v1738 = vpop.f32.mrb[0].mxu0
      %v1739 = vadd.f32 %v1450, %v1738
      %v1740 = vpop.f32.mrb[0].mxu0
      %v1741 = vpop.f32.mrb[0].mxu0
      %v1742 = vadd.f32 %v1453, %v1741
      %v1743 = vpop.f32.mrb[0].mxu0
      %1744 = vmatprep.mubr.bf16.mxu0 %v878
      %1745 = vmatmul.mubr.bf16.gmra.mrb[0].mxu0 %v877
      %v1746 = vpop.f32.mrb[0].mxu0
      %v1747 = vadd.f32 %v1458, %v1746
      %v1748 = vpop.f32.mrb[0].mxu0
      %v1749 = vpop.f32.mrb[0].mxu0
      %v1750 = vadd.f32 %v1461, %v1749
      %v1751 = vpop.f32.mrb[0].mxu0
      %1752 = vmatprep.mubr.bf16.mxu0 %v882
      %1753 = vmatmul.mubr.bf16.gmra.mrb[0].mxu0 %v881
      %v1754 = vpop.f32.mrb[0].mxu0
      %v1755 = vadd.f32 %v1466, %v1754
      %v1756 = vpop.f32.mrb[0].mxu0
      %v1757 = vpop.f32.mrb[0].mxu0
      %v1758 = vadd.f32 %v1469, %v1757
      %v1759 = vpop.f32.mrb[0].mxu0
      %1760 = vmatprep.mubr.bf16.mxu0 %v886
      %1761 = vmatmul.mubr.bf16.gmra.mrb[0].mxu0 %v885
      %v1762 = vpop.f32.mrb[0].mxu0
      %v1763 = vadd.f32 %v1474, %v1762
      %v1764 = vpop.f32.mrb[0].mxu0
      %v1765 = vpop.f32.mrb[0].mxu0
      %v1766 = vadd.f32 %v1477, %v1765
      %v1767 = vpop.f32.mrb[0].mxu0
      %1768 = vmatprep.mubr.bf16.mxu0 %v890
      %1769 = vmatmul.mubr.bf16.gmra.mrb[0].mxu0 %v889
      %v1770 = vpop.f32.mrb[0].mxu0
      %v1771 = vadd.f32 %v1482, %v1770
      %v1772 = vpop.f32.mrb[0].mxu0
      %v1773 = vpop.f32.mrb[0].mxu0
      %v1774 = vadd.f32 %v1485, %v1773
      %v1775 = vpop.f32.mrb[0].mxu0
      %1776 = vmatprep.mubr.bf16.mxu0 %v894
      %1777 = vmatmul.mubr.bf16.gmra.mrb[0].mxu0 %v893
      %v1778 = vpop.f32.mrb[0].mxu0
      %v1779 = vadd.f32 %v1490, %v1778
      %v1780 = vpop.f32.mrb[0].mxu0
      %v1781 = vpop.f32.mrb[0].mxu0
      %v1782 = vadd.f32 %v1493, %v1781
      %v1783 = vpop.f32.mrb[0].mxu0
      %1784 = vmatprep.mubr.bf16.mxu0 %v898
      %1785 = vmatmul.mubr.bf16.gmra.mrb[0].mxu0 %v897
      %v1786 = vpop.f32.mrb[0].mxu0
      %v1787 = vadd.f32 %v1498, %v1786
      %v1788 = vpop.f32.mrb[0].mxu0
      %v1789 = vpop.f32.mrb[0].mxu0
      %v1790 = vadd.f32 %v1501, %v1789
      %v1791 = vpop.f32.mrb[0].mxu0
      %1792 = vmatprep.mubr.bf16.mxu0 %v902
      %1793 = vmatmul.mubr.bf16.gmra.mrb[0].mxu0 %v901
      %v1794 = vpop.f32.mrb[0].mxu0
      %v1795 = vadd.f32 %v1506, %v1794
      %v1796 = vpop.f32.mrb[0].mxu0
      %v1797 = vpop.f32.mrb[0].mxu0
      %v1798 = vadd.f32 %v1509, %v1797
      %v1799 = vpop.f32.mrb[0].mxu0
      %1800 = vdwg.mxu0
      %1801 = vst [vmem:[%s190] sm:$0xff] %v1547
      %1802 = vst [vmem:[%s190 + $0x8] sm:$0xff] %v1550
      %1803 = vst [vmem:[%s190 + $0x10] sm:$0xff] %v1555
      %1804 = vst [vmem:[%s190 + $0x18] sm:$0xff] %v1558
      %1805 = vst [vmem:[%s190 + $0x20] sm:$0xff] %v1563
      %1806 = vst [vmem:[%s190 + $0x28] sm:$0xff] %v1566
      %1807 = vst [vmem:[%s190 + $0x30] sm:$0xff] %v1571
      %1808 = vst [vmem:[%s190 + $0x38] sm:$0xff] %v1574
      %1809 = vst [vmem:[%s190 + $0x40] sm:$0xff] %v1579
      %1810 = vst [vmem:[%s190 + $0x48] sm:$0xff] %v1582
      %1811 = vst [vmem:[%s190 + $0x50] sm:$0xff] %v1587
      %1812 = vst [vmem:[%s190 + $0x58] sm:$0xff] %v1590
      %1813 = vst [vmem:[%s190 + $0x60] sm:$0xff] %v1595
      %1814 = vst [vmem:[%s190 + $0x68] sm:$0xff] %v1598
      %1815 = vst [vmem:[%s190 + $0x70] sm:$0xff] %v1603
      %1816 = vst [vmem:[%s190 + $0x78] sm:$0xff] %v1606
      %1817 = vst [vmem:[%s190 + $0x80] sm:$0xff] %v1611
      %1818 = vst [vmem:[%s190 + $0x88] sm:$0xff] %v1614
      %1819 = vst [vmem:[%s190 + $0x90] sm:$0xff] %v1619
      %1820 = vst [vmem:[%s190 + $0x98] sm:$0xff] %v1622
      %1821 = vst [vmem:[%s190 + $0xa0] sm:$0xff] %v1627
      %1822 = vst [vmem:[%s190 + $0xa8] sm:$0xff] %v1630
      %1823 = vst [vmem:[%s190 + $0xb0] sm:$0xff] %v1635
      %1824 = vst [vmem:[%s190 + $0xb8] sm:$0xff] %v1638
      %1825 = vst [vmem:[%s190 + $0xc0] sm:$0xff] %v1643
      %1826 = vst [vmem:[%s190 + $0xc8] sm:$0xff] %v1646
      %1827 = vst [vmem:[%s190 + $0xd0] sm:$0xff] %v1651
      %1828 = vst [vmem:[%s190 + $0xd8] sm:$0xff] %v1654
      %1829 = vst [vmem:[%s190 + $0xe0] sm:$0xff] %v1659
      %1830 = vst [vmem:[%s190 + $0xe8] sm:$0xff] %v1662
      %1831 = vst [vmem:[%s190 + $0xf0] sm:$0xff] %v1667
      %1832 = vst [vmem:[%s190 + $0xf8] sm:$0xff] %v1670
      %1833 = vst [vmem:[%s190 + $0x100] sm:$0xff] %v1675
      %1834 = vst [vmem:[%s190 + $0x108] sm:$0xff] %v1678
      %1835 = vst [vmem:[%s190 + $0x110] sm:$0xff] %v1683
      %1836 = vst [vmem:[%s190 + $0x118] sm:$0xff] %v1686
      %1837 = vst [vmem:[%s190 + $0x120] sm:$0xff] %v1691
      %1838 = vst [vmem:[%s190 + $0x128] sm:$0xff] %v1694
      %1839 = vst [vmem:[%s190 + $0x130] sm:$0xff] %v1699
      %1840 = vst [vmem:[%s190 + $0x138] sm:$0xff] %v1702
      %1841 = vst [vmem:[%s190 + $0x140] sm:$0xff] %v1707
      %1842 = vst [vmem:[%s190 + $0x148] sm:$0xff] %v1710
      %1843 = vst [vmem:[%s190 + $0x150] sm:$0xff] %v1715
      %1844 = vst [vmem:[%s190 + $0x158] sm:$0xff] %v1718
      %1845 = vst [vmem:[%s190 + $0x160] sm:$0xff] %v1723
      %1846 = vst [vmem:[%s190 + $0x168] sm:$0xff] %v1726
      %1847 = vst [vmem:[%s190 + $0x170] sm:$0xff] %v1731
      %1848 = vst [vmem:[%s190 + $0x178] sm:$0xff] %v1734
      %1849 = vst [vmem:[%s190 + $0x180] sm:$0xff] %v1739
      %1850 = vst [vmem:[%s190 + $0x188] sm:$0xff] %v1742
      %1851 = vst [vmem:[%s190 + $0x190] sm:$0xff] %v1747
      %1852 = vst [vmem:[%s190 + $0x198] sm:$0xff] %v1750
      %1853 = vst [vmem:[%s190 + $0x1a0] sm:$0xff] %v1755
      %1854 = vst [vmem:[%s190 + $0x1a8] sm:$0xff] %v1758
      %1855 = vst [vmem:[%s190 + $0x1b0] sm:$0xff] %v1763
      %1856 = vst [vmem:[%s190 + $0x1b8] sm:$0xff] %v1766
      %1857 = vst [vmem:[%s190 + $0x1c0] sm:$0xff] %v1771
      %1858 = vst [vmem:[%s190 + $0x1c8] sm:$0xff] %v1774
      %1859 = vst [vmem:[%s190 + $0x1d0] sm:$0xff] %v1779
      %1860 = vst [vmem:[%s190 + $0x1d8] sm:$0xff] %v1782
      %1861 = vst [vmem:[%s190 + $0x1e0] sm:$0xff] %v1787
      %1862 = vst [vmem:[%s190 + $0x1e8] sm:$0xff] %v1790
      %1863 = vst [vmem:[%s190 + $0x1f0] sm:$0xff] %v1795
      %1864 = vst [vmem:[%s190 + $0x1f8] sm:$0xff] %v1798
      %p1865 = scmp.lt.s32.totalorder %s14, 3
      %s1866 = scalar_select %p1865, %s14, 3
      %s1867 = smul.addr %s1866, 64
      %s1868 = smul.addr %s1867, 8
      %s1869 = scalar_lea.vmem %s3, %s1868
      // Predicated region
      $region33: #{generator_forward.7} parent=31 // pred_check
        %p1870 = pneg %p105
      $region34: #{generator_forward.7} parent=31 // pred_check_branch
        %1872 = sbr.rel (%p1870) target = $region36
      $region35: #{generator_forward.7} parent=31 // pred_region
        _
      $region36: #{generator_forward.7} parent=31 // pred_fallthru
        _
    $region32: #{generator_forward.7} parent=5 // pred_fallthru
      _
    %p1873 = scmp.le.s32.totalorder 2, %s9
    // Predicated region
    $region37: #{generator_forward.7} parent=5 // pred_check
      %p1874 = pneg %p1873
    $region38: #{generator_forward.7} parent=5 // pred_check_branch
      %1876 = sbr.rel (%p1874) target = $region40
    $region39: #{generator_forward.7} parent=5 // pred_region
      %s1877 = ssub.s32 %s9, 2
      // Predicated region
      $region41: #{generator_forward.7} parent=39 // pred_check
        %p1878 = pneg %p111
      $region42: #{generator_forward.7} parent=39 // pred_check_branch
        %1880 = sbr.rel (%p1878) target = $region44
      $region43: #{generator_forward.7} parent=39 // pred_region
        %p1881 = scmp.lt.s32.totalorder %s15, 3
        %s1882 = scalar_select %p1881, %s15, 3
        %s1883 = smul.addr %s1882, 64
        %s1884 = smul.addr %s1883, 8
        %s1885 = scalar_lea.vmem %s3, %s1884
      $region44: #{generator_forward.7} parent=39 // pred_fallthru
        _
    $region40: #{generator_forward.7} parent=5 // pred_fallthru
      _
  $region6: #{generator_forward.7} parent=0 // loop_footer
    %s13 = sadd.s32 1, %s9
  $region7: #{generator_forward.7} parent=0 // loop_footer_branch
    %8 = sbr.rel target = $region3
  $region8: #{generator_forward.7} parent=0 // loop_exit
    _

// kernel: squeeze.1
$region0: #{squeeze.1}
  %s0 = inlined_call_operand.vmem [shape: f32[4,512], index: 0, kind: input, shape index: {}]
  %s1 = inlined_call_operand.vmem [shape: f32[2,2,2,16,16], index: 1, kind: output, shape index: {}]
  $region1: #{squeeze.1} parent=0
    #allocation0 [shape = 'u8[16384]{0}', space=vmem, size = 0x4000, scoped, tag = 'scoped mem for input reshape']
    %s3 = sshllo.u32 0, 4
    %s4 = smul.addr 4, 3
    %s5 = scalar_lea.vmem %s0, %s4
    %v6 = vld [vmem:[%s5] sm:%s3]
    %s7 = scalar_lea.vmem [#allocation0], 24
    %8 = vst [vmem:[%s7] sm:%s3] %v6
    %s9 = smul.addr 4, 2
    %s10 = scalar_lea.vmem %s0, %s9
    %v11 = vld [vmem:[%s10] sm:%s3]
    %s12 = scalar_lea.vmem [#allocation0], 16
    %13 = vst [vmem:[%s12] sm:%s3] %v11
    %s14 = scalar_lea.vmem %s0, 4
    %v15 = vld [vmem:[%s14] sm:%s3]
    %s16 = scalar_lea.vmem [#allocation0], 8
    %17 = vst [vmem:[%s16] sm:%s3] %v15
    %v18 = vld [vmem:[%s0] sm:%s3]
    %19 = vst [vmem:[#allocation0] sm:%s3] %v18
    %v20 = vld [vmem:[#allocation0] sm:$0xf]
    %vm21 = vcmask 130048
    %22 = vst.msk [vmem:[%s1] sm:$0x1] %vm21, %v20
    %s23 = scalar_lea.vmem %s1, 31
    %24 = vst.msk [vmem:[%s23] sm:$0x2] %vm21, %v20
    %s25 = scalar_lea.vmem %s1, 62
    %26 = vst.msk [vmem:[%s25] sm:$0x4] %vm21, %v20
    %s27 = scalar_lea.vmem %s1, 93
    %28 = vst.msk [vmem:[%s27] sm:$0x8] %vm21, %v20
    %s29 = scalar_lea.vmem [#allocation0], 8
    %v30 = vld [vmem:[%s29] sm:$0xf]
    %vm31 = vcmask 130048
    %s32 = scalar_lea.vmem %s1, 8
    %33 = vst.msk [vmem:[%s32] sm:$0x1] %vm31, %v30
    %s34 = scalar_lea.vmem %s1, 39
    %35 = vst.msk [vmem:[%s34] sm:$0x2] %vm31, %v30
    %s36 = scalar_lea.vmem %s1, 70
    %37 = vst.msk [vmem:[%s36] sm:$0x4] %vm31, %v30
    %s38 = scalar_lea.vmem %s1, 101
    %39 = vst.msk [vmem:[%s38] sm:$0x8] %vm31, %v30
    %s40 = scalar_lea.vmem [#allocation0], 16
    %v41 = vld [vmem:[%s40] sm:$0xf]
    %vm42 = vcmask 130048
    %s43 = scalar_lea.vmem %s1, 16
    %44 = vst.msk [vmem:[%s43] sm:$0x1] %vm42, %v41
    %s45 = scalar_lea.vmem %s1, 47
    %46 = vst.msk [vmem:[%s45] sm:$0x2] %vm42, %v41
    %s47 = scalar_lea.vmem %s1, 78
    %48 = vst.msk [vmem:[%s47] sm:$0x4] %vm42, %v41
    %s49 = scalar_lea.vmem %s1, 109
    %50 = vst.msk [vmem:[%s49] sm:$0x8] %vm42, %v41
    %s51 = scalar_lea.vmem [#allocation0], 24
    %v52 = vld [vmem:[%s51] sm:$0xf]
    %vm53 = vcmask 130048
    %s54 = scalar_lea.vmem %s1, 24
    %55 = vst.msk [vmem:[%s54] sm:$0x1] %vm53, %v52
    %s56 = scalar_lea.vmem %s1, 55
    %57 = vst.msk [vmem:[%s56] sm:$0x2] %vm53, %v52
    %s58 = scalar_lea.vmem %s1, 86
    %59 = vst.msk [vmem:[%s58] sm:$0x4] %vm53, %v52
    %s60 = scalar_lea.vmem %s1, 117
    %61 = vst.msk [vmem:[%s60] sm:$0x8] %vm53, %v52
    %v62 = vld [vmem:[#allocation0] ss:$8 sm:$0xf]
    %s63 = scalar_lea.vmem [#allocation0], 4294967265
    %v64 = vld [vmem:[%s63] ss:$8 sm:$0xf0]
    %vm65 = vcmask 1047556
    %v66 = vsel %vm65, %v64, %v62
    %67 = vrot.lane.b32.xlu0 %v66, 112
    %v68 = vpop.permute.xlu0 %67
    %vm69 = vcmask 130048
    %s70 = scalar_lea.vmem %s1, 1
    %71 = vst.msk [vmem:[%s70] ss:$8 sm:$0xf] %vm69, %v68
    %s72 = scalar_lea.vmem %s1, 1
    %73 = vst.msk [vmem:[%s72] ss:$8 sm:$0xf0] %vm69, %v68
    %s74 = scalar_lea.vmem [#allocation0], 2
    %v75 = vld [vmem:[%s74] ss:$8 sm:$0xf]
    %s76 = scalar_lea.vmem [#allocation0], 4294967267
    %v77 = vld [vmem:[%s76] ss:$8 sm:$0xf0]
    %vm78 = vcmask 1047556
    %v79 = vsel %vm78, %v77, %v75
    %80 = vrot.lane.b32.xlu0 %v79, 112
    %v81 = vpop.permute.xlu0 %80
    %vm82 = vcmask 130048
    %s83 = scalar_lea.vmem %s1, 65
    %84 = vst.msk [vmem:[%s83] ss:$8 sm:$0xf] %vm82, %v81
    %s85 = scalar_lea.vmem %s1, 65
    %86 = vst.msk [vmem:[%s85] ss:$8 sm:$0xf0] %vm82, %v81
    %v87 = vld [vmem:[#allocation0] ss:$8 sm:$0xf]
    %s88 = scalar_lea.vmem [#allocation0], 4294967265
    %v89 = vld [vmem:[%s88] ss:$8 sm:$0xf0]
    %vm90 = vcmask 1047556
    %v91 = vsel %vm90, %v89, %v87
    %92 = vrot.lane.b32.xlu0 %v91, 96
    %v93 = vpop.permute.xlu0 %92
    %vm94 = vcmask 130048
    %s95 = scalar_lea.vmem %s1, 2
    %96 = vst.msk [vmem:[%s95] ss:$8 sm:$0xf] %vm94, %v93
    %s97 = scalar_lea.vmem %s1, 2
    %98 = vst.msk [vmem:[%s97] ss:$8 sm:$0xf0] %vm94, %v93
    %s99 = scalar_lea.vmem [#allocation0], 2
    %v100 = vld [vmem:[%s99] ss:$8 sm:$0xf]
    %s101 = scalar_lea.vmem [#allocation0], 4294967267
    %v102 = vld [vmem:[%s101] ss:$8 sm:$0xf0]
    %vm103 = vcmask 1047556
    %v104 = vsel %vm103, %v102, %v100
    %105 = vrot.lane.b32.xlu0 %v104, 96
    %v106 = vpop.permute.xlu0 %105
    %vm107 = vcmask 130048
    %s108 = scalar_lea.vmem %s1, 66
    %109 = vst.msk [vmem:[%s108] ss:$8 sm:$0xf] %vm107, %v106
    %s110 = scalar_lea.vmem %s1, 66
    %111 = vst.msk [vmem:[%s110] ss:$8 sm:$0xf0] %vm107, %v106
    %v112 = vld [vmem:[#allocation0] ss:$8 sm:$0xf]
    %s113 = scalar_lea.vmem [#allocation0], 4294967265
    %v114 = vld [vmem:[%s113] ss:$8 sm:$0xf0]
    %vm115 = vcmask 1047556
    %v116 = vsel %vm115, %v114, %v112
    %117 = vrot.lane.b32.xlu0 %v116, 80
    %v118 = vpop.permute.xlu0 %117
    %vm119 = vcmask 130048
    %s120 = scalar_lea.vmem %s1, 3
    %121 = vst.msk [vmem:[%s120] ss:$8 sm:$0xf] %vm119, %v118
    %s122 = scalar_lea.vmem %s1, 3
    %123 = vst.msk [vmem:[%s122] ss:$8 sm:$0xf0] %vm119, %v118
    %s124 = scalar_lea.vmem [#allocation0], 2
    %v125 = vld [vmem:[%s124] ss:$8 sm:$0xf]
    %s126 = scalar_lea.vmem [#allocation0], 4294967267
    %v127 = vld [vmem:[%s126] ss:$8 sm:$0xf0]
    %vm128 = vcmask 1047556
    %v129 = vsel %vm128, %v127, %v125
    %130 = vrot.lane.b32.xlu0 %v129, 80
    %v131 = vpop.permute.xlu0 %130
    %vm132 = vcmask 130048
    %s133 = scalar_lea.vmem %s1, 67
    %134 = vst.msk [vmem:[%s133] ss:$8 sm:$0xf] %vm132, %v131
    %s135 = scalar_lea.vmem %s1, 67
    %136 = vst.msk [vmem:[%s135] ss:$8 sm:$0xf0] %vm132, %v131
    %v137 = vld [vmem:[#allocation0] ss:$8 sm:$0xf]
    %s138 = scalar_lea.vmem [#allocation0], 4294967265
    %v139 = vld [vmem:[%s138] ss:$8 sm:$0xf0]
    %vm140 = vcmask 1047556
    %v141 = vsel %vm140, %v139, %v137
    %142 = vrot.lane.b32.xlu0 %v141, 64
    %v143 = vpop.permute.xlu0 %142
    %vm144 = vcmask 130048
    %s145 = scalar_lea.vmem %s1, 4
    %146 = vst.msk [vmem:[%s145] ss:$8 sm:$0xf] %vm144, %v143
    %s147 = scalar_lea.vmem %s1, 4
    %148 = vst.msk [vmem:[%s147] ss:$8 sm:$0xf0] %vm144, %v143
    %s149 = scalar_lea.vmem [#allocation0], 2
    %v150 = vld [vmem:[%s149] ss:$8 sm:$0xf]
    %s151 = scalar_lea.vmem [#allocation0], 4294967267
    %v152 = vld [vmem:[%s151] ss:$8 sm:$0xf0]
    %vm153 = vcmask 1047556
    %v154 = vsel %vm153, %v152, %v150
    %155 = vrot.lane.b32.xlu0 %v154, 64
    %v156 = vpop.permute.xlu0 %155
    %vm157 = vcmask 130048
    %s158 = scalar_lea.vmem %s1, 68
    %159 = vst.msk [vmem:[%s158] ss:$8 sm:$0xf] %vm157, %v156
    %s160 = scalar_lea.vmem %s1, 68
    %161 = vst.msk [vmem:[%s160] ss:$8 sm:$0xf0] %vm157, %v156
    %v162 = vld [vmem:[#allocation0] ss:$8 sm:$0xf]
    %s163 = scalar_lea.vmem [#allocation0], 4294967265
    %v164 = vld [vmem:[%s163] ss:$8 sm:$0xf0]
    %vm165 = vcmask 1047556
    %v166 = vsel %vm165, %v164, %v162
    %167 = vrot.lane.b32.xlu0 %v166, 48
    %v168 = vpop.permute.xlu0 %167
    %vm169 = vcmask 130048
    %s170 = scalar_lea.vmem %s1, 5
    %171 = vst.msk [vmem:[%s170] ss:$8 sm:$0xf] %vm169, %v168
    %s172 = scalar_lea.vmem %s1, 5
    %173 = vst.msk [vmem:[%s172] ss:$8 sm:$0xf0] %vm169, %v168
    %s174 = scalar_lea.vmem [#allocation0], 2
    %v175 = vld [vmem:[%s174] ss:$8 sm:$0xf]
    %s176 = scalar_lea.vmem [#allocation0], 4294967267
    %v177 = vld [vmem:[%s176] ss:$8 sm:$0xf0]
    %vm178 = vcmask 1047556
    %v179 = vsel %vm178, %v177, %v175
    %180 = vrot.lane.b32.xlu0 %v179, 48
    %v181 = vpop.permute.xlu0 %180
    %vm182 = vcmask 130048
    %s183 = scalar_lea.vmem %s1, 69
    %184 = vst.msk [vmem:[%s183] ss:$8 sm:$0xf] %vm182, %v181
    %s185 = scalar_lea.vmem %s1, 69
    %186 = vst.msk [vmem:[%s185] ss:$8 sm:$0xf0] %vm182, %v181
    %v187 = vld [vmem:[#allocation0] ss:$8 sm:$0xf]
    %s188 = scalar_lea.vmem [#allocation0], 4294967265
    %v189 = vld [vmem:[%s188] ss:$8 sm:$0xf0]
    %vm190 = vcmask 1047556
    %v191 = vsel %vm190, %v189, %v187
    %192 = vrot.lane.b32.xlu0 %v191, 32
    %v193 = vpop.permute.xlu0 %192
    %vm194 = vcmask 130048
    %s195 = scalar_lea.vmem %s1, 6
    %196 = vst.msk [vmem:[%s195] ss:$8 sm:$0xf] %vm194, %v193
    %s197 = scalar_lea.vmem %s1, 6
    %198 = vst.msk [vmem:[%s197] ss:$8 sm:$0xf0] %vm194, %v193
    %s199 = scalar_lea.vmem [#allocation0], 2
    %v200 = vld [vmem:[%s199] ss:$8 sm:$0xf]
    %s201 = scalar_lea.vmem [#allocation0], 4294967267
    %v202 = vld [vmem:[%s201] ss:$8 sm:$0xf0]
    %vm203 = vcmask 1047556
    %v204 = vsel %vm203, %v202, %v200
    %205 = vrot.lane.b32.xlu0 %v204, 32
    %v206 = vpop.permute.xlu0 %205
    %vm207 = vcmask 130048
    %s208 = scalar_lea.vmem %s1, 70
    %209 = vst.msk [vmem:[%s208] ss:$8 sm:$0xf] %vm207, %v206
    %s210 = scalar_lea.vmem %s1, 70
    %211 = vst.msk [vmem:[%s210] ss:$8 sm:$0xf0] %vm207, %v206
    %v212 = vld [vmem:[#allocation0] ss:$8 sm:$0xf]
    %s213 = scalar_lea.vmem [#allocation0], 4294967265
    %v214 = vld [vmem:[%s213] ss:$8 sm:$0xf0]
    %vm215 = vcmask 1047556
    %v216 = vsel %vm215, %v214, %v212
    %217 = vrot.lane.b32.xlu0 %v216, 16
    %v218 = vpop.permute.xlu0 %217
    %vm219 = vcmask 130048
    %s220 = scalar_lea.vmem %s1, 7
    %221 = vst.msk [vmem:[%s220] ss:$8 sm:$0xf] %vm219, %v218
    %s222 = scalar_lea.vmem %s1, 7
    %223 = vst.msk [vmem:[%s222] ss:$8 sm:$0xf0] %vm219, %v218
    %s224 = scalar_lea.vmem [#allocation0], 2
    %v225 = vld [vmem:[%s224] ss:$8 sm:$0xf]
    %s226 = scalar_lea.vmem [#allocation0], 4294967267
    %v227 = vld [vmem:[%s226] ss:$8 sm:$0xf0]
    %vm228 = vcmask 1047556
    %v229 = vsel %vm228, %v227, %v225
    %230 = vrot.lane.b32.xlu0 %v229, 16
    %v231 = vpop.permute.xlu0 %230
    %vm232 = vcmask 130048
    %s233 = scalar_lea.vmem %s1, 71
    %234 = vst.msk [vmem:[%s233] ss:$8 sm:$0xf] %vm232, %v231
    %s235 = scalar_lea.vmem %s1, 71
    %236 = vst.msk [vmem:[%s235] ss:$8 sm:$0xf0] %vm232, %v231

</llo_original>
